<compile_context>
chip_gen: v6e
topology: v6e:2x2x1
jax: 0.10.0
libtpu: 0.0.40
codegen_flags: <defaults>
</compile_context>

<pallas_src>
import jax
import jax.numpy as jnp
from jax import lax
from jax.experimental import pallas as pl
from jax.experimental.pallas import tpu as pltpu


def _round_up(x, m):
    return ((x + m - 1) // m) * m


# ---------------------------------------------------------------------------
# Fused features kernel: conv1(3->16)+ReLU+pool2, conv2(16->32)+ReLU+pool2,
# all inside one pallas_call with a per-image grid.  All spatial data is kept
# as flat "canvases" (rows of stride WB, a multiple of 8) so the 3x3 conv is
# expressed as 9 big accumulating matmuls and pooling is cheap VPU work.
# ---------------------------------------------------------------------------
def conv_features(x_nchw, kp):
    B, C0, H, W = x_nchw.shape
    C0P = 8                                  # pad input channels 3 -> 8
    C1 = kp["conv1_w9"].shape[-1]            # 16
    C2 = kp["conv2_w9"].shape[-1]            # 32
    Ho, Wo = H // 2, W // 2
    Ho2, Wo2 = Ho // 2, Wo // 2
    WB1 = _round_up(W + 2, 8)                # conv1 output row stride (mult of 8)
    WSP1 = WB1 + 2                           # physical canvas width (room for dx shift)
    WB2 = _round_up(Wo + 2, 8)
    WSP2 = WB2 + 2
    R1, R2 = H + 2, Ho + 2

    # Host-side glue: NCHW -> NHWC, zero ring for padding=1, channel pad 3->8,
    # extra zero columns up to the canvas width.
    x = jnp.transpose(x_nchw, (0, 2, 3, 1)).astype(jnp.float32)
    x = jnp.pad(x, ((0, 0), (1, 1), (1, WSP1 - 1 - W), (0, C0P - C0)))
    # x: (B, R1, WSP1, C0P); image pixel (i, j) sits at canvas (i+1, j+1).

    def kernel(x_ref, w1_ref, b1_ref, w2_ref, b2_ref, o_ref,
               p1_scr, c2_scr, p2_scr):
        def conv3x3(src, h_img, wbox, w_ref):
            # src: zero-padded canvas ref (h_img+2, wbox+2, cin)
            # returns (h_img*wbox, cout) f32: output pixel (h, w) at row h*wbox+w,
            # columns >= valid width are garbage and are never pooled.
            cin = src.shape[-1]
            cout = w_ref.shape[-1]
            m = h_img * wbox
            acc = jnp.zeros((m, cout), jnp.float32)
            for dy in range(3):
                for dx in range(3):
                    box = src[pl.ds(dy, h_img), pl.ds(dx, wbox), :]
                    acc = acc + jnp.dot(box.reshape(m, cin),
                                        w_ref[3 * dy + dx],
                                        preferred_element_type=jnp.float32)
            return acc

        def relu_pool(acc, b_ref, h_img, wbox, w_img, scr):
            # bias + ReLU, then 2x2 max-pool on the VPU.
            c = acc.shape[-1]
            act = jnp.maximum(acc + b_ref[...], 0.0)        # (h_img*wbox, c)
            # H-pool: merge row pairs along the (aligned) sublane dim, max halves.
            pair = act.reshape(h_img // 2, 2 * wbox, c)
            scr[...] = jnp.maximum(pair[:, :wbox, :], pair[:, wbox:, :])
            # W-pool + compaction via sublane-strided reads (even/odd columns).
            return jnp.maximum(
                scr[:, pl.ds(0, w_img // 2, stride=2), :],
                scr[:, pl.ds(1, w_img // 2, stride=2), :])

        # ---- layer 1: conv 3->16, ReLU, pool ----
        a1 = conv3x3(x_ref, H, WB1, w1_ref)
        p1 = relu_pool(a1, b1_ref, H, WB1, W, p1_scr)        # (Ho, Wo, C1)

        # ---- stage pooled output into conv2's zero-padded VMEM canvas ----
        c2_scr[...] = jnp.zeros_like(c2_scr)
        c2_scr[pl.ds(1, Ho), pl.ds(1, Wo), :] = p1

        # ---- layer 2: conv 16->32, ReLU, pool ----
        a2 = conv3x3(c2_scr, Ho, WB2, w2_ref)
        p2 = relu_pool(a2, b2_ref, Ho, WB2, Wo, p2_scr)      # (Ho2, Wo2, C2)

        o_ref[...] = p2.astype(o_ref.dtype)

    return pl.pallas_call(
        kernel,
        out_shape=jax.ShapeDtypeStruct((B, Ho2, Wo2, C2), jnp.float32),
        grid=(B,),
        in_specs=[
            pl.BlockSpec((None, R1, WSP1, C0P), lambda b: (b, 0, 0, 0)),
            pl.BlockSpec((9, C0P, C1), lambda b: (0, 0, 0)),
            pl.BlockSpec((1, C1), lambda b: (0, 0)),
            pl.BlockSpec((9, C1, C2), lambda b: (0, 0, 0)),
            pl.BlockSpec((1, C2), lambda b: (0, 0)),
        ],
        out_specs=pl.BlockSpec((None, Ho2, Wo2, C2), lambda b: (b, 0, 0, 0)),
        scratch_shapes=[
            pltpu.VMEM((Ho, WB1, C1), jnp.float32),    # layer-1 H-pooled rows
            pltpu.VMEM((R2, WSP2, C1), jnp.float32),   # conv2 input canvas
            pltpu.VMEM((Ho2, WB2, C2), jnp.float32),   # layer-2 H-pooled rows
        ],
        compiler_params=pltpu.CompilerParams(
            dimension_semantics=("parallel",),         # independent images (v7x 2 TCs)
            vmem_limit_bytes=32 * 1024 * 1024,         # budget ~8 MiB even at S=128
        ),
    )(x, kp["conv1_w9"], kp["conv1_b"], kp["conv2_w9"], kp["conv2_b"])


# ---------------------------------------------------------------------------
# Classifier: Linear -> ReLU -> Linear, K-tiled over the big reduction dim so
# the fc1 weight DMA pipelines with the matmul (accumulator + pl.when finalize).
# ---------------------------------------------------------------------------
def mlp(x, w1t, b1, w2t, b2):
    B, F = x.shape
    NH = w1t.shape[1]
    NC = w2t.shape[1]

    TK = F                                   # reduction tile (multiple of 128 or == F)
    for cand in (4096, 2048, 1024, 512, 256, 128):
        if F % cand == 0 and F // cand >= 2:
            TK = cand
            break
    nk = F // TK

    def kernel(x_ref, w1_ref, b1_ref, w2_ref, b2_ref, o_ref, acc_ref):
        k = pl.program_id(0)

        @pl.when(k == 0)
        def _init():
            acc_ref[...] = jnp.zeros_like(acc_ref)

        acc_ref[...] += jnp.dot(x_ref[...], w1_ref[...],
                                preferred_element_type=jnp.float32)

        @pl.when(k == pl.num_programs(0) - 1)
        def _finish():
            h = jnp.maximum(acc_ref[...] + b1_ref[...], 0.0)
            o_ref[...] = (jnp.dot(h, w2_ref[...],
                                  preferred_element_type=jnp.float32)
                          + b2_ref[...]).astype(o_ref.dtype)

    return pl.pallas_call(
        kernel,
        out_shape=jax.ShapeDtypeStruct((B, NC), jnp.float32),
        grid=(nk,),
        in_specs=[
            pl.BlockSpec((B, TK), lambda k: (0, k)),
            pl.BlockSpec((TK, NH), lambda k: (k, 0)),
            pl.BlockSpec((1, NH), lambda k: (0, 0)),
            pl.BlockSpec((NH, NC), lambda k: (0, 0)),
            pl.BlockSpec((1, NC), lambda k: (0, 0)),
        ],
        out_specs=pl.BlockSpec((B, NC), lambda k: (0, 0)),
        scratch_shapes=[pltpu.VMEM((B, NH), jnp.float32)],
        compiler_params=pltpu.CompilerParams(
            dimension_semantics=("arbitrary",)),       # reduction axis
    )(x, w1t, b1, w2t, b2)


# ---------------------------------------------------------------------------
# One-time parameter preparation (kernel-friendly layouts; no per-call .T):
#   - conv weights as (9, Cin_pad, Cout) tap-major
#   - fc1 columns permuted from torch's NCHW-flatten order to NHWC-flatten order
#     and transposed to (F, 64); fc2 transposed to (64, num_classes)
# ---------------------------------------------------------------------------
def prepare_params(params, image_size):
    Ho2 = Wo2 = image_size // 4
    C2 = params["conv2_w"].shape[0]
    F = C2 * Ho2 * Wo2

    def conv_taps(w_oihw, cin_pad):
        cout, cin, _, _ = w_oihw.shape
        w = jnp.transpose(w_oihw, (2, 3, 1, 0))               # (3, 3, cin, cout)
        w = jnp.pad(w, ((0, 0), (0, 0), (0, cin_pad - cin), (0, 0)))
        return w.reshape(9, cin_pad, cout).astype(jnp.float32)

    nh = params["fc1_w"].shape[0]
    w1 = params["fc1_w"].reshape(nh, C2, Ho2, Wo2)            # (64, C, H, W)
    w1 = jnp.transpose(w1, (2, 3, 1, 0)).reshape(F, nh)       # NHWC-flatten columns

    return {
        "conv1_w9": conv_taps(params["conv1_w"], 8),
        "conv1_b": params["conv1_b"].reshape(1, -1).astype(jnp.float32),
        "conv2_w9": conv_taps(params["conv2_w"], params["conv2_w"].shape[1]),
        "conv2_b": params["conv2_b"].reshape(1, -1).astype(jnp.float32),
        "fc1_wT": w1.astype(jnp.float32),
        "fc1_b": params["fc1_b"].reshape(1, -1).astype(jnp.float32),
        "fc2_wT": params["fc2_w"].T.astype(jnp.float32),
        "fc2_b": params["fc2_b"].reshape(1, -1).astype(jnp.float32),
    }


@jax.jit
def simple_cnn_forward(x_nchw, kparams):
    feats = conv_features(x_nchw, kparams)                    # (B, H/4, W/4, 32)
    x = feats.reshape(feats.shape[0], -1)                     # free NHWC flatten
    return mlp(x, kparams["fc1_wT"], kparams["fc1_b"],
               kparams["fc2_wT"], kparams["fc2_b"])


# ---------------------------------------------------------------------------
# Pure-JAX reference (torch-layout params) for verification.
# ---------------------------------------------------------------------------
def reference_forward(x_nchw, params):
    def conv_block(x, w, b):
        y = lax.conv_general_dilated(x, w, (1, 1), "SAME",
                                     dimension_numbers=("NCHW", "OIHW", "NCHW"))
        y = jnp.maximum(y + b.reshape(1, -1, 1, 1), 0.0)
        return lax.reduce_window(y, -jnp.inf, lax.max,
                                 (1, 1, 2, 2), (1, 1, 2, 2), "VALID")

    x = conv_block(x_nchw, params["conv1_w"], params["conv1_b"])
    x = conv_block(x, params["conv2_w"], params["conv2_b"])
    x = x.reshape(x.shape[0], -1)                              # NCHW flatten (torch order)
    x = jnp.maximum(x @ params["fc1_w"].T + params["fc1_b"], 0.0)
    return x @ params["fc2_w"].T + params["fc2_b"]


if __name__ == "__main__":
    S = 16            # synthetic image size (module default is 128); fc1 uses 32*(S//4)^2
    B = 2
    NUM_CLASSES = 2
    key = jax.random.PRNGKey(0)
    ks = jax.random.split(key, 9)

    x = jax.random.normal(ks[0], (B, 3, S, S), dtype=jnp.float32)
    params = {
        "conv1_w": 0.10 * jax.random.normal(ks[1], (16, 3, 3, 3), jnp.float32),
        "conv1_b": 0.10 * jax.random.normal(ks[2], (16,), jnp.float32),
        "conv2_w": 0.10 * jax.random.normal(ks[3], (32, 16, 3, 3), jnp.float32),
        "conv2_b": 0.10 * jax.random.normal(ks[4], (32,), jnp.float32),
        "fc1_w": 0.05 * jax.random.normal(ks[5], (64, 32 * (S // 4) * (S // 4)), jnp.float32),
        "fc1_b": 0.05 * jax.random.normal(ks[6], (64,), jnp.float32),
        "fc2_w": 0.05 * jax.random.normal(ks[7], (NUM_CLASSES, 64), jnp.float32),
        "fc2_b": 0.05 * jax.random.normal(ks[8], (NUM_CLASSES,), jnp.float32),
    }

    kparams = prepare_params(params, S)                        # one-time prep

    out = jax.block_until_ready(simple_cnn_forward(x, kparams))
    assert out.shape == (B, NUM_CLASSES), out.shape

    ref = jax.block_until_ready(reference_forward(x, params))
    if not bool(jnp.allclose(out, ref, atol=1e-4, rtol=1e-4)):  # tightened from 1e-2
        raise AssertionError(f"Pallas output mismatch vs reference:\n{out}\n{ref}")

    print("KERNEL_OK")
</pallas_src>

<mosaic_0001>
module attributes {stable_mosaic.version = 11 : i64} {
  func.func @kernel(%arg0: i32, %arg1: memref<1x18x26x8xf32, #tpu.memory_space<vmem>>, %arg2: memref<9x8x16xf32, #tpu.memory_space<vmem>>, %arg3: memref<1x16xf32, #tpu.memory_space<vmem>>, %arg4: memref<9x16x32xf32, #tpu.memory_space<vmem>>, %arg5: memref<1x32xf32, #tpu.memory_space<vmem>>, %arg6: memref<1x4x4x32xf32, #tpu.memory_space<vmem>>, %arg7: memref<8x24x16xf32, #tpu.memory_space<vmem>>, %arg8: memref<10x18x16xf32, #tpu.memory_space<vmem>>, %arg9: memref<4x16x32xf32, #tpu.memory_space<vmem>>) attributes {dimension_semantics = [#tpu.dimension_semantics<parallel>], iteration_bounds = array<i64: 2>, scalar_prefetch = 0 : i64, scratch_operands = 3 : i64, tpu.core_type = #tpu.core_type<tc>, window_params = [{transform_indices = @transform_0, window_bounds = array<i64: 1, 18, 26, 8>}, {pipeline_mode = #tpu.pipeline_mode<synchronous>, transform_indices = @transform_1, window_bounds = array<i64: 9, 8, 16>}, {pipeline_mode = #tpu.pipeline_mode<synchronous>, transform_indices = @transform_2, window_bounds = array<i64: 1, 16>}, {pipeline_mode = #tpu.pipeline_mode<synchronous>, transform_indices = @transform_3, window_bounds = array<i64: 9, 16, 32>}, {pipeline_mode = #tpu.pipeline_mode<synchronous>, transform_indices = @transform_4, window_bounds = array<i64: 1, 32>}, {transform_indices = @transform_5, window_bounds = array<i64: 1, 4, 4, 32>}]} {
    %cst = arith.constant 0.000000e+00 : f32
    %0 = vector.broadcast %cst : f32 to vector<384x16xf32>
    %c0 = arith.constant 0 : index
    %c0_0 = arith.constant 0 : index
    %c0_1 = arith.constant 0 : index
    %c0_2 = arith.constant 0 : index
    %1 = vector.load %arg1[%c0, %c0_0, %c0_1, %c0_2] : memref<1x18x26x8xf32, #tpu.memory_space<vmem>>, vector<1x16x24x8xf32>
    %2 = vector.shape_cast %1 : vector<1x16x24x8xf32> to vector<16x24x8xf32>
    %3 = vector.shape_cast %2 : vector<16x24x8xf32> to vector<384x8xf32>
    %c0_3 = arith.constant 0 : index
    %c0_4 = arith.constant 0 : index
    %c0_5 = arith.constant 0 : index
    %4 = vector.load %arg2[%c0_3, %c0_4, %c0_5] : memref<9x8x16xf32, #tpu.memory_space<vmem>>, vector<1x8x16xf32>
    %5 = vector.shape_cast %4 : vector<1x8x16xf32> to vector<8x16xf32>
    %cst_6 = arith.constant dense<0.000000e+00> : vector<384x16xf32>
    %6 = tpu.matmul %3, %5, %cst_6 {dimension_numbers = #tpu.dot_dimension_numbers<[1], [0], [0], [1], [0, 0, 1, 1], [], []>} : vector<384x8xf32>, vector<8x16xf32>, vector<384x16xf32> -> vector<384x16xf32>
    %7 = arith.addf %0, %6 : vector<384x16xf32>
    %c0_7 = arith.constant 0 : index
    %c0_8 = arith.constant 0 : index
    %c1 = arith.constant 1 : index
    %c0_9 = arith.constant 0 : index
    %8 = vector.load %arg1[%c0_7, %c0_8, %c1, %c0_9] : memref<1x18x26x8xf32, #tpu.memory_space<vmem>>, vector<1x16x24x8xf32>
    %9 = vector.shape_cast %8 : vector<1x16x24x8xf32> to vector<16x24x8xf32>
    %10 = vector.shape_cast %9 : vector<16x24x8xf32> to vector<384x8xf32>
    %c1_10 = arith.constant 1 : index
    %c0_11 = arith.constant 0 : index
    %c0_12 = arith.constant 0 : index
    %11 = vector.load %arg2[%c1_10, %c0_11, %c0_12] : memref<9x8x16xf32, #tpu.memory_space<vmem>>, vector<1x8x16xf32>
    %12 = vector.shape_cast %11 : vector<1x8x16xf32> to vector<8x16xf32>
    %cst_13 = arith.constant dense<0.000000e+00> : vector<384x16xf32>
    %13 = tpu.matmul %10, %12, %cst_13 {dimension_numbers = #tpu.dot_dimension_numbers<[1], [0], [0], [1], [0, 0, 1, 1], [], []>} : vector<384x8xf32>, vector<8x16xf32>, vector<384x16xf32> -> vector<384x16xf32>
    %14 = arith.addf %7, %13 : vector<384x16xf32>
    %c0_14 = arith.constant 0 : index
    %c0_15 = arith.constant 0 : index
    %c2 = arith.constant 2 : index
    %c0_16 = arith.constant 0 : index
    %15 = vector.load %arg1[%c0_14, %c0_15, %c2, %c0_16] : memref<1x18x26x8xf32, #tpu.memory_space<vmem>>, vector<1x16x24x8xf32>
    %16 = vector.shape_cast %15 : vector<1x16x24x8xf32> to vector<16x24x8xf32>
    %17 = vector.shape_cast %16 : vector<16x24x8xf32> to vector<384x8xf32>
    %c2_17 = arith.constant 2 : index
    %c0_18 = arith.constant 0 : index
    %c0_19 = arith.constant 0 : index
    %18 = vector.load %arg2[%c2_17, %c0_18, %c0_19] : memref<9x8x16xf32, #tpu.memory_space<vmem>>, vector<1x8x16xf32>
    %19 = vector.shape_cast %18 : vector<1x8x16xf32> to vector<8x16xf32>
    %cst_20 = arith.constant dense<0.000000e+00> : vector<384x16xf32>
    %20 = tpu.matmul %17, %19, %cst_20 {dimension_numbers = #tpu.dot_dimension_numbers<[1], [0], [0], [1], [0, 0, 1, 1], [], []>} : vector<384x8xf32>, vector<8x16xf32>, vector<384x16xf32> -> vector<384x16xf32>
    %21 = arith.addf %14, %20 : vector<384x16xf32>
    %c0_21 = arith.constant 0 : index
    %c1_22 = arith.constant 1 : index
    %c0_23 = arith.constant 0 : index
    %c0_24 = arith.constant 0 : index
    %22 = vector.load %arg1[%c0_21, %c1_22, %c0_23, %c0_24] : memref<1x18x26x8xf32, #tpu.memory_space<vmem>>, vector<1x16x24x8xf32>
    %23 = vector.shape_cast %22 : vector<1x16x24x8xf32> to vector<16x24x8xf32>
    %24 = vector.shape_cast %23 : vector<16x24x8xf32> to vector<384x8xf32>
    %c3 = arith.constant 3 : index
    %c0_25 = arith.constant 0 : index
    %c0_26 = arith.constant 0 : index
    %25 = vector.load %arg2[%c3, %c0_25, %c0_26] : memref<9x8x16xf32, #tpu.memory_space<vmem>>, vector<1x8x16xf32>
    %26 = vector.shape_cast %25 : vector<1x8x16xf32> to vector<8x16xf32>
    %cst_27 = arith.constant dense<0.000000e+00> : vector<384x16xf32>
    %27 = tpu.matmul %24, %26, %cst_27 {dimension_numbers = #tpu.dot_dimension_numbers<[1], [0], [0], [1], [0, 0, 1, 1], [], []>} : vector<384x8xf32>, vector<8x16xf32>, vector<384x16xf32> -> vector<384x16xf32>
    %28 = arith.addf %21, %27 : vector<384x16xf32>
    %c0_28 = arith.constant 0 : index
    %c1_29 = arith.constant 1 : index
    %c1_30 = arith.constant 1 : index
    %c0_31 = arith.constant 0 : index
    %29 = vector.load %arg1[%c0_28, %c1_29, %c1_30, %c0_31] : memref<1x18x26x8xf32, #tpu.memory_space<vmem>>, vector<1x16x24x8xf32>
    %30 = vector.shape_cast %29 : vector<1x16x24x8xf32> to vector<16x24x8xf32>
    %31 = vector.shape_cast %30 : vector<16x24x8xf32> to vector<384x8xf32>
    %c4 = arith.constant 4 : index
    %c0_32 = arith.constant 0 : index
    %c0_33 = arith.constant 0 : index
    %32 = vector.load %arg2[%c4, %c0_32, %c0_33] : memref<9x8x16xf32, #tpu.memory_space<vmem>>, vector<1x8x16xf32>
    %33 = vector.shape_cast %32 : vector<1x8x16xf32> to vector<8x16xf32>
    %cst_34 = arith.constant dense<0.000000e+00> : vector<384x16xf32>
    %34 = tpu.matmul %31, %33, %cst_34 {dimension_numbers = #tpu.dot_dimension_numbers<[1], [0], [0], [1], [0, 0, 1, 1], [], []>} : vector<384x8xf32>, vector<8x16xf32>, vector<384x16xf32> -> vector<384x16xf32>
    %35 = arith.addf %28, %34 : vector<384x16xf32>
    %c0_35 = arith.constant 0 : index
    %c1_36 = arith.constant 1 : index
    %c2_37 = arith.constant 2 : index
    %c0_38 = arith.constant 0 : index
    %36 = vector.load %arg1[%c0_35, %c1_36, %c2_37, %c0_38] : memref<1x18x26x8xf32, #tpu.memory_space<vmem>>, vector<1x16x24x8xf32>
    %37 = vector.shape_cast %36 : vector<1x16x24x8xf32> to vector<16x24x8xf32>
    %38 = vector.shape_cast %37 : vector<16x24x8xf32> to vector<384x8xf32>
    %c5 = arith.constant 5 : index
    %c0_39 = arith.constant 0 : index
    %c0_40 = arith.constant 0 : index
    %39 = vector.load %arg2[%c5, %c0_39, %c0_40] : memref<9x8x16xf32, #tpu.memory_space<vmem>>, vector<1x8x16xf32>
    %40 = vector.shape_cast %39 : vector<1x8x16xf32> to vector<8x16xf32>
    %cst_41 = arith.constant dense<0.000000e+00> : vector<384x16xf32>
    %41 = tpu.matmul %38, %40, %cst_41 {dimension_numbers = #tpu.dot_dimension_numbers<[1], [0], [0], [1], [0, 0, 1, 1], [], []>} : vector<384x8xf32>, vector<8x16xf32>, vector<384x16xf32> -> vector<384x16xf32>
    %42 = arith.addf %35, %41 : vector<384x16xf32>
    %c0_42 = arith.constant 0 : index
    %c2_43 = arith.constant 2 : index
    %c0_44 = arith.constant 0 : index
    %c0_45 = arith.constant 0 : index
    %43 = vector.load %arg1[%c0_42, %c2_43, %c0_44, %c0_45] : memref<1x18x26x8xf32, #tpu.memory_space<vmem>>, vector<1x16x24x8xf32>
    %44 = vector.shape_cast %43 : vector<1x16x24x8xf32> to vector<16x24x8xf32>
    %45 = vector.shape_cast %44 : vector<16x24x8xf32> to vector<384x8xf32>
    %c6 = arith.constant 6 : index
    %c0_46 = arith.constant 0 : index
    %c0_47 = arith.constant 0 : index
    %46 = vector.load %arg2[%c6, %c0_46, %c0_47] : memref<9x8x16xf32, #tpu.memory_space<vmem>>, vector<1x8x16xf32>
    %47 = vector.shape_cast %46 : vector<1x8x16xf32> to vector<8x16xf32>
    %cst_48 = arith.constant dense<0.000000e+00> : vector<384x16xf32>
    %48 = tpu.matmul %45, %47, %cst_48 {dimension_numbers = #tpu.dot_dimension_numbers<[1], [0], [0], [1], [0, 0, 1, 1], [], []>} : vector<384x8xf32>, vector<8x16xf32>, vector<384x16xf32> -> vector<384x16xf32>
    %49 = arith.addf %42, %48 : vector<384x16xf32>
    %c0_49 = arith.constant 0 : index
    %c2_50 = arith.constant 2 : index
    %c1_51 = arith.constant 1 : index
    %c0_52 = arith.constant 0 : index
    %50 = vector.load %arg1[%c0_49, %c2_50, %c1_51, %c0_52] : memref<1x18x26x8xf32, #tpu.memory_space<vmem>>, vector<1x16x24x8xf32>
    %51 = vector.shape_cast %50 : vector<1x16x24x8xf32> to vector<16x24x8xf32>
    %52 = vector.shape_cast %51 : vector<16x24x8xf32> to vector<384x8xf32>
    %c7 = arith.constant 7 : index
    %c0_53 = arith.constant 0 : index
    %c0_54 = arith.constant 0 : index
    %53 = vector.load %arg2[%c7, %c0_53, %c0_54] : memref<9x8x16xf32, #tpu.memory_space<vmem>>, vector<1x8x16xf32>
    %54 = vector.shape_cast %53 : vector<1x8x16xf32> to vector<8x16xf32>
    %cst_55 = arith.constant dense<0.000000e+00> : vector<384x16xf32>
    %55 = tpu.matmul %52, %54, %cst_55 {dimension_numbers = #tpu.dot_dimension_numbers<[1], [0], [0], [1], [0, 0, 1, 1], [], []>} : vector<384x8xf32>, vector<8x16xf32>, vector<384x16xf32> -> vector<384x16xf32>
    %56 = arith.addf %49, %55 : vector<384x16xf32>
    %c0_56 = arith.constant 0 : index
    %c2_57 = arith.constant 2 : index
    %c2_58 = arith.constant 2 : index
    %c0_59 = arith.constant 0 : index
    %57 = vector.load %arg1[%c0_56, %c2_57, %c2_58, %c0_59] : memref<1x18x26x8xf32, #tpu.memory_space<vmem>>, vector<1x16x24x8xf32>
    %58 = vector.shape_cast %57 : vector<1x16x24x8xf32> to vector<16x24x8xf32>
    %59 = vector.shape_cast %58 : vector<16x24x8xf32> to vector<384x8xf32>
    %c8 = arith.constant 8 : index
    %c0_60 = arith.constant 0 : index
    %c0_61 = arith.constant 0 : index
    %60 = vector.load %arg2[%c8, %c0_60, %c0_61] : memref<9x8x16xf32, #tpu.memory_space<vmem>>, vector<1x8x16xf32>
    %61 = vector.shape_cast %60 : vector<1x8x16xf32> to vector<8x16xf32>
    %cst_62 = arith.constant dense<0.000000e+00> : vector<384x16xf32>
    %62 = tpu.matmul %59, %61, %cst_62 {dimension_numbers = #tpu.dot_dimension_numbers<[1], [0], [0], [1], [0, 0, 1, 1], [], []>} : vector<384x8xf32>, vector<8x16xf32>, vector<384x16xf32> -> vector<384x16xf32>
    %63 = arith.addf %56, %62 : vector<384x16xf32>
    %c0_63 = arith.constant 0 : index
    %c0_64 = arith.constant 0 : index
    %64 = vector.load %arg3[%c0_63, %c0_64] : memref<1x16xf32, #tpu.memory_space<vmem>>, vector<1x16xf32>
    %65 = vector.broadcast %64 : vector<1x16xf32> to vector<384x16xf32>
    %66 = arith.addf %63, %65 : vector<384x16xf32>
    %cst_65 = arith.constant 0.000000e+00 : f32
    %67 = vector.broadcast %cst_65 : f32 to vector<384x16xf32>
    %68 = arith.maximumf %66, %67 : vector<384x16xf32>
    %69 = vector.shape_cast %68 : vector<384x16xf32> to vector<8x48x16xf32>
    %70 = vector.extract_strided_slice %69 {offsets = [0, 0, 0], sizes = [8, 24, 16], strides = [1, 1, 1]} : vector<8x48x16xf32> to vector<8x24x16xf32>
    %71 = vector.extract_strided_slice %69 {offsets = [0, 24, 0], sizes = [8, 24, 16], strides = [1, 1, 1]} : vector<8x48x16xf32> to vector<8x24x16xf32>
    %72 = arith.maximumf %70, %71 : vector<8x24x16xf32>
    %c0_66 = arith.constant 0 : index
    %c0_67 = arith.constant 0 : index
    %c0_68 = arith.constant 0 : index
    %73 = vector.load %arg7[%c0_66, %c0_67, %c0_68] : memref<8x24x16xf32, #tpu.memory_space<vmem>>, vector<8x24x16xf32>
    tpu.vector_store %arg7[%c0_66, %c0_67, %c0_68], %72 {strides = array<i32>} : memref<8x24x16xf32, #tpu.memory_space<vmem>>, vector<8x24x16xf32>,
    %c0_69 = arith.constant 0 : index
    %c0_70 = arith.constant 0 : index
    %c0_71 = arith.constant 0 : index
    %74 = tpu.strided_load %arg7[%c0_69, %c0_70, %c0_71] {strides = array<i32: 1, 2, 1>} : memref<8x24x16xf32, #tpu.memory_space<vmem>>, vector<8x8x16xf32>
    %c0_72 = arith.constant 0 : index
    %c1_73 = arith.constant 1 : index
    %c0_74 = arith.constant 0 : index
    %75 = tpu.strided_load %arg7[%c0_72, %c1_73, %c0_74] {strides = array<i32: 1, 2, 1>} : memref<8x24x16xf32, #tpu.memory_space<vmem>>, vector<8x8x16xf32>
    %76 = arith.maximumf %74, %75 : vector<8x8x16xf32>
    %cst_75 = arith.constant 0.000000e+00 : f32
    %77 = vector.broadcast %cst_75 : f32 to vector<10x18x16xf32>
    %c0_76 = arith.constant 0 : index
    %c0_77 = arith.constant 0 : index
    %c0_78 = arith.constant 0 : index
    %78 = vector.load %arg8[%c0_76, %c0_77, %c0_78] : memref<10x18x16xf32, #tpu.memory_space<vmem>>, vector<10x18x16xf32>
    tpu.vector_store %arg8[%c0_76, %c0_77, %c0_78], %77 {strides = array<i32>} : memref<10x18x16xf32, #tpu.memory_space<vmem>>, vector<10x18x16xf32>,
    %c1_79 = arith.constant 1 : index
    %c1_80 = arith.constant 1 : index
    %c0_81 = arith.constant 0 : index
    %79 = vector.load %arg8[%c1_79, %c1_80, %c0_81] : memref<10x18x16xf32, #tpu.memory_space<vmem>>, vector<8x8x16xf32>
    tpu.vector_store %arg8[%c1_79, %c1_80, %c0_81], %76 {strides = array<i32>} : memref<10x18x16xf32, #tpu.memory_space<vmem>>, vector<8x8x16xf32>,
    %cst_82 = arith.constant 0.000000e+00 : f32
    %80 = vector.broadcast %cst_82 : f32 to vector<128x32xf32>
    %c0_83 = arith.constant 0 : index
    %c0_84 = arith.constant 0 : index
    %c0_85 = arith.constant 0 : index
    %81 = vector.load %arg8[%c0_83, %c0_84, %c0_85] : memref<10x18x16xf32, #tpu.memory_space<vmem>>, vector<8x16x16xf32>
    %82 = vector.shape_cast %81 : vector<8x16x16xf32> to vector<128x16xf32>
    %c0_86 = arith.constant 0 : index
    %c0_87 = arith.constant 0 : index
    %c0_88 = arith.constant 0 : index
    %83 = vector.load %arg4[%c0_86, %c0_87, %c0_88] : memref<9x16x32xf32, #tpu.memory_space<vmem>>, vector<1x16x32xf32>
    %84 = vector.shape_cast %83 : vector<1x16x32xf32> to vector<16x32xf32>
    %cst_89 = arith.constant dense<0.000000e+00> : vector<128x32xf32>
    %85 = tpu.matmul %82, %84, %cst_89 {dimension_numbers = #tpu.dot_dimension_numbers<[1], [0], [0], [1], [0, 0, 1, 1], [], []>} : vector<128x16xf32>, vector<16x32xf32>, vector<128x32xf32> -> vector<128x32xf32>
    %86 = arith.addf %80, %85 : vector<128x32xf32>
    %c0_90 = arith.constant 0 : index
    %c1_91 = arith.constant 1 : index
    %c0_92 = arith.constant 0 : index
    %87 = vector.load %arg8[%c0_90, %c1_91, %c0_92] : memref<10x18x16xf32, #tpu.memory_space<vmem>>, vector<8x16x16xf32>
    %88 = vector.shape_cast %87 : vector<8x16x16xf32> to vector<128x16xf32>
    %c1_93 = arith.constant 1 : index
    %c0_94 = arith.constant 0 : index
    %c0_95 = arith.constant 0 : index
    %89 = vector.load %arg4[%c1_93, %c0_94, %c0_95] : memref<9x16x32xf32, #tpu.memory_space<vmem>>, vector<1x16x32xf32>
    %90 = vector.shape_cast %89 : vector<1x16x32xf32> to vector<16x32xf32>
    %cst_96 = arith.constant dense<0.000000e+00> : vector<128x32xf32>
    %91 = tpu.matmul %88, %90, %cst_96 {dimension_numbers = #tpu.dot_dimension_numbers<[1], [0], [0], [1], [0, 0, 1, 1], [], []>} : vector<128x16xf32>, vector<16x32xf32>, vector<128x32xf32> -> vector<128x32xf32>
    %92 = arith.addf %86, %91 : vector<128x32xf32>
    %c0_97 = arith.constant 0 : index
    %c2_98 = arith.constant 2 : index
    %c0_99 = arith.constant 0 : index
    %93 = vector.load %arg8[%c0_97, %c2_98, %c0_99] : memref<10x18x16xf32, #tpu.memory_space<vmem>>, vector<8x16x16xf32>
    %94 = vector.shape_cast %93 : vector<8x16x16xf32> to vector<128x16xf32>
    %c2_100 = arith.constant 2 : index
    %c0_101 = arith.constant 0 : index
    %c0_102 = arith.constant 0 : index
    %95 = vector.load %arg4[%c2_100, %c0_101, %c0_102] : memref<9x16x32xf32, #tpu.memory_space<vmem>>, vector<1x16x32xf32>
    %96 = vector.shape_cast %95 : vector<1x16x32xf32> to vector<16x32xf32>
    %cst_103 = arith.constant dense<0.000000e+00> : vector<128x32xf32>
    %97 = tpu.matmul %94, %96, %cst_103 {dimension_numbers = #tpu.dot_dimension_numbers<[1], [0], [0], [1], [0, 0, 1, 1], [], []>} : vector<128x16xf32>, vector<16x32xf32>, vector<128x32xf32> -> vector<128x32xf32>
    %98 = arith.addf %92, %97 : vector<128x32xf32>
    %c1_104 = arith.constant 1 : index
    %c0_105 = arith.constant 0 : index
    %c0_106 = arith.constant 0 : index
    %99 = vector.load %arg8[%c1_104, %c0_105, %c0_106] : memref<10x18x16xf32, #tpu.memory_space<vmem>>, vector<8x16x16xf32>
    %100 = vector.shape_cast %99 : vector<8x16x16xf32> to vector<128x16xf32>
    %c3_107 = arith.constant 3 : index
    %c0_108 = arith.constant 0 : index
    %c0_109 = arith.constant 0 : index
    %101 = vector.load %arg4[%c3_107, %c0_108, %c0_109] : memref<9x16x32xf32, #tpu.memory_space<vmem>>, vector<1x16x32xf32>
    %102 = vector.shape_cast %101 : vector<1x16x32xf32> to vector<16x32xf32>
    %cst_110 = arith.constant dense<0.000000e+00> : vector<128x32xf32>
    %103 = tpu.matmul %100, %102, %cst_110 {dimension_numbers = #tpu.dot_dimension_numbers<[1], [0], [0], [1], [0, 0, 1, 1], [], []>} : vector<128x16xf32>, vector<16x32xf32>, vector<128x32xf32> -> vector<128x32xf32>
    %104 = arith.addf %98, %103 : vector<128x32xf32>
    %c1_111 = arith.constant 1 : index
    %c1_112 = arith.constant 1 : index
    %c0_113 = arith.constant 0 : index
    %105 = vector.load %arg8[%c1_111, %c1_112, %c0_113] : memref<10x18x16xf32, #tpu.memory_space<vmem>>, vector<8x16x16xf32>
    %106 = vector.shape_cast %105 : vector<8x16x16xf32> to vector<128x16xf32>
    %c4_114 = arith.constant 4 : index
    %c0_115 = arith.constant 0 : index
    %c0_116 = arith.constant 0 : index
    %107 = vector.load %arg4[%c4_114, %c0_115, %c0_116] : memref<9x16x32xf32, #tpu.memory_space<vmem>>, vector<1x16x32xf32>
    %108 = vector.shape_cast %107 : vector<1x16x32xf32> to vector<16x32xf32>
    %cst_117 = arith.constant dense<0.000000e+00> : vector<128x32xf32>
    %109 = tpu.matmul %106, %108, %cst_117 {dimension_numbers = #tpu.dot_dimension_numbers<[1], [0], [0], [1], [0, 0, 1, 1], [], []>} : vector<128x16xf32>, vector<16x32xf32>, vector<128x32xf32> -> vector<128x32xf32>
    %110 = arith.addf %104, %109 : vector<128x32xf32>
    %c1_118 = arith.constant 1 : index
    %c2_119 = arith.constant 2 : index
    %c0_120 = arith.constant 0 : index
    %111 = vector.load %arg8[%c1_118, %c2_119, %c0_120] : memref<10x18x16xf32, #tpu.memory_space<vmem>>, vector<8x16x16xf32>
    %112 = vector.shape_cast %111 : vector<8x16x16xf32> to vector<128x16xf32>
    %c5_121 = arith.constant 5 : index
    %c0_122 = arith.constant 0 : index
    %c0_123 = arith.constant 0 : index
    %113 = vector.load %arg4[%c5_121, %c0_122, %c0_123] : memref<9x16x32xf32, #tpu.memory_space<vmem>>, vector<1x16x32xf32>
    %114 = vector.shape_cast %113 : vector<1x16x32xf32> to vector<16x32xf32>
    %cst_124 = arith.constant dense<0.000000e+00> : vector<128x32xf32>
    %115 = tpu.matmul %112, %114, %cst_124 {dimension_numbers = #tpu.dot_dimension_numbers<[1], [0], [0], [1], [0, 0, 1, 1], [], []>} : vector<128x16xf32>, vector<16x32xf32>, vector<128x32xf32> -> vector<128x32xf32>
    %116 = arith.addf %110, %115 : vector<128x32xf32>
    %c2_125 = arith.constant 2 : index
    %c0_126 = arith.constant 0 : index
    %c0_127 = arith.constant 0 : index
    %117 = vector.load %arg8[%c2_125, %c0_126, %c0_127] : memref<10x18x16xf32, #tpu.memory_space<vmem>>, vector<8x16x16xf32>
    %118 = vector.shape_cast %117 : vector<8x16x16xf32> to vector<128x16xf32>
    %c6_128 = arith.constant 6 : index
    %c0_129 = arith.constant 0 : index
    %c0_130 = arith.constant 0 : index
    %119 = vector.load %arg4[%c6_128, %c0_129, %c0_130] : memref<9x16x32xf32, #tpu.memory_space<vmem>>, vector<1x16x32xf32>
    %120 = vector.shape_cast %119 : vector<1x16x32xf32> to vector<16x32xf32>
    %cst_131 = arith.constant dense<0.000000e+00> : vector<128x32xf32>
    %121 = tpu.matmul %118, %120, %cst_131 {dimension_numbers = #tpu.dot_dimension_numbers<[1], [0], [0], [1], [0, 0, 1, 1], [], []>} : vector<128x16xf32>, vector<16x32xf32>, vector<128x32xf32> -> vector<128x32xf32>
    %122 = arith.addf %116, %121 : vector<128x32xf32>
    %c2_132 = arith.constant 2 : index
    %c1_133 = arith.constant 1 : index
    %c0_134 = arith.constant 0 : index
    %123 = vector.load %arg8[%c2_132, %c1_133, %c0_134] : memref<10x18x16xf32, #tpu.memory_space<vmem>>, vector<8x16x16xf32>
    %124 = vector.shape_cast %123 : vector<8x16x16xf32> to vector<128x16xf32>
    %c7_135 = arith.constant 7 : index
    %c0_136 = arith.constant 0 : index
    %c0_137 = arith.constant 0 : index
    %125 = vector.load %arg4[%c7_135, %c0_136, %c0_137] : memref<9x16x32xf32, #tpu.memory_space<vmem>>, vector<1x16x32xf32>
    %126 = vector.shape_cast %125 : vector<1x16x32xf32> to vector<16x32xf32>
    %cst_138 = arith.constant dense<0.000000e+00> : vector<128x32xf32>
    %127 = tpu.matmul %124, %126, %cst_138 {dimension_numbers = #tpu.dot_dimension_numbers<[1], [0], [0], [1], [0, 0, 1, 1], [], []>} : vector<128x16xf32>, vector<16x32xf32>, vector<128x32xf32> -> vector<128x32xf32>
    %128 = arith.addf %122, %127 : vector<128x32xf32>
    %c2_139 = arith.constant 2 : index
    %c2_140 = arith.constant 2 : index
    %c0_141 = arith.constant 0 : index
    %129 = vector.load %arg8[%c2_139, %c2_140, %c0_141] : memref<10x18x16xf32, #tpu.memory_space<vmem>>, vector<8x16x16xf32>
    %130 = vector.shape_cast %129 : vector<8x16x16xf32> to vector<128x16xf32>
    %c8_142 = arith.constant 8 : index
    %c0_143 = arith.constant 0 : index
    %c0_144 = arith.constant 0 : index
    %131 = vector.load %arg4[%c8_142, %c0_143, %c0_144] : memref<9x16x32xf32, #tpu.memory_space<vmem>>, vector<1x16x32xf32>
    %132 = vector.shape_cast %131 : vector<1x16x32xf32> to vector<16x32xf32>
    %cst_145 = arith.constant dense<0.000000e+00> : vector<128x32xf32>
    %133 = tpu.matmul %130, %132, %cst_145 {dimension_numbers = #tpu.dot_dimension_numbers<[1], [0], [0], [1], [0, 0, 1, 1], [], []>} : vector<128x16xf32>, vector<16x32xf32>, vector<128x32xf32> -> vector<128x32xf32>
    %134 = arith.addf %128, %133 : vector<128x32xf32>
    %c0_146 = arith.constant 0 : index
    %c0_147 = arith.constant 0 : index
    %135 = vector.load %arg5[%c0_146, %c0_147] : memref<1x32xf32, #tpu.memory_space<vmem>>, vector<1x32xf32>
    %136 = vector.broadcast %135 : vector<1x32xf32> to vector<128x32xf32>
    %137 = arith.addf %134, %136 : vector<128x32xf32>
    %cst_148 = arith.constant 0.000000e+00 : f32
    %138 = vector.broadcast %cst_148 : f32 to vector<128x32xf32>
    %139 = arith.maximumf %137, %138 : vector<128x32xf32>
    %140 = vector.shape_cast %139 : vector<128x32xf32> to vector<4x32x32xf32>
    %141 = vector.extract_strided_slice %140 {offsets = [0, 0, 0], sizes = [4, 16, 32], strides = [1, 1, 1]} : vector<4x32x32xf32> to vector<4x16x32xf32>
    %142 = vector.extract_strided_slice %140 {offsets = [0, 16, 0], sizes = [4, 16, 32], strides = [1, 1, 1]} : vector<4x32x32xf32> to vector<4x16x32xf32>
    %143 = arith.maximumf %141, %142 : vector<4x16x32xf32>
    %c0_149 = arith.constant 0 : index
    %c0_150 = arith.constant 0 : index
    %c0_151 = arith.constant 0 : index
    %144 = vector.load %arg9[%c0_149, %c0_150, %c0_151] : memref<4x16x32xf32, #tpu.memory_space<vmem>>, vector<4x16x32xf32>
    tpu.vector_store %arg9[%c0_149, %c0_150, %c0_151], %143 {strides = array<i32>} : memref<4x16x32xf32, #tpu.memory_space<vmem>>, vector<4x16x32xf32>,
    %c0_152 = arith.constant 0 : index
    %c0_153 = arith.constant 0 : index
    %c0_154 = arith.constant 0 : index
    %145 = tpu.strided_load %arg9[%c0_152, %c0_153, %c0_154] {strides = array<i32: 1, 2, 1>} : memref<4x16x32xf32, #tpu.memory_space<vmem>>, vector<4x4x32xf32>
    %c0_155 = arith.constant 0 : index
    %c1_156 = arith.constant 1 : index
    %c0_157 = arith.constant 0 : index
    %146 = tpu.strided_load %arg9[%c0_155, %c1_156, %c0_157] {strides = array<i32: 1, 2, 1>} : memref<4x16x32xf32, #tpu.memory_space<vmem>>, vector<4x4x32xf32>
    %147 = arith.maximumf %145, %146 : vector<4x4x32xf32>
    %c0_158 = arith.constant 0 : index
    %c0_159 = arith.constant 0 : index
    %c0_160 = arith.constant 0 : index
    %c0_161 = arith.constant 0 : index
    %148 = vector.load %arg6[%c0_158, %c0_159, %c0_160, %c0_161] : memref<1x4x4x32xf32, #tpu.memory_space<vmem>>, vector<1x4x4x32xf32>
    %149 = vector.shape_cast %148 : vector<1x4x4x32xf32> to vector<4x4x32xf32>
    %150 = vector.shape_cast %147 : vector<4x4x32xf32> to vector<1x4x4x32xf32>
    tpu.vector_store %arg6[%c0_158, %c0_159, %c0_160, %c0_161], %150 {strides = array<i32>} : memref<1x4x4x32xf32, #tpu.memory_space<vmem>>, vector<1x4x4x32xf32>,
    return
  }
  func.func @transform_0(%arg0: i32) -> (i32, i32, i32, i32) {
    %c0_i32 = arith.constant 0 : i32
    %c0_i32_0 = arith.constant 0 : i32
    %c0_i32_1 = arith.constant 0 : i32
    %c0_i32_2 = arith.constant 0 : i32
    return %arg0, %c0_i32, %c0_i32_0, %c0_i32_1 : i32, i32, i32, i32
  }
  func.func @transform_1(%arg0: i32) -> (i32, i32, i32) {
    %c0_i32 = arith.constant 0 : i32
    %c0_i32_0 = arith.constant 0 : i32
    %c0_i32_1 = arith.constant 0 : i32
    %c0_i32_2 = arith.constant 0 : i32
    return %c0_i32, %c0_i32_0, %c0_i32_1 : i32, i32, i32
  }
  func.func @transform_2(%arg0: i32) -> (i32, i32) {
    %c0_i32 = arith.constant 0 : i32
    %c0_i32_0 = arith.constant 0 : i32
    %c0_i32_1 = arith.constant 0 : i32
    return %c0_i32, %c0_i32_0 : i32, i32
  }
  func.func @transform_3(%arg0: i32) -> (i32, i32, i32) {
    %c0_i32 = arith.constant 0 : i32
    %c0_i32_0 = arith.constant 0 : i32
    %c0_i32_1 = arith.constant 0 : i32
    %c0_i32_2 = arith.constant 0 : i32
    return %c0_i32, %c0_i32_0, %c0_i32_1 : i32, i32, i32
  }
  func.func @transform_4(%arg0: i32) -> (i32, i32) {
    %c0_i32 = arith.constant 0 : i32
    %c0_i32_0 = arith.constant 0 : i32
    %c0_i32_1 = arith.constant 0 : i32
    return %c0_i32, %c0_i32_0 : i32, i32
  }
  func.func @transform_5(%arg0: i32) -> (i32, i32, i32, i32) {
    %c0_i32 = arith.constant 0 : i32
    %c0_i32_0 = arith.constant 0 : i32
    %c0_i32_1 = arith.constant 0 : i32
    %c0_i32_2 = arith.constant 0 : i32
    return %arg0, %c0_i32, %c0_i32_0, %c0_i32_1 : i32, i32, i32, i32
  }
}

module attributes {stable_mosaic.version = 11 : i64} {
  func.func @kernel(%arg0: i32, %arg1: memref<2x256xf32, #tpu.memory_space<vmem>>, %arg2: memref<256x64xf32, #tpu.memory_space<vmem>>, %arg3: memref<1x64xf32, #tpu.memory_space<vmem>>, %arg4: memref<64x2xf32, #tpu.memory_space<vmem>>, %arg5: memref<1x2xf32, #tpu.memory_space<vmem>>, %arg6: memref<2x2xf32, #tpu.memory_space<vmem>>, %arg7: memref<2x64xf32, #tpu.memory_space<vmem>>) attributes {dimension_semantics = [#tpu.dimension_semantics<arbitrary>], iteration_bounds = array<i64: 2>, scalar_prefetch = 0 : i64, scratch_operands = 1 : i64, tpu.core_type = #tpu.core_type<tc>, window_params = [{transform_indices = @transform_0, window_bounds = array<i64: 2, 256>}, {transform_indices = @transform_1, window_bounds = array<i64: 256, 64>}, {pipeline_mode = #tpu.pipeline_mode<synchronous>, transform_indices = @transform_2, window_bounds = array<i64: 1, 64>}, {pipeline_mode = #tpu.pipeline_mode<synchronous>, transform_indices = @transform_3, window_bounds = array<i64: 64, 2>}, {pipeline_mode = #tpu.pipeline_mode<synchronous>, transform_indices = @transform_4, window_bounds = array<i64: 1, 2>}, {pipeline_mode = #tpu.pipeline_mode<synchronous>, transform_indices = @transform_5, window_bounds = array<i64: 2, 2>}]} {
    %c0_i32 = arith.constant 0 : i32
    %0 = arith.cmpi eq, %arg0, %c0_i32 : i32
    %1 = arith.extui %0 : i1 to i32
    %c0_i32_0 = arith.constant 0 : i32
    %2 = arith.cmpi ne, %1, %c0_i32_0 : i32
    scf.if %2 {
      %cst_9 = arith.constant 0.000000e+00 : f32
      %12 = vector.broadcast %cst_9 : f32 to vector<2x64xf32>
      %c0_10 = arith.constant 0 : index
      %c0_11 = arith.constant 0 : index
      %13 = vector.load %arg7[%c0_10, %c0_11] : memref<2x64xf32, #tpu.memory_space<vmem>>, vector<2x64xf32>
      tpu.vector_store %arg7[%c0_10, %c0_11], %12 {strides = array<i32>} : memref<2x64xf32, #tpu.memory_space<vmem>>, vector<2x64xf32>,
    } else {
    }
    %c0 = arith.constant 0 : index
    %c0_1 = arith.constant 0 : index
    %3 = vector.load %arg7[%c0, %c0_1] : memref<2x64xf32, #tpu.memory_space<vmem>>, vector<2x64xf32>
    %c0_2 = arith.constant 0 : index
    %c0_3 = arith.constant 0 : index
    %4 = vector.load %arg1[%c0_2, %c0_3] : memref<2x256xf32, #tpu.memory_space<vmem>>, vector<2x256xf32>
    %c0_4 = arith.constant 0 : index
    %c0_5 = arith.constant 0 : index
    %5 = vector.load %arg2[%c0_4, %c0_5] : memref<256x64xf32, #tpu.memory_space<vmem>>, vector<256x64xf32>
    %cst = arith.constant dense<0.000000e+00> : vector<2x64xf32>
    %6 = tpu.matmul %4, %5, %cst {dimension_numbers = #tpu.dot_dimension_numbers<[1], [0], [0], [1], [0, 0, 1, 1], [], []>} : vector<2x256xf32>, vector<256x64xf32>, vector<2x64xf32> -> vector<2x64xf32>
    %7 = arith.addf %3, %6 : vector<2x64xf32>
    %c0_6 = arith.constant 0 : index
    %c0_7 = arith.constant 0 : index
    %8 = vector.load %arg7[%c0_6, %c0_7] : memref<2x64xf32, #tpu.memory_space<vmem>>, vector<2x64xf32>
    tpu.vector_store %arg7[%c0_6, %c0_7], %7 {strides = array<i32>} : memref<2x64xf32, #tpu.memory_space<vmem>>, vector<2x64xf32>,
    %c1_i32 = arith.constant 1 : i32
    %9 = arith.cmpi eq, %arg0, %c1_i32 : i32
    %10 = arith.extui %9 : i1 to i32
    %c0_i32_8 = arith.constant 0 : i32
    %11 = arith.cmpi ne, %10, %c0_i32_8 : i32
    scf.if %11 {
      %c0_9 = arith.constant 0 : index
      %c0_10 = arith.constant 0 : index
      %12 = vector.load %arg7[%c0_9, %c0_10] : memref<2x64xf32, #tpu.memory_space<vmem>>, vector<2x64xf32>
      %c0_11 = arith.constant 0 : index
      %c0_12 = arith.constant 0 : index
      %13 = vector.load %arg3[%c0_11, %c0_12] : memref<1x64xf32, #tpu.memory_space<vmem>>, vector<1x64xf32>
      %14 = vector.broadcast %13 : vector<1x64xf32> to vector<2x64xf32>
      %15 = arith.addf %12, %14 : vector<2x64xf32>
      %cst_13 = arith.constant 0.000000e+00 : f32
      %16 = vector.broadcast %cst_13 : f32 to vector<2x64xf32>
      %17 = arith.maximumf %15, %16 : vector<2x64xf32>
      %c0_14 = arith.constant 0 : index
      %c0_15 = arith.constant 0 : index
      %18 = vector.load %arg4[%c0_14, %c0_15] : memref<64x2xf32, #tpu.memory_space<vmem>>, vector<64x2xf32>
      %cst_16 = arith.constant dense<0.000000e+00> : vector<2x2xf32>
      %19 = tpu.matmul %17, %18, %cst_16 {dimension_numbers = #tpu.dot_dimension_numbers<[1], [0], [0], [1], [0, 0, 1, 1], [], []>} : vector<2x64xf32>, vector<64x2xf32>, vector<2x2xf32> -> vector<2x2xf32>
      %c0_17 = arith.constant 0 : index
      %c0_18 = arith.constant 0 : index
      %20 = vector.load %arg5[%c0_17, %c0_18] : memref<1x2xf32, #tpu.memory_space<vmem>>, vector<1x2xf32>
      %21 = vector.broadcast %20 : vector<1x2xf32> to vector<2x2xf32>
      %22 = arith.addf %19, %21 : vector<2x2xf32>
      %c0_19 = arith.constant 0 : index
      %c0_20 = arith.constant 0 : index
      %23 = vector.load %arg6[%c0_19, %c0_20] : memref<2x2xf32, #tpu.memory_space<vmem>>, vector<2x2xf32>
      tpu.vector_store %arg6[%c0_19, %c0_20], %22 {strides = array<i32>} : memref<2x2xf32, #tpu.memory_space<vmem>>, vector<2x2xf32>,
    } else {
    }
    return
  }
  func.func @transform_0(%arg0: i32) -> (i32, i32) {
    %c0_i32 = arith.constant 0 : i32
    %c0_i32_0 = arith.constant 0 : i32
    return %c0_i32, %arg0 : i32, i32
  }
  func.func @transform_1(%arg0: i32) -> (i32, i32) {
    %c0_i32 = arith.constant 0 : i32
    %c0_i32_0 = arith.constant 0 : i32
    return %arg0, %c0_i32 : i32, i32
  }
  func.func @transform_2(%arg0: i32) -> (i32, i32) {
    %c0_i32 = arith.constant 0 : i32
    %c0_i32_0 = arith.constant 0 : i32
    %c0_i32_1 = arith.constant 0 : i32
    return %c0_i32, %c0_i32_0 : i32, i32
  }
  func.func @transform_3(%arg0: i32) -> (i32, i32) {
    %c0_i32 = arith.constant 0 : i32
    %c0_i32_0 = arith.constant 0 : i32
    %c0_i32_1 = arith.constant 0 : i32
    return %c0_i32, %c0_i32_0 : i32, i32
  }
  func.func @transform_4(%arg0: i32) -> (i32, i32) {
    %c0_i32 = arith.constant 0 : i32
    %c0_i32_0 = arith.constant 0 : i32
    %c0_i32_1 = arith.constant 0 : i32
    return %c0_i32, %c0_i32_0 : i32, i32
  }
  func.func @transform_5(%arg0: i32) -> (i32, i32) {
    %c0_i32 = arith.constant 0 : i32
    %c0_i32_0 = arith.constant 0 : i32
    %c0_i32_1 = arith.constant 0 : i32
    return %c0_i32, %c0_i32_0 : i32, i32
  }
}

</mosaic_0001>

<llo_original>
// kernel: simple_cnn_forward.3
$region0: #{simple_cnn_forward.3}
  #allocation0 [shape = 'u32[]', space=smem, size = 0x4, offset = 0x4, fixed_abs, tag = 'smem constant byte address 0x4 - core index']
  #allocation1 [shape = 'u32[144,128]{1,0:T(1,128)}', space=vmem, size = 0x12000, scoped, tag = 'internal scratch']
  #allocation2 [shape = 'f32[2,64]{1,0:T(2,128)}', space=vmem, size = 0x400, scoped, tag = 'scratch operand']
  %s0 = inlined_call_operand.vmem [shape: f32[2,512], index: 0, kind: input, shape index: {}]
  %s1 = inlined_call_operand.vmem [shape: f32[512,64], index: 1, kind: input, shape index: {}]
  %s2 = inlined_call_operand.vmem [shape: f32[1,64], index: 2, kind: input, shape index: {}]
  %s3 = inlined_call_operand.vmem [shape: f32[64,2], index: 3, kind: input, shape index: {}]
  %s4 = inlined_call_operand.vmem [shape: f32[1,2], index: 4, kind: input, shape index: {}]
  %s5 = inlined_call_operand.hbm [shape: f32[2,2], index: 5, kind: output, shape index: {}]
  %s6 = sld [smem:[#allocation0]]
  $region61: #{simple_cnn_forward.3} parent=0
    _
  %s8 = ssub.s32 1, %s6
  %s9 = scalar_select 0, %s8, %s6
  $region1: #{simple_cnn_forward.3} parent=0
    #allocation3 [shape = 'u8[1024]{0}', space=vmem, size = 0x400, scoped, tag = 'output window, operand 0, single buffered']
    #allocation4 [shape = 's32[2]{0}', space=sflag, size = 0x8, scoped, tag = 'scoped memory for simple_cnn_forward.3']
    %10 = vsyncpa [#allocation4], 0
    loop: start=0, step=1, limit=4
    $region2: #{simple_cnn_forward.3} parent=1 // loop_pre_header
      _
    $region3: #{simple_cnn_forward.3} parent=1 // loop_header
      %s12 = sphi 0, %s16
      %p13 = scmp.ge.s32.totalorder %s12, 4
      %s22 = sphi 0, %s24
      %s25 = sphi 0, %s22
      %s26 = sphi 0, %s25
      %s42 = sphi 0, %s26
      %s48 = sphi 0, %s50
      %s51 = sphi 0, %s48
      %s52 = sphi 0, %s51
      %s68 = sphi 0, %s52
      %s72 = sphi 0, %s72
      %s74 = sphi 0, %s72
      %s75 = sphi 0, %s74
      %s89 = sphi 0, %s75
      %s93 = sphi 0, %s93
      %s95 = sphi 0, %s93
      %s96 = sphi 0, %s95
      %s110 = sphi 0, %s96
      %s114 = sphi 0, %s114
      %s116 = sphi 0, %s114
      %s117 = sphi 0, %s116
      %s131 = sphi 0, %s117
      %s135 = sphi 0, %s135
      %s137 = sphi 0, %s135
      %s138 = sphi 0, %s137
      %s152 = sphi 0, %s138
    $region4: #{simple_cnn_forward.3} parent=1 // loop_header_branch
      %15 = sbr.rel (%p13) target = $region8
    $region5: #{simple_cnn_forward.3} parent=1 // loop_body
      %s17 = ssub.s32 %s12, 1
      %s18 = ssub.s32 %s12, 2
      %s19 = sadd.s32 %s12, 1
      %s20 = ssub.s32 %s12, %s19
      %p21 = scmp.eq.s32.totalorder %s20, 0
      %s23 = sadd.s32 %s22, 1
      %s24 = scalar_select %p21, %s22, %s23
      %p27 = pneg %p21
      %p28 = scmp.eq.s32.totalorder %s12, 1
      %p29 = por %p27, %p28
      %p30 = scmp.ne.s32.totalorder %s22, %s25
      %p31 = scmp.eq.s32.totalorder %s12, 0
      %p32 = por %p30, %p31
      %p33 = scmp.ne.s32.totalorder %s22, %s25
      %p34 = scmp.eq.s32.totalorder %s17, 1
      %p35 = por %p33, %p34
      %p36 = scmp.ne.s32.totalorder %s25, %s26
      %p37 = scmp.eq.s32.totalorder %s17, 0
      %p38 = por %p36, %p37
      %p39 = scmp.ne.s32.totalorder %s25, %s26
      %p40 = scmp.eq.s32.totalorder %s18, 1
      %p41 = por %p39, %p40
      %p43 = scmp.ne.s32.totalorder %s26, %s42
      %p44 = scmp.eq.s32.totalorder %s18, 0
      %p45 = por %p43, %p44
      %s46 = ssub.s32 %s12, %s19
      %p47 = scmp.eq.s32.totalorder %s46, 0
      %s49 = sadd.s32 %s48, 1
      %s50 = scalar_select %p47, %s48, %s49
      %p53 = pneg %p47
      %p54 = scmp.eq.s32.totalorder %s12, 1
      %p55 = por %p53, %p54
      %p56 = scmp.ne.s32.totalorder %s48, %s51
      %p57 = scmp.eq.s32.totalorder %s12, 0
      %p58 = por %p56, %p57
      %p59 = scmp.ne.s32.totalorder %s48, %s51
      %p60 = scmp.eq.s32.totalorder %s17, 1
      %p61 = por %p59, %p60
      %p62 = scmp.ne.s32.totalorder %s51, %s52
      %p63 = scmp.eq.s32.totalorder %s17, 0
      %p64 = por %p62, %p63
      %p65 = scmp.ne.s32.totalorder %s51, %s52
      %p66 = scmp.eq.s32.totalorder %s18, 1
      %p67 = por %p65, %p66
      %p69 = scmp.ne.s32.totalorder %s52, %s68
      %p70 = scmp.eq.s32.totalorder %s18, 0
      %p71 = por %p69, %p70
      %s73 = sadd.s32 %s72, 1
      %p76 = scmp.eq.s32.totalorder %s12, 1
      %p77 = scmp.ne.s32.totalorder %s72, %s74
      %p78 = scmp.eq.s32.totalorder %s12, 0
      %p79 = por %p77, %p78
      %p80 = scmp.ne.s32.totalorder %s72, %s74
      %p81 = scmp.eq.s32.totalorder %s17, 1
      %p82 = por %p80, %p81
      %p83 = scmp.ne.s32.totalorder %s74, %s75
      %p84 = scmp.eq.s32.totalorder %s17, 0
      %p85 = por %p83, %p84
      %p86 = scmp.ne.s32.totalorder %s74, %s75
      %p87 = scmp.eq.s32.totalorder %s18, 1
      %p88 = por %p86, %p87
      %p90 = scmp.ne.s32.totalorder %s75, %s89
      %p91 = scmp.eq.s32.totalorder %s18, 0
      %p92 = por %p90, %p91
      %s94 = sadd.s32 %s93, 1
      %p97 = scmp.eq.s32.totalorder %s12, 1
      %p98 = scmp.ne.s32.totalorder %s93, %s95
      %p99 = scmp.eq.s32.totalorder %s12, 0
      %p100 = por %p98, %p99
      %p101 = scmp.ne.s32.totalorder %s93, %s95
      %p102 = scmp.eq.s32.totalorder %s17, 1
      %p103 = por %p101, %p102
      %p104 = scmp.ne.s32.totalorder %s95, %s96
      %p105 = scmp.eq.s32.totalorder %s17, 0
      %p106 = por %p104, %p105
      %p107 = scmp.ne.s32.totalorder %s95, %s96
      %p108 = scmp.eq.s32.totalorder %s18, 1
      %p109 = por %p107, %p108
      %p111 = scmp.ne.s32.totalorder %s96, %s110
      %p112 = scmp.eq.s32.totalorder %s18, 0
      %p113 = por %p111, %p112
      %s115 = sadd.s32 %s114, 1
      %p118 = scmp.eq.s32.totalorder %s12, 1
      %p119 = scmp.ne.s32.totalorder %s114, %s116
      %p120 = scmp.eq.s32.totalorder %s12, 0
      %p121 = por %p119, %p120
      %p122 = scmp.ne.s32.totalorder %s114, %s116
      %p123 = scmp.eq.s32.totalorder %s17, 1
      %p124 = por %p122, %p123
      %p125 = scmp.ne.s32.totalorder %s116, %s117
      %p126 = scmp.eq.s32.totalorder %s17, 0
      %p127 = por %p125, %p126
      %p128 = scmp.ne.s32.totalorder %s116, %s117
      %p129 = scmp.eq.s32.totalorder %s18, 1
      %p130 = por %p128, %p129
      %p132 = scmp.ne.s32.totalorder %s117, %s131
      %p133 = scmp.eq.s32.totalorder %s18, 0
      %p134 = por %p132, %p133
      %s136 = sadd.s32 %s135, 1
      %p139 = scmp.eq.s32.totalorder %s12, 1
      %p140 = scmp.ne.s32.totalorder %s135, %s137
      %p141 = scmp.eq.s32.totalorder %s12, 0
      %p142 = por %p140, %p141
      %p143 = scmp.ne.s32.totalorder %s135, %s137
      %p144 = scmp.eq.s32.totalorder %s17, 1
      %p145 = por %p143, %p144
      %p146 = scmp.ne.s32.totalorder %s137, %s138
      %p147 = scmp.eq.s32.totalorder %s17, 0
      %p148 = por %p146, %p147
      %p149 = scmp.ne.s32.totalorder %s137, %s138
      %p150 = scmp.eq.s32.totalorder %s18, 1
      %p151 = por %p149, %p150
      %p153 = scmp.ne.s32.totalorder %s138, %s152
      %p154 = scmp.eq.s32.totalorder %s18, 0
      %p155 = por %p153, %p154
      %p156 = scmp.le.s32.totalorder 1, %s12
      %p157 = scmp.lt.s32.totalorder %s12, 3
      %p158 = pnand %p156, %p157
      %p159 = pneg %p158
      // Predicated region
      $region9: #{simple_cnn_forward.3} parent=5 // pred_check
        _
      $region10: #{simple_cnn_forward.3} parent=5 // pred_check_branch
        %161 = sbr.rel (%p158) target = $region12
      $region11: #{simple_cnn_forward.3} parent=5 // pred_region
        %s162 = ssub.s32 %s12, 1
        // Predicated region
        $region13: #{simple_cnn_forward.3} parent=11 // pred_check
          %p163 = pneg %p85
        $region14: #{simple_cnn_forward.3} parent=11 // pred_check_branch
          %165 = sbr.rel (%p163) target = $region16
        $region15: #{simple_cnn_forward.3} parent=11 // pred_region
          _
        $region16: #{simple_cnn_forward.3} parent=11 // pred_fallthru
          _
        // Predicated region
        $region17: #{simple_cnn_forward.3} parent=11 // pred_check
          %p166 = pneg %p106
        $region18: #{simple_cnn_forward.3} parent=11 // pred_check_branch
          %168 = sbr.rel (%p166) target = $region20
        $region19: #{simple_cnn_forward.3} parent=11 // pred_region
          _
        $region20: #{simple_cnn_forward.3} parent=11 // pred_fallthru
          _
        // Predicated region
        $region21: #{simple_cnn_forward.3} parent=11 // pred_check
          %p169 = pneg %p127
        $region22: #{simple_cnn_forward.3} parent=11 // pred_check_branch
          %171 = sbr.rel (%p169) target = $region24
        $region23: #{simple_cnn_forward.3} parent=11 // pred_region
          _
        $region24: #{simple_cnn_forward.3} parent=11 // pred_fallthru
          _
      $region12: #{simple_cnn_forward.3} parent=5 // pred_fallthru
        _
      %p172 = scmp.lt.s32.totalorder %s12, 2
      // Predicated region
      $region25: #{simple_cnn_forward.3} parent=5 // pred_check
        %p173 = pneg %p172
      $region26: #{simple_cnn_forward.3} parent=5 // pred_check_branch
        %175 = sbr.rel (%p173) target = $region28
      $region27: #{simple_cnn_forward.3} parent=5 // pred_region
        // Predicated region
        $region29: #{simple_cnn_forward.3} parent=27 // pred_check
          %p176 = pneg %p32
        $region30: #{simple_cnn_forward.3} parent=27 // pred_check_branch
          %178 = sbr.rel (%p176) target = $region32
        $region31: #{simple_cnn_forward.3} parent=27 // pred_region
          %s179 = smul.u32 2, %s12
          %p180 = scmp.lt.s32.totalorder %s179, 3
          %s181 = scalar_select %p180, %s179, 3
          %s182 = smul.addr %s181, 2
          %s183 = scalar_lea.vmem %s0, %s182
          %s184 = smul.u32 2, %s12
        $region32: #{simple_cnn_forward.3} parent=27 // pred_fallthru
          _
        // Predicated region
        $region33: #{simple_cnn_forward.3} parent=27 // pred_check
          %p185 = pneg %p58
        $region34: #{simple_cnn_forward.3} parent=27 // pred_check_branch
          %187 = sbr.rel (%p185) target = $region36
        $region35: #{simple_cnn_forward.3} parent=27 // pred_region
          %s188 = smul.u32 32, %s12
          %p189 = scmp.lt.s32.totalorder %s188, 63
          %s190 = scalar_select %p189, %s188, 63
          %s191 = smul.addr %s190, 8
          %s192 = scalar_lea.vmem %s1, %s191
          %s193 = smul.u32 32, %s12
        $region36: #{simple_cnn_forward.3} parent=27 // pred_fallthru
          _
      $region28: #{simple_cnn_forward.3} parent=5 // pred_fallthru
        _
      %p194 = scmp.le.s32.totalorder 1, %s12
      %p195 = scmp.lt.s32.totalorder %s12, 3
      %p196 = pnand %p194, %p195
      %p197 = pneg %p196
      // Predicated region
      $region37: #{simple_cnn_forward.3} parent=5 // pred_check
        _
      $region38: #{simple_cnn_forward.3} parent=5 // pred_check_branch
        %199 = sbr.rel (%p196) target = $region40
      $region39: #{simple_cnn_forward.3} parent=5 // pred_region
        %s200 = ssub.s32 %s12, 1
        %s201 = smul.u32 2, %s17
        %p202 = scmp.lt.s32.totalorder %s201, 3
        %s203 = scalar_select %p202, %s201, 3
        %s204 = smul.addr %s203, 2
        %s205 = scalar_lea.vmem %s0, %s204
        %p206 = pneg %p38
        %p207 = pneg %p35
        %s208 = smul.u32 32, %s17
        %p209 = scmp.lt.s32.totalorder %s208, 63
        %s210 = scalar_select %p209, %s208, 63
        %s211 = smul.addr %s210, 8
        %s212 = scalar_lea.vmem %s1, %s211
        %p213 = pneg %p64
        %p214 = pneg %p61
        %p215 = pneg %p85
        %p216 = pneg %p82
        %p217 = pneg %p106
        %p218 = pneg %p103
        %p219 = pneg %p127
        %p220 = pneg %p124
        %p221 = pneg %p148
        %p222 = pneg %p145
        %s223 = smul.u32 2, %s17
        %p224 = scmp.lt.s32.totalorder %s223, 3
        %s225 = scalar_select %p224, %s223, 3
        %s226 = smul.addr %s225, 2
        %s227 = scalar_lea.vmem %s0, %s226
        %s228 = smul.u32 2, %s17
        %s229 = smul.u32 32, %s17
        %p230 = scmp.lt.s32.totalorder %s229, 63
        %s231 = scalar_select %p230, %s229, 63
        %s232 = smul.addr %s231, 8
        %s233 = scalar_lea.vmem %s1, %s232
        %s234 = smul.u32 32, %s17
        %p235 = scmp.eq.s32.totalorder %s17, 0
        // Predicated region
        $region41: #{simple_cnn_forward.3} parent=39 // pred_check
          %p236 = pneg %p235
        $region42: #{simple_cnn_forward.3} parent=39 // pred_check_branch
          %238 = sbr.rel (%p236) target = $region44
        $region43: #{simple_cnn_forward.3} parent=39 // pred_region
          %vm239 = vcmask 517120
          %240 = vst.msk [vmem:[#allocation2] sm:$0x3] %vm239, 0.0
        $region44: #{simple_cnn_forward.3} parent=39 // pred_fallthru
          _
        %v241 = vld [vmem:[#allocation2] sm:$0x3]
        %v242 = vld [vmem:[%s227] sm:$0xf]
        %v243 = vld [vmem:[%s233] sm:$0xff]
        %v244 = vld [vmem:[%s233 + $0x8] sm:$0xff]
        %v245 = vld [vmem:[%s233 + $0x10] sm:$0xff]
        %v246 = vld [vmem:[%s233 + $0x18] sm:$0xff]
        %v247 = vld [vmem:[%s233 + $0x20] sm:$0xff]
        %v248 = vld [vmem:[%s233 + $0x28] sm:$0xff]
        %v249 = vld [vmem:[%s233 + $0x30] sm:$0xff]
        %v250 = vld [vmem:[%s233 + $0x38] sm:$0xff]
        %v251 = vld [vmem:[%s233 + $0x40] sm:$0xff]
        %v252 = vld [vmem:[%s233 + $0x48] sm:$0xff]
        %v253 = vld [vmem:[%s233 + $0x50] sm:$0xff]
        %v254 = vld [vmem:[%s233 + $0x58] sm:$0xff]
        %v255 = vld [vmem:[%s233 + $0x60] sm:$0xff]
        %v256 = vld [vmem:[%s233 + $0x68] sm:$0xff]
        %v257 = vld [vmem:[%s233 + $0x70] sm:$0xff]
        %v258 = vld [vmem:[%s233 + $0x78] sm:$0xff]
        %v259 = vld [vmem:[%s233 + $0x80] sm:$0xff]
        %v260 = vld [vmem:[%s233 + $0x88] sm:$0xff]
        %v261 = vld [vmem:[%s233 + $0x90] sm:$0xff]
        %v262 = vld [vmem:[%s233 + $0x98] sm:$0xff]
        %v263 = vld [vmem:[%s233 + $0xa0] sm:$0xff]
        %v264 = vld [vmem:[%s233 + $0xa8] sm:$0xff]
        %v265 = vld [vmem:[%s233 + $0xb0] sm:$0xff]
        %v266 = vld [vmem:[%s233 + $0xb8] sm:$0xff]
        %v267 = vld [vmem:[%s233 + $0xc0] sm:$0xff]
        %v268 = vld [vmem:[%s233 + $0xc8] sm:$0xff]
        %v269 = vld [vmem:[%s233 + $0xd0] sm:$0xff]
        %v270 = vld [vmem:[%s233 + $0xd8] sm:$0xff]
        %v271 = vld [vmem:[%s233 + $0xe0] sm:$0xff]
        %v272 = vld [vmem:[%s233 + $0xe8] sm:$0xff]
        %v273 = vld [vmem:[%s233 + $0xf0] sm:$0xff]
        %v274 = vld [vmem:[%s233 + $0xf8] sm:$0xff]
        %v277 = vunpack.c.l.s4 1983009808
        %v278 = vunpack.c.0.s8 %v277
        %v279 = vlaneseq
        %v280 = vshrl.u32 %v279, 7
        %v281 = vsub.s32 %v278, %v280
        %v282 = vrot.slane %v242, %v281
        %v283 = vcombine.high %v282, %v282
        %286 = vmatprep.subr.mxu0 0.0
        %287 = vmatpush1.msra.mxu0 %v258
        %288 = vmatprep.subr.mxu0 0.0
        %289 = vmatpush1.msra.mxu0 %v257
        %290 = vmatprep.subr.mxu0 0.0
        %291 = vmatpush1.msra.mxu0 %v256
        %292 = vmatprep.subr.mxu0 0.0
        %293 = vmatpush1.msra.mxu0 %v255
        %294 = vmatprep.subr.mxu0 0.0
        %295 = vmatpush1.msra.mxu0 %v254
        %296 = vmatprep.subr.mxu0 0.0
        %297 = vmatpush1.msra.mxu0 %v253
        %298 = vmatprep.subr.mxu0 0.0
        %299 = vmatpush1.msra.mxu0 %v252
        %300 = vmatprep.subr.mxu0 0.0
        %301 = vmatpush1.msra.mxu0 %v251
        %302 = vmatprep.subr.mxu0 0.0
        %303 = vmatpush1.msra.mxu0 %v250
        %304 = vmatprep.subr.mxu0 0.0
        %305 = vmatpush1.msra.mxu0 %v249
        %306 = vmatprep.subr.mxu0 0.0
        %307 = vmatpush1.msra.mxu0 %v248
        %308 = vmatprep.subr.mxu0 0.0
        %309 = vmatpush1.msra.mxu0 %v247
        %310 = vmatprep.subr.mxu0 0.0
        %311 = vmatpush1.msra.mxu0 %v246
        %312 = vmatprep.subr.mxu0 0.0
        %313 = vmatpush1.msra.mxu0 %v245
        %314 = vmatprep.subr.mxu0 0.0
        %315 = vmatpush1.msra.mxu0 %v244
        %316 = vmatprep.subr.mxu0 0.0
        %317 = vmatpush1.msra.mxu0 %v243
        %318 = vmatprep.subr.mxu0 0.0
        %319 = vmatpush2.msra.mxu0 %v274
        %320 = vmatprep.subr.mxu0 0.0
        %321 = vmatpush2.msra.mxu0 %v273
        %322 = vmatprep.subr.mxu0 0.0
        %323 = vmatpush2.msra.mxu0 %v272
        %324 = vmatprep.subr.mxu0 0.0
        %325 = vmatpush2.msra.mxu0 %v271
        %326 = vmatprep.subr.mxu0 0.0
        %327 = vmatpush2.msra.mxu0 %v270
        %328 = vmatprep.subr.mxu0 0.0
        %329 = vmatpush2.msra.mxu0 %v269
        %330 = vmatprep.subr.mxu0 0.0
        %331 = vmatpush2.msra.mxu0 %v268
        %332 = vmatprep.subr.mxu0 0.0
        %333 = vmatpush2.msra.mxu0 %v267
        %334 = vmatprep.subr.mxu0 0.0
        %335 = vmatpush2.msra.mxu0 %v266
        %336 = vmatprep.subr.mxu0 0.0
        %337 = vmatpush2.msra.mxu0 %v265
        %338 = vmatprep.subr.mxu0 0.0
        %339 = vmatpush2.msra.mxu0 %v264
        %340 = vmatprep.subr.mxu0 0.0
        %341 = vmatpush2.msra.mxu0 %v263
        %342 = vmatprep.subr.mxu0 0.0
        %343 = vmatpush2.msra.mxu0 %v262
        %344 = vmatprep.subr.mxu0 0.0
        %345 = vmatpush2.msra.mxu0 %v261
        %346 = vmatprep.subr.mxu0 0.0
        %347 = vmatpush2.msra.mxu0 %v260
        %348 = vmatprep.subr.mxu0 0.0
        %349 = vmatpush2.msra.mxu0 %v259
        %350 = vmatprep.mubr.f32.mxu0 %v283
        %351 = vmatmul.mubr.f32.gmra.mxu0 %v282
        %v352 = vpop.f32.mrf.mxu0
        %v353 = vadd.f32 0.0, %v352
        %v354 = vpop.f32.mrf.mxu0
        %355 = vdwg.mxu0
        %v356 = vadd.f32 %v241, %v353
        %vm357 = vcmask 517120
        %358 = vst.msk [vmem:[#allocation2] sm:$0x3] %vm357, %v356
        %p359 = scmp.eq.s32.totalorder %s17, 1
        // Predicated region
        $region45: #{simple_cnn_forward.3} parent=39 // pred_check
          %p360 = pneg %p359
        $region46: #{simple_cnn_forward.3} parent=39 // pred_check_branch
          %362 = sbr.rel (%p360) target = $region48
        $region47: #{simple_cnn_forward.3} parent=39 // pred_region
          %v363 = vld [vmem:[#allocation2] sm:$0x3]
          %v364 = vld [vmem:[%s2] sm:$0x1]
          %v366 = vlaneseq
          %v367 = vshrl.u32 %v366, 7
          %v368 = vsub.s32 0, %v367
          %v369 = vrot.slane %v364, %v368
          %v371 = vadd.f32 %v363, %v369
          %v372 = vmax.f32 %v371, 0.0
          %v373 = vld [vmem:[%s3] sm:$0xff]
          %v374 = vld [vmem:[%s3 + $0x8] sm:$0xff]
          %v375 = vld [vmem:[%s3 + $0x10] sm:$0xff]
          %v376 = vld [vmem:[%s3 + $0x18] sm:$0xff]
          %v377 = vld [vmem:[%s3 + $0x20] sm:$0xff]
          %v378 = vld [vmem:[%s3 + $0x28] sm:$0xff]
          %v379 = vld [vmem:[%s3 + $0x30] sm:$0xff]
          %v380 = vld [vmem:[%s3 + $0x38] sm:$0xff]
          %v381 = vld [vmem:[%s4] sm:$0x1]
          %v383 = vlaneseq
          %v384 = vshrl.u32 %v383, 7
          %v385 = vsub.s32 0, %v384
          %v386 = vrot.slane %v381, %v385
          %vm388 = vcmask 523264
          %v390 = vsel %vm388, %v372, 0
          %392 = vmatprep.subr.mxu0 0.0
          %393 = vmatpush1.msra.mxu0 0.0
          %394 = vmatprep.subr.mxu0 0.0
          %395 = vmatpush1.msra.mxu0 0.0
          %396 = vmatprep.subr.mxu0 0.0
          %397 = vmatpush1.msra.mxu0 0.0
          %398 = vmatprep.subr.mxu0 0.0
          %399 = vmatpush1.msra.mxu0 0.0
          %400 = vmatprep.subr.mxu0 0.0
          %401 = vmatpush1.msra.mxu0 0.0
          %402 = vmatprep.subr.mxu0 0.0
          %403 = vmatpush1.msra.mxu0 0.0
          %404 = vmatprep.subr.mxu0 0.0
          %405 = vmatpush1.msra.mxu0 0.0
          %406 = vmatprep.subr.mxu0 0.0
          %407 = vmatpush1.msra.mxu0 0.0
          %408 = vmatprep.subr.mxu0 0.0
          %409 = vmatpush1.msra.mxu0 %v380
          %410 = vmatprep.subr.mxu0 0.0
          %411 = vmatpush1.msra.mxu0 %v379
          %412 = vmatprep.subr.mxu0 0.0
          %413 = vmatpush1.msra.mxu0 %v378
          %414 = vmatprep.subr.mxu0 0.0
          %415 = vmatpush1.msra.mxu0 %v377
          %416 = vmatprep.subr.mxu0 0.0
          %417 = vmatpush1.msra.mxu0 %v376
          %418 = vmatprep.subr.mxu0 0.0
          %419 = vmatpush1.msra.mxu0 %v375
          %420 = vmatprep.subr.mxu0 0.0
          %421 = vmatpush1.msra.mxu0 %v374
          %422 = vmatprep.subr.mxu0 0.0
          %423 = vmatpush1.msra.mxu0 %v373
          %424 = vmatprep.subr.mxu0 0.0
          %425 = vmatpush2.msra.mxu0 0.0
          %426 = vmatprep.subr.mxu0 0.0
          %427 = vmatpush2.msra.mxu0 0.0
          %428 = vmatprep.subr.mxu0 0.0
          %429 = vmatpush2.msra.mxu0 0.0
          %430 = vmatprep.subr.mxu0 0.0
          %431 = vmatpush2.msra.mxu0 0.0
          %432 = vmatprep.subr.mxu0 0.0
          %433 = vmatpush2.msra.mxu0 0.0
          %434 = vmatprep.subr.mxu0 0.0
          %435 = vmatpush2.msra.mxu0 0.0
          %436 = vmatprep.subr.mxu0 0.0
          %437 = vmatpush2.msra.mxu0 0.0
          %438 = vmatprep.subr.mxu0 0.0
          %439 = vmatpush2.msra.mxu0 0.0
          %440 = vmatprep.subr.mxu0 0.0
          %441 = vmatpush2.msra.mxu0 0.0
          %442 = vmatprep.subr.mxu0 0.0
          %443 = vmatpush2.msra.mxu0 0.0
          %444 = vmatprep.subr.mxu0 0.0
          %445 = vmatpush2.msra.mxu0 0.0
          %446 = vmatprep.subr.mxu0 0.0
          %447 = vmatpush2.msra.mxu0 0.0
          %448 = vmatprep.subr.mxu0 0.0
          %449 = vmatpush2.msra.mxu0 0.0
          %450 = vmatprep.subr.mxu0 0.0
          %451 = vmatpush2.msra.mxu0 0.0
          %452 = vmatprep.subr.mxu0 0.0
          %453 = vmatpush2.msra.mxu0 0.0
          %454 = vmatprep.subr.mxu0 0.0
          %455 = vmatpush2.msra.mxu0 0.0
          %456 = vmatprep.mubr.f32.mxu0 0.0
          %457 = vmatmul.mubr.f32.gmra.mxu0 %v390
          %v458 = vpop.f32.mrf.mxu0
          %v459 = vadd.f32 %v386, %v458
          %v460 = vpop.f32.mrf.mxu0
          %461 = vdwg.mxu0
          %vm462 = vcmask 9216
          %463 = vst.msk [vmem:[#allocation3] sm:$0x3] %vm462, %v459
        $region48: #{simple_cnn_forward.3} parent=39 // pred_fallthru
          _
        // Predicated region
        $region49: #{simple_cnn_forward.3} parent=39 // pred_check
          %p464 = pneg %p145
        $region50: #{simple_cnn_forward.3} parent=39 // pred_check_branch
          %466 = sbr.rel (%p464) target = $region52
        $region51: #{simple_cnn_forward.3} parent=39 // pred_region
          %s468 = ssub.s32 32, 32
          %469 = vsyncadd [#allocation4], %s468
          %s471 = sshll.u32 [#allocation3], 4
          %s472 = int_to_ptr.vmem [resolvable:$true] %s471
          %474 = dma.vmem_to_hbm [thread:$0]  %s472, 32, %s5, [#allocation4]
        $region52: #{simple_cnn_forward.3} parent=39 // pred_fallthru
          _
        // Predicated region
        $region53: #{simple_cnn_forward.3} parent=39 // pred_check
          %p475 = pneg %p145
        $region54: #{simple_cnn_forward.3} parent=39 // pred_check_branch
          %477 = sbr.rel (%p475) target = $region56
        $region55: #{simple_cnn_forward.3} parent=39 // pred_region
          %478 = dma.done [#allocation4], 32
        $region56: #{simple_cnn_forward.3} parent=39 // pred_fallthru
          _
      $region40: #{simple_cnn_forward.3} parent=5 // pred_fallthru
        _
      %p479 = scmp.le.s32.totalorder 2, %s12
      // Predicated region
      $region57: #{simple_cnn_forward.3} parent=5 // pred_check
        %p480 = pneg %p479
      $region58: #{simple_cnn_forward.3} parent=5 // pred_check_branch
        %482 = sbr.rel (%p480) target = $region60
      $region59: #{simple_cnn_forward.3} parent=5 // pred_region
        %s483 = ssub.s32 %s12, 2
      $region60: #{simple_cnn_forward.3} parent=5 // pred_fallthru
        _
    $region6: #{simple_cnn_forward.3} parent=1 // loop_footer
      %s16 = sadd.s32 1, %s12
    $region7: #{simple_cnn_forward.3} parent=1 // loop_footer_branch
      %11 = sbr.rel target = $region3
    $region8: #{simple_cnn_forward.3} parent=1 // loop_exit
      _
    %484 = vsyncpa [#allocation4], 1
    %s485 = scalar_lea.sflag [#allocation4], 1
    %486 = vsyncpa %s485, 1

// kernel: simple_cnn_forward.2
$region0: #{simple_cnn_forward.2}
  #allocation0 [shape = 'u32[]', space=smem, size = 0x4, offset = 0x4, fixed_abs, tag = 'smem constant byte address 0x4 - core index']
  #allocation1 [shape = 'u32[144,128]{1,0:T(1,128)}', space=vmem, size = 0x12000, scoped, tag = 'internal scratch']
  #allocation2 [shape = 'f32[8,24,16]{2,1,0:T(8,128)}', space=vmem, size = 0x18000, scoped, tag = 'scratch operand']
  #allocation3 [shape = 'f32[10,18,16]{2,1,0:T(8,128)}', space=vmem, size = 0x1e000, scoped, tag = 'scratch operand']
  #allocation4 [shape = 'f32[4,16,32]{2,1,0:T(8,128)}', space=vmem, size = 0x8000, scoped, tag = 'scratch operand']
  %s0 = inlined_call_operand.vmem [shape: f32[2,18,26,8], index: 0, kind: input, shape index: {}]
  %s1 = inlined_call_operand.vmem [shape: f32[9,8,16], index: 1, kind: input, shape index: {}]
  %s2 = inlined_call_operand.vmem [shape: f32[1,16], index: 2, kind: input, shape index: {}]
  %s3 = inlined_call_operand.vmem [shape: f32[9,16,32], index: 3, kind: input, shape index: {}]
  %s4 = inlined_call_operand.vmem [shape: f32[1,32], index: 4, kind: input, shape index: {}]
  %s5 = inlined_call_operand.vmem [shape: f32[2,4,4,32], index: 5, kind: output, shape index: {}]
  %s6 = sld [smem:[#allocation0]]
  $region53: #{simple_cnn_forward.2} parent=0
    _
  %s8 = ssub.s32 1, %s6
  %s9 = scalar_select 0, %s8, %s6
  loop: start=0, step=1, limit=4
  $region2: #{simple_cnn_forward.2} parent=0 // loop_pre_header
    _
  $region3: #{simple_cnn_forward.2} parent=0 // loop_header
    %s11 = sphi 0, %s15
    %p12 = scmp.ge.s32.totalorder %s11, 4
    %s21 = sphi 0, %s23
    %s24 = sphi 0, %s21
    %s25 = sphi 0, %s24
    %s41 = sphi 0, %s25
    %s45 = sphi 0, %s45
    %s47 = sphi 0, %s45
    %s48 = sphi 0, %s47
    %s62 = sphi 0, %s48
    %s66 = sphi 0, %s66
    %s68 = sphi 0, %s66
    %s69 = sphi 0, %s68
    %s83 = sphi 0, %s69
    %s87 = sphi 0, %s87
    %s89 = sphi 0, %s87
    %s90 = sphi 0, %s89
    %s104 = sphi 0, %s90
    %s108 = sphi 0, %s108
    %s110 = sphi 0, %s108
    %s111 = sphi 0, %s110
    %s125 = sphi 0, %s111
    %s131 = sphi 0, %s133
    %s134 = sphi 0, %s131
    %s135 = sphi 0, %s134
    %s151 = sphi 0, %s135
  $region4: #{simple_cnn_forward.2} parent=0 // loop_header_branch
    %14 = sbr.rel (%p12) target = $region8
  $region5: #{simple_cnn_forward.2} parent=0 // loop_body
    %s16 = ssub.s32 %s11, 1
    %s17 = ssub.s32 %s11, 2
    %s18 = sadd.s32 %s11, 1
    %s19 = ssub.s32 %s11, %s18
    %p20 = scmp.eq.s32.totalorder %s19, 0
    %s22 = sadd.s32 %s21, 1
    %s23 = scalar_select %p20, %s21, %s22
    %p26 = pneg %p20
    %p27 = scmp.eq.s32.totalorder %s11, 1
    %p28 = por %p26, %p27
    %p29 = scmp.ne.s32.totalorder %s21, %s24
    %p30 = scmp.eq.s32.totalorder %s11, 0
    %p31 = por %p29, %p30
    %p32 = scmp.ne.s32.totalorder %s21, %s24
    %p33 = scmp.eq.s32.totalorder %s16, 1
    %p34 = por %p32, %p33
    %p35 = scmp.ne.s32.totalorder %s24, %s25
    %p36 = scmp.eq.s32.totalorder %s16, 0
    %p37 = por %p35, %p36
    %p38 = scmp.ne.s32.totalorder %s24, %s25
    %p39 = scmp.eq.s32.totalorder %s17, 1
    %p40 = por %p38, %p39
    %p42 = scmp.ne.s32.totalorder %s25, %s41
    %p43 = scmp.eq.s32.totalorder %s17, 0
    %p44 = por %p42, %p43
    %s46 = sadd.s32 %s45, 1
    %p49 = scmp.eq.s32.totalorder %s11, 1
    %p50 = scmp.ne.s32.totalorder %s45, %s47
    %p51 = scmp.eq.s32.totalorder %s11, 0
    %p52 = por %p50, %p51
    %p53 = scmp.ne.s32.totalorder %s45, %s47
    %p54 = scmp.eq.s32.totalorder %s16, 1
    %p55 = por %p53, %p54
    %p56 = scmp.ne.s32.totalorder %s47, %s48
    %p57 = scmp.eq.s32.totalorder %s16, 0
    %p58 = por %p56, %p57
    %p59 = scmp.ne.s32.totalorder %s47, %s48
    %p60 = scmp.eq.s32.totalorder %s17, 1
    %p61 = por %p59, %p60
    %p63 = scmp.ne.s32.totalorder %s48, %s62
    %p64 = scmp.eq.s32.totalorder %s17, 0
    %p65 = por %p63, %p64
    %s67 = sadd.s32 %s66, 1
    %p70 = scmp.eq.s32.totalorder %s11, 1
    %p71 = scmp.ne.s32.totalorder %s66, %s68
    %p72 = scmp.eq.s32.totalorder %s11, 0
    %p73 = por %p71, %p72
    %p74 = scmp.ne.s32.totalorder %s66, %s68
    %p75 = scmp.eq.s32.totalorder %s16, 1
    %p76 = por %p74, %p75
    %p77 = scmp.ne.s32.totalorder %s68, %s69
    %p78 = scmp.eq.s32.totalorder %s16, 0
    %p79 = por %p77, %p78
    %p80 = scmp.ne.s32.totalorder %s68, %s69
    %p81 = scmp.eq.s32.totalorder %s17, 1
    %p82 = por %p80, %p81
    %p84 = scmp.ne.s32.totalorder %s69, %s83
    %p85 = scmp.eq.s32.totalorder %s17, 0
    %p86 = por %p84, %p85
    %s88 = sadd.s32 %s87, 1
    %p91 = scmp.eq.s32.totalorder %s11, 1
    %p92 = scmp.ne.s32.totalorder %s87, %s89
    %p93 = scmp.eq.s32.totalorder %s11, 0
    %p94 = por %p92, %p93
    %p95 = scmp.ne.s32.totalorder %s87, %s89
    %p96 = scmp.eq.s32.totalorder %s16, 1
    %p97 = por %p95, %p96
    %p98 = scmp.ne.s32.totalorder %s89, %s90
    %p99 = scmp.eq.s32.totalorder %s16, 0
    %p100 = por %p98, %p99
    %p101 = scmp.ne.s32.totalorder %s89, %s90
    %p102 = scmp.eq.s32.totalorder %s17, 1
    %p103 = por %p101, %p102
    %p105 = scmp.ne.s32.totalorder %s90, %s104
    %p106 = scmp.eq.s32.totalorder %s17, 0
    %p107 = por %p105, %p106
    %s109 = sadd.s32 %s108, 1
    %p112 = scmp.eq.s32.totalorder %s11, 1
    %p113 = scmp.ne.s32.totalorder %s108, %s110
    %p114 = scmp.eq.s32.totalorder %s11, 0
    %p115 = por %p113, %p114
    %p116 = scmp.ne.s32.totalorder %s108, %s110
    %p117 = scmp.eq.s32.totalorder %s16, 1
    %p118 = por %p116, %p117
    %p119 = scmp.ne.s32.totalorder %s110, %s111
    %p120 = scmp.eq.s32.totalorder %s16, 0
    %p121 = por %p119, %p120
    %p122 = scmp.ne.s32.totalorder %s110, %s111
    %p123 = scmp.eq.s32.totalorder %s17, 1
    %p124 = por %p122, %p123
    %p126 = scmp.ne.s32.totalorder %s111, %s125
    %p127 = scmp.eq.s32.totalorder %s17, 0
    %p128 = por %p126, %p127
    %s129 = ssub.s32 %s11, %s18
    %p130 = scmp.eq.s32.totalorder %s129, 0
    %s132 = sadd.s32 %s131, 1
    %s133 = scalar_select %p130, %s131, %s132
    %p136 = pneg %p130
    %p137 = scmp.eq.s32.totalorder %s11, 1
    %p138 = por %p136, %p137
    %p139 = scmp.ne.s32.totalorder %s131, %s134
    %p140 = scmp.eq.s32.totalorder %s11, 0
    %p141 = por %p139, %p140
    %p142 = scmp.ne.s32.totalorder %s131, %s134
    %p143 = scmp.eq.s32.totalorder %s16, 1
    %p144 = por %p142, %p143
    %p145 = scmp.ne.s32.totalorder %s134, %s135
    %p146 = scmp.eq.s32.totalorder %s16, 0
    %p147 = por %p145, %p146
    %p148 = scmp.ne.s32.totalorder %s134, %s135
    %p149 = scmp.eq.s32.totalorder %s17, 1
    %p150 = por %p148, %p149
    %p152 = scmp.ne.s32.totalorder %s135, %s151
    %p153 = scmp.eq.s32.totalorder %s17, 0
    %p154 = por %p152, %p153
    %p155 = scmp.le.s32.totalorder 1, %s11
    %p156 = scmp.lt.s32.totalorder %s11, 3
    %p157 = pnand %p155, %p156
    %p158 = pneg %p157
    // Predicated region
    $region9: #{simple_cnn_forward.2} parent=5 // pred_check
      _
    $region10: #{simple_cnn_forward.2} parent=5 // pred_check_branch
      %160 = sbr.rel (%p157) target = $region12
    $region11: #{simple_cnn_forward.2} parent=5 // pred_region
      %s161 = ssub.s32 %s11, 1
      // Predicated region
      $region13: #{simple_cnn_forward.2} parent=11 // pred_check
        %p162 = pneg %p58
      $region14: #{simple_cnn_forward.2} parent=11 // pred_check_branch
        %164 = sbr.rel (%p162) target = $region16
      $region15: #{simple_cnn_forward.2} parent=11 // pred_region
        _
      $region16: #{simple_cnn_forward.2} parent=11 // pred_fallthru
        _
      // Predicated region
      $region17: #{simple_cnn_forward.2} parent=11 // pred_check
        %p165 = pneg %p79
      $region18: #{simple_cnn_forward.2} parent=11 // pred_check_branch
        %167 = sbr.rel (%p165) target = $region20
      $region19: #{simple_cnn_forward.2} parent=11 // pred_region
        _
      $region20: #{simple_cnn_forward.2} parent=11 // pred_fallthru
        _
      // Predicated region
      $region21: #{simple_cnn_forward.2} parent=11 // pred_check
        %p168 = pneg %p100
      $region22: #{simple_cnn_forward.2} parent=11 // pred_check_branch
        %170 = sbr.rel (%p168) target = $region24
      $region23: #{simple_cnn_forward.2} parent=11 // pred_region
        _
      $region24: #{simple_cnn_forward.2} parent=11 // pred_fallthru
        _
      // Predicated region
      $region25: #{simple_cnn_forward.2} parent=11 // pred_check
        %p171 = pneg %p121
      $region26: #{simple_cnn_forward.2} parent=11 // pred_check_branch
        %173 = sbr.rel (%p171) target = $region28
      $region27: #{simple_cnn_forward.2} parent=11 // pred_region
        _
      $region28: #{simple_cnn_forward.2} parent=11 // pred_fallthru
        _
    $region12: #{simple_cnn_forward.2} parent=5 // pred_fallthru
      _
    %p174 = scmp.lt.s32.totalorder %s11, 2
    // Predicated region
    $region29: #{simple_cnn_forward.2} parent=5 // pred_check
      %p175 = pneg %p174
    $region30: #{simple_cnn_forward.2} parent=5 // pred_check_branch
      %177 = sbr.rel (%p175) target = $region32
    $region31: #{simple_cnn_forward.2} parent=5 // pred_region
      // Predicated region
      $region33: #{simple_cnn_forward.2} parent=31 // pred_check
        %p178 = pneg %p31
      $region34: #{simple_cnn_forward.2} parent=31 // pred_check_branch
        %180 = sbr.rel (%p178) target = $region36
      $region35: #{simple_cnn_forward.2} parent=31 // pred_region
        %p181 = scmp.lt.s32.totalorder %s11, 1
        %s182 = scalar_select %p181, %s11, 1
        %s183 = smul.addr %s182, 72
        %s184 = smul.addr %s183, 8
        %s185 = scalar_lea.vmem %s0, %s184
      $region36: #{simple_cnn_forward.2} parent=31 // pred_fallthru
        _
    $region32: #{simple_cnn_forward.2} parent=5 // pred_fallthru
      _
    %p186 = scmp.le.s32.totalorder 1, %s11
    %p187 = scmp.lt.s32.totalorder %s11, 3
    %p188 = pnand %p186, %p187
    %p189 = pneg %p188
    // Predicated region
    $region37: #{simple_cnn_forward.2} parent=5 // pred_check
      _
    $region38: #{simple_cnn_forward.2} parent=5 // pred_check_branch
      %191 = sbr.rel (%p188) target = $region40
    $region39: #{simple_cnn_forward.2} parent=5 // pred_region
      %s192 = ssub.s32 %s11, 1
      %p193 = scmp.lt.s32.totalorder %s16, 1
      %s194 = scalar_select %p193, %s16, 1
      %s195 = smul.addr %s194, 72
      %s196 = smul.addr %s195, 8
      %s197 = scalar_lea.vmem %s0, %s196
      %p198 = pneg %p37
      %p199 = pneg %p34
      %p200 = pneg %p58
      %p201 = pneg %p55
      %p202 = pneg %p79
      %p203 = pneg %p76
      %p204 = pneg %p100
      %p205 = pneg %p97
      %p206 = pneg %p121
      %p207 = pneg %p118
      %p208 = pneg %p147
      %p209 = pneg %p144
      %p210 = scmp.lt.s32.totalorder %s16, 1
      %s211 = scalar_select %p210, %s16, 1
      %s212 = smul.addr %s211, 4
      %s213 = smul.addr %s212, 4
      %s214 = scalar_lea.vmem %s5, %s213
      %p215 = scmp.lt.s32.totalorder %s16, 1
      %s216 = scalar_select %p215, %s16, 1
      %s217 = smul.addr %s216, 72
      %s218 = smul.addr %s217, 8
      %s219 = scalar_lea.vmem %s0, %s218
      %p220 = scmp.lt.s32.totalorder %s16, 1
      %s221 = scalar_select %p220, %s16, 1
      %s222 = smul.addr %s221, 4
      %s223 = smul.addr %s222, 4
      %s224 = scalar_lea.vmem %s5, %s223
      %v225 = vld [vmem:[%s219] sm:$0xff]
      %v226 = vld [vmem:[%s219 + $0x8] sm:$0xff]
      %v227 = vld [vmem:[%s219 + $0x10] sm:$0xff]
      %v228 = vld [vmem:[%s219 + $0x20] sm:$0xff]
      %v229 = vld [vmem:[%s219 + $0x28] sm:$0xff]
      %v230 = vld [vmem:[%s219 + $0x30] sm:$0xff]
      %v231 = vld [vmem:[%s219 + $0x40] sm:$0xff]
      %v232 = vld [vmem:[%s219 + $0x48] sm:$0xff]
      %v233 = vld [vmem:[%s219 + $0x50] sm:$0xff]
      %v234 = vld [vmem:[%s219 + $0x60] sm:$0xff]
      %v235 = vld [vmem:[%s219 + $0x68] sm:$0xff]
      %v236 = vld [vmem:[%s219 + $0x70] sm:$0xff]
      %v237 = vld [vmem:[%s219 + $0x80] sm:$0xff]
      %v238 = vld [vmem:[%s219 + $0x88] sm:$0xff]
      %v239 = vld [vmem:[%s219 + $0x90] sm:$0xff]
      %v240 = vld [vmem:[%s219 + $0xa0] sm:$0xff]
      %v241 = vld [vmem:[%s219 + $0xa8] sm:$0xff]
      %v242 = vld [vmem:[%s219 + $0xb0] sm:$0xff]
      %v243 = vld [vmem:[%s219 + $0xc0] sm:$0xff]
      %v244 = vld [vmem:[%s219 + $0xc8] sm:$0xff]
      %v245 = vld [vmem:[%s219 + $0xd0] sm:$0xff]
      %v246 = vld [vmem:[%s219 + $0xe0] sm:$0xff]
      %v247 = vld [vmem:[%s219 + $0xe8] sm:$0xff]
      %v248 = vld [vmem:[%s219 + $0xf0] sm:$0xff]
      %v249 = vld [vmem:[%s219 + $0x100] sm:$0xff]
      %v250 = vld [vmem:[%s219 + $0x108] sm:$0xff]
      %v251 = vld [vmem:[%s219 + $0x110] sm:$0xff]
      %v252 = vld [vmem:[%s219 + $0x120] sm:$0xff]
      %v253 = vld [vmem:[%s219 + $0x128] sm:$0xff]
      %v254 = vld [vmem:[%s219 + $0x130] sm:$0xff]
      %v255 = vld [vmem:[%s219 + $0x140] sm:$0xff]
      %v256 = vld [vmem:[%s219 + $0x148] sm:$0xff]
      %v257 = vld [vmem:[%s219 + $0x150] sm:$0xff]
      %v258 = vld [vmem:[%s219 + $0x160] sm:$0xff]
      %v259 = vld [vmem:[%s219 + $0x168] sm:$0xff]
      %v260 = vld [vmem:[%s219 + $0x170] sm:$0xff]
      %v261 = vld [vmem:[%s219 + $0x180] sm:$0xff]
      %v262 = vld [vmem:[%s219 + $0x188] sm:$0xff]
      %v263 = vld [vmem:[%s219 + $0x190] sm:$0xff]
      %v264 = vld [vmem:[%s219 + $0x1a0] sm:$0xff]
      %v265 = vld [vmem:[%s219 + $0x1a8] sm:$0xff]
      %v266 = vld [vmem:[%s219 + $0x1b0] sm:$0xff]
      %v267 = vld [vmem:[%s219 + $0x1c0] sm:$0xff]
      %v268 = vld [vmem:[%s219 + $0x1c8] sm:$0xff]
      %v269 = vld [vmem:[%s219 + $0x1d0] sm:$0xff]
      %v270 = vld [vmem:[%s219 + $0x1e0] sm:$0xff]
      %v271 = vld [vmem:[%s219 + $0x1e8] sm:$0xff]
      %v272 = vld [vmem:[%s219 + $0x1f0] sm:$0xff]
      %v273 = vld [vmem:[%s1] sm:$0xff]
      %v274 = vld [vmem:[%s219 + $0x1] sm:$0xff]
      %v275 = vld [vmem:[%s219 + $0x9] sm:$0xff]
      %v276 = vld [vmem:[%s219 + $0x11] sm:$0xff]
      %v277 = vld [vmem:[%s219 + $0x21] sm:$0xff]
      %v278 = vld [vmem:[%s219 + $0x29] sm:$0xff]
      %v279 = vld [vmem:[%s219 + $0x31] sm:$0xff]
      %v280 = vld [vmem:[%s219 + $0x41] sm:$0xff]
      %v281 = vld [vmem:[%s219 + $0x49] sm:$0xff]
      %v282 = vld [vmem:[%s219 + $0x51] sm:$0xff]
      %v283 = vld [vmem:[%s219 + $0x61] sm:$0xff]
      %v284 = vld [vmem:[%s219 + $0x69] sm:$0xff]
      %v285 = vld [vmem:[%s219 + $0x71] sm:$0xff]
      %v286 = vld [vmem:[%s219 + $0x81] sm:$0xff]
      %v287 = vld [vmem:[%s219 + $0x89] sm:$0xff]
      %v288 = vld [vmem:[%s219 + $0x91] sm:$0xff]
      %v289 = vld [vmem:[%s219 + $0xa1] sm:$0xff]
      %v290 = vld [vmem:[%s219 + $0xa9] sm:$0xff]
      %v291 = vld [vmem:[%s219 + $0xb1] sm:$0xff]
      %v292 = vld [vmem:[%s219 + $0xc1] sm:$0xff]
      %v293 = vld [vmem:[%s219 + $0xc9] sm:$0xff]
      %v294 = vld [vmem:[%s219 + $0xd1] sm:$0xff]
      %v295 = vld [vmem:[%s219 + $0xe1] sm:$0xff]
      %v296 = vld [vmem:[%s219 + $0xe9] sm:$0xff]
      %v297 = vld [vmem:[%s219 + $0xf1] sm:$0xff]
      %v298 = vld [vmem:[%s219 + $0x101] sm:$0xff]
      %v299 = vld [vmem:[%s219 + $0x109] sm:$0xff]
      %v300 = vld [vmem:[%s219 + $0x111] sm:$0xff]
      %v301 = vld [vmem:[%s219 + $0x121] sm:$0xff]
      %v302 = vld [vmem:[%s219 + $0x129] sm:$0xff]
      %v303 = vld [vmem:[%s219 + $0x131] sm:$0xff]
      %v304 = vld [vmem:[%s219 + $0x141] sm:$0xff]
      %v305 = vld [vmem:[%s219 + $0x149] sm:$0xff]
      %v306 = vld [vmem:[%s219 + $0x151] sm:$0xff]
      %v307 = vld [vmem:[%s219 + $0x161] sm:$0xff]
      %v308 = vld [vmem:[%s219 + $0x169] sm:$0xff]
      %v309 = vld [vmem:[%s219 + $0x171] sm:$0xff]
      %v310 = vld [vmem:[%s219 + $0x181] sm:$0xff]
      %v311 = vld [vmem:[%s219 + $0x189] sm:$0xff]
      %v312 = vld [vmem:[%s219 + $0x191] sm:$0xff]
      %v313 = vld [vmem:[%s219 + $0x1a1] sm:$0xff]
      %v314 = vld [vmem:[%s219 + $0x1a9] sm:$0xff]
      %v315 = vld [vmem:[%s219 + $0x1b1] sm:$0xff]
      %v316 = vld [vmem:[%s219 + $0x1c1] sm:$0xff]
      %v317 = vld [vmem:[%s219 + $0x1c9] sm:$0xff]
      %v318 = vld [vmem:[%s219 + $0x1d1] sm:$0xff]
      %v319 = vld [vmem:[%s219 + $0x1e1] sm:$0xff]
      %v320 = vld [vmem:[%s219 + $0x1e9] sm:$0xff]
      %v321 = vld [vmem:[%s219 + $0x1f1] sm:$0xff]
      %s322 = scalar_lea.vmem %s1, 8
      %v323 = vld [vmem:[%s322] sm:$0xff]
      %vm324 = vcmask 64512
      %v326 = vsel %vm324, %v274, 0
      %v329 = vsel %vm324, %v275, 0
      %v332 = vsel %vm324, %v276, 0
      %v335 = vsel %vm324, %v277, 0
      %v338 = vsel %vm324, %v278, 0
      %v341 = vsel %vm324, %v279, 0
      %v344 = vsel %vm324, %v280, 0
      %v347 = vsel %vm324, %v281, 0
      %v350 = vsel %vm324, %v282, 0
      %v353 = vsel %vm324, %v283, 0
      %v356 = vsel %vm324, %v284, 0
      %v359 = vsel %vm324, %v285, 0
      %v362 = vsel %vm324, %v286, 0
      %v365 = vsel %vm324, %v287, 0
      %v368 = vsel %vm324, %v288, 0
      %v371 = vsel %vm324, %v289, 0
      %v374 = vsel %vm324, %v290, 0
      %v377 = vsel %vm324, %v291, 0
      %v380 = vsel %vm324, %v292, 0
      %v383 = vsel %vm324, %v293, 0
      %v386 = vsel %vm324, %v294, 0
      %v389 = vsel %vm324, %v295, 0
      %v392 = vsel %vm324, %v296, 0
      %v395 = vsel %vm324, %v297, 0
      %v398 = vsel %vm324, %v298, 0
      %v401 = vsel %vm324, %v299, 0
      %v404 = vsel %vm324, %v300, 0
      %v407 = vsel %vm324, %v301, 0
      %v410 = vsel %vm324, %v302, 0
      %v413 = vsel %vm324, %v303, 0
      %v416 = vsel %vm324, %v304, 0
      %v419 = vsel %vm324, %v305, 0
      %v422 = vsel %vm324, %v306, 0
      %v425 = vsel %vm324, %v307, 0
      %v428 = vsel %vm324, %v308, 0
      %v431 = vsel %vm324, %v309, 0
      %v434 = vsel %vm324, %v310, 0
      %v437 = vsel %vm324, %v311, 0
      %v440 = vsel %vm324, %v312, 0
      %v443 = vsel %vm324, %v313, 0
      %v446 = vsel %vm324, %v314, 0
      %v449 = vsel %vm324, %v315, 0
      %v452 = vsel %vm324, %v316, 0
      %v455 = vsel %vm324, %v317, 0
      %v458 = vsel %vm324, %v318, 0
      %v461 = vsel %vm324, %v319, 0
      %v464 = vsel %vm324, %v320, 0
      %v467 = vsel %vm324, %v321, 0
      %469 = vmatprep.subr.mxu0 0.0
      %470 = vmatpush1.msra.mxu0 0.0
      %471 = vmatprep.subr.mxu0 0.0
      %472 = vmatpush1.msra.mxu0 0.0
      %473 = vmatprep.subr.mxu0 0.0
      %474 = vmatpush1.msra.mxu0 0.0
      %475 = vmatprep.subr.mxu0 0.0
      %476 = vmatpush1.msra.mxu0 0.0
      %477 = vmatprep.subr.mxu0 0.0
      %478 = vmatpush1.msra.mxu0 0.0
      %479 = vmatprep.subr.mxu0 0.0
      %480 = vmatpush1.msra.mxu0 0.0
      %481 = vmatprep.subr.mxu0 0.0
      %482 = vmatpush1.msra.mxu0 0.0
      %483 = vmatprep.subr.mxu0 0.0
      %484 = vmatpush1.msra.mxu0 0.0
      %485 = vmatprep.subr.mxu0 0.0
      %486 = vmatpush1.msra.mxu0 0.0
      %487 = vmatprep.subr.mxu0 0.0
      %488 = vmatpush1.msra.mxu0 0.0
      %489 = vmatprep.subr.mxu0 0.0
      %490 = vmatpush1.msra.mxu0 0.0
      %491 = vmatprep.subr.mxu0 0.0
      %492 = vmatpush1.msra.mxu0 0.0
      %493 = vmatprep.subr.mxu0 0.0
      %494 = vmatpush1.msra.mxu0 0.0
      %495 = vmatprep.subr.mxu0 0.0
      %496 = vmatpush1.msra.mxu0 0.0
      %497 = vmatprep.subr.mxu0 0.0
      %498 = vmatpush1.msra.mxu0 0.0
      %499 = vmatprep.subr.mxu0 0.0
      %500 = vmatpush1.msra.mxu0 %v323
      %501 = vmatprep.subr.mxu0 0.0
      %502 = vmatpush2.msra.mxu0 0.0
      %503 = vmatprep.subr.mxu0 0.0
      %504 = vmatpush2.msra.mxu0 0.0
      %505 = vmatprep.subr.mxu0 0.0
      %506 = vmatpush2.msra.mxu0 0.0
      %507 = vmatprep.subr.mxu0 0.0
      %508 = vmatpush2.msra.mxu0 0.0
      %509 = vmatprep.subr.mxu0 0.0
      %510 = vmatpush2.msra.mxu0 0.0
      %511 = vmatprep.subr.mxu0 0.0
      %512 = vmatpush2.msra.mxu0 0.0
      %513 = vmatprep.subr.mxu0 0.0
      %514 = vmatpush2.msra.mxu0 0.0
      %515 = vmatprep.subr.mxu0 0.0
      %516 = vmatpush2.msra.mxu0 0.0
      %517 = vmatprep.subr.mxu0 0.0
      %518 = vmatpush2.msra.mxu0 0.0
      %519 = vmatprep.subr.mxu0 0.0
      %520 = vmatpush2.msra.mxu0 0.0
      %521 = vmatprep.subr.mxu0 0.0
      %522 = vmatpush2.msra.mxu0 0.0
      %523 = vmatprep.subr.mxu0 0.0
      %524 = vmatpush2.msra.mxu0 0.0
      %525 = vmatprep.subr.mxu0 0.0
      %526 = vmatpush2.msra.mxu0 0.0
      %527 = vmatprep.subr.mxu0 0.0
      %528 = vmatpush2.msra.mxu0 0.0
      %529 = vmatprep.subr.mxu0 0.0
      %530 = vmatpush2.msra.mxu0 0.0
      %531 = vmatprep.subr.mxu0 0.0
      %532 = vmatpush2.msra.mxu0 0.0
      %533 = vmatprep.mubr.f32.mxu0 0.0
      %534 = vmatmul.mubr.f32.gmra.mxu0 %v326
      %v535 = vpop.f32.mrf.mxu0
      %v536 = vadd.f32 0.0, %v535
      %v537 = vpop.f32.mrf.mxu0
      %538 = vmatprep.mubr.f32.mxu0 0.0
      %539 = vmatmul.mubr.f32.gmra.mxu0 %v329
      %v540 = vpop.f32.mrf.mxu0
      %v541 = vadd.f32 0.0, %v540
      %v542 = vpop.f32.mrf.mxu0
      %543 = vmatprep.mubr.f32.mxu0 0.0
      %544 = vmatmul.mubr.f32.gmra.mxu0 %v332
      %v545 = vpop.f32.mrf.mxu0
      %v546 = vadd.f32 0.0, %v545
      %v547 = vpop.f32.mrf.mxu0
      %548 = vmatprep.mubr.f32.mxu0 0.0
      %549 = vmatmul.mubr.f32.gmra.mxu0 %v335
      %v550 = vpop.f32.mrf.mxu0
      %v551 = vadd.f32 0.0, %v550
      %v552 = vpop.f32.mrf.mxu0
      %553 = vmatprep.mubr.f32.mxu0 0.0
      %554 = vmatmul.mubr.f32.gmra.mxu0 %v338
      %v555 = vpop.f32.mrf.mxu0
      %v556 = vadd.f32 0.0, %v555
      %v557 = vpop.f32.mrf.mxu0
      %558 = vmatprep.mubr.f32.mxu0 0.0
      %559 = vmatmul.mubr.f32.gmra.mxu0 %v341
      %v560 = vpop.f32.mrf.mxu0
      %v561 = vadd.f32 0.0, %v560
      %v562 = vpop.f32.mrf.mxu0
      %563 = vmatprep.mubr.f32.mxu0 0.0
      %564 = vmatmul.mubr.f32.gmra.mxu0 %v344
      %v565 = vpop.f32.mrf.mxu0
      %v566 = vadd.f32 0.0, %v565
      %v567 = vpop.f32.mrf.mxu0
      %568 = vmatprep.mubr.f32.mxu0 0.0
      %569 = vmatmul.mubr.f32.gmra.mxu0 %v347
      %v570 = vpop.f32.mrf.mxu0
      %v571 = vadd.f32 0.0, %v570
      %v572 = vpop.f32.mrf.mxu0
      %573 = vmatprep.mubr.f32.mxu0 0.0
      %574 = vmatmul.mubr.f32.gmra.mxu0 %v350
      %v575 = vpop.f32.mrf.mxu0
      %v576 = vadd.f32 0.0, %v575
      %v577 = vpop.f32.mrf.mxu0
      %578 = vmatprep.mubr.f32.mxu0 0.0
      %579 = vmatmul.mubr.f32.gmra.mxu0 %v353
      %v580 = vpop.f32.mrf.mxu0
      %v581 = vadd.f32 0.0, %v580
      %v582 = vpop.f32.mrf.mxu0
      %583 = vmatprep.mubr.f32.mxu0 0.0
      %584 = vmatmul.mubr.f32.gmra.mxu0 %v356
      %v585 = vpop.f32.mrf.mxu0
      %v586 = vadd.f32 0.0, %v585
      %v587 = vpop.f32.mrf.mxu0
      %588 = vmatprep.mubr.f32.mxu0 0.0
      %589 = vmatmul.mubr.f32.gmra.mxu0 %v359
      %v590 = vpop.f32.mrf.mxu0
      %v591 = vadd.f32 0.0, %v590
      %v592 = vpop.f32.mrf.mxu0
      %593 = vmatprep.mubr.f32.mxu0 0.0
      %594 = vmatmul.mubr.f32.gmra.mxu0 %v362
      %v595 = vpop.f32.mrf.mxu0
      %v596 = vadd.f32 0.0, %v595
      %v597 = vpop.f32.mrf.mxu0
      %598 = vmatprep.mubr.f32.mxu0 0.0
      %599 = vmatmul.mubr.f32.gmra.mxu0 %v365
      %v600 = vpop.f32.mrf.mxu0
      %v601 = vadd.f32 0.0, %v600
      %v602 = vpop.f32.mrf.mxu0
      %603 = vmatprep.mubr.f32.mxu0 0.0
      %604 = vmatmul.mubr.f32.gmra.mxu0 %v368
      %v605 = vpop.f32.mrf.mxu0
      %v606 = vadd.f32 0.0, %v605
      %v607 = vpop.f32.mrf.mxu0
      %608 = vmatprep.mubr.f32.mxu0 0.0
      %609 = vmatmul.mubr.f32.gmra.mxu0 %v371
      %v610 = vpop.f32.mrf.mxu0
      %v611 = vadd.f32 0.0, %v610
      %v612 = vpop.f32.mrf.mxu0
      %613 = vmatprep.mubr.f32.mxu0 0.0
      %614 = vmatmul.mubr.f32.gmra.mxu0 %v374
      %v615 = vpop.f32.mrf.mxu0
      %v616 = vadd.f32 0.0, %v615
      %v617 = vpop.f32.mrf.mxu0
      %618 = vmatprep.mubr.f32.mxu0 0.0
      %619 = vmatmul.mubr.f32.gmra.mxu0 %v377
      %v620 = vpop.f32.mrf.mxu0
      %v621 = vadd.f32 0.0, %v620
      %v622 = vpop.f32.mrf.mxu0
      %623 = vmatprep.mubr.f32.mxu0 0.0
      %624 = vmatmul.mubr.f32.gmra.mxu0 %v380
      %v625 = vpop.f32.mrf.mxu0
      %v626 = vadd.f32 0.0, %v625
      %v627 = vpop.f32.mrf.mxu0
      %628 = vmatprep.mubr.f32.mxu0 0.0
      %629 = vmatmul.mubr.f32.gmra.mxu0 %v383
      %v630 = vpop.f32.mrf.mxu0
      %v631 = vadd.f32 0.0, %v630
      %v632 = vpop.f32.mrf.mxu0
      %633 = vmatprep.mubr.f32.mxu0 0.0
      %634 = vmatmul.mubr.f32.gmra.mxu0 %v386
      %v635 = vpop.f32.mrf.mxu0
      %v636 = vadd.f32 0.0, %v635
      %v637 = vpop.f32.mrf.mxu0
      %638 = vmatprep.mubr.f32.mxu0 0.0
      %639 = vmatmul.mubr.f32.gmra.mxu0 %v389
      %v640 = vpop.f32.mrf.mxu0
      %v641 = vadd.f32 0.0, %v640
      %v642 = vpop.f32.mrf.mxu0
      %643 = vmatprep.mubr.f32.mxu0 0.0
      %644 = vmatmul.mubr.f32.gmra.mxu0 %v392
      %v645 = vpop.f32.mrf.mxu0
      %v646 = vadd.f32 0.0, %v645
      %v647 = vpop.f32.mrf.mxu0
      %648 = vmatprep.mubr.f32.mxu0 0.0
      %649 = vmatmul.mubr.f32.gmra.mxu0 %v395
      %v650 = vpop.f32.mrf.mxu0
      %v651 = vadd.f32 0.0, %v650
      %v652 = vpop.f32.mrf.mxu0
      %653 = vmatprep.mubr.f32.mxu0 0.0
      %654 = vmatmul.mubr.f32.gmra.mxu0 %v398
      %v655 = vpop.f32.mrf.mxu0
      %v656 = vadd.f32 0.0, %v655
      %v657 = vpop.f32.mrf.mxu0
      %658 = vmatprep.mubr.f32.mxu0 0.0
      %659 = vmatmul.mubr.f32.gmra.mxu0 %v401
      %v660 = vpop.f32.mrf.mxu0
      %v661 = vadd.f32 0.0, %v660
      %v662 = vpop.f32.mrf.mxu0
      %663 = vmatprep.mubr.f32.mxu0 0.0
      %664 = vmatmul.mubr.f32.gmra.mxu0 %v404
      %v665 = vpop.f32.mrf.mxu0
      %v666 = vadd.f32 0.0, %v665
      %v667 = vpop.f32.mrf.mxu0
      %668 = vmatprep.mubr.f32.mxu0 0.0
      %669 = vmatmul.mubr.f32.gmra.mxu0 %v407
      %v670 = vpop.f32.mrf.mxu0
      %v671 = vadd.f32 0.0, %v670
      %v672 = vpop.f32.mrf.mxu0
      %673 = vmatprep.mubr.f32.mxu0 0.0
      %674 = vmatmul.mubr.f32.gmra.mxu0 %v410
      %v675 = vpop.f32.mrf.mxu0
      %v676 = vadd.f32 0.0, %v675
      %v677 = vpop.f32.mrf.mxu0
      %678 = vmatprep.mubr.f32.mxu0 0.0
      %679 = vmatmul.mubr.f32.gmra.mxu0 %v413
      %v680 = vpop.f32.mrf.mxu0
      %v681 = vadd.f32 0.0, %v680
      %v682 = vpop.f32.mrf.mxu0
      %683 = vmatprep.mubr.f32.mxu0 0.0
      %684 = vmatmul.mubr.f32.gmra.mxu0 %v416
      %v685 = vpop.f32.mrf.mxu0
      %v686 = vadd.f32 0.0, %v685
      %v687 = vpop.f32.mrf.mxu0
      %688 = vmatprep.mubr.f32.mxu0 0.0
      %689 = vmatmul.mubr.f32.gmra.mxu0 %v419
      %v690 = vpop.f32.mrf.mxu0
      %v691 = vadd.f32 0.0, %v690
      %v692 = vpop.f32.mrf.mxu0
      %693 = vmatprep.mubr.f32.mxu0 0.0
      %694 = vmatmul.mubr.f32.gmra.mxu0 %v422
      %v695 = vpop.f32.mrf.mxu0
      %v696 = vadd.f32 0.0, %v695
      %v697 = vpop.f32.mrf.mxu0
      %698 = vmatprep.mubr.f32.mxu0 0.0
      %699 = vmatmul.mubr.f32.gmra.mxu0 %v425
      %v700 = vpop.f32.mrf.mxu0
      %v701 = vadd.f32 0.0, %v700
      %v702 = vpop.f32.mrf.mxu0
      %703 = vmatprep.mubr.f32.mxu0 0.0
      %704 = vmatmul.mubr.f32.gmra.mxu0 %v428
      %v705 = vpop.f32.mrf.mxu0
      %v706 = vadd.f32 0.0, %v705
      %v707 = vpop.f32.mrf.mxu0
      %708 = vmatprep.mubr.f32.mxu0 0.0
      %709 = vmatmul.mubr.f32.gmra.mxu0 %v431
      %v710 = vpop.f32.mrf.mxu0
      %v711 = vadd.f32 0.0, %v710
      %v712 = vpop.f32.mrf.mxu0
      %713 = vmatprep.mubr.f32.mxu0 0.0
      %714 = vmatmul.mubr.f32.gmra.mxu0 %v434
      %v715 = vpop.f32.mrf.mxu0
      %v716 = vadd.f32 0.0, %v715
      %v717 = vpop.f32.mrf.mxu0
      %718 = vmatprep.mubr.f32.mxu0 0.0
      %719 = vmatmul.mubr.f32.gmra.mxu0 %v437
      %v720 = vpop.f32.mrf.mxu0
      %v721 = vadd.f32 0.0, %v720
      %v722 = vpop.f32.mrf.mxu0
      %723 = vmatprep.mubr.f32.mxu0 0.0
      %724 = vmatmul.mubr.f32.gmra.mxu0 %v440
      %v725 = vpop.f32.mrf.mxu0
      %v726 = vadd.f32 0.0, %v725
      %v727 = vpop.f32.mrf.mxu0
      %728 = vmatprep.mubr.f32.mxu0 0.0
      %729 = vmatmul.mubr.f32.gmra.mxu0 %v443
      %v730 = vpop.f32.mrf.mxu0
      %v731 = vadd.f32 0.0, %v730
      %v732 = vpop.f32.mrf.mxu0
      %733 = vmatprep.mubr.f32.mxu0 0.0
      %734 = vmatmul.mubr.f32.gmra.mxu0 %v446
      %v735 = vpop.f32.mrf.mxu0
      %v736 = vadd.f32 0.0, %v735
      %v737 = vpop.f32.mrf.mxu0
      %738 = vmatprep.mubr.f32.mxu0 0.0
      %739 = vmatmul.mubr.f32.gmra.mxu0 %v449
      %v740 = vpop.f32.mrf.mxu0
      %v741 = vadd.f32 0.0, %v740
      %v742 = vpop.f32.mrf.mxu0
      %743 = vmatprep.mubr.f32.mxu0 0.0
      %744 = vmatmul.mubr.f32.gmra.mxu0 %v452
      %v745 = vpop.f32.mrf.mxu0
      %v746 = vadd.f32 0.0, %v745
      %v747 = vpop.f32.mrf.mxu0
      %748 = vmatprep.mubr.f32.mxu0 0.0
      %749 = vmatmul.mubr.f32.gmra.mxu0 %v455
      %v750 = vpop.f32.mrf.mxu0
      %v751 = vadd.f32 0.0, %v750
      %v752 = vpop.f32.mrf.mxu0
      %753 = vmatprep.mubr.f32.mxu0 0.0
      %754 = vmatmul.mubr.f32.gmra.mxu0 %v458
      %v755 = vpop.f32.mrf.mxu0
      %v756 = vadd.f32 0.0, %v755
      %v757 = vpop.f32.mrf.mxu0
      %758 = vmatprep.mubr.f32.mxu0 0.0
      %759 = vmatmul.mubr.f32.gmra.mxu0 %v461
      %v760 = vpop.f32.mrf.mxu0
      %v761 = vadd.f32 0.0, %v760
      %v762 = vpop.f32.mrf.mxu0
      %763 = vmatprep.mubr.f32.mxu0 0.0
      %764 = vmatmul.mubr.f32.gmra.mxu0 %v464
      %v765 = vpop.f32.mrf.mxu0
      %v766 = vadd.f32 0.0, %v765
      %v767 = vpop.f32.mrf.mxu0
      %768 = vmatprep.mubr.f32.mxu0 0.0
      %769 = vmatmul.mubr.f32.gmra.mxu0 %v467
      %v770 = vpop.f32.mrf.mxu0
      %v771 = vadd.f32 0.0, %v770
      %v772 = vpop.f32.mrf.mxu0
      %773 = vdwg.mxu0
      %v775 = vsel %vm324, %v225, 0
      %v778 = vsel %vm324, %v226, 0
      %v781 = vsel %vm324, %v227, 0
      %v784 = vsel %vm324, %v228, 0
      %v787 = vsel %vm324, %v229, 0
      %v790 = vsel %vm324, %v230, 0
      %v793 = vsel %vm324, %v231, 0
      %v796 = vsel %vm324, %v232, 0
      %v799 = vsel %vm324, %v233, 0
      %v802 = vsel %vm324, %v234, 0
      %v805 = vsel %vm324, %v235, 0
      %v808 = vsel %vm324, %v236, 0
      %v811 = vsel %vm324, %v237, 0
      %v814 = vsel %vm324, %v238, 0
      %v817 = vsel %vm324, %v239, 0
      %v820 = vsel %vm324, %v240, 0
      %v823 = vsel %vm324, %v241, 0
      %v826 = vsel %vm324, %v242, 0
      %v829 = vsel %vm324, %v243, 0
      %v832 = vsel %vm324, %v244, 0
      %v835 = vsel %vm324, %v245, 0
      %v838 = vsel %vm324, %v246, 0
      %v841 = vsel %vm324, %v247, 0
      %v844 = vsel %vm324, %v248, 0
      %v847 = vsel %vm324, %v249, 0
      %v850 = vsel %vm324, %v250, 0
      %v853 = vsel %vm324, %v251, 0
      %v856 = vsel %vm324, %v252, 0
      %v859 = vsel %vm324, %v253, 0
      %v862 = vsel %vm324, %v254, 0
      %v865 = vsel %vm324, %v255, 0
      %v868 = vsel %vm324, %v256, 0
      %v871 = vsel %vm324, %v257, 0
      %v874 = vsel %vm324, %v258, 0
      %v877 = vsel %vm324, %v259, 0
      %v880 = vsel %vm324, %v260, 0
      %v883 = vsel %vm324, %v261, 0
      %v886 = vsel %vm324, %v262, 0
      %v889 = vsel %vm324, %v263, 0
      %v892 = vsel %vm324, %v264, 0
      %v895 = vsel %vm324, %v265, 0
      %v898 = vsel %vm324, %v266, 0
      %v901 = vsel %vm324, %v267, 0
      %v904 = vsel %vm324, %v268, 0
      %v907 = vsel %vm324, %v269, 0
      %v910 = vsel %vm324, %v270, 0
      %v913 = vsel %vm324, %v271, 0
      %v916 = vsel %vm324, %v272, 0
      %918 = vmatprep.subr.mxu0 0.0
      %919 = vmatpush1.msra.mxu0 0.0
      %920 = vmatprep.subr.mxu0 0.0
      %921 = vmatpush1.msra.mxu0 0.0
      %922 = vmatprep.subr.mxu0 0.0
      %923 = vmatpush1.msra.mxu0 0.0
      %924 = vmatprep.subr.mxu0 0.0
      %925 = vmatpush1.msra.mxu0 0.0
      %926 = vmatprep.subr.mxu0 0.0
      %927 = vmatpush1.msra.mxu0 0.0
      %928 = vmatprep.subr.mxu0 0.0
      %929 = vmatpush1.msra.mxu0 0.0
      %930 = vmatprep.subr.mxu0 0.0
      %931 = vmatpush1.msra.mxu0 0.0
      %932 = vmatprep.subr.mxu0 0.0
      %933 = vmatpush1.msra.mxu0 0.0
      %934 = vmatprep.subr.mxu0 0.0
      %935 = vmatpush1.msra.mxu0 0.0
      %936 = vmatprep.subr.mxu0 0.0
      %937 = vmatpush1.msra.mxu0 0.0
      %938 = vmatprep.subr.mxu0 0.0
      %939 = vmatpush1.msra.mxu0 0.0
      %940 = vmatprep.subr.mxu0 0.0
      %941 = vmatpush1.msra.mxu0 0.0
      %942 = vmatprep.subr.mxu0 0.0
      %943 = vmatpush1.msra.mxu0 0.0
      %944 = vmatprep.subr.mxu0 0.0
      %945 = vmatpush1.msra.mxu0 0.0
      %946 = vmatprep.subr.mxu0 0.0
      %947 = vmatpush1.msra.mxu0 0.0
      %948 = vmatprep.subr.mxu0 0.0
      %949 = vmatpush1.msra.mxu0 %v273
      %950 = vmatprep.subr.mxu0 0.0
      %951 = vmatpush2.msra.mxu0 0.0
      %952 = vmatprep.subr.mxu0 0.0
      %953 = vmatpush2.msra.mxu0 0.0
      %954 = vmatprep.subr.mxu0 0.0
      %955 = vmatpush2.msra.mxu0 0.0
      %956 = vmatprep.subr.mxu0 0.0
      %957 = vmatpush2.msra.mxu0 0.0
      %958 = vmatprep.subr.mxu0 0.0
      %959 = vmatpush2.msra.mxu0 0.0
      %960 = vmatprep.subr.mxu0 0.0
      %961 = vmatpush2.msra.mxu0 0.0
      %962 = vmatprep.subr.mxu0 0.0
      %963 = vmatpush2.msra.mxu0 0.0
      %964 = vmatprep.subr.mxu0 0.0
      %965 = vmatpush2.msra.mxu0 0.0
      %966 = vmatprep.subr.mxu0 0.0
      %967 = vmatpush2.msra.mxu0 0.0
      %968 = vmatprep.subr.mxu0 0.0
      %969 = vmatpush2.msra.mxu0 0.0
      %970 = vmatprep.subr.mxu0 0.0
      %971 = vmatpush2.msra.mxu0 0.0
      %972 = vmatprep.subr.mxu0 0.0
      %973 = vmatpush2.msra.mxu0 0.0
      %974 = vmatprep.subr.mxu0 0.0
      %975 = vmatpush2.msra.mxu0 0.0
      %976 = vmatprep.subr.mxu0 0.0
      %977 = vmatpush2.msra.mxu0 0.0
      %978 = vmatprep.subr.mxu0 0.0
      %979 = vmatpush2.msra.mxu0 0.0
      %980 = vmatprep.subr.mxu0 0.0
      %981 = vmatpush2.msra.mxu0 0.0
      %982 = vmatprep.mubr.f32.mxu0 0.0
      %983 = vmatmul.mubr.f32.gmra.mxu0 %v775
      %v984 = vpop.f32.mrf.mxu0
      %v985 = vadd.f32 %v536, %v984
      %v986 = vpop.f32.mrf.mxu0
      %987 = vmatprep.mubr.f32.mxu0 0.0
      %988 = vmatmul.mubr.f32.gmra.mxu0 %v778
      %v989 = vpop.f32.mrf.mxu0
      %v990 = vadd.f32 %v541, %v989
      %v991 = vpop.f32.mrf.mxu0
      %992 = vmatprep.mubr.f32.mxu0 0.0
      %993 = vmatmul.mubr.f32.gmra.mxu0 %v781
      %v994 = vpop.f32.mrf.mxu0
      %v995 = vadd.f32 %v546, %v994
      %v996 = vpop.f32.mrf.mxu0
      %997 = vmatprep.mubr.f32.mxu0 0.0
      %998 = vmatmul.mubr.f32.gmra.mxu0 %v784
      %v999 = vpop.f32.mrf.mxu0
      %v1000 = vadd.f32 %v551, %v999
      %v1001 = vpop.f32.mrf.mxu0
      %1002 = vmatprep.mubr.f32.mxu0 0.0
      %1003 = vmatmul.mubr.f32.gmra.mxu0 %v787
      %v1004 = vpop.f32.mrf.mxu0
      %v1005 = vadd.f32 %v556, %v1004
      %v1006 = vpop.f32.mrf.mxu0
      %1007 = vmatprep.mubr.f32.mxu0 0.0
      %1008 = vmatmul.mubr.f32.gmra.mxu0 %v790
      %v1009 = vpop.f32.mrf.mxu0
      %v1010 = vadd.f32 %v561, %v1009
      %v1011 = vpop.f32.mrf.mxu0
      %1012 = vmatprep.mubr.f32.mxu0 0.0
      %1013 = vmatmul.mubr.f32.gmra.mxu0 %v793
      %v1014 = vpop.f32.mrf.mxu0
      %v1015 = vadd.f32 %v566, %v1014
      %v1016 = vpop.f32.mrf.mxu0
      %1017 = vmatprep.mubr.f32.mxu0 0.0
      %1018 = vmatmul.mubr.f32.gmra.mxu0 %v796
      %v1019 = vpop.f32.mrf.mxu0
      %v1020 = vadd.f32 %v571, %v1019
      %v1021 = vpop.f32.mrf.mxu0
      %1022 = vmatprep.mubr.f32.mxu0 0.0
      %1023 = vmatmul.mubr.f32.gmra.mxu0 %v799
      %v1024 = vpop.f32.mrf.mxu0
      %v1025 = vadd.f32 %v576, %v1024
      %v1026 = vpop.f32.mrf.mxu0
      %1027 = vmatprep.mubr.f32.mxu0 0.0
      %1028 = vmatmul.mubr.f32.gmra.mxu0 %v802
      %v1029 = vpop.f32.mrf.mxu0
      %v1030 = vadd.f32 %v581, %v1029
      %v1031 = vpop.f32.mrf.mxu0
      %1032 = vmatprep.mubr.f32.mxu0 0.0
      %1033 = vmatmul.mubr.f32.gmra.mxu0 %v805
      %v1034 = vpop.f32.mrf.mxu0
      %v1035 = vadd.f32 %v586, %v1034
      %v1036 = vpop.f32.mrf.mxu0
      %1037 = vmatprep.mubr.f32.mxu0 0.0
      %1038 = vmatmul.mubr.f32.gmra.mxu0 %v808
      %v1039 = vpop.f32.mrf.mxu0
      %v1040 = vadd.f32 %v591, %v1039
      %v1041 = vpop.f32.mrf.mxu0
      %1042 = vmatprep.mubr.f32.mxu0 0.0
      %1043 = vmatmul.mubr.f32.gmra.mxu0 %v811
      %v1044 = vpop.f32.mrf.mxu0
      %v1045 = vadd.f32 %v596, %v1044
      %v1046 = vpop.f32.mrf.mxu0
      %1047 = vmatprep.mubr.f32.mxu0 0.0
      %1048 = vmatmul.mubr.f32.gmra.mxu0 %v814
      %v1049 = vpop.f32.mrf.mxu0
      %v1050 = vadd.f32 %v601, %v1049
      %v1051 = vpop.f32.mrf.mxu0
      %1052 = vmatprep.mubr.f32.mxu0 0.0
      %1053 = vmatmul.mubr.f32.gmra.mxu0 %v817
      %v1054 = vpop.f32.mrf.mxu0
      %v1055 = vadd.f32 %v606, %v1054
      %v1056 = vpop.f32.mrf.mxu0
      %1057 = vmatprep.mubr.f32.mxu0 0.0
      %1058 = vmatmul.mubr.f32.gmra.mxu0 %v820
      %v1059 = vpop.f32.mrf.mxu0
      %v1060 = vadd.f32 %v611, %v1059
      %v1061 = vpop.f32.mrf.mxu0
      %1062 = vmatprep.mubr.f32.mxu0 0.0
      %1063 = vmatmul.mubr.f32.gmra.mxu0 %v823
      %v1064 = vpop.f32.mrf.mxu0
      %v1065 = vadd.f32 %v616, %v1064
      %v1066 = vpop.f32.mrf.mxu0
      %1067 = vmatprep.mubr.f32.mxu0 0.0
      %1068 = vmatmul.mubr.f32.gmra.mxu0 %v826
      %v1069 = vpop.f32.mrf.mxu0
      %v1070 = vadd.f32 %v621, %v1069
      %v1071 = vpop.f32.mrf.mxu0
      %1072 = vmatprep.mubr.f32.mxu0 0.0
      %1073 = vmatmul.mubr.f32.gmra.mxu0 %v829
      %v1074 = vpop.f32.mrf.mxu0
      %v1075 = vadd.f32 %v626, %v1074
      %v1076 = vpop.f32.mrf.mxu0
      %1077 = vmatprep.mubr.f32.mxu0 0.0
      %1078 = vmatmul.mubr.f32.gmra.mxu0 %v832
      %v1079 = vpop.f32.mrf.mxu0
      %v1080 = vadd.f32 %v631, %v1079
      %v1081 = vpop.f32.mrf.mxu0
      %1082 = vmatprep.mubr.f32.mxu0 0.0
      %1083 = vmatmul.mubr.f32.gmra.mxu0 %v835
      %v1084 = vpop.f32.mrf.mxu0
      %v1085 = vadd.f32 %v636, %v1084
      %v1086 = vpop.f32.mrf.mxu0
      %1087 = vmatprep.mubr.f32.mxu0 0.0
      %1088 = vmatmul.mubr.f32.gmra.mxu0 %v838
      %v1089 = vpop.f32.mrf.mxu0
      %v1090 = vadd.f32 %v641, %v1089
      %v1091 = vpop.f32.mrf.mxu0
      %1092 = vmatprep.mubr.f32.mxu0 0.0
      %1093 = vmatmul.mubr.f32.gmra.mxu0 %v841
      %v1094 = vpop.f32.mrf.mxu0
      %v1095 = vadd.f32 %v646, %v1094
      %v1096 = vpop.f32.mrf.mxu0
      %1097 = vmatprep.mubr.f32.mxu0 0.0
      %1098 = vmatmul.mubr.f32.gmra.mxu0 %v844
      %v1099 = vpop.f32.mrf.mxu0
      %v1100 = vadd.f32 %v651, %v1099
      %v1101 = vpop.f32.mrf.mxu0
      %1102 = vmatprep.mubr.f32.mxu0 0.0
      %1103 = vmatmul.mubr.f32.gmra.mxu0 %v847
      %v1104 = vpop.f32.mrf.mxu0
      %v1105 = vadd.f32 %v656, %v1104
      %v1106 = vpop.f32.mrf.mxu0
      %1107 = vmatprep.mubr.f32.mxu0 0.0
      %1108 = vmatmul.mubr.f32.gmra.mxu0 %v850
      %v1109 = vpop.f32.mrf.mxu0
      %v1110 = vadd.f32 %v661, %v1109
      %v1111 = vpop.f32.mrf.mxu0
      %1112 = vmatprep.mubr.f32.mxu0 0.0
      %1113 = vmatmul.mubr.f32.gmra.mxu0 %v853
      %v1114 = vpop.f32.mrf.mxu0
      %v1115 = vadd.f32 %v666, %v1114
      %v1116 = vpop.f32.mrf.mxu0
      %1117 = vmatprep.mubr.f32.mxu0 0.0
      %1118 = vmatmul.mubr.f32.gmra.mxu0 %v856
      %v1119 = vpop.f32.mrf.mxu0
      %v1120 = vadd.f32 %v671, %v1119
      %v1121 = vpop.f32.mrf.mxu0
      %1122 = vmatprep.mubr.f32.mxu0 0.0
      %1123 = vmatmul.mubr.f32.gmra.mxu0 %v859
      %v1124 = vpop.f32.mrf.mxu0
      %v1125 = vadd.f32 %v676, %v1124
      %v1126 = vpop.f32.mrf.mxu0
      %1127 = vmatprep.mubr.f32.mxu0 0.0
      %1128 = vmatmul.mubr.f32.gmra.mxu0 %v862
      %v1129 = vpop.f32.mrf.mxu0
      %v1130 = vadd.f32 %v681, %v1129
      %v1131 = vpop.f32.mrf.mxu0
      %1132 = vmatprep.mubr.f32.mxu0 0.0
      %1133 = vmatmul.mubr.f32.gmra.mxu0 %v865
      %v1134 = vpop.f32.mrf.mxu0
      %v1135 = vadd.f32 %v686, %v1134
      %v1136 = vpop.f32.mrf.mxu0
      %1137 = vmatprep.mubr.f32.mxu0 0.0
      %1138 = vmatmul.mubr.f32.gmra.mxu0 %v868
      %v1139 = vpop.f32.mrf.mxu0
      %v1140 = vadd.f32 %v691, %v1139
      %v1141 = vpop.f32.mrf.mxu0
      %1142 = vmatprep.mubr.f32.mxu0 0.0
      %1143 = vmatmul.mubr.f32.gmra.mxu0 %v871
      %v1144 = vpop.f32.mrf.mxu0
      %v1145 = vadd.f32 %v696, %v1144
      %v1146 = vpop.f32.mrf.mxu0
      %1147 = vmatprep.mubr.f32.mxu0 0.0
      %1148 = vmatmul.mubr.f32.gmra.mxu0 %v874
      %v1149 = vpop.f32.mrf.mxu0
      %v1150 = vadd.f32 %v701, %v1149
      %v1151 = vpop.f32.mrf.mxu0
      %1152 = vmatprep.mubr.f32.mxu0 0.0
      %1153 = vmatmul.mubr.f32.gmra.mxu0 %v877
      %v1154 = vpop.f32.mrf.mxu0
      %v1155 = vadd.f32 %v706, %v1154
      %v1156 = vpop.f32.mrf.mxu0
      %1157 = vmatprep.mubr.f32.mxu0 0.0
      %1158 = vmatmul.mubr.f32.gmra.mxu0 %v880
      %v1159 = vpop.f32.mrf.mxu0
      %v1160 = vadd.f32 %v711, %v1159
      %v1161 = vpop.f32.mrf.mxu0
      %1162 = vmatprep.mubr.f32.mxu0 0.0
      %1163 = vmatmul.mubr.f32.gmra.mxu0 %v883
      %v1164 = vpop.f32.mrf.mxu0
      %v1165 = vadd.f32 %v716, %v1164
      %v1166 = vpop.f32.mrf.mxu0
      %1167 = vmatprep.mubr.f32.mxu0 0.0
      %1168 = vmatmul.mubr.f32.gmra.mxu0 %v886
      %v1169 = vpop.f32.mrf.mxu0
      %v1170 = vadd.f32 %v721, %v1169
      %v1171 = vpop.f32.mrf.mxu0
      %1172 = vmatprep.mubr.f32.mxu0 0.0
      %1173 = vmatmul.mubr.f32.gmra.mxu0 %v889
      %v1174 = vpop.f32.mrf.mxu0
      %v1175 = vadd.f32 %v726, %v1174
      %v1176 = vpop.f32.mrf.mxu0
      %1177 = vmatprep.mubr.f32.mxu0 0.0
      %1178 = vmatmul.mubr.f32.gmra.mxu0 %v892
      %v1179 = vpop.f32.mrf.mxu0
      %v1180 = vadd.f32 %v731, %v1179
      %v1181 = vpop.f32.mrf.mxu0
      %1182 = vmatprep.mubr.f32.mxu0 0.0
      %1183 = vmatmul.mubr.f32.gmra.mxu0 %v895
      %v1184 = vpop.f32.mrf.mxu0
      %v1185 = vadd.f32 %v736, %v1184
      %v1186 = vpop.f32.mrf.mxu0
      %1187 = vmatprep.mubr.f32.mxu0 0.0
      %1188 = vmatmul.mubr.f32.gmra.mxu0 %v898
      %v1189 = vpop.f32.mrf.mxu0
      %v1190 = vadd.f32 %v741, %v1189
      %v1191 = vpop.f32.mrf.mxu0
      %1192 = vmatprep.mubr.f32.mxu0 0.0
      %1193 = vmatmul.mubr.f32.gmra.mxu0 %v901
      %v1194 = vpop.f32.mrf.mxu0
      %v1195 = vadd.f32 %v746, %v1194
      %v1196 = vpop.f32.mrf.mxu0
      %1197 = vmatprep.mubr.f32.mxu0 0.0
      %1198 = vmatmul.mubr.f32.gmra.mxu0 %v904
      %v1199 = vpop.f32.mrf.mxu0
      %v1200 = vadd.f32 %v751, %v1199
      %v1201 = vpop.f32.mrf.mxu0
      %1202 = vmatprep.mubr.f32.mxu0 0.0
      %1203 = vmatmul.mubr.f32.gmra.mxu0 %v907
      %v1204 = vpop.f32.mrf.mxu0
      %v1205 = vadd.f32 %v756, %v1204
      %v1206 = vpop.f32.mrf.mxu0
      %1207 = vmatprep.mubr.f32.mxu0 0.0
      %1208 = vmatmul.mubr.f32.gmra.mxu0 %v910
      %v1209 = vpop.f32.mrf.mxu0
      %v1210 = vadd.f32 %v761, %v1209
      %v1211 = vpop.f32.mrf.mxu0
      %1212 = vmatprep.mubr.f32.mxu0 0.0
      %1213 = vmatmul.mubr.f32.gmra.mxu0 %v913
      %v1214 = vpop.f32.mrf.mxu0
      %v1215 = vadd.f32 %v766, %v1214
      %v1216 = vpop.f32.mrf.mxu0
      %1217 = vmatprep.mubr.f32.mxu0 0.0
      %1218 = vmatmul.mubr.f32.gmra.mxu0 %v916
      %v1219 = vpop.f32.mrf.mxu0
      %v1220 = vadd.f32 %v771, %v1219
      %v1221 = vpop.f32.mrf.mxu0
      %1222 = vdwg.mxu0
      %v1223 = vld [vmem:[%s219 + $0x2] sm:$0xff]
      %v1224 = vld [vmem:[%s219 + $0xa] sm:$0xff]
      %v1225 = vld [vmem:[%s219 + $0x12] sm:$0xff]
      %v1226 = vld [vmem:[%s219 + $0x22] sm:$0xff]
      %v1227 = vld [vmem:[%s219 + $0x2a] sm:$0xff]
      %v1228 = vld [vmem:[%s219 + $0x32] sm:$0xff]
      %v1229 = vld [vmem:[%s219 + $0x42] sm:$0xff]
      %v1230 = vld [vmem:[%s219 + $0x4a] sm:$0xff]
      %v1231 = vld [vmem:[%s219 + $0x52] sm:$0xff]
      %v1232 = vld [vmem:[%s219 + $0x62] sm:$0xff]
      %v1233 = vld [vmem:[%s219 + $0x6a] sm:$0xff]
      %v1234 = vld [vmem:[%s219 + $0x72] sm:$0xff]
      %v1235 = vld [vmem:[%s219 + $0x82] sm:$0xff]
      %v1236 = vld [vmem:[%s219 + $0x8a] sm:$0xff]
      %v1237 = vld [vmem:[%s219 + $0x92] sm:$0xff]
      %v1238 = vld [vmem:[%s219 + $0xa2] sm:$0xff]
      %v1239 = vld [vmem:[%s219 + $0xaa] sm:$0xff]
      %v1240 = vld [vmem:[%s219 + $0xb2] sm:$0xff]
      %v1241 = vld [vmem:[%s219 + $0xc2] sm:$0xff]
      %v1242 = vld [vmem:[%s219 + $0xca] sm:$0xff]
      %v1243 = vld [vmem:[%s219 + $0xd2] sm:$0xff]
      %v1244 = vld [vmem:[%s219 + $0xe2] sm:$0xff]
      %v1245 = vld [vmem:[%s219 + $0xea] sm:$0xff]
      %v1246 = vld [vmem:[%s219 + $0xf2] sm:$0xff]
      %v1247 = vld [vmem:[%s219 + $0x102] sm:$0xff]
      %v1248 = vld [vmem:[%s219 + $0x10a] sm:$0xff]
      %v1249 = vld [vmem:[%s219 + $0x112] sm:$0xff]
      %v1250 = vld [vmem:[%s219 + $0x122] sm:$0xff]
      %v1251 = vld [vmem:[%s219 + $0x12a] sm:$0xff]
      %v1252 = vld [vmem:[%s219 + $0x132] sm:$0xff]
      %v1253 = vld [vmem:[%s219 + $0x142] sm:$0xff]
      %v1254 = vld [vmem:[%s219 + $0x14a] sm:$0xff]
      %v1255 = vld [vmem:[%s219 + $0x152] sm:$0xff]
      %v1256 = vld [vmem:[%s219 + $0x162] sm:$0xff]
      %v1257 = vld [vmem:[%s219 + $0x16a] sm:$0xff]
      %v1258 = vld [vmem:[%s219 + $0x172] sm:$0xff]
      %v1259 = vld [vmem:[%s219 + $0x182] sm:$0xff]
      %v1260 = vld [vmem:[%s219 + $0x18a] sm:$0xff]
      %v1261 = vld [vmem:[%s219 + $0x192] sm:$0xff]
      %v1262 = vld [vmem:[%s219 + $0x1a2] sm:$0xff]
      %v1263 = vld [vmem:[%s219 + $0x1aa] sm:$0xff]
      %v1264 = vld [vmem:[%s219 + $0x1b2] sm:$0xff]
      %v1265 = vld [vmem:[%s219 + $0x1c2] sm:$0xff]
      %v1266 = vld [vmem:[%s219 + $0x1ca] sm:$0xff]
      %v1267 = vld [vmem:[%s219 + $0x1d2] sm:$0xff]
      %v1268 = vld [vmem:[%s219 + $0x1e2] sm:$0xff]
      %v1269 = vld [vmem:[%s219 + $0x1ea] sm:$0xff]
      %v1270 = vld [vmem:[%s219 + $0x1f2] sm:$0xff]
      %s1271 = scalar_lea.vmem %s1, 16
      %v1272 = vld [vmem:[%s1271] sm:$0xff]
      %v1274 = vsel %vm324, %v1223, 0
      %v1277 = vsel %vm324, %v1224, 0
      %v1280 = vsel %vm324, %v1225, 0
      %v1283 = vsel %vm324, %v1226, 0
      %v1286 = vsel %vm324, %v1227, 0
      %v1289 = vsel %vm324, %v1228, 0
      %v1292 = vsel %vm324, %v1229, 0
      %v1295 = vsel %vm324, %v1230, 0
      %v1298 = vsel %vm324, %v1231, 0
      %v1301 = vsel %vm324, %v1232, 0
      %v1304 = vsel %vm324, %v1233, 0
      %v1307 = vsel %vm324, %v1234, 0
      %v1310 = vsel %vm324, %v1235, 0
      %v1313 = vsel %vm324, %v1236, 0
      %v1316 = vsel %vm324, %v1237, 0
      %v1319 = vsel %vm324, %v1238, 0
      %v1322 = vsel %vm324, %v1239, 0
      %v1325 = vsel %vm324, %v1240, 0
      %v1328 = vsel %vm324, %v1241, 0
      %v1331 = vsel %vm324, %v1242, 0
      %v1334 = vsel %vm324, %v1243, 0
      %v1337 = vsel %vm324, %v1244, 0
      %v1340 = vsel %vm324, %v1245, 0
      %v1343 = vsel %vm324, %v1246, 0
      %v1346 = vsel %vm324, %v1247, 0
      %v1349 = vsel %vm324, %v1248, 0
      %v1352 = vsel %vm324, %v1249, 0
      %v1355 = vsel %vm324, %v1250, 0
      %v1358 = vsel %vm324, %v1251, 0
      %v1361 = vsel %vm324, %v1252, 0
      %v1364 = vsel %vm324, %v1253, 0
      %v1367 = vsel %vm324, %v1254, 0
      %v1370 = vsel %vm324, %v1255, 0
      %v1373 = vsel %vm324, %v1256, 0
      %v1376 = vsel %vm324, %v1257, 0
      %v1379 = vsel %vm324, %v1258, 0
      %v1382 = vsel %vm324, %v1259, 0
      %v1385 = vsel %vm324, %v1260, 0
      %v1388 = vsel %vm324, %v1261, 0
      %v1391 = vsel %vm324, %v1262, 0
      %v1394 = vsel %vm324, %v1263, 0
      %v1397 = vsel %vm324, %v1264, 0
      %v1400 = vsel %vm324, %v1265, 0
      %v1403 = vsel %vm324, %v1266, 0
      %v1406 = vsel %vm324, %v1267, 0
      %v1409 = vsel %vm324, %v1268, 0
      %v1412 = vsel %vm324, %v1269, 0
      %v1415 = vsel %vm324, %v1270, 0
      %1417 = vmatprep.subr.mxu0 0.0
      %1418 = vmatpush1.msra.mxu0 0.0
      %1419 = vmatprep.subr.mxu0 0.0
      %1420 = vmatpush1.msra.mxu0 0.0
      %1421 = vmatprep.subr.mxu0 0.0
      %1422 = vmatpush1.msra.mxu0 0.0
      %1423 = vmatprep.subr.mxu0 0.0
      %1424 = vmatpush1.msra.mxu0 0.0
      %1425 = vmatprep.subr.mxu0 0.0
      %1426 = vmatpush1.msra.mxu0 0.0
      %1427 = vmatprep.subr.mxu0 0.0
      %1428 = vmatpush1.msra.mxu0 0.0
      %1429 = vmatprep.subr.mxu0 0.0
      %1430 = vmatpush1.msra.mxu0 0.0
      %1431 = vmatprep.subr.mxu0 0.0
      %1432 = vmatpush1.msra.mxu0 0.0
      %1433 = vmatprep.subr.mxu0 0.0
      %1434 = vmatpush1.msra.mxu0 0.0
      %1435 = vmatprep.subr.mxu0 0.0
      %1436 = vmatpush1.msra.mxu0 0.0
      %1437 = vmatprep.subr.mxu0 0.0
      %1438 = vmatpush1.msra.mxu0 0.0
      %1439 = vmatprep.subr.mxu0 0.0
      %1440 = vmatpush1.msra.mxu0 0.0
      %1441 = vmatprep.subr.mxu0 0.0
      %1442 = vmatpush1.msra.mxu0 0.0
      %1443 = vmatprep.subr.mxu0 0.0
      %1444 = vmatpush1.msra.mxu0 0.0
      %1445 = vmatprep.subr.mxu0 0.0
      %1446 = vmatpush1.msra.mxu0 0.0
      %1447 = vmatprep.subr.mxu0 0.0
      %1448 = vmatpush1.msra.mxu0 %v1272
      %1449 = vmatprep.subr.mxu0 0.0
      %1450 = vmatpush2.msra.mxu0 0.0
      %1451 = vmatprep.subr.mxu0 0.0
      %1452 = vmatpush2.msra.mxu0 0.0
      %1453 = vmatprep.subr.mxu0 0.0
      %1454 = vmatpush2.msra.mxu0 0.0
      %1455 = vmatprep.subr.mxu0 0.0
      %1456 = vmatpush2.msra.mxu0 0.0
      %1457 = vmatprep.subr.mxu0 0.0
      %1458 = vmatpush2.msra.mxu0 0.0
      %1459 = vmatprep.subr.mxu0 0.0
      %1460 = vmatpush2.msra.mxu0 0.0
      %1461 = vmatprep.subr.mxu0 0.0
      %1462 = vmatpush2.msra.mxu0 0.0
      %1463 = vmatprep.subr.mxu0 0.0
      %1464 = vmatpush2.msra.mxu0 0.0
      %1465 = vmatprep.subr.mxu0 0.0
      %1466 = vmatpush2.msra.mxu0 0.0
      %1467 = vmatprep.subr.mxu0 0.0
      %1468 = vmatpush2.msra.mxu0 0.0
      %1469 = vmatprep.subr.mxu0 0.0
      %1470 = vmatpush2.msra.mxu0 0.0
      %1471 = vmatprep.subr.mxu0 0.0
      %1472 = vmatpush2.msra.mxu0 0.0
      %1473 = vmatprep.subr.mxu0 0.0
      %1474 = vmatpush2.msra.mxu0 0.0
      %1475 = vmatprep.subr.mxu0 0.0
      %1476 = vmatpush2.msra.mxu0 0.0
      %1477 = vmatprep.subr.mxu0 0.0
      %1478 = vmatpush2.msra.mxu0 0.0
      %1479 = vmatprep.subr.mxu0 0.0
      %1480 = vmatpush2.msra.mxu0 0.0
      %1481 = vmatprep.mubr.f32.mxu0 0.0
      %1482 = vmatmul.mubr.f32.gmra.mxu0 %v1274
      %v1483 = vpop.f32.mrf.mxu0
      %v1484 = vadd.f32 0.0, %v1483
      %v1485 = vpop.f32.mrf.mxu0
      %1486 = vmatprep.mubr.f32.mxu0 0.0
      %1487 = vmatmul.mubr.f32.gmra.mxu0 %v1277
      %v1488 = vpop.f32.mrf.mxu0
      %v1489 = vadd.f32 0.0, %v1488
      %v1490 = vpop.f32.mrf.mxu0
      %1491 = vmatprep.mubr.f32.mxu0 0.0
      %1492 = vmatmul.mubr.f32.gmra.mxu0 %v1280
      %v1493 = vpop.f32.mrf.mxu0
      %v1494 = vadd.f32 0.0, %v1493
      %v1495 = vpop.f32.mrf.mxu0
      %1496 = vmatprep.mubr.f32.mxu0 0.0
      %1497 = vmatmul.mubr.f32.gmra.mxu0 %v1283
      %v1498 = vpop.f32.mrf.mxu0
      %v1499 = vadd.f32 0.0, %v1498
      %v1500 = vpop.f32.mrf.mxu0
      %1501 = vmatprep.mubr.f32.mxu0 0.0
      %1502 = vmatmul.mubr.f32.gmra.mxu0 %v1286
      %v1503 = vpop.f32.mrf.mxu0
      %v1504 = vadd.f32 0.0, %v1503
      %v1505 = vpop.f32.mrf.mxu0
      %1506 = vmatprep.mubr.f32.mxu0 0.0
      %1507 = vmatmul.mubr.f32.gmra.mxu0 %v1289
      %v1508 = vpop.f32.mrf.mxu0
      %v1509 = vadd.f32 0.0, %v1508
      %v1510 = vpop.f32.mrf.mxu0
      %1511 = vmatprep.mubr.f32.mxu0 0.0
      %1512 = vmatmul.mubr.f32.gmra.mxu0 %v1292
      %v1513 = vpop.f32.mrf.mxu0
      %v1514 = vadd.f32 0.0, %v1513
      %v1515 = vpop.f32.mrf.mxu0
      %1516 = vmatprep.mubr.f32.mxu0 0.0
      %1517 = vmatmul.mubr.f32.gmra.mxu0 %v1295
      %v1518 = vpop.f32.mrf.mxu0
      %v1519 = vadd.f32 0.0, %v1518
      %v1520 = vpop.f32.mrf.mxu0
      %1521 = vmatprep.mubr.f32.mxu0 0.0
      %1522 = vmatmul.mubr.f32.gmra.mxu0 %v1298
      %v1523 = vpop.f32.mrf.mxu0
      %v1524 = vadd.f32 0.0, %v1523
      %v1525 = vpop.f32.mrf.mxu0
      %1526 = vmatprep.mubr.f32.mxu0 0.0
      %1527 = vmatmul.mubr.f32.gmra.mxu0 %v1301
      %v1528 = vpop.f32.mrf.mxu0
      %v1529 = vadd.f32 0.0, %v1528
      %v1530 = vpop.f32.mrf.mxu0
      %1531 = vmatprep.mubr.f32.mxu0 0.0
      %1532 = vmatmul.mubr.f32.gmra.mxu0 %v1304
      %v1533 = vpop.f32.mrf.mxu0
      %v1534 = vadd.f32 0.0, %v1533
      %v1535 = vpop.f32.mrf.mxu0
      %1536 = vmatprep.mubr.f32.mxu0 0.0
      %1537 = vmatmul.mubr.f32.gmra.mxu0 %v1307
      %v1538 = vpop.f32.mrf.mxu0
      %v1539 = vadd.f32 0.0, %v1538
      %v1540 = vpop.f32.mrf.mxu0
      %1541 = vmatprep.mubr.f32.mxu0 0.0
      %1542 = vmatmul.mubr.f32.gmra.mxu0 %v1310
      %v1543 = vpop.f32.mrf.mxu0
      %v1544 = vadd.f32 0.0, %v1543
      %v1545 = vpop.f32.mrf.mxu0
      %1546 = vmatprep.mubr.f32.mxu0 0.0
      %1547 = vmatmul.mubr.f32.gmra.mxu0 %v1313
      %v1548 = vpop.f32.mrf.mxu0
      %v1549 = vadd.f32 0.0, %v1548
      %v1550 = vpop.f32.mrf.mxu0
      %1551 = vmatprep.mubr.f32.mxu0 0.0
      %1552 = vmatmul.mubr.f32.gmra.mxu0 %v1316
      %v1553 = vpop.f32.mrf.mxu0
      %v1554 = vadd.f32 0.0, %v1553
      %v1555 = vpop.f32.mrf.mxu0
      %1556 = vmatprep.mubr.f32.mxu0 0.0
      %1557 = vmatmul.mubr.f32.gmra.mxu0 %v1319
      %v1558 = vpop.f32.mrf.mxu0
      %v1559 = vadd.f32 0.0, %v1558
      %v1560 = vpop.f32.mrf.mxu0
      %1561 = vmatprep.mubr.f32.mxu0 0.0
      %1562 = vmatmul.mubr.f32.gmra.mxu0 %v1322
      %v1563 = vpop.f32.mrf.mxu0
      %v1564 = vadd.f32 0.0, %v1563
      %v1565 = vpop.f32.mrf.mxu0
      %1566 = vmatprep.mubr.f32.mxu0 0.0
      %1567 = vmatmul.mubr.f32.gmra.mxu0 %v1325
      %v1568 = vpop.f32.mrf.mxu0
      %v1569 = vadd.f32 0.0, %v1568
      %v1570 = vpop.f32.mrf.mxu0
      %1571 = vmatprep.mubr.f32.mxu0 0.0
      %1572 = vmatmul.mubr.f32.gmra.mxu0 %v1328
      %v1573 = vpop.f32.mrf.mxu0
      %v1574 = vadd.f32 0.0, %v1573
      %v1575 = vpop.f32.mrf.mxu0
      %1576 = vmatprep.mubr.f32.mxu0 0.0
      %1577 = vmatmul.mubr.f32.gmra.mxu0 %v1331
      %v1578 = vpop.f32.mrf.mxu0
      %v1579 = vadd.f32 0.0, %v1578
      %v1580 = vpop.f32.mrf.mxu0
      %1581 = vmatprep.mubr.f32.mxu0 0.0
      %1582 = vmatmul.mubr.f32.gmra.mxu0 %v1334
      %v1583 = vpop.f32.mrf.mxu0
      %v1584 = vadd.f32 0.0, %v1583
      %v1585 = vpop.f32.mrf.mxu0
      %1586 = vmatprep.mubr.f32.mxu0 0.0
      %1587 = vmatmul.mubr.f32.gmra.mxu0 %v1337
      %v1588 = vpop.f32.mrf.mxu0
      %v1589 = vadd.f32 0.0, %v1588
      %v1590 = vpop.f32.mrf.mxu0
      %1591 = vmatprep.mubr.f32.mxu0 0.0
      %1592 = vmatmul.mubr.f32.gmra.mxu0 %v1340
      %v1593 = vpop.f32.mrf.mxu0
      %v1594 = vadd.f32 0.0, %v1593
      %v1595 = vpop.f32.mrf.mxu0
      %1596 = vmatprep.mubr.f32.mxu0 0.0
      %1597 = vmatmul.mubr.f32.gmra.mxu0 %v1343
      %v1598 = vpop.f32.mrf.mxu0
      %v1599 = vadd.f32 0.0, %v1598
      %v1600 = vpop.f32.mrf.mxu0
      %1601 = vmatprep.mubr.f32.mxu0 0.0
      %1602 = vmatmul.mubr.f32.gmra.mxu0 %v1346
      %v1603 = vpop.f32.mrf.mxu0
      %v1604 = vadd.f32 0.0, %v1603
      %v1605 = vpop.f32.mrf.mxu0
      %1606 = vmatprep.mubr.f32.mxu0 0.0
      %1607 = vmatmul.mubr.f32.gmra.mxu0 %v1349
      %v1608 = vpop.f32.mrf.mxu0
      %v1609 = vadd.f32 0.0, %v1608
      %v1610 = vpop.f32.mrf.mxu0
      %1611 = vmatprep.mubr.f32.mxu0 0.0
      %1612 = vmatmul.mubr.f32.gmra.mxu0 %v1352
      %v1613 = vpop.f32.mrf.mxu0
      %v1614 = vadd.f32 0.0, %v1613
      %v1615 = vpop.f32.mrf.mxu0
      %1616 = vmatprep.mubr.f32.mxu0 0.0
      %1617 = vmatmul.mubr.f32.gmra.mxu0 %v1355
      %v1618 = vpop.f32.mrf.mxu0
      %v1619 = vadd.f32 0.0, %v1618
      %v1620 = vpop.f32.mrf.mxu0
      %1621 = vmatprep.mubr.f32.mxu0 0.0
      %1622 = vmatmul.mubr.f32.gmra.mxu0 %v1358
      %v1623 = vpop.f32.mrf.mxu0
      %v1624 = vadd.f32 0.0, %v1623
      %v1625 = vpop.f32.mrf.mxu0
      %1626 = vmatprep.mubr.f32.mxu0 0.0
      %1627 = vmatmul.mubr.f32.gmra.mxu0 %v1361
      %v1628 = vpop.f32.mrf.mxu0
      %v1629 = vadd.f32 0.0, %v1628
      %v1630 = vpop.f32.mrf.mxu0
      %1631 = vmatprep.mubr.f32.mxu0 0.0
      %1632 = vmatmul.mubr.f32.gmra.mxu0 %v1364
      %v1633 = vpop.f32.mrf.mxu0
      %v1634 = vadd.f32 0.0, %v1633
      %v1635 = vpop.f32.mrf.mxu0
      %1636 = vmatprep.mubr.f32.mxu0 0.0
      %1637 = vmatmul.mubr.f32.gmra.mxu0 %v1367
      %v1638 = vpop.f32.mrf.mxu0
      %v1639 = vadd.f32 0.0, %v1638
      %v1640 = vpop.f32.mrf.mxu0
      %1641 = vmatprep.mubr.f32.mxu0 0.0
      %1642 = vmatmul.mubr.f32.gmra.mxu0 %v1370
      %v1643 = vpop.f32.mrf.mxu0
      %v1644 = vadd.f32 0.0, %v1643
      %v1645 = vpop.f32.mrf.mxu0
      %1646 = vmatprep.mubr.f32.mxu0 0.0
      %1647 = vmatmul.mubr.f32.gmra.mxu0 %v1373
      %v1648 = vpop.f32.mrf.mxu0
      %v1649 = vadd.f32 0.0, %v1648
      %v1650 = vpop.f32.mrf.mxu0
      %1651 = vmatprep.mubr.f32.mxu0 0.0
      %1652 = vmatmul.mubr.f32.gmra.mxu0 %v1376
      %v1653 = vpop.f32.mrf.mxu0
      %v1654 = vadd.f32 0.0, %v1653
      %v1655 = vpop.f32.mrf.mxu0
      %1656 = vmatprep.mubr.f32.mxu0 0.0
      %1657 = vmatmul.mubr.f32.gmra.mxu0 %v1379
      %v1658 = vpop.f32.mrf.mxu0
      %v1659 = vadd.f32 0.0, %v1658
      %v1660 = vpop.f32.mrf.mxu0
      %1661 = vmatprep.mubr.f32.mxu0 0.0
      %1662 = vmatmul.mubr.f32.gmra.mxu0 %v1382
      %v1663 = vpop.f32.mrf.mxu0
      %v1664 = vadd.f32 0.0, %v1663
      %v1665 = vpop.f32.mrf.mxu0
      %1666 = vmatprep.mubr.f32.mxu0 0.0
      %1667 = vmatmul.mubr.f32.gmra.mxu0 %v1385
      %v1668 = vpop.f32.mrf.mxu0
      %v1669 = vadd.f32 0.0, %v1668
      %v1670 = vpop.f32.mrf.mxu0
      %1671 = vmatprep.mubr.f32.mxu0 0.0
      %1672 = vmatmul.mubr.f32.gmra.mxu0 %v1388
      %v1673 = vpop.f32.mrf.mxu0
      %v1674 = vadd.f32 0.0, %v1673
      %v1675 = vpop.f32.mrf.mxu0
      %1676 = vmatprep.mubr.f32.mxu0 0.0
      %1677 = vmatmul.mubr.f32.gmra.mxu0 %v1391
      %v1678 = vpop.f32.mrf.mxu0
      %v1679 = vadd.f32 0.0, %v1678
      %v1680 = vpop.f32.mrf.mxu0
      %1681 = vmatprep.mubr.f32.mxu0 0.0
      %1682 = vmatmul.mubr.f32.gmra.mxu0 %v1394
      %v1683 = vpop.f32.mrf.mxu0
      %v1684 = vadd.f32 0.0, %v1683
      %v1685 = vpop.f32.mrf.mxu0
      %1686 = vmatprep.mubr.f32.mxu0 0.0
      %1687 = vmatmul.mubr.f32.gmra.mxu0 %v1397
      %v1688 = vpop.f32.mrf.mxu0
      %v1689 = vadd.f32 0.0, %v1688
      %v1690 = vpop.f32.mrf.mxu0
      %1691 = vmatprep.mubr.f32.mxu0 0.0
      %1692 = vmatmul.mubr.f32.gmra.mxu0 %v1400
      %v1693 = vpop.f32.mrf.mxu0
      %v1694 = vadd.f32 0.0, %v1693
      %v1695 = vpop.f32.mrf.mxu0
      %1696 = vmatprep.mubr.f32.mxu0 0.0
      %1697 = vmatmul.mubr.f32.gmra.mxu0 %v1403
      %v1698 = vpop.f32.mrf.mxu0
      %v1699 = vadd.f32 0.0, %v1698
      %v1700 = vpop.f32.mrf.mxu0
      %1701 = vmatprep.mubr.f32.mxu0 0.0
      %1702 = vmatmul.mubr.f32.gmra.mxu0 %v1406
      %v1703 = vpop.f32.mrf.mxu0
      %v1704 = vadd.f32 0.0, %v1703
      %v1705 = vpop.f32.mrf.mxu0
      %1706 = vmatprep.mubr.f32.mxu0 0.0
      %1707 = vmatmul.mubr.f32.gmra.mxu0 %v1409
      %v1708 = vpop.f32.mrf.mxu0
      %v1709 = vadd.f32 0.0, %v1708
      %v1710 = vpop.f32.mrf.mxu0
      %1711 = vmatprep.mubr.f32.mxu0 0.0
      %1712 = vmatmul.mubr.f32.gmra.mxu0 %v1412
      %v1713 = vpop.f32.mrf.mxu0
      %v1714 = vadd.f32 0.0, %v1713
      %v1715 = vpop.f32.mrf.mxu0
      %1716 = vmatprep.mubr.f32.mxu0 0.0
      %1717 = vmatmul.mubr.f32.gmra.mxu0 %v1415
      %v1718 = vpop.f32.mrf.mxu0
      %v1719 = vadd.f32 0.0, %v1718
      %v1720 = vpop.f32.mrf.mxu0
      %1721 = vdwg.mxu0
      %v1722 = vadd.f32 %v985, %v1484
      %v1723 = vadd.f32 %v990, %v1489
      %v1724 = vadd.f32 %v995, %v1494
      %v1725 = vadd.f32 %v1000, %v1499
      %v1726 = vadd.f32 %v1005, %v1504
      %v1727 = vadd.f32 %v1010, %v1509
      %v1728 = vadd.f32 %v1015, %v1514
      %v1729 = vadd.f32 %v1020, %v1519
      %v1730 = vadd.f32 %v1025, %v1524
      %v1731 = vadd.f32 %v1030, %v1529
      %v1732 = vadd.f32 %v1035, %v1534
      %v1733 = vadd.f32 %v1040, %v1539
      %v1734 = vadd.f32 %v1045, %v1544
      %v1735 = vadd.f32 %v1050, %v1549
      %v1736 = vadd.f32 %v1055, %v1554
      %v1737 = vadd.f32 %v1060, %v1559
      %v1738 = vadd.f32 %v1065, %v1564
      %v1739 = vadd.f32 %v1070, %v1569
      %v1740 = vadd.f32 %v1075, %v1574
      %v1741 = vadd.f32 %v1080, %v1579
      %v1742 = vadd.f32 %v1085, %v1584
      %v1743 = vadd.f32 %v1090, %v1589
      %v1744 = vadd.f32 %v1095, %v1594
      %v1745 = vadd.f32 %v1100, %v1599
      %v1746 = vadd.f32 %v1105, %v1604
      %v1747 = vadd.f32 %v1110, %v1609
      %v1748 = vadd.f32 %v1115, %v1614
      %v1749 = vadd.f32 %v1120, %v1619
      %v1750 = vadd.f32 %v1125, %v1624
      %v1751 = vadd.f32 %v1130, %v1629
      %v1752 = vadd.f32 %v1135, %v1634
      %v1753 = vadd.f32 %v1140, %v1639
      %v1754 = vadd.f32 %v1145, %v1644
      %v1755 = vadd.f32 %v1150, %v1649
      %v1756 = vadd.f32 %v1155, %v1654
      %v1757 = vadd.f32 %v1160, %v1659
      %v1758 = vadd.f32 %v1165, %v1664
      %v1759 = vadd.f32 %v1170, %v1669
      %v1760 = vadd.f32 %v1175, %v1674
      %v1761 = vadd.f32 %v1180, %v1679
      %v1762 = vadd.f32 %v1185, %v1684
      %v1763 = vadd.f32 %v1190, %v1689
      %v1764 = vadd.f32 %v1195, %v1694
      %v1765 = vadd.f32 %v1200, %v1699
      %v1766 = vadd.f32 %v1205, %v1704
      %v1767 = vadd.f32 %v1210, %v1709
      %v1768 = vadd.f32 %v1215, %v1714
      %v1769 = vadd.f32 %v1220, %v1719
      %s1770 = scalar_lea.vmem %s219, 32
      %v1771 = vld [vmem:[%s1770] sm:$0xff]
      %v1772 = vld [vmem:[%s1770 + $0x8] sm:$0xff]
      %v1773 = vld [vmem:[%s1770 + $0x10] sm:$0xff]
      %v1774 = vld [vmem:[%s1770 + $0x20] sm:$0xff]
      %v1775 = vld [vmem:[%s1770 + $0x28] sm:$0xff]
      %v1776 = vld [vmem:[%s1770 + $0x30] sm:$0xff]
      %v1777 = vld [vmem:[%s1770 + $0x40] sm:$0xff]
      %v1778 = vld [vmem:[%s1770 + $0x48] sm:$0xff]
      %v1779 = vld [vmem:[%s1770 + $0x50] sm:$0xff]
      %v1780 = vld [vmem:[%s1770 + $0x60] sm:$0xff]
      %v1781 = vld [vmem:[%s1770 + $0x68] sm:$0xff]
      %v1782 = vld [vmem:[%s1770 + $0x70] sm:$0xff]
      %v1783 = vld [vmem:[%s1770 + $0x80] sm:$0xff]
      %v1784 = vld [vmem:[%s1770 + $0x88] sm:$0xff]
      %v1785 = vld [vmem:[%s1770 + $0x90] sm:$0xff]
      %v1786 = vld [vmem:[%s1770 + $0xa0] sm:$0xff]
      %v1787 = vld [vmem:[%s1770 + $0xa8] sm:$0xff]
      %v1788 = vld [vmem:[%s1770 + $0xb0] sm:$0xff]
      %v1789 = vld [vmem:[%s1770 + $0xc0] sm:$0xff]
      %v1790 = vld [vmem:[%s1770 + $0xc8] sm:$0xff]
      %v1791 = vld [vmem:[%s1770 + $0xd0] sm:$0xff]
      %v1792 = vld [vmem:[%s1770 + $0xe0] sm:$0xff]
      %v1793 = vld [vmem:[%s1770 + $0xe8] sm:$0xff]
      %v1794 = vld [vmem:[%s1770 + $0xf0] sm:$0xff]
      %v1795 = vld [vmem:[%s1770 + $0x100] sm:$0xff]
      %v1796 = vld [vmem:[%s1770 + $0x108] sm:$0xff]
      %v1797 = vld [vmem:[%s1770 + $0x110] sm:$0xff]
      %v1798 = vld [vmem:[%s1770 + $0x120] sm:$0xff]
      %v1799 = vld [vmem:[%s1770 + $0x128] sm:$0xff]
      %v1800 = vld [vmem:[%s1770 + $0x130] sm:$0xff]
      %v1801 = vld [vmem:[%s1770 + $0x140] sm:$0xff]
      %v1802 = vld [vmem:[%s1770 + $0x148] sm:$0xff]
      %v1803 = vld [vmem:[%s1770 + $0x150] sm:$0xff]
      %v1804 = vld [vmem:[%s1770 + $0x160] sm:$0xff]
      %v1805 = vld [vmem:[%s1770 + $0x168] sm:$0xff]
      %v1806 = vld [vmem:[%s1770 + $0x170] sm:$0xff]
      %v1807 = vld [vmem:[%s1770 + $0x180] sm:$0xff]
      %v1808 = vld [vmem:[%s1770 + $0x188] sm:$0xff]
      %v1809 = vld [vmem:[%s1770 + $0x190] sm:$0xff]
      %v1810 = vld [vmem:[%s1770 + $0x1a0] sm:$0xff]
      %v1811 = vld [vmem:[%s1770 + $0x1a8] sm:$0xff]
      %v1812 = vld [vmem:[%s1770 + $0x1b0] sm:$0xff]
      %v1813 = vld [vmem:[%s1770 + $0x1c0] sm:$0xff]
      %v1814 = vld [vmem:[%s1770 + $0x1c8] sm:$0xff]
      %v1815 = vld [vmem:[%s1770 + $0x1d0] sm:$0xff]
      %v1816 = vld [vmem:[%s1770 + $0x1e0] sm:$0xff]
      %v1817 = vld [vmem:[%s1770 + $0x1e8] sm:$0xff]
      %v1818 = vld [vmem:[%s1770 + $0x1f0] sm:$0xff]
      %s1819 = scalar_lea.vmem %s1, 24
      %v1820 = vld [vmem:[%s1819] sm:$0xff]
      %v1822 = vsel %vm324, %v1771, 0
      %v1825 = vsel %vm324, %v1772, 0
      %v1828 = vsel %vm324, %v1773, 0
      %v1831 = vsel %vm324, %v1774, 0
      %v1834 = vsel %vm324, %v1775, 0
      %v1837 = vsel %vm324, %v1776, 0
      %v1840 = vsel %vm324, %v1777, 0
      %v1843 = vsel %vm324, %v1778, 0
      %v1846 = vsel %vm324, %v1779, 0
      %v1849 = vsel %vm324, %v1780, 0
      %v1852 = vsel %vm324, %v1781, 0
      %v1855 = vsel %vm324, %v1782, 0
      %v1858 = vsel %vm324, %v1783, 0
      %v1861 = vsel %vm324, %v1784, 0
      %v1864 = vsel %vm324, %v1785, 0
      %v1867 = vsel %vm324, %v1786, 0
      %v1870 = vsel %vm324, %v1787, 0
      %v1873 = vsel %vm324, %v1788, 0
      %v1876 = vsel %vm324, %v1789, 0
      %v1879 = vsel %vm324, %v1790, 0
      %v1882 = vsel %vm324, %v1791, 0
      %v1885 = vsel %vm324, %v1792, 0
      %v1888 = vsel %vm324, %v1793, 0
      %v1891 = vsel %vm324, %v1794, 0
      %v1894 = vsel %vm324, %v1795, 0
      %v1897 = vsel %vm324, %v1796, 0
      %v1900 = vsel %vm324, %v1797, 0
      %v1903 = vsel %vm324, %v1798, 0
      %v1906 = vsel %vm324, %v1799, 0
      %v1909 = vsel %vm324, %v1800, 0
      %v1912 = vsel %vm324, %v1801, 0
      %v1915 = vsel %vm324, %v1802, 0
      %v1918 = vsel %vm324, %v1803, 0
      %v1921 = vsel %vm324, %v1804, 0
      %v1924 = vsel %vm324, %v1805, 0
      %v1927 = vsel %vm324, %v1806, 0
      %v1930 = vsel %vm324, %v1807, 0
      %v1933 = vsel %vm324, %v1808, 0
      %v1936 = vsel %vm324, %v1809, 0
      %v1939 = vsel %vm324, %v1810, 0
      %v1942 = vsel %vm324, %v1811, 0
      %v1945 = vsel %vm324, %v1812, 0
      %v1948 = vsel %vm324, %v1813, 0
      %v1951 = vsel %vm324, %v1814, 0
      %v1954 = vsel %vm324, %v1815, 0
      %v1957 = vsel %vm324, %v1816, 0
      %v1960 = vsel %vm324, %v1817, 0
      %v1963 = vsel %vm324, %v1818, 0
      %1965 = vmatprep.subr.mxu0 0.0
      %1966 = vmatpush1.msra.mxu0 0.0
      %1967 = vmatprep.subr.mxu0 0.0
      %1968 = vmatpush1.msra.mxu0 0.0
      %1969 = vmatprep.subr.mxu0 0.0
      %1970 = vmatpush1.msra.mxu0 0.0
      %1971 = vmatprep.subr.mxu0 0.0
      %1972 = vmatpush1.msra.mxu0 0.0
      %1973 = vmatprep.subr.mxu0 0.0
      %1974 = vmatpush1.msra.mxu0 0.0
      %1975 = vmatprep.subr.mxu0 0.0
      %1976 = vmatpush1.msra.mxu0 0.0
      %1977 = vmatprep.subr.mxu0 0.0
      %1978 = vmatpush1.msra.mxu0 0.0
      %1979 = vmatprep.subr.mxu0 0.0
      %1980 = vmatpush1.msra.mxu0 0.0
      %1981 = vmatprep.subr.mxu0 0.0
      %1982 = vmatpush1.msra.mxu0 0.0
      %1983 = vmatprep.subr.mxu0 0.0
      %1984 = vmatpush1.msra.mxu0 0.0
      %1985 = vmatprep.subr.mxu0 0.0
      %1986 = vmatpush1.msra.mxu0 0.0
      %1987 = vmatprep.subr.mxu0 0.0
      %1988 = vmatpush1.msra.mxu0 0.0
      %1989 = vmatprep.subr.mxu0 0.0
      %1990 = vmatpush1.msra.mxu0 0.0
      %1991 = vmatprep.subr.mxu0 0.0
      %1992 = vmatpush1.msra.mxu0 0.0
      %1993 = vmatprep.subr.mxu0 0.0
      %1994 = vmatpush1.msra.mxu0 0.0
      %1995 = vmatprep.subr.mxu0 0.0
      %1996 = vmatpush1.msra.mxu0 %v1820
      %1997 = vmatprep.subr.mxu0 0.0
      %1998 = vmatpush2.msra.mxu0 0.0
      %1999 = vmatprep.subr.mxu0 0.0
      %2000 = vmatpush2.msra.mxu0 0.0
      %2001 = vmatprep.subr.mxu0 0.0
      %2002 = vmatpush2.msra.mxu0 0.0
      %2003 = vmatprep.subr.mxu0 0.0
      %2004 = vmatpush2.msra.mxu0 0.0
      %2005 = vmatprep.subr.mxu0 0.0
      %2006 = vmatpush2.msra.mxu0 0.0
      %2007 = vmatprep.subr.mxu0 0.0
      %2008 = vmatpush2.msra.mxu0 0.0
      %2009 = vmatprep.subr.mxu0 0.0
      %2010 = vmatpush2.msra.mxu0 0.0
      %2011 = vmatprep.subr.mxu0 0.0
      %2012 = vmatpush2.msra.mxu0 0.0
      %2013 = vmatprep.subr.mxu0 0.0
      %2014 = vmatpush2.msra.mxu0 0.0
      %2015 = vmatprep.subr.mxu0 0.0
      %2016 = vmatpush2.msra.mxu0 0.0
      %2017 = vmatprep.subr.mxu0 0.0
      %2018 = vmatpush2.msra.mxu0 0.0
      %2019 = vmatprep.subr.mxu0 0.0
      %2020 = vmatpush2.msra.mxu0 0.0
      %2021 = vmatprep.subr.mxu0 0.0
      %2022 = vmatpush2.msra.mxu0 0.0
      %2023 = vmatprep.subr.mxu0 0.0
      %2024 = vmatpush2.msra.mxu0 0.0
      %2025 = vmatprep.subr.mxu0 0.0
      %2026 = vmatpush2.msra.mxu0 0.0
      %2027 = vmatprep.subr.mxu0 0.0
      %2028 = vmatpush2.msra.mxu0 0.0
      %2029 = vmatprep.mubr.f32.mxu0 0.0
      %2030 = vmatmul.mubr.f32.gmra.mxu0 %v1822
      %v2031 = vpop.f32.mrf.mxu0
      %v2032 = vadd.f32 0.0, %v2031
      %v2033 = vpop.f32.mrf.mxu0
      %2034 = vmatprep.mubr.f32.mxu0 0.0
      %2035 = vmatmul.mubr.f32.gmra.mxu0 %v1825
      %v2036 = vpop.f32.mrf.mxu0
      %v2037 = vadd.f32 0.0, %v2036
      %v2038 = vpop.f32.mrf.mxu0
      %2039 = vmatprep.mubr.f32.mxu0 0.0
      %2040 = vmatmul.mubr.f32.gmra.mxu0 %v1828
      %v2041 = vpop.f32.mrf.mxu0
      %v2042 = vadd.f32 0.0, %v2041
      %v2043 = vpop.f32.mrf.mxu0
      %2044 = vmatprep.mubr.f32.mxu0 0.0
      %2045 = vmatmul.mubr.f32.gmra.mxu0 %v1831
      %v2046 = vpop.f32.mrf.mxu0
      %v2047 = vadd.f32 0.0, %v2046
      %v2048 = vpop.f32.mrf.mxu0
      %2049 = vmatprep.mubr.f32.mxu0 0.0
      %2050 = vmatmul.mubr.f32.gmra.mxu0 %v1834
      %v2051 = vpop.f32.mrf.mxu0
      %v2052 = vadd.f32 0.0, %v2051
      %v2053 = vpop.f32.mrf.mxu0
      %2054 = vmatprep.mubr.f32.mxu0 0.0
      %2055 = vmatmul.mubr.f32.gmra.mxu0 %v1837
      %v2056 = vpop.f32.mrf.mxu0
      %v2057 = vadd.f32 0.0, %v2056
      %v2058 = vpop.f32.mrf.mxu0
      %2059 = vmatprep.mubr.f32.mxu0 0.0
      %2060 = vmatmul.mubr.f32.gmra.mxu0 %v1840
      %v2061 = vpop.f32.mrf.mxu0
      %v2062 = vadd.f32 0.0, %v2061
      %v2063 = vpop.f32.mrf.mxu0
      %2064 = vmatprep.mubr.f32.mxu0 0.0
      %2065 = vmatmul.mubr.f32.gmra.mxu0 %v1843
      %v2066 = vpop.f32.mrf.mxu0
      %v2067 = vadd.f32 0.0, %v2066
      %v2068 = vpop.f32.mrf.mxu0
      %2069 = vmatprep.mubr.f32.mxu0 0.0
      %2070 = vmatmul.mubr.f32.gmra.mxu0 %v1846
      %v2071 = vpop.f32.mrf.mxu0
      %v2072 = vadd.f32 0.0, %v2071
      %v2073 = vpop.f32.mrf.mxu0
      %2074 = vmatprep.mubr.f32.mxu0 0.0
      %2075 = vmatmul.mubr.f32.gmra.mxu0 %v1849
      %v2076 = vpop.f32.mrf.mxu0
      %v2077 = vadd.f32 0.0, %v2076
      %v2078 = vpop.f32.mrf.mxu0
      %2079 = vmatprep.mubr.f32.mxu0 0.0
      %2080 = vmatmul.mubr.f32.gmra.mxu0 %v1852
      %v2081 = vpop.f32.mrf.mxu0
      %v2082 = vadd.f32 0.0, %v2081
      %v2083 = vpop.f32.mrf.mxu0
      %2084 = vmatprep.mubr.f32.mxu0 0.0
      %2085 = vmatmul.mubr.f32.gmra.mxu0 %v1855
      %v2086 = vpop.f32.mrf.mxu0
      %v2087 = vadd.f32 0.0, %v2086
      %v2088 = vpop.f32.mrf.mxu0
      %2089 = vmatprep.mubr.f32.mxu0 0.0
      %2090 = vmatmul.mubr.f32.gmra.mxu0 %v1858
      %v2091 = vpop.f32.mrf.mxu0
      %v2092 = vadd.f32 0.0, %v2091
      %v2093 = vpop.f32.mrf.mxu0
      %2094 = vmatprep.mubr.f32.mxu0 0.0
      %2095 = vmatmul.mubr.f32.gmra.mxu0 %v1861
      %v2096 = vpop.f32.mrf.mxu0
      %v2097 = vadd.f32 0.0, %v2096
      %v2098 = vpop.f32.mrf.mxu0
      %2099 = vmatprep.mubr.f32.mxu0 0.0
      %2100 = vmatmul.mubr.f32.gmra.mxu0 %v1864
      %v2101 = vpop.f32.mrf.mxu0
      %v2102 = vadd.f32 0.0, %v2101
      %v2103 = vpop.f32.mrf.mxu0
      %2104 = vmatprep.mubr.f32.mxu0 0.0
      %2105 = vmatmul.mubr.f32.gmra.mxu0 %v1867
      %v2106 = vpop.f32.mrf.mxu0
      %v2107 = vadd.f32 0.0, %v2106
      %v2108 = vpop.f32.mrf.mxu0
      %2109 = vmatprep.mubr.f32.mxu0 0.0
      %2110 = vmatmul.mubr.f32.gmra.mxu0 %v1870
      %v2111 = vpop.f32.mrf.mxu0
      %v2112 = vadd.f32 0.0, %v2111
      %v2113 = vpop.f32.mrf.mxu0
      %2114 = vmatprep.mubr.f32.mxu0 0.0
      %2115 = vmatmul.mubr.f32.gmra.mxu0 %v1873
      %v2116 = vpop.f32.mrf.mxu0
      %v2117 = vadd.f32 0.0, %v2116
      %v2118 = vpop.f32.mrf.mxu0
      %2119 = vmatprep.mubr.f32.mxu0 0.0
      %2120 = vmatmul.mubr.f32.gmra.mxu0 %v1876
      %v2121 = vpop.f32.mrf.mxu0
      %v2122 = vadd.f32 0.0, %v2121
      %v2123 = vpop.f32.mrf.mxu0
      %2124 = vmatprep.mubr.f32.mxu0 0.0
      %2125 = vmatmul.mubr.f32.gmra.mxu0 %v1879
      %v2126 = vpop.f32.mrf.mxu0
      %v2127 = vadd.f32 0.0, %v2126
      %v2128 = vpop.f32.mrf.mxu0
      %2129 = vmatprep.mubr.f32.mxu0 0.0
      %2130 = vmatmul.mubr.f32.gmra.mxu0 %v1882
      %v2131 = vpop.f32.mrf.mxu0
      %v2132 = vadd.f32 0.0, %v2131
      %v2133 = vpop.f32.mrf.mxu0
      %2134 = vmatprep.mubr.f32.mxu0 0.0
      %2135 = vmatmul.mubr.f32.gmra.mxu0 %v1885
      %v2136 = vpop.f32.mrf.mxu0
      %v2137 = vadd.f32 0.0, %v2136
      %v2138 = vpop.f32.mrf.mxu0
      %2139 = vmatprep.mubr.f32.mxu0 0.0
      %2140 = vmatmul.mubr.f32.gmra.mxu0 %v1888
      %v2141 = vpop.f32.mrf.mxu0
      %v2142 = vadd.f32 0.0, %v2141
      %v2143 = vpop.f32.mrf.mxu0
      %2144 = vmatprep.mubr.f32.mxu0 0.0
      %2145 = vmatmul.mubr.f32.gmra.mxu0 %v1891
      %v2146 = vpop.f32.mrf.mxu0
      %v2147 = vadd.f32 0.0, %v2146
      %v2148 = vpop.f32.mrf.mxu0
      %2149 = vmatprep.mubr.f32.mxu0 0.0
      %2150 = vmatmul.mubr.f32.gmra.mxu0 %v1894
      %v2151 = vpop.f32.mrf.mxu0
      %v2152 = vadd.f32 0.0, %v2151
      %v2153 = vpop.f32.mrf.mxu0
      %2154 = vmatprep.mubr.f32.mxu0 0.0
      %2155 = vmatmul.mubr.f32.gmra.mxu0 %v1897
      %v2156 = vpop.f32.mrf.mxu0
      %v2157 = vadd.f32 0.0, %v2156
      %v2158 = vpop.f32.mrf.mxu0
      %2159 = vmatprep.mubr.f32.mxu0 0.0
      %2160 = vmatmul.mubr.f32.gmra.mxu0 %v1900
      %v2161 = vpop.f32.mrf.mxu0
      %v2162 = vadd.f32 0.0, %v2161
      %v2163 = vpop.f32.mrf.mxu0
      %2164 = vmatprep.mubr.f32.mxu0 0.0
      %2165 = vmatmul.mubr.f32.gmra.mxu0 %v1903
      %v2166 = vpop.f32.mrf.mxu0
      %v2167 = vadd.f32 0.0, %v2166
      %v2168 = vpop.f32.mrf.mxu0
      %2169 = vmatprep.mubr.f32.mxu0 0.0
      %2170 = vmatmul.mubr.f32.gmra.mxu0 %v1906
      %v2171 = vpop.f32.mrf.mxu0
      %v2172 = vadd.f32 0.0, %v2171
      %v2173 = vpop.f32.mrf.mxu0
      %2174 = vmatprep.mubr.f32.mxu0 0.0
      %2175 = vmatmul.mubr.f32.gmra.mxu0 %v1909
      %v2176 = vpop.f32.mrf.mxu0
      %v2177 = vadd.f32 0.0, %v2176
      %v2178 = vpop.f32.mrf.mxu0
      %2179 = vmatprep.mubr.f32.mxu0 0.0
      %2180 = vmatmul.mubr.f32.gmra.mxu0 %v1912
      %v2181 = vpop.f32.mrf.mxu0
      %v2182 = vadd.f32 0.0, %v2181
      %v2183 = vpop.f32.mrf.mxu0
      %2184 = vmatprep.mubr.f32.mxu0 0.0
      %2185 = vmatmul.mubr.f32.gmra.mxu0 %v1915
      %v2186 = vpop.f32.mrf.mxu0
      %v2187 = vadd.f32 0.0, %v2186
      %v2188 = vpop.f32.mrf.mxu0
      %2189 = vmatprep.mubr.f32.mxu0 0.0
      %2190 = vmatmul.mubr.f32.gmra.mxu0 %v1918
      %v2191 = vpop.f32.mrf.mxu0
      %v2192 = vadd.f32 0.0, %v2191
      %v2193 = vpop.f32.mrf.mxu0
      %2194 = vmatprep.mubr.f32.mxu0 0.0
      %2195 = vmatmul.mubr.f32.gmra.mxu0 %v1921
      %v2196 = vpop.f32.mrf.mxu0
      %v2197 = vadd.f32 0.0, %v2196
      %v2198 = vpop.f32.mrf.mxu0
      %2199 = vmatprep.mubr.f32.mxu0 0.0
      %2200 = vmatmul.mubr.f32.gmra.mxu0 %v1924
      %v2201 = vpop.f32.mrf.mxu0
      %v2202 = vadd.f32 0.0, %v2201
      %v2203 = vpop.f32.mrf.mxu0
      %2204 = vmatprep.mubr.f32.mxu0 0.0
      %2205 = vmatmul.mubr.f32.gmra.mxu0 %v1927
      %v2206 = vpop.f32.mrf.mxu0
      %v2207 = vadd.f32 0.0, %v2206
      %v2208 = vpop.f32.mrf.mxu0
      %2209 = vmatprep.mubr.f32.mxu0 0.0
      %2210 = vmatmul.mubr.f32.gmra.mxu0 %v1930
      %v2211 = vpop.f32.mrf.mxu0
      %v2212 = vadd.f32 0.0, %v2211
      %v2213 = vpop.f32.mrf.mxu0
      %2214 = vmatprep.mubr.f32.mxu0 0.0
      %2215 = vmatmul.mubr.f32.gmra.mxu0 %v1933
      %v2216 = vpop.f32.mrf.mxu0
      %v2217 = vadd.f32 0.0, %v2216
      %v2218 = vpop.f32.mrf.mxu0
      %2219 = vmatprep.mubr.f32.mxu0 0.0
      %2220 = vmatmul.mubr.f32.gmra.mxu0 %v1936
      %v2221 = vpop.f32.mrf.mxu0
      %v2222 = vadd.f32 0.0, %v2221
      %v2223 = vpop.f32.mrf.mxu0
      %2224 = vmatprep.mubr.f32.mxu0 0.0
      %2225 = vmatmul.mubr.f32.gmra.mxu0 %v1939
      %v2226 = vpop.f32.mrf.mxu0
      %v2227 = vadd.f32 0.0, %v2226
      %v2228 = vpop.f32.mrf.mxu0
      %2229 = vmatprep.mubr.f32.mxu0 0.0
      %2230 = vmatmul.mubr.f32.gmra.mxu0 %v1942
      %v2231 = vpop.f32.mrf.mxu0
      %v2232 = vadd.f32 0.0, %v2231
      %v2233 = vpop.f32.mrf.mxu0
      %2234 = vmatprep.mubr.f32.mxu0 0.0
      %2235 = vmatmul.mubr.f32.gmra.mxu0 %v1945
      %v2236 = vpop.f32.mrf.mxu0
      %v2237 = vadd.f32 0.0, %v2236
      %v2238 = vpop.f32.mrf.mxu0
      %2239 = vmatprep.mubr.f32.mxu0 0.0
      %2240 = vmatmul.mubr.f32.gmra.mxu0 %v1948
      %v2241 = vpop.f32.mrf.mxu0
      %v2242 = vadd.f32 0.0, %v2241
      %v2243 = vpop.f32.mrf.mxu0
      %2244 = vmatprep.mubr.f32.mxu0 0.0
      %2245 = vmatmul.mubr.f32.gmra.mxu0 %v1951
      %v2246 = vpop.f32.mrf.mxu0
      %v2247 = vadd.f32 0.0, %v2246
      %v2248 = vpop.f32.mrf.mxu0
      %2249 = vmatprep.mubr.f32.mxu0 0.0
      %2250 = vmatmul.mubr.f32.gmra.mxu0 %v1954
      %v2251 = vpop.f32.mrf.mxu0
      %v2252 = vadd.f32 0.0, %v2251
      %v2253 = vpop.f32.mrf.mxu0
      %2254 = vmatprep.mubr.f32.mxu0 0.0
      %2255 = vmatmul.mubr.f32.gmra.mxu0 %v1957
      %v2256 = vpop.f32.mrf.mxu0
      %v2257 = vadd.f32 0.0, %v2256
      %v2258 = vpop.f32.mrf.mxu0
      %2259 = vmatprep.mubr.f32.mxu0 0.0
      %2260 = vmatmul.mubr.f32.gmra.mxu0 %v1960
      %v2261 = vpop.f32.mrf.mxu0
      %v2262 = vadd.f32 0.0, %v2261
      %v2263 = vpop.f32.mrf.mxu0
      %2264 = vmatprep.mubr.f32.mxu0 0.0
      %2265 = vmatmul.mubr.f32.gmra.mxu0 %v1963
      %v2266 = vpop.f32.mrf.mxu0
      %v2267 = vadd.f32 0.0, %v2266
      %v2268 = vpop.f32.mrf.mxu0
      %2269 = vdwg.mxu0
      %v2270 = vadd.f32 %v1722, %v2032
      %v2271 = vadd.f32 %v1723, %v2037
      %v2272 = vadd.f32 %v1724, %v2042
      %v2273 = vadd.f32 %v1725, %v2047
      %v2274 = vadd.f32 %v1726, %v2052
      %v2275 = vadd.f32 %v1727, %v2057
      %v2276 = vadd.f32 %v1728, %v2062
      %v2277 = vadd.f32 %v1729, %v2067
      %v2278 = vadd.f32 %v1730, %v2072
      %v2279 = vadd.f32 %v1731, %v2077
      %v2280 = vadd.f32 %v1732, %v2082
      %v2281 = vadd.f32 %v1733, %v2087
      %v2282 = vadd.f32 %v1734, %v2092
      %v2283 = vadd.f32 %v1735, %v2097
      %v2284 = vadd.f32 %v1736, %v2102
      %v2285 = vadd.f32 %v1737, %v2107
      %v2286 = vadd.f32 %v1738, %v2112
      %v2287 = vadd.f32 %v1739, %v2117
      %v2288 = vadd.f32 %v1740, %v2122
      %v2289 = vadd.f32 %v1741, %v2127
      %v2290 = vadd.f32 %v1742, %v2132
      %v2291 = vadd.f32 %v1743, %v2137
      %v2292 = vadd.f32 %v1744, %v2142
      %v2293 = vadd.f32 %v1745, %v2147
      %v2294 = vadd.f32 %v1746, %v2152
      %v2295 = vadd.f32 %v1747, %v2157
      %v2296 = vadd.f32 %v1748, %v2162
      %v2297 = vadd.f32 %v1749, %v2167
      %v2298 = vadd.f32 %v1750, %v2172
      %v2299 = vadd.f32 %v1751, %v2177
      %v2300 = vadd.f32 %v1752, %v2182
      %v2301 = vadd.f32 %v1753, %v2187
      %v2302 = vadd.f32 %v1754, %v2192
      %v2303 = vadd.f32 %v1755, %v2197
      %v2304 = vadd.f32 %v1756, %v2202
      %v2305 = vadd.f32 %v1757, %v2207
      %v2306 = vadd.f32 %v1758, %v2212
      %v2307 = vadd.f32 %v1759, %v2217
      %v2308 = vadd.f32 %v1760, %v2222
      %v2309 = vadd.f32 %v1761, %v2227
      %v2310 = vadd.f32 %v1762, %v2232
      %v2311 = vadd.f32 %v1763, %v2237
      %v2312 = vadd.f32 %v1764, %v2242
      %v2313 = vadd.f32 %v1765, %v2247
      %v2314 = vadd.f32 %v1766, %v2252
      %v2315 = vadd.f32 %v1767, %v2257
      %v2316 = vadd.f32 %v1768, %v2262
      %v2317 = vadd.f32 %v1769, %v2267
      %v2318 = vld [vmem:[%s1770 + $0x1] sm:$0xff]
      %v2319 = vld [vmem:[%s1770 + $0x9] sm:$0xff]
      %v2320 = vld [vmem:[%s1770 + $0x11] sm:$0xff]
      %v2321 = vld [vmem:[%s1770 + $0x21] sm:$0xff]
      %v2322 = vld [vmem:[%s1770 + $0x29] sm:$0xff]
      %v2323 = vld [vmem:[%s1770 + $0x31] sm:$0xff]
      %v2324 = vld [vmem:[%s1770 + $0x41] sm:$0xff]
      %v2325 = vld [vmem:[%s1770 + $0x49] sm:$0xff]
      %v2326 = vld [vmem:[%s1770 + $0x51] sm:$0xff]
      %v2327 = vld [vmem:[%s1770 + $0x61] sm:$0xff]
      %v2328 = vld [vmem:[%s1770 + $0x69] sm:$0xff]
      %v2329 = vld [vmem:[%s1770 + $0x71] sm:$0xff]
      %v2330 = vld [vmem:[%s1770 + $0x81] sm:$0xff]
      %v2331 = vld [vmem:[%s1770 + $0x89] sm:$0xff]
      %v2332 = vld [vmem:[%s1770 + $0x91] sm:$0xff]
      %v2333 = vld [vmem:[%s1770 + $0xa1] sm:$0xff]
      %v2334 = vld [vmem:[%s1770 + $0xa9] sm:$0xff]
      %v2335 = vld [vmem:[%s1770 + $0xb1] sm:$0xff]
      %v2336 = vld [vmem:[%s1770 + $0xc1] sm:$0xff]
      %v2337 = vld [vmem:[%s1770 + $0xc9] sm:$0xff]
      %v2338 = vld [vmem:[%s1770 + $0xd1] sm:$0xff]
      %v2339 = vld [vmem:[%s1770 + $0xe1] sm:$0xff]
      %v2340 = vld [vmem:[%s1770 + $0xe9] sm:$0xff]
      %v2341 = vld [vmem:[%s1770 + $0xf1] sm:$0xff]
      %v2342 = vld [vmem:[%s1770 + $0x101] sm:$0xff]
      %v2343 = vld [vmem:[%s1770 + $0x109] sm:$0xff]
      %v2344 = vld [vmem:[%s1770 + $0x111] sm:$0xff]
      %v2345 = vld [vmem:[%s1770 + $0x121] sm:$0xff]
      %v2346 = vld [vmem:[%s1770 + $0x129] sm:$0xff]
      %v2347 = vld [vmem:[%s1770 + $0x131] sm:$0xff]
      %v2348 = vld [vmem:[%s1770 + $0x141] sm:$0xff]
      %v2349 = vld [vmem:[%s1770 + $0x149] sm:$0xff]
      %v2350 = vld [vmem:[%s1770 + $0x151] sm:$0xff]
      %v2351 = vld [vmem:[%s1770 + $0x161] sm:$0xff]
      %v2352 = vld [vmem:[%s1770 + $0x169] sm:$0xff]
      %v2353 = vld [vmem:[%s1770 + $0x171] sm:$0xff]
      %v2354 = vld [vmem:[%s1770 + $0x181] sm:$0xff]
      %v2355 = vld [vmem:[%s1770 + $0x189] sm:$0xff]
      %v2356 = vld [vmem:[%s1770 + $0x191] sm:$0xff]
      %v2357 = vld [vmem:[%s1770 + $0x1a1] sm:$0xff]
      %v2358 = vld [vmem:[%s1770 + $0x1a9] sm:$0xff]
      %v2359 = vld [vmem:[%s1770 + $0x1b1] sm:$0xff]
      %v2360 = vld [vmem:[%s1770 + $0x1c1] sm:$0xff]
      %v2361 = vld [vmem:[%s1770 + $0x1c9] sm:$0xff]
      %v2362 = vld [vmem:[%s1770 + $0x1d1] sm:$0xff]
      %v2363 = vld [vmem:[%s1770 + $0x1e1] sm:$0xff]
      %v2364 = vld [vmem:[%s1770 + $0x1e9] sm:$0xff]
      %v2365 = vld [vmem:[%s1770 + $0x1f1] sm:$0xff]
      %s2366 = scalar_lea.vmem %s1, 32
      %v2367 = vld [vmem:[%s2366] sm:$0xff]
      %v2369 = vsel %vm324, %v2318, 0
      %v2372 = vsel %vm324, %v2319, 0
      %v2375 = vsel %vm324, %v2320, 0
      %v2378 = vsel %vm324, %v2321, 0
      %v2381 = vsel %vm324, %v2322, 0
      %v2384 = vsel %vm324, %v2323, 0
      %v2387 = vsel %vm324, %v2324, 0
      %v2390 = vsel %vm324, %v2325, 0
      %v2393 = vsel %vm324, %v2326, 0
      %v2396 = vsel %vm324, %v2327, 0
      %v2399 = vsel %vm324, %v2328, 0
      %v2402 = vsel %vm324, %v2329, 0
      %v2405 = vsel %vm324, %v2330, 0
      %v2408 = vsel %vm324, %v2331, 0
      %v2411 = vsel %vm324, %v2332, 0
      %v2414 = vsel %vm324, %v2333, 0
      %v2417 = vsel %vm324, %v2334, 0
      %v2420 = vsel %vm324, %v2335, 0
      %v2423 = vsel %vm324, %v2336, 0
      %v2426 = vsel %vm324, %v2337, 0
      %v2429 = vsel %vm324, %v2338, 0
      %v2432 = vsel %vm324, %v2339, 0
      %v2435 = vsel %vm324, %v2340, 0
      %v2438 = vsel %vm324, %v2341, 0
      %v2441 = vsel %vm324, %v2342, 0
      %v2444 = vsel %vm324, %v2343, 0
      %v2447 = vsel %vm324, %v2344, 0
      %v2450 = vsel %vm324, %v2345, 0
      %v2453 = vsel %vm324, %v2346, 0
      %v2456 = vsel %vm324, %v2347, 0
      %v2459 = vsel %vm324, %v2348, 0
      %v2462 = vsel %vm324, %v2349, 0
      %v2465 = vsel %vm324, %v2350, 0
      %v2468 = vsel %vm324, %v2351, 0
      %v2471 = vsel %vm324, %v2352, 0
      %v2474 = vsel %vm324, %v2353, 0
      %v2477 = vsel %vm324, %v2354, 0
      %v2480 = vsel %vm324, %v2355, 0
      %v2483 = vsel %vm324, %v2356, 0
      %v2486 = vsel %vm324, %v2357, 0
      %v2489 = vsel %vm324, %v2358, 0
      %v2492 = vsel %vm324, %v2359, 0
      %v2495 = vsel %vm324, %v2360, 0
      %v2498 = vsel %vm324, %v2361, 0
      %v2501 = vsel %vm324, %v2362, 0
      %v2504 = vsel %vm324, %v2363, 0
      %v2507 = vsel %vm324, %v2364, 0
      %v2510 = vsel %vm324, %v2365, 0
      %2512 = vmatprep.subr.mxu0 0.0
      %2513 = vmatpush1.msra.mxu0 0.0
      %2514 = vmatprep.subr.mxu0 0.0
      %2515 = vmatpush1.msra.mxu0 0.0
      %2516 = vmatprep.subr.mxu0 0.0
      %2517 = vmatpush1.msra.mxu0 0.0
      %2518 = vmatprep.subr.mxu0 0.0
      %2519 = vmatpush1.msra.mxu0 0.0
      %2520 = vmatprep.subr.mxu0 0.0
      %2521 = vmatpush1.msra.mxu0 0.0
      %2522 = vmatprep.subr.mxu0 0.0
      %2523 = vmatpush1.msra.mxu0 0.0
      %2524 = vmatprep.subr.mxu0 0.0
      %2525 = vmatpush1.msra.mxu0 0.0
      %2526 = vmatprep.subr.mxu0 0.0
      %2527 = vmatpush1.msra.mxu0 0.0
      %2528 = vmatprep.subr.mxu0 0.0
      %2529 = vmatpush1.msra.mxu0 0.0
      %2530 = vmatprep.subr.mxu0 0.0
      %2531 = vmatpush1.msra.mxu0 0.0
      %2532 = vmatprep.subr.mxu0 0.0
      %2533 = vmatpush1.msra.mxu0 0.0
      %2534 = vmatprep.subr.mxu0 0.0
      %2535 = vmatpush1.msra.mxu0 0.0
      %2536 = vmatprep.subr.mxu0 0.0
      %2537 = vmatpush1.msra.mxu0 0.0
      %2538 = vmatprep.subr.mxu0 0.0
      %2539 = vmatpush1.msra.mxu0 0.0
      %2540 = vmatprep.subr.mxu0 0.0
      %2541 = vmatpush1.msra.mxu0 0.0
      %2542 = vmatprep.subr.mxu0 0.0
      %2543 = vmatpush1.msra.mxu0 %v2367
      %2544 = vmatprep.subr.mxu0 0.0
      %2545 = vmatpush2.msra.mxu0 0.0
      %2546 = vmatprep.subr.mxu0 0.0
      %2547 = vmatpush2.msra.mxu0 0.0
      %2548 = vmatprep.subr.mxu0 0.0
      %2549 = vmatpush2.msra.mxu0 0.0
      %2550 = vmatprep.subr.mxu0 0.0
      %2551 = vmatpush2.msra.mxu0 0.0
      %2552 = vmatprep.subr.mxu0 0.0
      %2553 = vmatpush2.msra.mxu0 0.0
      %2554 = vmatprep.subr.mxu0 0.0
      %2555 = vmatpush2.msra.mxu0 0.0
      %2556 = vmatprep.subr.mxu0 0.0
      %2557 = vmatpush2.msra.mxu0 0.0
      %2558 = vmatprep.subr.mxu0 0.0
      %2559 = vmatpush2.msra.mxu0 0.0
      %2560 = vmatprep.subr.mxu0 0.0
      %2561 = vmatpush2.msra.mxu0 0.0
      %2562 = vmatprep.subr.mxu0 0.0
      %2563 = vmatpush2.msra.mxu0 0.0
      %2564 = vmatprep.subr.mxu0 0.0
      %2565 = vmatpush2.msra.mxu0 0.0
      %2566 = vmatprep.subr.mxu0 0.0
      %2567 = vmatpush2.msra.mxu0 0.0
      %2568 = vmatprep.subr.mxu0 0.0
      %2569 = vmatpush2.msra.mxu0 0.0
      %2570 = vmatprep.subr.mxu0 0.0
      %2571 = vmatpush2.msra.mxu0 0.0
      %2572 = vmatprep.subr.mxu0 0.0
      %2573 = vmatpush2.msra.mxu0 0.0
      %2574 = vmatprep.subr.mxu0 0.0
      %2575 = vmatpush2.msra.mxu0 0.0
      %2576 = vmatprep.mubr.f32.mxu0 0.0
      %2577 = vmatmul.mubr.f32.gmra.mxu0 %v2369
      %v2578 = vpop.f32.mrf.mxu0
      %v2579 = vadd.f32 0.0, %v2578
      %v2580 = vpop.f32.mrf.mxu0
      %2581 = vmatprep.mubr.f32.mxu0 0.0
      %2582 = vmatmul.mubr.f32.gmra.mxu0 %v2372
      %v2583 = vpop.f32.mrf.mxu0
      %v2584 = vadd.f32 0.0, %v2583
      %v2585 = vpop.f32.mrf.mxu0
      %2586 = vmatprep.mubr.f32.mxu0 0.0
      %2587 = vmatmul.mubr.f32.gmra.mxu0 %v2375
      %v2588 = vpop.f32.mrf.mxu0
      %v2589 = vadd.f32 0.0, %v2588
      %v2590 = vpop.f32.mrf.mxu0
      %2591 = vmatprep.mubr.f32.mxu0 0.0
      %2592 = vmatmul.mubr.f32.gmra.mxu0 %v2378
      %v2593 = vpop.f32.mrf.mxu0
      %v2594 = vadd.f32 0.0, %v2593
      %v2595 = vpop.f32.mrf.mxu0
      %2596 = vmatprep.mubr.f32.mxu0 0.0
      %2597 = vmatmul.mubr.f32.gmra.mxu0 %v2381
      %v2598 = vpop.f32.mrf.mxu0
      %v2599 = vadd.f32 0.0, %v2598
      %v2600 = vpop.f32.mrf.mxu0
      %2601 = vmatprep.mubr.f32.mxu0 0.0
      %2602 = vmatmul.mubr.f32.gmra.mxu0 %v2384
      %v2603 = vpop.f32.mrf.mxu0
      %v2604 = vadd.f32 0.0, %v2603
      %v2605 = vpop.f32.mrf.mxu0
      %2606 = vmatprep.mubr.f32.mxu0 0.0
      %2607 = vmatmul.mubr.f32.gmra.mxu0 %v2387
      %v2608 = vpop.f32.mrf.mxu0
      %v2609 = vadd.f32 0.0, %v2608
      %v2610 = vpop.f32.mrf.mxu0
      %2611 = vmatprep.mubr.f32.mxu0 0.0
      %2612 = vmatmul.mubr.f32.gmra.mxu0 %v2390
      %v2613 = vpop.f32.mrf.mxu0
      %v2614 = vadd.f32 0.0, %v2613
      %v2615 = vpop.f32.mrf.mxu0
      %2616 = vmatprep.mubr.f32.mxu0 0.0
      %2617 = vmatmul.mubr.f32.gmra.mxu0 %v2393
      %v2618 = vpop.f32.mrf.mxu0
      %v2619 = vadd.f32 0.0, %v2618
      %v2620 = vpop.f32.mrf.mxu0
      %2621 = vmatprep.mubr.f32.mxu0 0.0
      %2622 = vmatmul.mubr.f32.gmra.mxu0 %v2396
      %v2623 = vpop.f32.mrf.mxu0
      %v2624 = vadd.f32 0.0, %v2623
      %v2625 = vpop.f32.mrf.mxu0
      %2626 = vmatprep.mubr.f32.mxu0 0.0
      %2627 = vmatmul.mubr.f32.gmra.mxu0 %v2399
      %v2628 = vpop.f32.mrf.mxu0
      %v2629 = vadd.f32 0.0, %v2628
      %v2630 = vpop.f32.mrf.mxu0
      %2631 = vmatprep.mubr.f32.mxu0 0.0
      %2632 = vmatmul.mubr.f32.gmra.mxu0 %v2402
      %v2633 = vpop.f32.mrf.mxu0
      %v2634 = vadd.f32 0.0, %v2633
      %v2635 = vpop.f32.mrf.mxu0
      %2636 = vmatprep.mubr.f32.mxu0 0.0
      %2637 = vmatmul.mubr.f32.gmra.mxu0 %v2405
      %v2638 = vpop.f32.mrf.mxu0
      %v2639 = vadd.f32 0.0, %v2638
      %v2640 = vpop.f32.mrf.mxu0
      %2641 = vmatprep.mubr.f32.mxu0 0.0
      %2642 = vmatmul.mubr.f32.gmra.mxu0 %v2408
      %v2643 = vpop.f32.mrf.mxu0
      %v2644 = vadd.f32 0.0, %v2643
      %v2645 = vpop.f32.mrf.mxu0
      %2646 = vmatprep.mubr.f32.mxu0 0.0
      %2647 = vmatmul.mubr.f32.gmra.mxu0 %v2411
      %v2648 = vpop.f32.mrf.mxu0
      %v2649 = vadd.f32 0.0, %v2648
      %v2650 = vpop.f32.mrf.mxu0
      %2651 = vmatprep.mubr.f32.mxu0 0.0
      %2652 = vmatmul.mubr.f32.gmra.mxu0 %v2414
      %v2653 = vpop.f32.mrf.mxu0
      %v2654 = vadd.f32 0.0, %v2653
      %v2655 = vpop.f32.mrf.mxu0
      %2656 = vmatprep.mubr.f32.mxu0 0.0
      %2657 = vmatmul.mubr.f32.gmra.mxu0 %v2417
      %v2658 = vpop.f32.mrf.mxu0
      %v2659 = vadd.f32 0.0, %v2658
      %v2660 = vpop.f32.mrf.mxu0
      %2661 = vmatprep.mubr.f32.mxu0 0.0
      %2662 = vmatmul.mubr.f32.gmra.mxu0 %v2420
      %v2663 = vpop.f32.mrf.mxu0
      %v2664 = vadd.f32 0.0, %v2663
      %v2665 = vpop.f32.mrf.mxu0
      %2666 = vmatprep.mubr.f32.mxu0 0.0
      %2667 = vmatmul.mubr.f32.gmra.mxu0 %v2423
      %v2668 = vpop.f32.mrf.mxu0
      %v2669 = vadd.f32 0.0, %v2668
      %v2670 = vpop.f32.mrf.mxu0
      %2671 = vmatprep.mubr.f32.mxu0 0.0
      %2672 = vmatmul.mubr.f32.gmra.mxu0 %v2426
      %v2673 = vpop.f32.mrf.mxu0
      %v2674 = vadd.f32 0.0, %v2673
      %v2675 = vpop.f32.mrf.mxu0
      %2676 = vmatprep.mubr.f32.mxu0 0.0
      %2677 = vmatmul.mubr.f32.gmra.mxu0 %v2429
      %v2678 = vpop.f32.mrf.mxu0
      %v2679 = vadd.f32 0.0, %v2678
      %v2680 = vpop.f32.mrf.mxu0
      %2681 = vmatprep.mubr.f32.mxu0 0.0
      %2682 = vmatmul.mubr.f32.gmra.mxu0 %v2432
      %v2683 = vpop.f32.mrf.mxu0
      %v2684 = vadd.f32 0.0, %v2683
      %v2685 = vpop.f32.mrf.mxu0
      %2686 = vmatprep.mubr.f32.mxu0 0.0
      %2687 = vmatmul.mubr.f32.gmra.mxu0 %v2435
      %v2688 = vpop.f32.mrf.mxu0
      %v2689 = vadd.f32 0.0, %v2688
      %v2690 = vpop.f32.mrf.mxu0
      %2691 = vmatprep.mubr.f32.mxu0 0.0
      %2692 = vmatmul.mubr.f32.gmra.mxu0 %v2438
      %v2693 = vpop.f32.mrf.mxu0
      %v2694 = vadd.f32 0.0, %v2693
      %v2695 = vpop.f32.mrf.mxu0
      %2696 = vmatprep.mubr.f32.mxu0 0.0
      %2697 = vmatmul.mubr.f32.gmra.mxu0 %v2441
      %v2698 = vpop.f32.mrf.mxu0
      %v2699 = vadd.f32 0.0, %v2698
      %v2700 = vpop.f32.mrf.mxu0
      %2701 = vmatprep.mubr.f32.mxu0 0.0
      %2702 = vmatmul.mubr.f32.gmra.mxu0 %v2444
      %v2703 = vpop.f32.mrf.mxu0
      %v2704 = vadd.f32 0.0, %v2703
      %v2705 = vpop.f32.mrf.mxu0
      %2706 = vmatprep.mubr.f32.mxu0 0.0
      %2707 = vmatmul.mubr.f32.gmra.mxu0 %v2447
      %v2708 = vpop.f32.mrf.mxu0
      %v2709 = vadd.f32 0.0, %v2708
      %v2710 = vpop.f32.mrf.mxu0
      %2711 = vmatprep.mubr.f32.mxu0 0.0
      %2712 = vmatmul.mubr.f32.gmra.mxu0 %v2450
      %v2713 = vpop.f32.mrf.mxu0
      %v2714 = vadd.f32 0.0, %v2713
      %v2715 = vpop.f32.mrf.mxu0
      %2716 = vmatprep.mubr.f32.mxu0 0.0
      %2717 = vmatmul.mubr.f32.gmra.mxu0 %v2453
      %v2718 = vpop.f32.mrf.mxu0
      %v2719 = vadd.f32 0.0, %v2718
      %v2720 = vpop.f32.mrf.mxu0
      %2721 = vmatprep.mubr.f32.mxu0 0.0
      %2722 = vmatmul.mubr.f32.gmra.mxu0 %v2456
      %v2723 = vpop.f32.mrf.mxu0
      %v2724 = vadd.f32 0.0, %v2723
      %v2725 = vpop.f32.mrf.mxu0
      %2726 = vmatprep.mubr.f32.mxu0 0.0
      %2727 = vmatmul.mubr.f32.gmra.mxu0 %v2459
      %v2728 = vpop.f32.mrf.mxu0
      %v2729 = vadd.f32 0.0, %v2728
      %v2730 = vpop.f32.mrf.mxu0
      %2731 = vmatprep.mubr.f32.mxu0 0.0
      %2732 = vmatmul.mubr.f32.gmra.mxu0 %v2462
      %v2733 = vpop.f32.mrf.mxu0
      %v2734 = vadd.f32 0.0, %v2733
      %v2735 = vpop.f32.mrf.mxu0
      %2736 = vmatprep.mubr.f32.mxu0 0.0
      %2737 = vmatmul.mubr.f32.gmra.mxu0 %v2465
      %v2738 = vpop.f32.mrf.mxu0
      %v2739 = vadd.f32 0.0, %v2738
      %v2740 = vpop.f32.mrf.mxu0
      %2741 = vmatprep.mubr.f32.mxu0 0.0
      %2742 = vmatmul.mubr.f32.gmra.mxu0 %v2468
      %v2743 = vpop.f32.mrf.mxu0
      %v2744 = vadd.f32 0.0, %v2743
      %v2745 = vpop.f32.mrf.mxu0
      %2746 = vmatprep.mubr.f32.mxu0 0.0
      %2747 = vmatmul.mubr.f32.gmra.mxu0 %v2471
      %v2748 = vpop.f32.mrf.mxu0
      %v2749 = vadd.f32 0.0, %v2748
      %v2750 = vpop.f32.mrf.mxu0
      %2751 = vmatprep.mubr.f32.mxu0 0.0
      %2752 = vmatmul.mubr.f32.gmra.mxu0 %v2474
      %v2753 = vpop.f32.mrf.mxu0
      %v2754 = vadd.f32 0.0, %v2753
      %v2755 = vpop.f32.mrf.mxu0
      %2756 = vmatprep.mubr.f32.mxu0 0.0
      %2757 = vmatmul.mubr.f32.gmra.mxu0 %v2477
      %v2758 = vpop.f32.mrf.mxu0
      %v2759 = vadd.f32 0.0, %v2758
      %v2760 = vpop.f32.mrf.mxu0
      %2761 = vmatprep.mubr.f32.mxu0 0.0
      %2762 = vmatmul.mubr.f32.gmra.mxu0 %v2480
      %v2763 = vpop.f32.mrf.mxu0
      %v2764 = vadd.f32 0.0, %v2763
      %v2765 = vpop.f32.mrf.mxu0
      %2766 = vmatprep.mubr.f32.mxu0 0.0
      %2767 = vmatmul.mubr.f32.gmra.mxu0 %v2483
      %v2768 = vpop.f32.mrf.mxu0
      %v2769 = vadd.f32 0.0, %v2768
      %v2770 = vpop.f32.mrf.mxu0
      %2771 = vmatprep.mubr.f32.mxu0 0.0
      %2772 = vmatmul.mubr.f32.gmra.mxu0 %v2486
      %v2773 = vpop.f32.mrf.mxu0
      %v2774 = vadd.f32 0.0, %v2773
      %v2775 = vpop.f32.mrf.mxu0
      %2776 = vmatprep.mubr.f32.mxu0 0.0
      %2777 = vmatmul.mubr.f32.gmra.mxu0 %v2489
      %v2778 = vpop.f32.mrf.mxu0
      %v2779 = vadd.f32 0.0, %v2778
      %v2780 = vpop.f32.mrf.mxu0
      %2781 = vmatprep.mubr.f32.mxu0 0.0
      %2782 = vmatmul.mubr.f32.gmra.mxu0 %v2492
      %v2783 = vpop.f32.mrf.mxu0
      %v2784 = vadd.f32 0.0, %v2783
      %v2785 = vpop.f32.mrf.mxu0
      %2786 = vmatprep.mubr.f32.mxu0 0.0
      %2787 = vmatmul.mubr.f32.gmra.mxu0 %v2495
      %v2788 = vpop.f32.mrf.mxu0
      %v2789 = vadd.f32 0.0, %v2788
      %v2790 = vpop.f32.mrf.mxu0
      %2791 = vmatprep.mubr.f32.mxu0 0.0
      %2792 = vmatmul.mubr.f32.gmra.mxu0 %v2498
      %v2793 = vpop.f32.mrf.mxu0
      %v2794 = vadd.f32 0.0, %v2793
      %v2795 = vpop.f32.mrf.mxu0
      %2796 = vmatprep.mubr.f32.mxu0 0.0
      %2797 = vmatmul.mubr.f32.gmra.mxu0 %v2501
      %v2798 = vpop.f32.mrf.mxu0
      %v2799 = vadd.f32 0.0, %v2798
      %v2800 = vpop.f32.mrf.mxu0
      %2801 = vmatprep.mubr.f32.mxu0 0.0
      %2802 = vmatmul.mubr.f32.gmra.mxu0 %v2504
      %v2803 = vpop.f32.mrf.mxu0
      %v2804 = vadd.f32 0.0, %v2803
      %v2805 = vpop.f32.mrf.mxu0
      %2806 = vmatprep.mubr.f32.mxu0 0.0
      %2807 = vmatmul.mubr.f32.gmra.mxu0 %v2507
      %v2808 = vpop.f32.mrf.mxu0
      %v2809 = vadd.f32 0.0, %v2808
      %v2810 = vpop.f32.mrf.mxu0
      %2811 = vmatprep.mubr.f32.mxu0 0.0
      %2812 = vmatmul.mubr.f32.gmra.mxu0 %v2510
      %v2813 = vpop.f32.mrf.mxu0
      %v2814 = vadd.f32 0.0, %v2813
      %v2815 = vpop.f32.mrf.mxu0
      %2816 = vdwg.mxu0
      %v2817 = vadd.f32 %v2270, %v2579
      %v2818 = vadd.f32 %v2271, %v2584
      %v2819 = vadd.f32 %v2272, %v2589
      %v2820 = vadd.f32 %v2273, %v2594
      %v2821 = vadd.f32 %v2274, %v2599
      %v2822 = vadd.f32 %v2275, %v2604
      %v2823 = vadd.f32 %v2276, %v2609
      %v2824 = vadd.f32 %v2277, %v2614
      %v2825 = vadd.f32 %v2278, %v2619
      %v2826 = vadd.f32 %v2279, %v2624
      %v2827 = vadd.f32 %v2280, %v2629
      %v2828 = vadd.f32 %v2281, %v2634
      %v2829 = vadd.f32 %v2282, %v2639
      %v2830 = vadd.f32 %v2283, %v2644
      %v2831 = vadd.f32 %v2284, %v2649
      %v2832 = vadd.f32 %v2285, %v2654
      %v2833 = vadd.f32 %v2286, %v2659
      %v2834 = vadd.f32 %v2287, %v2664
      %v2835 = vadd.f32 %v2288, %v2669
      %v2836 = vadd.f32 %v2289, %v2674
      %v2837 = vadd.f32 %v2290, %v2679
      %v2838 = vadd.f32 %v2291, %v2684
      %v2839 = vadd.f32 %v2292, %v2689
      %v2840 = vadd.f32 %v2293, %v2694
      %v2841 = vadd.f32 %v2294, %v2699
      %v2842 = vadd.f32 %v2295, %v2704
      %v2843 = vadd.f32 %v2296, %v2709
      %v2844 = vadd.f32 %v2297, %v2714
      %v2845 = vadd.f32 %v2298, %v2719
      %v2846 = vadd.f32 %v2299, %v2724
      %v2847 = vadd.f32 %v2300, %v2729
      %v2848 = vadd.f32 %v2301, %v2734
      %v2849 = vadd.f32 %v2302, %v2739
      %v2850 = vadd.f32 %v2303, %v2744
      %v2851 = vadd.f32 %v2304, %v2749
      %v2852 = vadd.f32 %v2305, %v2754
      %v2853 = vadd.f32 %v2306, %v2759
      %v2854 = vadd.f32 %v2307, %v2764
      %v2855 = vadd.f32 %v2308, %v2769
      %v2856 = vadd.f32 %v2309, %v2774
      %v2857 = vadd.f32 %v2310, %v2779
      %v2858 = vadd.f32 %v2311, %v2784
      %v2859 = vadd.f32 %v2312, %v2789
      %v2860 = vadd.f32 %v2313, %v2794
      %v2861 = vadd.f32 %v2314, %v2799
      %v2862 = vadd.f32 %v2315, %v2804
      %v2863 = vadd.f32 %v2316, %v2809
      %v2864 = vadd.f32 %v2317, %v2814
      %v2865 = vld [vmem:[%s1770 + $0x2] sm:$0xff]
      %v2866 = vld [vmem:[%s1770 + $0xa] sm:$0xff]
      %v2867 = vld [vmem:[%s1770 + $0x12] sm:$0xff]
      %v2868 = vld [vmem:[%s1770 + $0x22] sm:$0xff]
      %v2869 = vld [vmem:[%s1770 + $0x2a] sm:$0xff]
      %v2870 = vld [vmem:[%s1770 + $0x32] sm:$0xff]
      %v2871 = vld [vmem:[%s1770 + $0x42] sm:$0xff]
      %v2872 = vld [vmem:[%s1770 + $0x4a] sm:$0xff]
      %v2873 = vld [vmem:[%s1770 + $0x52] sm:$0xff]
      %v2874 = vld [vmem:[%s1770 + $0x62] sm:$0xff]
      %v2875 = vld [vmem:[%s1770 + $0x6a] sm:$0xff]
      %v2876 = vld [vmem:[%s1770 + $0x72] sm:$0xff]
      %v2877 = vld [vmem:[%s1770 + $0x82] sm:$0xff]
      %v2878 = vld [vmem:[%s1770 + $0x8a] sm:$0xff]
      %v2879 = vld [vmem:[%s1770 + $0x92] sm:$0xff]
      %v2880 = vld [vmem:[%s1770 + $0xa2] sm:$0xff]
      %v2881 = vld [vmem:[%s1770 + $0xaa] sm:$0xff]
      %v2882 = vld [vmem:[%s1770 + $0xb2] sm:$0xff]
      %v2883 = vld [vmem:[%s1770 + $0xc2] sm:$0xff]
      %v2884 = vld [vmem:[%s1770 + $0xca] sm:$0xff]
      %v2885 = vld [vmem:[%s1770 + $0xd2] sm:$0xff]
      %v2886 = vld [vmem:[%s1770 + $0xe2] sm:$0xff]
      %v2887 = vld [vmem:[%s1770 + $0xea] sm:$0xff]
      %v2888 = vld [vmem:[%s1770 + $0xf2] sm:$0xff]
      %v2889 = vld [vmem:[%s1770 + $0x102] sm:$0xff]
      %v2890 = vld [vmem:[%s1770 + $0x10a] sm:$0xff]
      %v2891 = vld [vmem:[%s1770 + $0x112] sm:$0xff]
      %v2892 = vld [vmem:[%s1770 + $0x122] sm:$0xff]
      %v2893 = vld [vmem:[%s1770 + $0x12a] sm:$0xff]
      %v2894 = vld [vmem:[%s1770 + $0x132] sm:$0xff]
      %v2895 = vld [vmem:[%s1770 + $0x142] sm:$0xff]
      %v2896 = vld [vmem:[%s1770 + $0x14a] sm:$0xff]
      %v2897 = vld [vmem:[%s1770 + $0x152] sm:$0xff]
      %v2898 = vld [vmem:[%s1770 + $0x162] sm:$0xff]
      %v2899 = vld [vmem:[%s1770 + $0x16a] sm:$0xff]
      %v2900 = vld [vmem:[%s1770 + $0x172] sm:$0xff]
      %v2901 = vld [vmem:[%s1770 + $0x182] sm:$0xff]
      %v2902 = vld [vmem:[%s1770 + $0x18a] sm:$0xff]
      %v2903 = vld [vmem:[%s1770 + $0x192] sm:$0xff]
      %v2904 = vld [vmem:[%s1770 + $0x1a2] sm:$0xff]
      %v2905 = vld [vmem:[%s1770 + $0x1aa] sm:$0xff]
      %v2906 = vld [vmem:[%s1770 + $0x1b2] sm:$0xff]
      %v2907 = vld [vmem:[%s1770 + $0x1c2] sm:$0xff]
      %v2908 = vld [vmem:[%s1770 + $0x1ca] sm:$0xff]
      %v2909 = vld [vmem:[%s1770 + $0x1d2] sm:$0xff]
      %v2910 = vld [vmem:[%s1770 + $0x1e2] sm:$0xff]
      %v2911 = vld [vmem:[%s1770 + $0x1ea] sm:$0xff]
      %v2912 = vld [vmem:[%s1770 + $0x1f2] sm:$0xff]
      %s2913 = scalar_lea.vmem %s1, 40
      %v2914 = vld [vmem:[%s2913] sm:$0xff]
      %v2916 = vsel %vm324, %v2865, 0
      %v2919 = vsel %vm324, %v2866, 0
      %v2922 = vsel %vm324, %v2867, 0
      %v2925 = vsel %vm324, %v2868, 0
      %v2928 = vsel %vm324, %v2869, 0
      %v2931 = vsel %vm324, %v2870, 0
      %v2934 = vsel %vm324, %v2871, 0
      %v2937 = vsel %vm324, %v2872, 0
      %v2940 = vsel %vm324, %v2873, 0
      %v2943 = vsel %vm324, %v2874, 0
      %v2946 = vsel %vm324, %v2875, 0
      %v2949 = vsel %vm324, %v2876, 0
      %v2952 = vsel %vm324, %v2877, 0
      %v2955 = vsel %vm324, %v2878, 0
      %v2958 = vsel %vm324, %v2879, 0
      %v2961 = vsel %vm324, %v2880, 0
      %v2964 = vsel %vm324, %v2881, 0
      %v2967 = vsel %vm324, %v2882, 0
      %v2970 = vsel %vm324, %v2883, 0
      %v2973 = vsel %vm324, %v2884, 0
      %v2976 = vsel %vm324, %v2885, 0
      %v2979 = vsel %vm324, %v2886, 0
      %v2982 = vsel %vm324, %v2887, 0
      %v2985 = vsel %vm324, %v2888, 0
      %v2988 = vsel %vm324, %v2889, 0
      %v2991 = vsel %vm324, %v2890, 0
      %v2994 = vsel %vm324, %v2891, 0
      %v2997 = vsel %vm324, %v2892, 0
      %v3000 = vsel %vm324, %v2893, 0
      %v3003 = vsel %vm324, %v2894, 0
      %v3006 = vsel %vm324, %v2895, 0
      %v3009 = vsel %vm324, %v2896, 0
      %v3012 = vsel %vm324, %v2897, 0
      %v3015 = vsel %vm324, %v2898, 0
      %v3018 = vsel %vm324, %v2899, 0
      %v3021 = vsel %vm324, %v2900, 0
      %v3024 = vsel %vm324, %v2901, 0
      %v3027 = vsel %vm324, %v2902, 0
      %v3030 = vsel %vm324, %v2903, 0
      %v3033 = vsel %vm324, %v2904, 0
      %v3036 = vsel %vm324, %v2905, 0
      %v3039 = vsel %vm324, %v2906, 0
      %v3042 = vsel %vm324, %v2907, 0
      %v3045 = vsel %vm324, %v2908, 0
      %v3048 = vsel %vm324, %v2909, 0
      %v3051 = vsel %vm324, %v2910, 0
      %v3054 = vsel %vm324, %v2911, 0
      %v3057 = vsel %vm324, %v2912, 0
      %3059 = vmatprep.subr.mxu0 0.0
      %3060 = vmatpush1.msra.mxu0 0.0
      %3061 = vmatprep.subr.mxu0 0.0
      %3062 = vmatpush1.msra.mxu0 0.0
      %3063 = vmatprep.subr.mxu0 0.0
      %3064 = vmatpush1.msra.mxu0 0.0
      %3065 = vmatprep.subr.mxu0 0.0
      %3066 = vmatpush1.msra.mxu0 0.0
      %3067 = vmatprep.subr.mxu0 0.0
      %3068 = vmatpush1.msra.mxu0 0.0
      %3069 = vmatprep.subr.mxu0 0.0
      %3070 = vmatpush1.msra.mxu0 0.0
      %3071 = vmatprep.subr.mxu0 0.0
      %3072 = vmatpush1.msra.mxu0 0.0
      %3073 = vmatprep.subr.mxu0 0.0
      %3074 = vmatpush1.msra.mxu0 0.0
      %3075 = vmatprep.subr.mxu0 0.0
      %3076 = vmatpush1.msra.mxu0 0.0
      %3077 = vmatprep.subr.mxu0 0.0
      %3078 = vmatpush1.msra.mxu0 0.0
      %3079 = vmatprep.subr.mxu0 0.0
      %3080 = vmatpush1.msra.mxu0 0.0
      %3081 = vmatprep.subr.mxu0 0.0
      %3082 = vmatpush1.msra.mxu0 0.0
      %3083 = vmatprep.subr.mxu0 0.0
      %3084 = vmatpush1.msra.mxu0 0.0
      %3085 = vmatprep.subr.mxu0 0.0
      %3086 = vmatpush1.msra.mxu0 0.0
      %3087 = vmatprep.subr.mxu0 0.0
      %3088 = vmatpush1.msra.mxu0 0.0
      %3089 = vmatprep.subr.mxu0 0.0
      %3090 = vmatpush1.msra.mxu0 %v2914
      %3091 = vmatprep.subr.mxu0 0.0
      %3092 = vmatpush2.msra.mxu0 0.0
      %3093 = vmatprep.subr.mxu0 0.0
      %3094 = vmatpush2.msra.mxu0 0.0
      %3095 = vmatprep.subr.mxu0 0.0
      %3096 = vmatpush2.msra.mxu0 0.0
      %3097 = vmatprep.subr.mxu0 0.0
      %3098 = vmatpush2.msra.mxu0 0.0
      %3099 = vmatprep.subr.mxu0 0.0
      %3100 = vmatpush2.msra.mxu0 0.0
      %3101 = vmatprep.subr.mxu0 0.0
      %3102 = vmatpush2.msra.mxu0 0.0
      %3103 = vmatprep.subr.mxu0 0.0
      %3104 = vmatpush2.msra.mxu0 0.0
      %3105 = vmatprep.subr.mxu0 0.0
      %3106 = vmatpush2.msra.mxu0 0.0
      %3107 = vmatprep.subr.mxu0 0.0
      %3108 = vmatpush2.msra.mxu0 0.0
      %3109 = vmatprep.subr.mxu0 0.0
      %3110 = vmatpush2.msra.mxu0 0.0
      %3111 = vmatprep.subr.mxu0 0.0
      %3112 = vmatpush2.msra.mxu0 0.0
      %3113 = vmatprep.subr.mxu0 0.0
      %3114 = vmatpush2.msra.mxu0 0.0
      %3115 = vmatprep.subr.mxu0 0.0
      %3116 = vmatpush2.msra.mxu0 0.0
      %3117 = vmatprep.subr.mxu0 0.0
      %3118 = vmatpush2.msra.mxu0 0.0
      %3119 = vmatprep.subr.mxu0 0.0
      %3120 = vmatpush2.msra.mxu0 0.0
      %3121 = vmatprep.subr.mxu0 0.0
      %3122 = vmatpush2.msra.mxu0 0.0
      %3123 = vmatprep.mubr.f32.mxu0 0.0
      %3124 = vmatmul.mubr.f32.gmra.mxu0 %v2916
      %v3125 = vpop.f32.mrf.mxu0
      %v3126 = vadd.f32 0.0, %v3125
      %v3127 = vpop.f32.mrf.mxu0
      %3128 = vmatprep.mubr.f32.mxu0 0.0
      %3129 = vmatmul.mubr.f32.gmra.mxu0 %v2919
      %v3130 = vpop.f32.mrf.mxu0
      %v3131 = vadd.f32 0.0, %v3130
      %v3132 = vpop.f32.mrf.mxu0
      %3133 = vmatprep.mubr.f32.mxu0 0.0
      %3134 = vmatmul.mubr.f32.gmra.mxu0 %v2922
      %v3135 = vpop.f32.mrf.mxu0
      %v3136 = vadd.f32 0.0, %v3135
      %v3137 = vpop.f32.mrf.mxu0
      %3138 = vmatprep.mubr.f32.mxu0 0.0
      %3139 = vmatmul.mubr.f32.gmra.mxu0 %v2925
      %v3140 = vpop.f32.mrf.mxu0
      %v3141 = vadd.f32 0.0, %v3140
      %v3142 = vpop.f32.mrf.mxu0
      %3143 = vmatprep.mubr.f32.mxu0 0.0
      %3144 = vmatmul.mubr.f32.gmra.mxu0 %v2928
      %v3145 = vpop.f32.mrf.mxu0
      %v3146 = vadd.f32 0.0, %v3145
      %v3147 = vpop.f32.mrf.mxu0
      %3148 = vmatprep.mubr.f32.mxu0 0.0
      %3149 = vmatmul.mubr.f32.gmra.mxu0 %v2931
      %v3150 = vpop.f32.mrf.mxu0
      %v3151 = vadd.f32 0.0, %v3150
      %v3152 = vpop.f32.mrf.mxu0
      %3153 = vmatprep.mubr.f32.mxu0 0.0
      %3154 = vmatmul.mubr.f32.gmra.mxu0 %v2934
      %v3155 = vpop.f32.mrf.mxu0
      %v3156 = vadd.f32 0.0, %v3155
      %v3157 = vpop.f32.mrf.mxu0
      %3158 = vmatprep.mubr.f32.mxu0 0.0
      %3159 = vmatmul.mubr.f32.gmra.mxu0 %v2937
      %v3160 = vpop.f32.mrf.mxu0
      %v3161 = vadd.f32 0.0, %v3160
      %v3162 = vpop.f32.mrf.mxu0
      %3163 = vmatprep.mubr.f32.mxu0 0.0
      %3164 = vmatmul.mubr.f32.gmra.mxu0 %v2940
      %v3165 = vpop.f32.mrf.mxu0
      %v3166 = vadd.f32 0.0, %v3165
      %v3167 = vpop.f32.mrf.mxu0
      %3168 = vmatprep.mubr.f32.mxu0 0.0
      %3169 = vmatmul.mubr.f32.gmra.mxu0 %v2943
      %v3170 = vpop.f32.mrf.mxu0
      %v3171 = vadd.f32 0.0, %v3170
      %v3172 = vpop.f32.mrf.mxu0
      %3173 = vmatprep.mubr.f32.mxu0 0.0
      %3174 = vmatmul.mubr.f32.gmra.mxu0 %v2946
      %v3175 = vpop.f32.mrf.mxu0
      %v3176 = vadd.f32 0.0, %v3175
      %v3177 = vpop.f32.mrf.mxu0
      %3178 = vmatprep.mubr.f32.mxu0 0.0
      %3179 = vmatmul.mubr.f32.gmra.mxu0 %v2949
      %v3180 = vpop.f32.mrf.mxu0
      %v3181 = vadd.f32 0.0, %v3180
      %v3182 = vpop.f32.mrf.mxu0
      %3183 = vmatprep.mubr.f32.mxu0 0.0
      %3184 = vmatmul.mubr.f32.gmra.mxu0 %v2952
      %v3185 = vpop.f32.mrf.mxu0
      %v3186 = vadd.f32 0.0, %v3185
      %v3187 = vpop.f32.mrf.mxu0
      %3188 = vmatprep.mubr.f32.mxu0 0.0
      %3189 = vmatmul.mubr.f32.gmra.mxu0 %v2955
      %v3190 = vpop.f32.mrf.mxu0
      %v3191 = vadd.f32 0.0, %v3190
      %v3192 = vpop.f32.mrf.mxu0
      %3193 = vmatprep.mubr.f32.mxu0 0.0
      %3194 = vmatmul.mubr.f32.gmra.mxu0 %v2958
      %v3195 = vpop.f32.mrf.mxu0
      %v3196 = vadd.f32 0.0, %v3195
      %v3197 = vpop.f32.mrf.mxu0
      %3198 = vmatprep.mubr.f32.mxu0 0.0
      %3199 = vmatmul.mubr.f32.gmra.mxu0 %v2961
      %v3200 = vpop.f32.mrf.mxu0
      %v3201 = vadd.f32 0.0, %v3200
      %v3202 = vpop.f32.mrf.mxu0
      %3203 = vmatprep.mubr.f32.mxu0 0.0
      %3204 = vmatmul.mubr.f32.gmra.mxu0 %v2964
      %v3205 = vpop.f32.mrf.mxu0
      %v3206 = vadd.f32 0.0, %v3205
      %v3207 = vpop.f32.mrf.mxu0
      %3208 = vmatprep.mubr.f32.mxu0 0.0
      %3209 = vmatmul.mubr.f32.gmra.mxu0 %v2967
      %v3210 = vpop.f32.mrf.mxu0
      %v3211 = vadd.f32 0.0, %v3210
      %v3212 = vpop.f32.mrf.mxu0
      %3213 = vmatprep.mubr.f32.mxu0 0.0
      %3214 = vmatmul.mubr.f32.gmra.mxu0 %v2970
      %v3215 = vpop.f32.mrf.mxu0
      %v3216 = vadd.f32 0.0, %v3215
      %v3217 = vpop.f32.mrf.mxu0
      %3218 = vmatprep.mubr.f32.mxu0 0.0
      %3219 = vmatmul.mubr.f32.gmra.mxu0 %v2973
      %v3220 = vpop.f32.mrf.mxu0
      %v3221 = vadd.f32 0.0, %v3220
      %v3222 = vpop.f32.mrf.mxu0
      %3223 = vmatprep.mubr.f32.mxu0 0.0
      %3224 = vmatmul.mubr.f32.gmra.mxu0 %v2976
      %v3225 = vpop.f32.mrf.mxu0
      %v3226 = vadd.f32 0.0, %v3225
      %v3227 = vpop.f32.mrf.mxu0
      %3228 = vmatprep.mubr.f32.mxu0 0.0
      %3229 = vmatmul.mubr.f32.gmra.mxu0 %v2979
      %v3230 = vpop.f32.mrf.mxu0
      %v3231 = vadd.f32 0.0, %v3230
      %v3232 = vpop.f32.mrf.mxu0
      %3233 = vmatprep.mubr.f32.mxu0 0.0
      %3234 = vmatmul.mubr.f32.gmra.mxu0 %v2982
      %v3235 = vpop.f32.mrf.mxu0
      %v3236 = vadd.f32 0.0, %v3235
      %v3237 = vpop.f32.mrf.mxu0
      %3238 = vmatprep.mubr.f32.mxu0 0.0
      %3239 = vmatmul.mubr.f32.gmra.mxu0 %v2985
      %v3240 = vpop.f32.mrf.mxu0
      %v3241 = vadd.f32 0.0, %v3240
      %v3242 = vpop.f32.mrf.mxu0
      %3243 = vmatprep.mubr.f32.mxu0 0.0
      %3244 = vmatmul.mubr.f32.gmra.mxu0 %v2988
      %v3245 = vpop.f32.mrf.mxu0
      %v3246 = vadd.f32 0.0, %v3245
      %v3247 = vpop.f32.mrf.mxu0
      %3248 = vmatprep.mubr.f32.mxu0 0.0
      %3249 = vmatmul.mubr.f32.gmra.mxu0 %v2991
      %v3250 = vpop.f32.mrf.mxu0
      %v3251 = vadd.f32 0.0, %v3250
      %v3252 = vpop.f32.mrf.mxu0
      %3253 = vmatprep.mubr.f32.mxu0 0.0
      %3254 = vmatmul.mubr.f32.gmra.mxu0 %v2994
      %v3255 = vpop.f32.mrf.mxu0
      %v3256 = vadd.f32 0.0, %v3255
      %v3257 = vpop.f32.mrf.mxu0
      %3258 = vmatprep.mubr.f32.mxu0 0.0
      %3259 = vmatmul.mubr.f32.gmra.mxu0 %v2997
      %v3260 = vpop.f32.mrf.mxu0
      %v3261 = vadd.f32 0.0, %v3260
      %v3262 = vpop.f32.mrf.mxu0
      %3263 = vmatprep.mubr.f32.mxu0 0.0
      %3264 = vmatmul.mubr.f32.gmra.mxu0 %v3000
      %v3265 = vpop.f32.mrf.mxu0
      %v3266 = vadd.f32 0.0, %v3265
      %v3267 = vpop.f32.mrf.mxu0
      %3268 = vmatprep.mubr.f32.mxu0 0.0
      %3269 = vmatmul.mubr.f32.gmra.mxu0 %v3003
      %v3270 = vpop.f32.mrf.mxu0
      %v3271 = vadd.f32 0.0, %v3270
      %v3272 = vpop.f32.mrf.mxu0
      %3273 = vmatprep.mubr.f32.mxu0 0.0
      %3274 = vmatmul.mubr.f32.gmra.mxu0 %v3006
      %v3275 = vpop.f32.mrf.mxu0
      %v3276 = vadd.f32 0.0, %v3275
      %v3277 = vpop.f32.mrf.mxu0
      %3278 = vmatprep.mubr.f32.mxu0 0.0
      %3279 = vmatmul.mubr.f32.gmra.mxu0 %v3009
      %v3280 = vpop.f32.mrf.mxu0
      %v3281 = vadd.f32 0.0, %v3280
      %v3282 = vpop.f32.mrf.mxu0
      %3283 = vmatprep.mubr.f32.mxu0 0.0
      %3284 = vmatmul.mubr.f32.gmra.mxu0 %v3012
      %v3285 = vpop.f32.mrf.mxu0
      %v3286 = vadd.f32 0.0, %v3285
      %v3287 = vpop.f32.mrf.mxu0
      %3288 = vmatprep.mubr.f32.mxu0 0.0
      %3289 = vmatmul.mubr.f32.gmra.mxu0 %v3015
      %v3290 = vpop.f32.mrf.mxu0
      %v3291 = vadd.f32 0.0, %v3290
      %v3292 = vpop.f32.mrf.mxu0
      %3293 = vmatprep.mubr.f32.mxu0 0.0
      %3294 = vmatmul.mubr.f32.gmra.mxu0 %v3018
      %v3295 = vpop.f32.mrf.mxu0
      %v3296 = vadd.f32 0.0, %v3295
      %v3297 = vpop.f32.mrf.mxu0
      %3298 = vmatprep.mubr.f32.mxu0 0.0
      %3299 = vmatmul.mubr.f32.gmra.mxu0 %v3021
      %v3300 = vpop.f32.mrf.mxu0
      %v3301 = vadd.f32 0.0, %v3300
      %v3302 = vpop.f32.mrf.mxu0
      %3303 = vmatprep.mubr.f32.mxu0 0.0
      %3304 = vmatmul.mubr.f32.gmra.mxu0 %v3024
      %v3305 = vpop.f32.mrf.mxu0
      %v3306 = vadd.f32 0.0, %v3305
      %v3307 = vpop.f32.mrf.mxu0
      %3308 = vmatprep.mubr.f32.mxu0 0.0
      %3309 = vmatmul.mubr.f32.gmra.mxu0 %v3027
      %v3310 = vpop.f32.mrf.mxu0
      %v3311 = vadd.f32 0.0, %v3310
      %v3312 = vpop.f32.mrf.mxu0
      %3313 = vmatprep.mubr.f32.mxu0 0.0
      %3314 = vmatmul.mubr.f32.gmra.mxu0 %v3030
      %v3315 = vpop.f32.mrf.mxu0
      %v3316 = vadd.f32 0.0, %v3315
      %v3317 = vpop.f32.mrf.mxu0
      %3318 = vmatprep.mubr.f32.mxu0 0.0
      %3319 = vmatmul.mubr.f32.gmra.mxu0 %v3033
      %v3320 = vpop.f32.mrf.mxu0
      %v3321 = vadd.f32 0.0, %v3320
      %v3322 = vpop.f32.mrf.mxu0
      %3323 = vmatprep.mubr.f32.mxu0 0.0
      %3324 = vmatmul.mubr.f32.gmra.mxu0 %v3036
      %v3325 = vpop.f32.mrf.mxu0
      %v3326 = vadd.f32 0.0, %v3325
      %v3327 = vpop.f32.mrf.mxu0
      %3328 = vmatprep.mubr.f32.mxu0 0.0
      %3329 = vmatmul.mubr.f32.gmra.mxu0 %v3039
      %v3330 = vpop.f32.mrf.mxu0
      %v3331 = vadd.f32 0.0, %v3330
      %v3332 = vpop.f32.mrf.mxu0
      %3333 = vmatprep.mubr.f32.mxu0 0.0
      %3334 = vmatmul.mubr.f32.gmra.mxu0 %v3042
      %v3335 = vpop.f32.mrf.mxu0
      %v3336 = vadd.f32 0.0, %v3335
      %v3337 = vpop.f32.mrf.mxu0
      %3338 = vmatprep.mubr.f32.mxu0 0.0
      %3339 = vmatmul.mubr.f32.gmra.mxu0 %v3045
      %v3340 = vpop.f32.mrf.mxu0
      %v3341 = vadd.f32 0.0, %v3340
      %v3342 = vpop.f32.mrf.mxu0
      %3343 = vmatprep.mubr.f32.mxu0 0.0
      %3344 = vmatmul.mubr.f32.gmra.mxu0 %v3048
      %v3345 = vpop.f32.mrf.mxu0
      %v3346 = vadd.f32 0.0, %v3345
      %v3347 = vpop.f32.mrf.mxu0
      %3348 = vmatprep.mubr.f32.mxu0 0.0
      %3349 = vmatmul.mubr.f32.gmra.mxu0 %v3051
      %v3350 = vpop.f32.mrf.mxu0
      %v3351 = vadd.f32 0.0, %v3350
      %v3352 = vpop.f32.mrf.mxu0
      %3353 = vmatprep.mubr.f32.mxu0 0.0
      %3354 = vmatmul.mubr.f32.gmra.mxu0 %v3054
      %v3355 = vpop.f32.mrf.mxu0
      %v3356 = vadd.f32 0.0, %v3355
      %v3357 = vpop.f32.mrf.mxu0
      %3358 = vmatprep.mubr.f32.mxu0 0.0
      %3359 = vmatmul.mubr.f32.gmra.mxu0 %v3057
      %v3360 = vpop.f32.mrf.mxu0
      %v3361 = vadd.f32 0.0, %v3360
      %v3362 = vpop.f32.mrf.mxu0
      %3363 = vdwg.mxu0
      %v3364 = vadd.f32 %v2817, %v3126
      %v3365 = vadd.f32 %v2818, %v3131
      %v3366 = vadd.f32 %v2819, %v3136
      %v3367 = vadd.f32 %v2820, %v3141
      %v3368 = vadd.f32 %v2821, %v3146
      %v3369 = vadd.f32 %v2822, %v3151
      %v3370 = vadd.f32 %v2823, %v3156
      %v3371 = vadd.f32 %v2824, %v3161
      %v3372 = vadd.f32 %v2825, %v3166
      %v3373 = vadd.f32 %v2826, %v3171
      %v3374 = vadd.f32 %v2827, %v3176
      %v3375 = vadd.f32 %v2828, %v3181
      %v3376 = vadd.f32 %v2829, %v3186
      %v3377 = vadd.f32 %v2830, %v3191
      %v3378 = vadd.f32 %v2831, %v3196
      %v3379 = vadd.f32 %v2832, %v3201
      %v3380 = vadd.f32 %v2833, %v3206
      %v3381 = vadd.f32 %v2834, %v3211
      %v3382 = vadd.f32 %v2835, %v3216
      %v3383 = vadd.f32 %v2836, %v3221
      %v3384 = vadd.f32 %v2837, %v3226
      %v3385 = vadd.f32 %v2838, %v3231
      %v3386 = vadd.f32 %v2839, %v3236
      %v3387 = vadd.f32 %v2840, %v3241
      %v3388 = vadd.f32 %v2841, %v3246
      %v3389 = vadd.f32 %v2842, %v3251
      %v3390 = vadd.f32 %v2843, %v3256
      %v3391 = vadd.f32 %v2844, %v3261
      %v3392 = vadd.f32 %v2845, %v3266
      %v3393 = vadd.f32 %v2846, %v3271
      %v3394 = vadd.f32 %v2847, %v3276
      %v3395 = vadd.f32 %v2848, %v3281
      %v3396 = vadd.f32 %v2849, %v3286
      %v3397 = vadd.f32 %v2850, %v3291
      %v3398 = vadd.f32 %v2851, %v3296
      %v3399 = vadd.f32 %v2852, %v3301
      %v3400 = vadd.f32 %v2853, %v3306
      %v3401 = vadd.f32 %v2854, %v3311
      %v3402 = vadd.f32 %v2855, %v3316
      %v3403 = vadd.f32 %v2856, %v3321
      %v3404 = vadd.f32 %v2857, %v3326
      %v3405 = vadd.f32 %v2858, %v3331
      %v3406 = vadd.f32 %v2859, %v3336
      %v3407 = vadd.f32 %v2860, %v3341
      %v3408 = vadd.f32 %v2861, %v3346
      %v3409 = vadd.f32 %v2862, %v3351
      %v3410 = vadd.f32 %v2863, %v3356
      %v3411 = vadd.f32 %v2864, %v3361
      %s3412 = scalar_lea.vmem %s219, 64
      %v3413 = vld [vmem:[%s3412] sm:$0xff]
      %v3414 = vld [vmem:[%s3412 + $0x8] sm:$0xff]
      %v3415 = vld [vmem:[%s3412 + $0x10] sm:$0xff]
      %v3416 = vld [vmem:[%s3412 + $0x20] sm:$0xff]
      %v3417 = vld [vmem:[%s3412 + $0x28] sm:$0xff]
      %v3418 = vld [vmem:[%s3412 + $0x30] sm:$0xff]
      %v3419 = vld [vmem:[%s3412 + $0x40] sm:$0xff]
      %v3420 = vld [vmem:[%s3412 + $0x48] sm:$0xff]
      %v3421 = vld [vmem:[%s3412 + $0x50] sm:$0xff]
      %v3422 = vld [vmem:[%s3412 + $0x60] sm:$0xff]
      %v3423 = vld [vmem:[%s3412 + $0x68] sm:$0xff]
      %v3424 = vld [vmem:[%s3412 + $0x70] sm:$0xff]
      %v3425 = vld [vmem:[%s3412 + $0x80] sm:$0xff]
      %v3426 = vld [vmem:[%s3412 + $0x88] sm:$0xff]
      %v3427 = vld [vmem:[%s3412 + $0x90] sm:$0xff]
      %v3428 = vld [vmem:[%s3412 + $0xa0] sm:$0xff]
      %v3429 = vld [vmem:[%s3412 + $0xa8] sm:$0xff]
      %v3430 = vld [vmem:[%s3412 + $0xb0] sm:$0xff]
      %v3431 = vld [vmem:[%s3412 + $0xc0] sm:$0xff]
      %v3432 = vld [vmem:[%s3412 + $0xc8] sm:$0xff]
      %v3433 = vld [vmem:[%s3412 + $0xd0] sm:$0xff]
      %v3434 = vld [vmem:[%s3412 + $0xe0] sm:$0xff]
      %v3435 = vld [vmem:[%s3412 + $0xe8] sm:$0xff]
      %v3436 = vld [vmem:[%s3412 + $0xf0] sm:$0xff]
      %v3437 = vld [vmem:[%s3412 + $0x100] sm:$0xff]
      %v3438 = vld [vmem:[%s3412 + $0x108] sm:$0xff]
      %v3439 = vld [vmem:[%s3412 + $0x110] sm:$0xff]
      %v3440 = vld [vmem:[%s3412 + $0x120] sm:$0xff]
      %v3441 = vld [vmem:[%s3412 + $0x128] sm:$0xff]
      %v3442 = vld [vmem:[%s3412 + $0x130] sm:$0xff]
      %v3443 = vld [vmem:[%s3412 + $0x140] sm:$0xff]
      %v3444 = vld [vmem:[%s3412 + $0x148] sm:$0xff]
      %v3445 = vld [vmem:[%s3412 + $0x150] sm:$0xff]
      %v3446 = vld [vmem:[%s3412 + $0x160] sm:$0xff]
      %v3447 = vld [vmem:[%s3412 + $0x168] sm:$0xff]
      %v3448 = vld [vmem:[%s3412 + $0x170] sm:$0xff]
      %v3449 = vld [vmem:[%s3412 + $0x180] sm:$0xff]
      %v3450 = vld [vmem:[%s3412 + $0x188] sm:$0xff]
      %v3451 = vld [vmem:[%s3412 + $0x190] sm:$0xff]
      %v3452 = vld [vmem:[%s3412 + $0x1a0] sm:$0xff]
      %v3453 = vld [vmem:[%s3412 + $0x1a8] sm:$0xff]
      %v3454 = vld [vmem:[%s3412 + $0x1b0] sm:$0xff]
      %v3455 = vld [vmem:[%s3412 + $0x1c0] sm:$0xff]
      %v3456 = vld [vmem:[%s3412 + $0x1c8] sm:$0xff]
      %v3457 = vld [vmem:[%s3412 + $0x1d0] sm:$0xff]
      %v3458 = vld [vmem:[%s3412 + $0x1e0] sm:$0xff]
      %v3459 = vld [vmem:[%s3412 + $0x1e8] sm:$0xff]
      %v3460 = vld [vmem:[%s3412 + $0x1f0] sm:$0xff]
      %s3461 = scalar_lea.vmem %s1, 48
      %v3462 = vld [vmem:[%s3461] sm:$0xff]
      %v3464 = vsel %vm324, %v3413, 0
      %v3467 = vsel %vm324, %v3414, 0
      %v3470 = vsel %vm324, %v3415, 0
      %v3473 = vsel %vm324, %v3416, 0
      %v3476 = vsel %vm324, %v3417, 0
      %v3479 = vsel %vm324, %v3418, 0
      %v3482 = vsel %vm324, %v3419, 0
      %v3485 = vsel %vm324, %v3420, 0
      %v3488 = vsel %vm324, %v3421, 0
      %v3491 = vsel %vm324, %v3422, 0
      %v3494 = vsel %vm324, %v3423, 0
      %v3497 = vsel %vm324, %v3424, 0
      %v3500 = vsel %vm324, %v3425, 0
      %v3503 = vsel %vm324, %v3426, 0
      %v3506 = vsel %vm324, %v3427, 0
      %v3509 = vsel %vm324, %v3428, 0
      %v3512 = vsel %vm324, %v3429, 0
      %v3515 = vsel %vm324, %v3430, 0
      %v3518 = vsel %vm324, %v3431, 0
      %v3521 = vsel %vm324, %v3432, 0
      %v3524 = vsel %vm324, %v3433, 0
      %v3527 = vsel %vm324, %v3434, 0
      %v3530 = vsel %vm324, %v3435, 0
      %v3533 = vsel %vm324, %v3436, 0
      %v3536 = vsel %vm324, %v3437, 0
      %v3539 = vsel %vm324, %v3438, 0
      %v3542 = vsel %vm324, %v3439, 0
      %v3545 = vsel %vm324, %v3440, 0
      %v3548 = vsel %vm324, %v3441, 0
      %v3551 = vsel %vm324, %v3442, 0
      %v3554 = vsel %vm324, %v3443, 0
      %v3557 = vsel %vm324, %v3444, 0
      %v3560 = vsel %vm324, %v3445, 0
      %v3563 = vsel %vm324, %v3446, 0
      %v3566 = vsel %vm324, %v3447, 0
      %v3569 = vsel %vm324, %v3448, 0
      %v3572 = vsel %vm324, %v3449, 0
      %v3575 = vsel %vm324, %v3450, 0
      %v3578 = vsel %vm324, %v3451, 0
      %v3581 = vsel %vm324, %v3452, 0
      %v3584 = vsel %vm324, %v3453, 0
      %v3587 = vsel %vm324, %v3454, 0
      %v3590 = vsel %vm324, %v3455, 0
      %v3593 = vsel %vm324, %v3456, 0
      %v3596 = vsel %vm324, %v3457, 0
      %v3599 = vsel %vm324, %v3458, 0
      %v3602 = vsel %vm324, %v3459, 0
      %v3605 = vsel %vm324, %v3460, 0
      %3607 = vmatprep.subr.mxu0 0.0
      %3608 = vmatpush1.msra.mxu0 0.0
      %3609 = vmatprep.subr.mxu0 0.0
      %3610 = vmatpush1.msra.mxu0 0.0
      %3611 = vmatprep.subr.mxu0 0.0
      %3612 = vmatpush1.msra.mxu0 0.0
      %3613 = vmatprep.subr.mxu0 0.0
      %3614 = vmatpush1.msra.mxu0 0.0
      %3615 = vmatprep.subr.mxu0 0.0
      %3616 = vmatpush1.msra.mxu0 0.0
      %3617 = vmatprep.subr.mxu0 0.0
      %3618 = vmatpush1.msra.mxu0 0.0
      %3619 = vmatprep.subr.mxu0 0.0
      %3620 = vmatpush1.msra.mxu0 0.0
      %3621 = vmatprep.subr.mxu0 0.0
      %3622 = vmatpush1.msra.mxu0 0.0
      %3623 = vmatprep.subr.mxu0 0.0
      %3624 = vmatpush1.msra.mxu0 0.0
      %3625 = vmatprep.subr.mxu0 0.0
      %3626 = vmatpush1.msra.mxu0 0.0
      %3627 = vmatprep.subr.mxu0 0.0
      %3628 = vmatpush1.msra.mxu0 0.0
      %3629 = vmatprep.subr.mxu0 0.0
      %3630 = vmatpush1.msra.mxu0 0.0
      %3631 = vmatprep.subr.mxu0 0.0
      %3632 = vmatpush1.msra.mxu0 0.0
      %3633 = vmatprep.subr.mxu0 0.0
      %3634 = vmatpush1.msra.mxu0 0.0
      %3635 = vmatprep.subr.mxu0 0.0
      %3636 = vmatpush1.msra.mxu0 0.0
      %3637 = vmatprep.subr.mxu0 0.0
      %3638 = vmatpush1.msra.mxu0 %v3462
      %3639 = vmatprep.subr.mxu0 0.0
      %3640 = vmatpush2.msra.mxu0 0.0
      %3641 = vmatprep.subr.mxu0 0.0
      %3642 = vmatpush2.msra.mxu0 0.0
      %3643 = vmatprep.subr.mxu0 0.0
      %3644 = vmatpush2.msra.mxu0 0.0
      %3645 = vmatprep.subr.mxu0 0.0
      %3646 = vmatpush2.msra.mxu0 0.0
      %3647 = vmatprep.subr.mxu0 0.0
      %3648 = vmatpush2.msra.mxu0 0.0
      %3649 = vmatprep.subr.mxu0 0.0
      %3650 = vmatpush2.msra.mxu0 0.0
      %3651 = vmatprep.subr.mxu0 0.0
      %3652 = vmatpush2.msra.mxu0 0.0
      %3653 = vmatprep.subr.mxu0 0.0
      %3654 = vmatpush2.msra.mxu0 0.0
      %3655 = vmatprep.subr.mxu0 0.0
      %3656 = vmatpush2.msra.mxu0 0.0
      %3657 = vmatprep.subr.mxu0 0.0
      %3658 = vmatpush2.msra.mxu0 0.0
      %3659 = vmatprep.subr.mxu0 0.0
      %3660 = vmatpush2.msra.mxu0 0.0
      %3661 = vmatprep.subr.mxu0 0.0
      %3662 = vmatpush2.msra.mxu0 0.0
      %3663 = vmatprep.subr.mxu0 0.0
      %3664 = vmatpush2.msra.mxu0 0.0
      %3665 = vmatprep.subr.mxu0 0.0
      %3666 = vmatpush2.msra.mxu0 0.0
      %3667 = vmatprep.subr.mxu0 0.0
      %3668 = vmatpush2.msra.mxu0 0.0
      %3669 = vmatprep.subr.mxu0 0.0
      %3670 = vmatpush2.msra.mxu0 0.0
      %3671 = vmatprep.mubr.f32.mxu0 0.0
      %3672 = vmatmul.mubr.f32.gmra.mxu0 %v3464
      %v3673 = vpop.f32.mrf.mxu0
      %v3674 = vadd.f32 0.0, %v3673
      %v3675 = vpop.f32.mrf.mxu0
      %3676 = vmatprep.mubr.f32.mxu0 0.0
      %3677 = vmatmul.mubr.f32.gmra.mxu0 %v3467
      %v3678 = vpop.f32.mrf.mxu0
      %v3679 = vadd.f32 0.0, %v3678
      %v3680 = vpop.f32.mrf.mxu0
      %3681 = vmatprep.mubr.f32.mxu0 0.0
      %3682 = vmatmul.mubr.f32.gmra.mxu0 %v3470
      %v3683 = vpop.f32.mrf.mxu0
      %v3684 = vadd.f32 0.0, %v3683
      %v3685 = vpop.f32.mrf.mxu0
      %3686 = vmatprep.mubr.f32.mxu0 0.0
      %3687 = vmatmul.mubr.f32.gmra.mxu0 %v3473
      %v3688 = vpop.f32.mrf.mxu0
      %v3689 = vadd.f32 0.0, %v3688
      %v3690 = vpop.f32.mrf.mxu0
      %3691 = vmatprep.mubr.f32.mxu0 0.0
      %3692 = vmatmul.mubr.f32.gmra.mxu0 %v3476
      %v3693 = vpop.f32.mrf.mxu0
      %v3694 = vadd.f32 0.0, %v3693
      %v3695 = vpop.f32.mrf.mxu0
      %3696 = vmatprep.mubr.f32.mxu0 0.0
      %3697 = vmatmul.mubr.f32.gmra.mxu0 %v3479
      %v3698 = vpop.f32.mrf.mxu0
      %v3699 = vadd.f32 0.0, %v3698
      %v3700 = vpop.f32.mrf.mxu0
      %3701 = vmatprep.mubr.f32.mxu0 0.0
      %3702 = vmatmul.mubr.f32.gmra.mxu0 %v3482
      %v3703 = vpop.f32.mrf.mxu0
      %v3704 = vadd.f32 0.0, %v3703
      %v3705 = vpop.f32.mrf.mxu0
      %3706 = vmatprep.mubr.f32.mxu0 0.0
      %3707 = vmatmul.mubr.f32.gmra.mxu0 %v3485
      %v3708 = vpop.f32.mrf.mxu0
      %v3709 = vadd.f32 0.0, %v3708
      %v3710 = vpop.f32.mrf.mxu0
      %3711 = vmatprep.mubr.f32.mxu0 0.0
      %3712 = vmatmul.mubr.f32.gmra.mxu0 %v3488
      %v3713 = vpop.f32.mrf.mxu0
      %v3714 = vadd.f32 0.0, %v3713
      %v3715 = vpop.f32.mrf.mxu0
      %3716 = vmatprep.mubr.f32.mxu0 0.0
      %3717 = vmatmul.mubr.f32.gmra.mxu0 %v3491
      %v3718 = vpop.f32.mrf.mxu0
      %v3719 = vadd.f32 0.0, %v3718
      %v3720 = vpop.f32.mrf.mxu0
      %3721 = vmatprep.mubr.f32.mxu0 0.0
      %3722 = vmatmul.mubr.f32.gmra.mxu0 %v3494
      %v3723 = vpop.f32.mrf.mxu0
      %v3724 = vadd.f32 0.0, %v3723
      %v3725 = vpop.f32.mrf.mxu0
      %3726 = vmatprep.mubr.f32.mxu0 0.0
      %3727 = vmatmul.mubr.f32.gmra.mxu0 %v3497
      %v3728 = vpop.f32.mrf.mxu0
      %v3729 = vadd.f32 0.0, %v3728
      %v3730 = vpop.f32.mrf.mxu0
      %3731 = vmatprep.mubr.f32.mxu0 0.0
      %3732 = vmatmul.mubr.f32.gmra.mxu0 %v3500
      %v3733 = vpop.f32.mrf.mxu0
      %v3734 = vadd.f32 0.0, %v3733
      %v3735 = vpop.f32.mrf.mxu0
      %3736 = vmatprep.mubr.f32.mxu0 0.0
      %3737 = vmatmul.mubr.f32.gmra.mxu0 %v3503
      %v3738 = vpop.f32.mrf.mxu0
      %v3739 = vadd.f32 0.0, %v3738
      %v3740 = vpop.f32.mrf.mxu0
      %3741 = vmatprep.mubr.f32.mxu0 0.0
      %3742 = vmatmul.mubr.f32.gmra.mxu0 %v3506
      %v3743 = vpop.f32.mrf.mxu0
      %v3744 = vadd.f32 0.0, %v3743
      %v3745 = vpop.f32.mrf.mxu0
      %3746 = vmatprep.mubr.f32.mxu0 0.0
      %3747 = vmatmul.mubr.f32.gmra.mxu0 %v3509
      %v3748 = vpop.f32.mrf.mxu0
      %v3749 = vadd.f32 0.0, %v3748
      %v3750 = vpop.f32.mrf.mxu0
      %3751 = vmatprep.mubr.f32.mxu0 0.0
      %3752 = vmatmul.mubr.f32.gmra.mxu0 %v3512
      %v3753 = vpop.f32.mrf.mxu0
      %v3754 = vadd.f32 0.0, %v3753
      %v3755 = vpop.f32.mrf.mxu0
      %3756 = vmatprep.mubr.f32.mxu0 0.0
      %3757 = vmatmul.mubr.f32.gmra.mxu0 %v3515
      %v3758 = vpop.f32.mrf.mxu0
      %v3759 = vadd.f32 0.0, %v3758
      %v3760 = vpop.f32.mrf.mxu0
      %3761 = vmatprep.mubr.f32.mxu0 0.0
      %3762 = vmatmul.mubr.f32.gmra.mxu0 %v3518
      %v3763 = vpop.f32.mrf.mxu0
      %v3764 = vadd.f32 0.0, %v3763
      %v3765 = vpop.f32.mrf.mxu0
      %3766 = vmatprep.mubr.f32.mxu0 0.0
      %3767 = vmatmul.mubr.f32.gmra.mxu0 %v3521
      %v3768 = vpop.f32.mrf.mxu0
      %v3769 = vadd.f32 0.0, %v3768
      %v3770 = vpop.f32.mrf.mxu0
      %3771 = vmatprep.mubr.f32.mxu0 0.0
      %3772 = vmatmul.mubr.f32.gmra.mxu0 %v3524
      %v3773 = vpop.f32.mrf.mxu0
      %v3774 = vadd.f32 0.0, %v3773
      %v3775 = vpop.f32.mrf.mxu0
      %3776 = vmatprep.mubr.f32.mxu0 0.0
      %3777 = vmatmul.mubr.f32.gmra.mxu0 %v3527
      %v3778 = vpop.f32.mrf.mxu0
      %v3779 = vadd.f32 0.0, %v3778
      %v3780 = vpop.f32.mrf.mxu0
      %3781 = vmatprep.mubr.f32.mxu0 0.0
      %3782 = vmatmul.mubr.f32.gmra.mxu0 %v3530
      %v3783 = vpop.f32.mrf.mxu0
      %v3784 = vadd.f32 0.0, %v3783
      %v3785 = vpop.f32.mrf.mxu0
      %3786 = vmatprep.mubr.f32.mxu0 0.0
      %3787 = vmatmul.mubr.f32.gmra.mxu0 %v3533
      %v3788 = vpop.f32.mrf.mxu0
      %v3789 = vadd.f32 0.0, %v3788
      %v3790 = vpop.f32.mrf.mxu0
      %3791 = vmatprep.mubr.f32.mxu0 0.0
      %3792 = vmatmul.mubr.f32.gmra.mxu0 %v3536
      %v3793 = vpop.f32.mrf.mxu0
      %v3794 = vadd.f32 0.0, %v3793
      %v3795 = vpop.f32.mrf.mxu0
      %3796 = vmatprep.mubr.f32.mxu0 0.0
      %3797 = vmatmul.mubr.f32.gmra.mxu0 %v3539
      %v3798 = vpop.f32.mrf.mxu0
      %v3799 = vadd.f32 0.0, %v3798
      %v3800 = vpop.f32.mrf.mxu0
      %3801 = vmatprep.mubr.f32.mxu0 0.0
      %3802 = vmatmul.mubr.f32.gmra.mxu0 %v3542
      %v3803 = vpop.f32.mrf.mxu0
      %v3804 = vadd.f32 0.0, %v3803
      %v3805 = vpop.f32.mrf.mxu0
      %3806 = vmatprep.mubr.f32.mxu0 0.0
      %3807 = vmatmul.mubr.f32.gmra.mxu0 %v3545
      %v3808 = vpop.f32.mrf.mxu0
      %v3809 = vadd.f32 0.0, %v3808
      %v3810 = vpop.f32.mrf.mxu0
      %3811 = vmatprep.mubr.f32.mxu0 0.0
      %3812 = vmatmul.mubr.f32.gmra.mxu0 %v3548
      %v3813 = vpop.f32.mrf.mxu0
      %v3814 = vadd.f32 0.0, %v3813
      %v3815 = vpop.f32.mrf.mxu0
      %3816 = vmatprep.mubr.f32.mxu0 0.0
      %3817 = vmatmul.mubr.f32.gmra.mxu0 %v3551
      %v3818 = vpop.f32.mrf.mxu0
      %v3819 = vadd.f32 0.0, %v3818
      %v3820 = vpop.f32.mrf.mxu0
      %3821 = vmatprep.mubr.f32.mxu0 0.0
      %3822 = vmatmul.mubr.f32.gmra.mxu0 %v3554
      %v3823 = vpop.f32.mrf.mxu0
      %v3824 = vadd.f32 0.0, %v3823
      %v3825 = vpop.f32.mrf.mxu0
      %3826 = vmatprep.mubr.f32.mxu0 0.0
      %3827 = vmatmul.mubr.f32.gmra.mxu0 %v3557
      %v3828 = vpop.f32.mrf.mxu0
      %v3829 = vadd.f32 0.0, %v3828
      %v3830 = vpop.f32.mrf.mxu0
      %3831 = vmatprep.mubr.f32.mxu0 0.0
      %3832 = vmatmul.mubr.f32.gmra.mxu0 %v3560
      %v3833 = vpop.f32.mrf.mxu0
      %v3834 = vadd.f32 0.0, %v3833
      %v3835 = vpop.f32.mrf.mxu0
      %3836 = vmatprep.mubr.f32.mxu0 0.0
      %3837 = vmatmul.mubr.f32.gmra.mxu0 %v3563
      %v3838 = vpop.f32.mrf.mxu0
      %v3839 = vadd.f32 0.0, %v3838
      %v3840 = vpop.f32.mrf.mxu0
      %3841 = vmatprep.mubr.f32.mxu0 0.0
      %3842 = vmatmul.mubr.f32.gmra.mxu0 %v3566
      %v3843 = vpop.f32.mrf.mxu0
      %v3844 = vadd.f32 0.0, %v3843
      %v3845 = vpop.f32.mrf.mxu0
      %3846 = vmatprep.mubr.f32.mxu0 0.0
      %3847 = vmatmul.mubr.f32.gmra.mxu0 %v3569
      %v3848 = vpop.f32.mrf.mxu0
      %v3849 = vadd.f32 0.0, %v3848
      %v3850 = vpop.f32.mrf.mxu0
      %3851 = vmatprep.mubr.f32.mxu0 0.0
      %3852 = vmatmul.mubr.f32.gmra.mxu0 %v3572
      %v3853 = vpop.f32.mrf.mxu0
      %v3854 = vadd.f32 0.0, %v3853
      %v3855 = vpop.f32.mrf.mxu0
      %3856 = vmatprep.mubr.f32.mxu0 0.0
      %3857 = vmatmul.mubr.f32.gmra.mxu0 %v3575
      %v3858 = vpop.f32.mrf.mxu0
      %v3859 = vadd.f32 0.0, %v3858
      %v3860 = vpop.f32.mrf.mxu0
      %3861 = vmatprep.mubr.f32.mxu0 0.0
      %3862 = vmatmul.mubr.f32.gmra.mxu0 %v3578
      %v3863 = vpop.f32.mrf.mxu0
      %v3864 = vadd.f32 0.0, %v3863
      %v3865 = vpop.f32.mrf.mxu0
      %3866 = vmatprep.mubr.f32.mxu0 0.0
      %3867 = vmatmul.mubr.f32.gmra.mxu0 %v3581
      %v3868 = vpop.f32.mrf.mxu0
      %v3869 = vadd.f32 0.0, %v3868
      %v3870 = vpop.f32.mrf.mxu0
      %3871 = vmatprep.mubr.f32.mxu0 0.0
      %3872 = vmatmul.mubr.f32.gmra.mxu0 %v3584
      %v3873 = vpop.f32.mrf.mxu0
      %v3874 = vadd.f32 0.0, %v3873
      %v3875 = vpop.f32.mrf.mxu0
      %3876 = vmatprep.mubr.f32.mxu0 0.0
      %3877 = vmatmul.mubr.f32.gmra.mxu0 %v3587
      %v3878 = vpop.f32.mrf.mxu0
      %v3879 = vadd.f32 0.0, %v3878
      %v3880 = vpop.f32.mrf.mxu0
      %3881 = vmatprep.mubr.f32.mxu0 0.0
      %3882 = vmatmul.mubr.f32.gmra.mxu0 %v3590
      %v3883 = vpop.f32.mrf.mxu0
      %v3884 = vadd.f32 0.0, %v3883
      %v3885 = vpop.f32.mrf.mxu0
      %3886 = vmatprep.mubr.f32.mxu0 0.0
      %3887 = vmatmul.mubr.f32.gmra.mxu0 %v3593
      %v3888 = vpop.f32.mrf.mxu0
      %v3889 = vadd.f32 0.0, %v3888
      %v3890 = vpop.f32.mrf.mxu0
      %3891 = vmatprep.mubr.f32.mxu0 0.0
      %3892 = vmatmul.mubr.f32.gmra.mxu0 %v3596
      %v3893 = vpop.f32.mrf.mxu0
      %v3894 = vadd.f32 0.0, %v3893
      %v3895 = vpop.f32.mrf.mxu0
      %3896 = vmatprep.mubr.f32.mxu0 0.0
      %3897 = vmatmul.mubr.f32.gmra.mxu0 %v3599
      %v3898 = vpop.f32.mrf.mxu0
      %v3899 = vadd.f32 0.0, %v3898
      %v3900 = vpop.f32.mrf.mxu0
      %3901 = vmatprep.mubr.f32.mxu0 0.0
      %3902 = vmatmul.mubr.f32.gmra.mxu0 %v3602
      %v3903 = vpop.f32.mrf.mxu0
      %v3904 = vadd.f32 0.0, %v3903
      %v3905 = vpop.f32.mrf.mxu0
      %3906 = vmatprep.mubr.f32.mxu0 0.0
      %3907 = vmatmul.mubr.f32.gmra.mxu0 %v3605
      %v3908 = vpop.f32.mrf.mxu0
      %v3909 = vadd.f32 0.0, %v3908
      %v3910 = vpop.f32.mrf.mxu0
      %3911 = vdwg.mxu0
      %v3912 = vadd.f32 %v3364, %v3674
      %v3913 = vadd.f32 %v3365, %v3679
      %v3914 = vadd.f32 %v3366, %v3684
      %v3915 = vadd.f32 %v3367, %v3689
      %v3916 = vadd.f32 %v3368, %v3694
      %v3917 = vadd.f32 %v3369, %v3699
      %v3918 = vadd.f32 %v3370, %v3704
      %v3919 = vadd.f32 %v3371, %v3709
      %v3920 = vadd.f32 %v3372, %v3714
      %v3921 = vadd.f32 %v3373, %v3719
      %v3922 = vadd.f32 %v3374, %v3724
      %v3923 = vadd.f32 %v3375, %v3729
      %v3924 = vadd.f32 %v3376, %v3734
      %v3925 = vadd.f32 %v3377, %v3739
      %v3926 = vadd.f32 %v3378, %v3744
      %v3927 = vadd.f32 %v3379, %v3749
      %v3928 = vadd.f32 %v3380, %v3754
      %v3929 = vadd.f32 %v3381, %v3759
      %v3930 = vadd.f32 %v3382, %v3764
      %v3931 = vadd.f32 %v3383, %v3769
      %v3932 = vadd.f32 %v3384, %v3774
      %v3933 = vadd.f32 %v3385, %v3779
      %v3934 = vadd.f32 %v3386, %v3784
      %v3935 = vadd.f32 %v3387, %v3789
      %v3936 = vadd.f32 %v3388, %v3794
      %v3937 = vadd.f32 %v3389, %v3799
      %v3938 = vadd.f32 %v3390, %v3804
      %v3939 = vadd.f32 %v3391, %v3809
      %v3940 = vadd.f32 %v3392, %v3814
      %v3941 = vadd.f32 %v3393, %v3819
      %v3942 = vadd.f32 %v3394, %v3824
      %v3943 = vadd.f32 %v3395, %v3829
      %v3944 = vadd.f32 %v3396, %v3834
      %v3945 = vadd.f32 %v3397, %v3839
      %v3946 = vadd.f32 %v3398, %v3844
      %v3947 = vadd.f32 %v3399, %v3849
      %v3948 = vadd.f32 %v3400, %v3854
      %v3949 = vadd.f32 %v3401, %v3859
      %v3950 = vadd.f32 %v3402, %v3864
      %v3951 = vadd.f32 %v3403, %v3869
      %v3952 = vadd.f32 %v3404, %v3874
      %v3953 = vadd.f32 %v3405, %v3879
      %v3954 = vadd.f32 %v3406, %v3884
      %v3955 = vadd.f32 %v3407, %v3889
      %v3956 = vadd.f32 %v3408, %v3894
      %v3957 = vadd.f32 %v3409, %v3899
      %v3958 = vadd.f32 %v3410, %v3904
      %v3959 = vadd.f32 %v3411, %v3909
      %v3960 = vld [vmem:[%s3412 + $0x1] sm:$0xff]
      %v3961 = vld [vmem:[%s3412 + $0x9] sm:$0xff]
      %v3962 = vld [vmem:[%s3412 + $0x11] sm:$0xff]
      %v3963 = vld [vmem:[%s3412 + $0x21] sm:$0xff]
      %v3964 = vld [vmem:[%s3412 + $0x29] sm:$0xff]
      %v3965 = vld [vmem:[%s3412 + $0x31] sm:$0xff]
      %v3966 = vld [vmem:[%s3412 + $0x41] sm:$0xff]
      %v3967 = vld [vmem:[%s3412 + $0x49] sm:$0xff]
      %v3968 = vld [vmem:[%s3412 + $0x51] sm:$0xff]
      %v3969 = vld [vmem:[%s3412 + $0x61] sm:$0xff]
      %v3970 = vld [vmem:[%s3412 + $0x69] sm:$0xff]
      %v3971 = vld [vmem:[%s3412 + $0x71] sm:$0xff]
      %v3972 = vld [vmem:[%s3412 + $0x81] sm:$0xff]
      %v3973 = vld [vmem:[%s3412 + $0x89] sm:$0xff]
      %v3974 = vld [vmem:[%s3412 + $0x91] sm:$0xff]
      %v3975 = vld [vmem:[%s3412 + $0xa1] sm:$0xff]
      %v3976 = vld [vmem:[%s3412 + $0xa9] sm:$0xff]
      %v3977 = vld [vmem:[%s3412 + $0xb1] sm:$0xff]
      %v3978 = vld [vmem:[%s3412 + $0xc1] sm:$0xff]
      %v3979 = vld [vmem:[%s3412 + $0xc9] sm:$0xff]
      %v3980 = vld [vmem:[%s3412 + $0xd1] sm:$0xff]
      %v3981 = vld [vmem:[%s3412 + $0xe1] sm:$0xff]
      %v3982 = vld [vmem:[%s3412 + $0xe9] sm:$0xff]
      %v3983 = vld [vmem:[%s3412 + $0xf1] sm:$0xff]
      %v3984 = vld [vmem:[%s3412 + $0x101] sm:$0xff]
      %v3985 = vld [vmem:[%s3412 + $0x109] sm:$0xff]
      %v3986 = vld [vmem:[%s3412 + $0x111] sm:$0xff]
      %v3987 = vld [vmem:[%s3412 + $0x121] sm:$0xff]
      %v3988 = vld [vmem:[%s3412 + $0x129] sm:$0xff]
      %v3989 = vld [vmem:[%s3412 + $0x131] sm:$0xff]
      %v3990 = vld [vmem:[%s3412 + $0x141] sm:$0xff]
      %v3991 = vld [vmem:[%s3412 + $0x149] sm:$0xff]
      %v3992 = vld [vmem:[%s3412 + $0x151] sm:$0xff]
      %v3993 = vld [vmem:[%s3412 + $0x161] sm:$0xff]
      %v3994 = vld [vmem:[%s3412 + $0x169] sm:$0xff]
      %v3995 = vld [vmem:[%s3412 + $0x171] sm:$0xff]
      %v3996 = vld [vmem:[%s3412 + $0x181] sm:$0xff]
      %v3997 = vld [vmem:[%s3412 + $0x189] sm:$0xff]
      %v3998 = vld [vmem:[%s3412 + $0x191] sm:$0xff]
      %v3999 = vld [vmem:[%s3412 + $0x1a1] sm:$0xff]
      %v4000 = vld [vmem:[%s3412 + $0x1a9] sm:$0xff]
      %v4001 = vld [vmem:[%s3412 + $0x1b1] sm:$0xff]
      %v4002 = vld [vmem:[%s3412 + $0x1c1] sm:$0xff]
      %v4003 = vld [vmem:[%s3412 + $0x1c9] sm:$0xff]
      %v4004 = vld [vmem:[%s3412 + $0x1d1] sm:$0xff]
      %v4005 = vld [vmem:[%s3412 + $0x1e1] sm:$0xff]
      %v4006 = vld [vmem:[%s3412 + $0x1e9] sm:$0xff]
      %v4007 = vld [vmem:[%s3412 + $0x1f1] sm:$0xff]
      %s4008 = scalar_lea.vmem %s1, 56
      %v4009 = vld [vmem:[%s4008] sm:$0xff]
      %v4011 = vsel %vm324, %v3960, 0
      %v4014 = vsel %vm324, %v3961, 0
      %v4017 = vsel %vm324, %v3962, 0
      %v4020 = vsel %vm324, %v3963, 0
      %v4023 = vsel %vm324, %v3964, 0
      %v4026 = vsel %vm324, %v3965, 0
      %v4029 = vsel %vm324, %v3966, 0
      %v4032 = vsel %vm324, %v3967, 0
      %v4035 = vsel %vm324, %v3968, 0
      %v4038 = vsel %vm324, %v3969, 0
      %v4041 = vsel %vm324, %v3970, 0
      %v4044 = vsel %vm324, %v3971, 0
      %v4047 = vsel %vm324, %v3972, 0
      %v4050 = vsel %vm324, %v3973, 0
      %v4053 = vsel %vm324, %v3974, 0
      %v4056 = vsel %vm324, %v3975, 0
      %v4059 = vsel %vm324, %v3976, 0
      %v4062 = vsel %vm324, %v3977, 0
      %v4065 = vsel %vm324, %v3978, 0
      %v4068 = vsel %vm324, %v3979, 0
      %v4071 = vsel %vm324, %v3980, 0
      %v4074 = vsel %vm324, %v3981, 0
      %v4077 = vsel %vm324, %v3982, 0
      %v4080 = vsel %vm324, %v3983, 0
      %v4083 = vsel %vm324, %v3984, 0
      %v4086 = vsel %vm324, %v3985, 0
      %v4089 = vsel %vm324, %v3986, 0
      %v4092 = vsel %vm324, %v3987, 0
      %v4095 = vsel %vm324, %v3988, 0
      %v4098 = vsel %vm324, %v3989, 0
      %v4101 = vsel %vm324, %v3990, 0
      %v4104 = vsel %vm324, %v3991, 0
      %v4107 = vsel %vm324, %v3992, 0
      %v4110 = vsel %vm324, %v3993, 0
      %v4113 = vsel %vm324, %v3994, 0
      %v4116 = vsel %vm324, %v3995, 0
      %v4119 = vsel %vm324, %v3996, 0
      %v4122 = vsel %vm324, %v3997, 0
      %v4125 = vsel %vm324, %v3998, 0
      %v4128 = vsel %vm324, %v3999, 0
      %v4131 = vsel %vm324, %v4000, 0
      %v4134 = vsel %vm324, %v4001, 0
      %v4137 = vsel %vm324, %v4002, 0
      %v4140 = vsel %vm324, %v4003, 0
      %v4143 = vsel %vm324, %v4004, 0
      %v4146 = vsel %vm324, %v4005, 0
      %v4149 = vsel %vm324, %v4006, 0
      %v4152 = vsel %vm324, %v4007, 0
      %4154 = vmatprep.subr.mxu0 0.0
      %4155 = vmatpush1.msra.mxu0 0.0
      %4156 = vmatprep.subr.mxu0 0.0
      %4157 = vmatpush1.msra.mxu0 0.0
      %4158 = vmatprep.subr.mxu0 0.0
      %4159 = vmatpush1.msra.mxu0 0.0
      %4160 = vmatprep.subr.mxu0 0.0
      %4161 = vmatpush1.msra.mxu0 0.0
      %4162 = vmatprep.subr.mxu0 0.0
      %4163 = vmatpush1.msra.mxu0 0.0
      %4164 = vmatprep.subr.mxu0 0.0
      %4165 = vmatpush1.msra.mxu0 0.0
      %4166 = vmatprep.subr.mxu0 0.0
      %4167 = vmatpush1.msra.mxu0 0.0
      %4168 = vmatprep.subr.mxu0 0.0
      %4169 = vmatpush1.msra.mxu0 0.0
      %4170 = vmatprep.subr.mxu0 0.0
      %4171 = vmatpush1.msra.mxu0 0.0
      %4172 = vmatprep.subr.mxu0 0.0
      %4173 = vmatpush1.msra.mxu0 0.0
      %4174 = vmatprep.subr.mxu0 0.0
      %4175 = vmatpush1.msra.mxu0 0.0
      %4176 = vmatprep.subr.mxu0 0.0
      %4177 = vmatpush1.msra.mxu0 0.0
      %4178 = vmatprep.subr.mxu0 0.0
      %4179 = vmatpush1.msra.mxu0 0.0
      %4180 = vmatprep.subr.mxu0 0.0
      %4181 = vmatpush1.msra.mxu0 0.0
      %4182 = vmatprep.subr.mxu0 0.0
      %4183 = vmatpush1.msra.mxu0 0.0
      %4184 = vmatprep.subr.mxu0 0.0
      %4185 = vmatpush1.msra.mxu0 %v4009
      %4186 = vmatprep.subr.mxu0 0.0
      %4187 = vmatpush2.msra.mxu0 0.0
      %4188 = vmatprep.subr.mxu0 0.0
      %4189 = vmatpush2.msra.mxu0 0.0
      %4190 = vmatprep.subr.mxu0 0.0
      %4191 = vmatpush2.msra.mxu0 0.0
      %4192 = vmatprep.subr.mxu0 0.0
      %4193 = vmatpush2.msra.mxu0 0.0
      %4194 = vmatprep.subr.mxu0 0.0
      %4195 = vmatpush2.msra.mxu0 0.0
      %4196 = vmatprep.subr.mxu0 0.0
      %4197 = vmatpush2.msra.mxu0 0.0
      %4198 = vmatprep.subr.mxu0 0.0
      %4199 = vmatpush2.msra.mxu0 0.0
      %4200 = vmatprep.subr.mxu0 0.0
      %4201 = vmatpush2.msra.mxu0 0.0
      %4202 = vmatprep.subr.mxu0 0.0
      %4203 = vmatpush2.msra.mxu0 0.0
      %4204 = vmatprep.subr.mxu0 0.0
      %4205 = vmatpush2.msra.mxu0 0.0
      %4206 = vmatprep.subr.mxu0 0.0
      %4207 = vmatpush2.msra.mxu0 0.0
      %4208 = vmatprep.subr.mxu0 0.0
      %4209 = vmatpush2.msra.mxu0 0.0
      %4210 = vmatprep.subr.mxu0 0.0
      %4211 = vmatpush2.msra.mxu0 0.0
      %4212 = vmatprep.subr.mxu0 0.0
      %4213 = vmatpush2.msra.mxu0 0.0
      %4214 = vmatprep.subr.mxu0 0.0
      %4215 = vmatpush2.msra.mxu0 0.0
      %4216 = vmatprep.subr.mxu0 0.0
      %4217 = vmatpush2.msra.mxu0 0.0
      %4218 = vmatprep.mubr.f32.mxu0 0.0
      %4219 = vmatmul.mubr.f32.gmra.mxu0 %v4011
      %v4220 = vpop.f32.mrf.mxu0
      %v4221 = vadd.f32 0.0, %v4220
      %v4222 = vpop.f32.mrf.mxu0
      %4223 = vmatprep.mubr.f32.mxu0 0.0
      %4224 = vmatmul.mubr.f32.gmra.mxu0 %v4014
      %v4225 = vpop.f32.mrf.mxu0
      %v4226 = vadd.f32 0.0, %v4225
      %v4227 = vpop.f32.mrf.mxu0
      %4228 = vmatprep.mubr.f32.mxu0 0.0
      %4229 = vmatmul.mubr.f32.gmra.mxu0 %v4017
      %v4230 = vpop.f32.mrf.mxu0
      %v4231 = vadd.f32 0.0, %v4230
      %v4232 = vpop.f32.mrf.mxu0
      %4233 = vmatprep.mubr.f32.mxu0 0.0
      %4234 = vmatmul.mubr.f32.gmra.mxu0 %v4020
      %v4235 = vpop.f32.mrf.mxu0
      %v4236 = vadd.f32 0.0, %v4235
      %v4237 = vpop.f32.mrf.mxu0
      %4238 = vmatprep.mubr.f32.mxu0 0.0
      %4239 = vmatmul.mubr.f32.gmra.mxu0 %v4023
      %v4240 = vpop.f32.mrf.mxu0
      %v4241 = vadd.f32 0.0, %v4240
      %v4242 = vpop.f32.mrf.mxu0
      %4243 = vmatprep.mubr.f32.mxu0 0.0
      %4244 = vmatmul.mubr.f32.gmra.mxu0 %v4026
      %v4245 = vpop.f32.mrf.mxu0
      %v4246 = vadd.f32 0.0, %v4245
      %v4247 = vpop.f32.mrf.mxu0
      %4248 = vmatprep.mubr.f32.mxu0 0.0
      %4249 = vmatmul.mubr.f32.gmra.mxu0 %v4029
      %v4250 = vpop.f32.mrf.mxu0
      %v4251 = vadd.f32 0.0, %v4250
      %v4252 = vpop.f32.mrf.mxu0
      %4253 = vmatprep.mubr.f32.mxu0 0.0
      %4254 = vmatmul.mubr.f32.gmra.mxu0 %v4032
      %v4255 = vpop.f32.mrf.mxu0
      %v4256 = vadd.f32 0.0, %v4255
      %v4257 = vpop.f32.mrf.mxu0
      %4258 = vmatprep.mubr.f32.mxu0 0.0
      %4259 = vmatmul.mubr.f32.gmra.mxu0 %v4035
      %v4260 = vpop.f32.mrf.mxu0
      %v4261 = vadd.f32 0.0, %v4260
      %v4262 = vpop.f32.mrf.mxu0
      %4263 = vmatprep.mubr.f32.mxu0 0.0
      %4264 = vmatmul.mubr.f32.gmra.mxu0 %v4038
      %v4265 = vpop.f32.mrf.mxu0
      %v4266 = vadd.f32 0.0, %v4265
      %v4267 = vpop.f32.mrf.mxu0
      %4268 = vmatprep.mubr.f32.mxu0 0.0
      %4269 = vmatmul.mubr.f32.gmra.mxu0 %v4041
      %v4270 = vpop.f32.mrf.mxu0
      %v4271 = vadd.f32 0.0, %v4270
      %v4272 = vpop.f32.mrf.mxu0
      %4273 = vmatprep.mubr.f32.mxu0 0.0
      %4274 = vmatmul.mubr.f32.gmra.mxu0 %v4044
      %v4275 = vpop.f32.mrf.mxu0
      %v4276 = vadd.f32 0.0, %v4275
      %v4277 = vpop.f32.mrf.mxu0
      %4278 = vmatprep.mubr.f32.mxu0 0.0
      %4279 = vmatmul.mubr.f32.gmra.mxu0 %v4047
      %v4280 = vpop.f32.mrf.mxu0
      %v4281 = vadd.f32 0.0, %v4280
      %v4282 = vpop.f32.mrf.mxu0
      %4283 = vmatprep.mubr.f32.mxu0 0.0
      %4284 = vmatmul.mubr.f32.gmra.mxu0 %v4050
      %v4285 = vpop.f32.mrf.mxu0
      %v4286 = vadd.f32 0.0, %v4285
      %v4287 = vpop.f32.mrf.mxu0
      %4288 = vmatprep.mubr.f32.mxu0 0.0
      %4289 = vmatmul.mubr.f32.gmra.mxu0 %v4053
      %v4290 = vpop.f32.mrf.mxu0
      %v4291 = vadd.f32 0.0, %v4290
      %v4292 = vpop.f32.mrf.mxu0
      %4293 = vmatprep.mubr.f32.mxu0 0.0
      %4294 = vmatmul.mubr.f32.gmra.mxu0 %v4056
      %v4295 = vpop.f32.mrf.mxu0
      %v4296 = vadd.f32 0.0, %v4295
      %v4297 = vpop.f32.mrf.mxu0
      %4298 = vmatprep.mubr.f32.mxu0 0.0
      %4299 = vmatmul.mubr.f32.gmra.mxu0 %v4059
      %v4300 = vpop.f32.mrf.mxu0
      %v4301 = vadd.f32 0.0, %v4300
      %v4302 = vpop.f32.mrf.mxu0
      %4303 = vmatprep.mubr.f32.mxu0 0.0
      %4304 = vmatmul.mubr.f32.gmra.mxu0 %v4062
      %v4305 = vpop.f32.mrf.mxu0
      %v4306 = vadd.f32 0.0, %v4305
      %v4307 = vpop.f32.mrf.mxu0
      %4308 = vmatprep.mubr.f32.mxu0 0.0
      %4309 = vmatmul.mubr.f32.gmra.mxu0 %v4065
      %v4310 = vpop.f32.mrf.mxu0
      %v4311 = vadd.f32 0.0, %v4310
      %v4312 = vpop.f32.mrf.mxu0
      %4313 = vmatprep.mubr.f32.mxu0 0.0
      %4314 = vmatmul.mubr.f32.gmra.mxu0 %v4068
      %v4315 = vpop.f32.mrf.mxu0
      %v4316 = vadd.f32 0.0, %v4315
      %v4317 = vpop.f32.mrf.mxu0
      %4318 = vmatprep.mubr.f32.mxu0 0.0
      %4319 = vmatmul.mubr.f32.gmra.mxu0 %v4071
      %v4320 = vpop.f32.mrf.mxu0
      %v4321 = vadd.f32 0.0, %v4320
      %v4322 = vpop.f32.mrf.mxu0
      %4323 = vmatprep.mubr.f32.mxu0 0.0
      %4324 = vmatmul.mubr.f32.gmra.mxu0 %v4074
      %v4325 = vpop.f32.mrf.mxu0
      %v4326 = vadd.f32 0.0, %v4325
      %v4327 = vpop.f32.mrf.mxu0
      %4328 = vmatprep.mubr.f32.mxu0 0.0
      %4329 = vmatmul.mubr.f32.gmra.mxu0 %v4077
      %v4330 = vpop.f32.mrf.mxu0
      %v4331 = vadd.f32 0.0, %v4330
      %v4332 = vpop.f32.mrf.mxu0
      %4333 = vmatprep.mubr.f32.mxu0 0.0
      %4334 = vmatmul.mubr.f32.gmra.mxu0 %v4080
      %v4335 = vpop.f32.mrf.mxu0
      %v4336 = vadd.f32 0.0, %v4335
      %v4337 = vpop.f32.mrf.mxu0
      %4338 = vmatprep.mubr.f32.mxu0 0.0
      %4339 = vmatmul.mubr.f32.gmra.mxu0 %v4083
      %v4340 = vpop.f32.mrf.mxu0
      %v4341 = vadd.f32 0.0, %v4340
      %v4342 = vpop.f32.mrf.mxu0
      %4343 = vmatprep.mubr.f32.mxu0 0.0
      %4344 = vmatmul.mubr.f32.gmra.mxu0 %v4086
      %v4345 = vpop.f32.mrf.mxu0
      %v4346 = vadd.f32 0.0, %v4345
      %v4347 = vpop.f32.mrf.mxu0
      %4348 = vmatprep.mubr.f32.mxu0 0.0
      %4349 = vmatmul.mubr.f32.gmra.mxu0 %v4089
      %v4350 = vpop.f32.mrf.mxu0
      %v4351 = vadd.f32 0.0, %v4350
      %v4352 = vpop.f32.mrf.mxu0
      %4353 = vmatprep.mubr.f32.mxu0 0.0
      %4354 = vmatmul.mubr.f32.gmra.mxu0 %v4092
      %v4355 = vpop.f32.mrf.mxu0
      %v4356 = vadd.f32 0.0, %v4355
      %v4357 = vpop.f32.mrf.mxu0
      %4358 = vmatprep.mubr.f32.mxu0 0.0
      %4359 = vmatmul.mubr.f32.gmra.mxu0 %v4095
      %v4360 = vpop.f32.mrf.mxu0
      %v4361 = vadd.f32 0.0, %v4360
      %v4362 = vpop.f32.mrf.mxu0
      %4363 = vmatprep.mubr.f32.mxu0 0.0
      %4364 = vmatmul.mubr.f32.gmra.mxu0 %v4098
      %v4365 = vpop.f32.mrf.mxu0
      %v4366 = vadd.f32 0.0, %v4365
      %v4367 = vpop.f32.mrf.mxu0
      %4368 = vmatprep.mubr.f32.mxu0 0.0
      %4369 = vmatmul.mubr.f32.gmra.mxu0 %v4101
      %v4370 = vpop.f32.mrf.mxu0
      %v4371 = vadd.f32 0.0, %v4370
      %v4372 = vpop.f32.mrf.mxu0
      %4373 = vmatprep.mubr.f32.mxu0 0.0
      %4374 = vmatmul.mubr.f32.gmra.mxu0 %v4104
      %v4375 = vpop.f32.mrf.mxu0
      %v4376 = vadd.f32 0.0, %v4375
      %v4377 = vpop.f32.mrf.mxu0
      %4378 = vmatprep.mubr.f32.mxu0 0.0
      %4379 = vmatmul.mubr.f32.gmra.mxu0 %v4107
      %v4380 = vpop.f32.mrf.mxu0
      %v4381 = vadd.f32 0.0, %v4380
      %v4382 = vpop.f32.mrf.mxu0
      %4383 = vmatprep.mubr.f32.mxu0 0.0
      %4384 = vmatmul.mubr.f32.gmra.mxu0 %v4110
      %v4385 = vpop.f32.mrf.mxu0
      %v4386 = vadd.f32 0.0, %v4385
      %v4387 = vpop.f32.mrf.mxu0
      %4388 = vmatprep.mubr.f32.mxu0 0.0
      %4389 = vmatmul.mubr.f32.gmra.mxu0 %v4113
      %v4390 = vpop.f32.mrf.mxu0
      %v4391 = vadd.f32 0.0, %v4390
      %v4392 = vpop.f32.mrf.mxu0
      %4393 = vmatprep.mubr.f32.mxu0 0.0
      %4394 = vmatmul.mubr.f32.gmra.mxu0 %v4116
      %v4395 = vpop.f32.mrf.mxu0
      %v4396 = vadd.f32 0.0, %v4395
      %v4397 = vpop.f32.mrf.mxu0
      %4398 = vmatprep.mubr.f32.mxu0 0.0
      %4399 = vmatmul.mubr.f32.gmra.mxu0 %v4119
      %v4400 = vpop.f32.mrf.mxu0
      %v4401 = vadd.f32 0.0, %v4400
      %v4402 = vpop.f32.mrf.mxu0
      %4403 = vmatprep.mubr.f32.mxu0 0.0
      %4404 = vmatmul.mubr.f32.gmra.mxu0 %v4122
      %v4405 = vpop.f32.mrf.mxu0
      %v4406 = vadd.f32 0.0, %v4405
      %v4407 = vpop.f32.mrf.mxu0
      %4408 = vmatprep.mubr.f32.mxu0 0.0
      %4409 = vmatmul.mubr.f32.gmra.mxu0 %v4125
      %v4410 = vpop.f32.mrf.mxu0
      %v4411 = vadd.f32 0.0, %v4410
      %v4412 = vpop.f32.mrf.mxu0
      %4413 = vmatprep.mubr.f32.mxu0 0.0
      %4414 = vmatmul.mubr.f32.gmra.mxu0 %v4128
      %v4415 = vpop.f32.mrf.mxu0
      %v4416 = vadd.f32 0.0, %v4415
      %v4417 = vpop.f32.mrf.mxu0
      %4418 = vmatprep.mubr.f32.mxu0 0.0
      %4419 = vmatmul.mubr.f32.gmra.mxu0 %v4131
      %v4420 = vpop.f32.mrf.mxu0
      %v4421 = vadd.f32 0.0, %v4420
      %v4422 = vpop.f32.mrf.mxu0
      %4423 = vmatprep.mubr.f32.mxu0 0.0
      %4424 = vmatmul.mubr.f32.gmra.mxu0 %v4134
      %v4425 = vpop.f32.mrf.mxu0
      %v4426 = vadd.f32 0.0, %v4425
      %v4427 = vpop.f32.mrf.mxu0
      %4428 = vmatprep.mubr.f32.mxu0 0.0
      %4429 = vmatmul.mubr.f32.gmra.mxu0 %v4137
      %v4430 = vpop.f32.mrf.mxu0
      %v4431 = vadd.f32 0.0, %v4430
      %v4432 = vpop.f32.mrf.mxu0
      %4433 = vmatprep.mubr.f32.mxu0 0.0
      %4434 = vmatmul.mubr.f32.gmra.mxu0 %v4140
      %v4435 = vpop.f32.mrf.mxu0
      %v4436 = vadd.f32 0.0, %v4435
      %v4437 = vpop.f32.mrf.mxu0
      %4438 = vmatprep.mubr.f32.mxu0 0.0
      %4439 = vmatmul.mubr.f32.gmra.mxu0 %v4143
      %v4440 = vpop.f32.mrf.mxu0
      %v4441 = vadd.f32 0.0, %v4440
      %v4442 = vpop.f32.mrf.mxu0
      %4443 = vmatprep.mubr.f32.mxu0 0.0
      %4444 = vmatmul.mubr.f32.gmra.mxu0 %v4146
      %v4445 = vpop.f32.mrf.mxu0
      %v4446 = vadd.f32 0.0, %v4445
      %v4447 = vpop.f32.mrf.mxu0
      %4448 = vmatprep.mubr.f32.mxu0 0.0
      %4449 = vmatmul.mubr.f32.gmra.mxu0 %v4149
      %v4450 = vpop.f32.mrf.mxu0
      %v4451 = vadd.f32 0.0, %v4450
      %v4452 = vpop.f32.mrf.mxu0
      %4453 = vmatprep.mubr.f32.mxu0 0.0
      %4454 = vmatmul.mubr.f32.gmra.mxu0 %v4152
      %v4455 = vpop.f32.mrf.mxu0
      %v4456 = vadd.f32 0.0, %v4455
      %v4457 = vpop.f32.mrf.mxu0
      %4458 = vdwg.mxu0
      %v4459 = vadd.f32 %v3912, %v4221
      %v4460 = vadd.f32 %v3913, %v4226
      %v4461 = vadd.f32 %v3914, %v4231
      %v4462 = vadd.f32 %v3915, %v4236
      %v4463 = vadd.f32 %v3916, %v4241
      %v4464 = vadd.f32 %v3917, %v4246
      %v4465 = vadd.f32 %v3918, %v4251
      %v4466 = vadd.f32 %v3919, %v4256
      %v4467 = vadd.f32 %v3920, %v4261
      %v4468 = vadd.f32 %v3921, %v4266
      %v4469 = vadd.f32 %v3922, %v4271
      %v4470 = vadd.f32 %v3923, %v4276
      %v4471 = vadd.f32 %v3924, %v4281
      %v4472 = vadd.f32 %v3925, %v4286
      %v4473 = vadd.f32 %v3926, %v4291
      %v4474 = vadd.f32 %v3927, %v4296
      %v4475 = vadd.f32 %v3928, %v4301
      %v4476 = vadd.f32 %v3929, %v4306
      %v4477 = vadd.f32 %v3930, %v4311
      %v4478 = vadd.f32 %v3931, %v4316
      %v4479 = vadd.f32 %v3932, %v4321
      %v4480 = vadd.f32 %v3933, %v4326
      %v4481 = vadd.f32 %v3934, %v4331
      %v4482 = vadd.f32 %v3935, %v4336
      %v4483 = vadd.f32 %v3936, %v4341
      %v4484 = vadd.f32 %v3937, %v4346
      %v4485 = vadd.f32 %v3938, %v4351
      %v4486 = vadd.f32 %v3939, %v4356
      %v4487 = vadd.f32 %v3940, %v4361
      %v4488 = vadd.f32 %v3941, %v4366
      %v4489 = vadd.f32 %v3942, %v4371
      %v4490 = vadd.f32 %v3943, %v4376
      %v4491 = vadd.f32 %v3944, %v4381
      %v4492 = vadd.f32 %v3945, %v4386
      %v4493 = vadd.f32 %v3946, %v4391
      %v4494 = vadd.f32 %v3947, %v4396
      %v4495 = vadd.f32 %v3948, %v4401
      %v4496 = vadd.f32 %v3949, %v4406
      %v4497 = vadd.f32 %v3950, %v4411
      %v4498 = vadd.f32 %v3951, %v4416
      %v4499 = vadd.f32 %v3952, %v4421
      %v4500 = vadd.f32 %v3953, %v4426
      %v4501 = vadd.f32 %v3954, %v4431
      %v4502 = vadd.f32 %v3955, %v4436
      %v4503 = vadd.f32 %v3956, %v4441
      %v4504 = vadd.f32 %v3957, %v4446
      %v4505 = vadd.f32 %v3958, %v4451
      %v4506 = vadd.f32 %v3959, %v4456
      %v4507 = vld [vmem:[%s3412 + $0x2] sm:$0xff]
      %v4508 = vld [vmem:[%s3412 + $0xa] sm:$0xff]
      %v4509 = vld [vmem:[%s3412 + $0x12] sm:$0xff]
      %v4510 = vld [vmem:[%s3412 + $0x22] sm:$0xff]
      %v4511 = vld [vmem:[%s3412 + $0x2a] sm:$0xff]
      %v4512 = vld [vmem:[%s3412 + $0x32] sm:$0xff]
      %v4513 = vld [vmem:[%s3412 + $0x42] sm:$0xff]
      %v4514 = vld [vmem:[%s3412 + $0x4a] sm:$0xff]
      %v4515 = vld [vmem:[%s3412 + $0x52] sm:$0xff]
      %v4516 = vld [vmem:[%s3412 + $0x62] sm:$0xff]
      %v4517 = vld [vmem:[%s3412 + $0x6a] sm:$0xff]
      %v4518 = vld [vmem:[%s3412 + $0x72] sm:$0xff]
      %v4519 = vld [vmem:[%s3412 + $0x82] sm:$0xff]
      %v4520 = vld [vmem:[%s3412 + $0x8a] sm:$0xff]
      %v4521 = vld [vmem:[%s3412 + $0x92] sm:$0xff]
      %v4522 = vld [vmem:[%s3412 + $0xa2] sm:$0xff]
      %v4523 = vld [vmem:[%s3412 + $0xaa] sm:$0xff]
      %v4524 = vld [vmem:[%s3412 + $0xb2] sm:$0xff]
      %v4525 = vld [vmem:[%s3412 + $0xc2] sm:$0xff]
      %v4526 = vld [vmem:[%s3412 + $0xca] sm:$0xff]
      %v4527 = vld [vmem:[%s3412 + $0xd2] sm:$0xff]
      %v4528 = vld [vmem:[%s3412 + $0xe2] sm:$0xff]
      %v4529 = vld [vmem:[%s3412 + $0xea] sm:$0xff]
      %v4530 = vld [vmem:[%s3412 + $0xf2] sm:$0xff]
      %v4531 = vld [vmem:[%s3412 + $0x102] sm:$0xff]
      %v4532 = vld [vmem:[%s3412 + $0x10a] sm:$0xff]
      %v4533 = vld [vmem:[%s3412 + $0x112] sm:$0xff]
      %v4534 = vld [vmem:[%s3412 + $0x122] sm:$0xff]
      %v4535 = vld [vmem:[%s3412 + $0x12a] sm:$0xff]
      %v4536 = vld [vmem:[%s3412 + $0x132] sm:$0xff]
      %v4537 = vld [vmem:[%s3412 + $0x142] sm:$0xff]
      %v4538 = vld [vmem:[%s3412 + $0x14a] sm:$0xff]
      %v4539 = vld [vmem:[%s3412 + $0x152] sm:$0xff]
      %v4540 = vld [vmem:[%s3412 + $0x162] sm:$0xff]
      %v4541 = vld [vmem:[%s3412 + $0x16a] sm:$0xff]
      %v4542 = vld [vmem:[%s3412 + $0x172] sm:$0xff]
      %v4543 = vld [vmem:[%s3412 + $0x182] sm:$0xff]
      %v4544 = vld [vmem:[%s3412 + $0x18a] sm:$0xff]
      %v4545 = vld [vmem:[%s3412 + $0x192] sm:$0xff]
      %v4546 = vld [vmem:[%s3412 + $0x1a2] sm:$0xff]
      %v4547 = vld [vmem:[%s3412 + $0x1aa] sm:$0xff]
      %v4548 = vld [vmem:[%s3412 + $0x1b2] sm:$0xff]
      %v4549 = vld [vmem:[%s3412 + $0x1c2] sm:$0xff]
      %v4550 = vld [vmem:[%s3412 + $0x1ca] sm:$0xff]
      %v4551 = vld [vmem:[%s3412 + $0x1d2] sm:$0xff]
      %v4552 = vld [vmem:[%s3412 + $0x1e2] sm:$0xff]
      %v4553 = vld [vmem:[%s3412 + $0x1ea] sm:$0xff]
      %v4554 = vld [vmem:[%s3412 + $0x1f2] sm:$0xff]
      %s4555 = scalar_lea.vmem %s1, 64
      %v4556 = vld [vmem:[%s4555] sm:$0xff]
      %v4558 = vsel %vm324, %v4507, 0
      %v4561 = vsel %vm324, %v4508, 0
      %v4564 = vsel %vm324, %v4509, 0
      %v4567 = vsel %vm324, %v4510, 0
      %v4570 = vsel %vm324, %v4511, 0
      %v4573 = vsel %vm324, %v4512, 0
      %v4576 = vsel %vm324, %v4513, 0
      %v4579 = vsel %vm324, %v4514, 0
      %v4582 = vsel %vm324, %v4515, 0
      %v4585 = vsel %vm324, %v4516, 0
      %v4588 = vsel %vm324, %v4517, 0
      %v4591 = vsel %vm324, %v4518, 0
      %v4594 = vsel %vm324, %v4519, 0
      %v4597 = vsel %vm324, %v4520, 0
      %v4600 = vsel %vm324, %v4521, 0
      %v4603 = vsel %vm324, %v4522, 0
      %v4606 = vsel %vm324, %v4523, 0
      %v4609 = vsel %vm324, %v4524, 0
      %v4612 = vsel %vm324, %v4525, 0
      %v4615 = vsel %vm324, %v4526, 0
      %v4618 = vsel %vm324, %v4527, 0
      %v4621 = vsel %vm324, %v4528, 0
      %v4624 = vsel %vm324, %v4529, 0
      %v4627 = vsel %vm324, %v4530, 0
      %v4630 = vsel %vm324, %v4531, 0
      %v4633 = vsel %vm324, %v4532, 0
      %v4636 = vsel %vm324, %v4533, 0
      %v4639 = vsel %vm324, %v4534, 0
      %v4642 = vsel %vm324, %v4535, 0
      %v4645 = vsel %vm324, %v4536, 0
      %v4648 = vsel %vm324, %v4537, 0
      %v4651 = vsel %vm324, %v4538, 0
      %v4654 = vsel %vm324, %v4539, 0
      %v4657 = vsel %vm324, %v4540, 0
      %v4660 = vsel %vm324, %v4541, 0
      %v4663 = vsel %vm324, %v4542, 0
      %v4666 = vsel %vm324, %v4543, 0
      %v4669 = vsel %vm324, %v4544, 0
      %v4672 = vsel %vm324, %v4545, 0
      %v4675 = vsel %vm324, %v4546, 0
      %v4678 = vsel %vm324, %v4547, 0
      %v4681 = vsel %vm324, %v4548, 0
      %v4684 = vsel %vm324, %v4549, 0
      %v4687 = vsel %vm324, %v4550, 0
      %v4690 = vsel %vm324, %v4551, 0
      %v4693 = vsel %vm324, %v4552, 0
      %v4696 = vsel %vm324, %v4553, 0
      %v4699 = vsel %vm324, %v4554, 0
      %4701 = vmatprep.subr.mxu0 0.0
      %4702 = vmatpush1.msra.mxu0 0.0
      %4703 = vmatprep.subr.mxu0 0.0
      %4704 = vmatpush1.msra.mxu0 0.0
      %4705 = vmatprep.subr.mxu0 0.0
      %4706 = vmatpush1.msra.mxu0 0.0
      %4707 = vmatprep.subr.mxu0 0.0
      %4708 = vmatpush1.msra.mxu0 0.0
      %4709 = vmatprep.subr.mxu0 0.0
      %4710 = vmatpush1.msra.mxu0 0.0
      %4711 = vmatprep.subr.mxu0 0.0
      %4712 = vmatpush1.msra.mxu0 0.0
      %4713 = vmatprep.subr.mxu0 0.0
      %4714 = vmatpush1.msra.mxu0 0.0
      %4715 = vmatprep.subr.mxu0 0.0
      %4716 = vmatpush1.msra.mxu0 0.0
      %4717 = vmatprep.subr.mxu0 0.0
      %4718 = vmatpush1.msra.mxu0 0.0
      %4719 = vmatprep.subr.mxu0 0.0
      %4720 = vmatpush1.msra.mxu0 0.0
      %4721 = vmatprep.subr.mxu0 0.0
      %4722 = vmatpush1.msra.mxu0 0.0
      %4723 = vmatprep.subr.mxu0 0.0
      %4724 = vmatpush1.msra.mxu0 0.0
      %4725 = vmatprep.subr.mxu0 0.0
      %4726 = vmatpush1.msra.mxu0 0.0
      %4727 = vmatprep.subr.mxu0 0.0
      %4728 = vmatpush1.msra.mxu0 0.0
      %4729 = vmatprep.subr.mxu0 0.0
      %4730 = vmatpush1.msra.mxu0 0.0
      %4731 = vmatprep.subr.mxu0 0.0
      %4732 = vmatpush1.msra.mxu0 %v4556
      %4733 = vmatprep.subr.mxu0 0.0
      %4734 = vmatpush2.msra.mxu0 0.0
      %4735 = vmatprep.subr.mxu0 0.0
      %4736 = vmatpush2.msra.mxu0 0.0
      %4737 = vmatprep.subr.mxu0 0.0
      %4738 = vmatpush2.msra.mxu0 0.0
      %4739 = vmatprep.subr.mxu0 0.0
      %4740 = vmatpush2.msra.mxu0 0.0
      %4741 = vmatprep.subr.mxu0 0.0
      %4742 = vmatpush2.msra.mxu0 0.0
      %4743 = vmatprep.subr.mxu0 0.0
      %4744 = vmatpush2.msra.mxu0 0.0
      %4745 = vmatprep.subr.mxu0 0.0
      %4746 = vmatpush2.msra.mxu0 0.0
      %4747 = vmatprep.subr.mxu0 0.0
      %4748 = vmatpush2.msra.mxu0 0.0
      %4749 = vmatprep.subr.mxu0 0.0
      %4750 = vmatpush2.msra.mxu0 0.0
      %4751 = vmatprep.subr.mxu0 0.0
      %4752 = vmatpush2.msra.mxu0 0.0
      %4753 = vmatprep.subr.mxu0 0.0
      %4754 = vmatpush2.msra.mxu0 0.0
      %4755 = vmatprep.subr.mxu0 0.0
      %4756 = vmatpush2.msra.mxu0 0.0
      %4757 = vmatprep.subr.mxu0 0.0
      %4758 = vmatpush2.msra.mxu0 0.0
      %4759 = vmatprep.subr.mxu0 0.0
      %4760 = vmatpush2.msra.mxu0 0.0
      %4761 = vmatprep.subr.mxu0 0.0
      %4762 = vmatpush2.msra.mxu0 0.0
      %4763 = vmatprep.subr.mxu0 0.0
      %4764 = vmatpush2.msra.mxu0 0.0
      %4765 = vmatprep.mubr.f32.mxu0 0.0
      %4766 = vmatmul.mubr.f32.gmra.mxu0 %v4558
      %v4767 = vpop.f32.mrf.mxu0
      %v4768 = vadd.f32 0.0, %v4767
      %v4769 = vpop.f32.mrf.mxu0
      %4770 = vmatprep.mubr.f32.mxu0 0.0
      %4771 = vmatmul.mubr.f32.gmra.mxu0 %v4561
      %v4772 = vpop.f32.mrf.mxu0
      %v4773 = vadd.f32 0.0, %v4772
      %v4774 = vpop.f32.mrf.mxu0
      %4775 = vmatprep.mubr.f32.mxu0 0.0
      %4776 = vmatmul.mubr.f32.gmra.mxu0 %v4564
      %v4777 = vpop.f32.mrf.mxu0
      %v4778 = vadd.f32 0.0, %v4777
      %v4779 = vpop.f32.mrf.mxu0
      %4780 = vmatprep.mubr.f32.mxu0 0.0
      %4781 = vmatmul.mubr.f32.gmra.mxu0 %v4567
      %v4782 = vpop.f32.mrf.mxu0
      %v4783 = vadd.f32 0.0, %v4782
      %v4784 = vpop.f32.mrf.mxu0
      %4785 = vmatprep.mubr.f32.mxu0 0.0
      %4786 = vmatmul.mubr.f32.gmra.mxu0 %v4570
      %v4787 = vpop.f32.mrf.mxu0
      %v4788 = vadd.f32 0.0, %v4787
      %v4789 = vpop.f32.mrf.mxu0
      %4790 = vmatprep.mubr.f32.mxu0 0.0
      %4791 = vmatmul.mubr.f32.gmra.mxu0 %v4573
      %v4792 = vpop.f32.mrf.mxu0
      %v4793 = vadd.f32 0.0, %v4792
      %v4794 = vpop.f32.mrf.mxu0
      %4795 = vmatprep.mubr.f32.mxu0 0.0
      %4796 = vmatmul.mubr.f32.gmra.mxu0 %v4576
      %v4797 = vpop.f32.mrf.mxu0
      %v4798 = vadd.f32 0.0, %v4797
      %v4799 = vpop.f32.mrf.mxu0
      %4800 = vmatprep.mubr.f32.mxu0 0.0
      %4801 = vmatmul.mubr.f32.gmra.mxu0 %v4579
      %v4802 = vpop.f32.mrf.mxu0
      %v4803 = vadd.f32 0.0, %v4802
      %v4804 = vpop.f32.mrf.mxu0
      %4805 = vmatprep.mubr.f32.mxu0 0.0
      %4806 = vmatmul.mubr.f32.gmra.mxu0 %v4582
      %v4807 = vpop.f32.mrf.mxu0
      %v4808 = vadd.f32 0.0, %v4807
      %v4809 = vpop.f32.mrf.mxu0
      %4810 = vmatprep.mubr.f32.mxu0 0.0
      %4811 = vmatmul.mubr.f32.gmra.mxu0 %v4585
      %v4812 = vpop.f32.mrf.mxu0
      %v4813 = vadd.f32 0.0, %v4812
      %v4814 = vpop.f32.mrf.mxu0
      %4815 = vmatprep.mubr.f32.mxu0 0.0
      %4816 = vmatmul.mubr.f32.gmra.mxu0 %v4588
      %v4817 = vpop.f32.mrf.mxu0
      %v4818 = vadd.f32 0.0, %v4817
      %v4819 = vpop.f32.mrf.mxu0
      %4820 = vmatprep.mubr.f32.mxu0 0.0
      %4821 = vmatmul.mubr.f32.gmra.mxu0 %v4591
      %v4822 = vpop.f32.mrf.mxu0
      %v4823 = vadd.f32 0.0, %v4822
      %v4824 = vpop.f32.mrf.mxu0
      %4825 = vmatprep.mubr.f32.mxu0 0.0
      %4826 = vmatmul.mubr.f32.gmra.mxu0 %v4594
      %v4827 = vpop.f32.mrf.mxu0
      %v4828 = vadd.f32 0.0, %v4827
      %v4829 = vpop.f32.mrf.mxu0
      %4830 = vmatprep.mubr.f32.mxu0 0.0
      %4831 = vmatmul.mubr.f32.gmra.mxu0 %v4597
      %v4832 = vpop.f32.mrf.mxu0
      %v4833 = vadd.f32 0.0, %v4832
      %v4834 = vpop.f32.mrf.mxu0
      %4835 = vmatprep.mubr.f32.mxu0 0.0
      %4836 = vmatmul.mubr.f32.gmra.mxu0 %v4600
      %v4837 = vpop.f32.mrf.mxu0
      %v4838 = vadd.f32 0.0, %v4837
      %v4839 = vpop.f32.mrf.mxu0
      %4840 = vmatprep.mubr.f32.mxu0 0.0
      %4841 = vmatmul.mubr.f32.gmra.mxu0 %v4603
      %v4842 = vpop.f32.mrf.mxu0
      %v4843 = vadd.f32 0.0, %v4842
      %v4844 = vpop.f32.mrf.mxu0
      %4845 = vmatprep.mubr.f32.mxu0 0.0
      %4846 = vmatmul.mubr.f32.gmra.mxu0 %v4606
      %v4847 = vpop.f32.mrf.mxu0
      %v4848 = vadd.f32 0.0, %v4847
      %v4849 = vpop.f32.mrf.mxu0
      %4850 = vmatprep.mubr.f32.mxu0 0.0
      %4851 = vmatmul.mubr.f32.gmra.mxu0 %v4609
      %v4852 = vpop.f32.mrf.mxu0
      %v4853 = vadd.f32 0.0, %v4852
      %v4854 = vpop.f32.mrf.mxu0
      %4855 = vmatprep.mubr.f32.mxu0 0.0
      %4856 = vmatmul.mubr.f32.gmra.mxu0 %v4612
      %v4857 = vpop.f32.mrf.mxu0
      %v4858 = vadd.f32 0.0, %v4857
      %v4859 = vpop.f32.mrf.mxu0
      %4860 = vmatprep.mubr.f32.mxu0 0.0
      %4861 = vmatmul.mubr.f32.gmra.mxu0 %v4615
      %v4862 = vpop.f32.mrf.mxu0
      %v4863 = vadd.f32 0.0, %v4862
      %v4864 = vpop.f32.mrf.mxu0
      %4865 = vmatprep.mubr.f32.mxu0 0.0
      %4866 = vmatmul.mubr.f32.gmra.mxu0 %v4618
      %v4867 = vpop.f32.mrf.mxu0
      %v4868 = vadd.f32 0.0, %v4867
      %v4869 = vpop.f32.mrf.mxu0
      %4870 = vmatprep.mubr.f32.mxu0 0.0
      %4871 = vmatmul.mubr.f32.gmra.mxu0 %v4621
      %v4872 = vpop.f32.mrf.mxu0
      %v4873 = vadd.f32 0.0, %v4872
      %v4874 = vpop.f32.mrf.mxu0
      %4875 = vmatprep.mubr.f32.mxu0 0.0
      %4876 = vmatmul.mubr.f32.gmra.mxu0 %v4624
      %v4877 = vpop.f32.mrf.mxu0
      %v4878 = vadd.f32 0.0, %v4877
      %v4879 = vpop.f32.mrf.mxu0
      %4880 = vmatprep.mubr.f32.mxu0 0.0
      %4881 = vmatmul.mubr.f32.gmra.mxu0 %v4627
      %v4882 = vpop.f32.mrf.mxu0
      %v4883 = vadd.f32 0.0, %v4882
      %v4884 = vpop.f32.mrf.mxu0
      %4885 = vmatprep.mubr.f32.mxu0 0.0
      %4886 = vmatmul.mubr.f32.gmra.mxu0 %v4630
      %v4887 = vpop.f32.mrf.mxu0
      %v4888 = vadd.f32 0.0, %v4887
      %v4889 = vpop.f32.mrf.mxu0
      %4890 = vmatprep.mubr.f32.mxu0 0.0
      %4891 = vmatmul.mubr.f32.gmra.mxu0 %v4633
      %v4892 = vpop.f32.mrf.mxu0
      %v4893 = vadd.f32 0.0, %v4892
      %v4894 = vpop.f32.mrf.mxu0
      %4895 = vmatprep.mubr.f32.mxu0 0.0
      %4896 = vmatmul.mubr.f32.gmra.mxu0 %v4636
      %v4897 = vpop.f32.mrf.mxu0
      %v4898 = vadd.f32 0.0, %v4897
      %v4899 = vpop.f32.mrf.mxu0
      %4900 = vmatprep.mubr.f32.mxu0 0.0
      %4901 = vmatmul.mubr.f32.gmra.mxu0 %v4639
      %v4902 = vpop.f32.mrf.mxu0
      %v4903 = vadd.f32 0.0, %v4902
      %v4904 = vpop.f32.mrf.mxu0
      %4905 = vmatprep.mubr.f32.mxu0 0.0
      %4906 = vmatmul.mubr.f32.gmra.mxu0 %v4642
      %v4907 = vpop.f32.mrf.mxu0
      %v4908 = vadd.f32 0.0, %v4907
      %v4909 = vpop.f32.mrf.mxu0
      %4910 = vmatprep.mubr.f32.mxu0 0.0
      %4911 = vmatmul.mubr.f32.gmra.mxu0 %v4645
      %v4912 = vpop.f32.mrf.mxu0
      %v4913 = vadd.f32 0.0, %v4912
      %v4914 = vpop.f32.mrf.mxu0
      %4915 = vmatprep.mubr.f32.mxu0 0.0
      %4916 = vmatmul.mubr.f32.gmra.mxu0 %v4648
      %v4917 = vpop.f32.mrf.mxu0
      %v4918 = vadd.f32 0.0, %v4917
      %v4919 = vpop.f32.mrf.mxu0
      %4920 = vmatprep.mubr.f32.mxu0 0.0
      %4921 = vmatmul.mubr.f32.gmra.mxu0 %v4651
      %v4922 = vpop.f32.mrf.mxu0
      %v4923 = vadd.f32 0.0, %v4922
      %v4924 = vpop.f32.mrf.mxu0
      %4925 = vmatprep.mubr.f32.mxu0 0.0
      %4926 = vmatmul.mubr.f32.gmra.mxu0 %v4654
      %v4927 = vpop.f32.mrf.mxu0
      %v4928 = vadd.f32 0.0, %v4927
      %v4929 = vpop.f32.mrf.mxu0
      %4930 = vmatprep.mubr.f32.mxu0 0.0
      %4931 = vmatmul.mubr.f32.gmra.mxu0 %v4657
      %v4932 = vpop.f32.mrf.mxu0
      %v4933 = vadd.f32 0.0, %v4932
      %v4934 = vpop.f32.mrf.mxu0
      %4935 = vmatprep.mubr.f32.mxu0 0.0
      %4936 = vmatmul.mubr.f32.gmra.mxu0 %v4660
      %v4937 = vpop.f32.mrf.mxu0
      %v4938 = vadd.f32 0.0, %v4937
      %v4939 = vpop.f32.mrf.mxu0
      %4940 = vmatprep.mubr.f32.mxu0 0.0
      %4941 = vmatmul.mubr.f32.gmra.mxu0 %v4663
      %v4942 = vpop.f32.mrf.mxu0
      %v4943 = vadd.f32 0.0, %v4942
      %v4944 = vpop.f32.mrf.mxu0
      %4945 = vmatprep.mubr.f32.mxu0 0.0
      %4946 = vmatmul.mubr.f32.gmra.mxu0 %v4666
      %v4947 = vpop.f32.mrf.mxu0
      %v4948 = vadd.f32 0.0, %v4947
      %v4949 = vpop.f32.mrf.mxu0
      %4950 = vmatprep.mubr.f32.mxu0 0.0
      %4951 = vmatmul.mubr.f32.gmra.mxu0 %v4669
      %v4952 = vpop.f32.mrf.mxu0
      %v4953 = vadd.f32 0.0, %v4952
      %v4954 = vpop.f32.mrf.mxu0
      %4955 = vmatprep.mubr.f32.mxu0 0.0
      %4956 = vmatmul.mubr.f32.gmra.mxu0 %v4672
      %v4957 = vpop.f32.mrf.mxu0
      %v4958 = vadd.f32 0.0, %v4957
      %v4959 = vpop.f32.mrf.mxu0
      %4960 = vmatprep.mubr.f32.mxu0 0.0
      %4961 = vmatmul.mubr.f32.gmra.mxu0 %v4675
      %v4962 = vpop.f32.mrf.mxu0
      %v4963 = vadd.f32 0.0, %v4962
      %v4964 = vpop.f32.mrf.mxu0
      %4965 = vmatprep.mubr.f32.mxu0 0.0
      %4966 = vmatmul.mubr.f32.gmra.mxu0 %v4678
      %v4967 = vpop.f32.mrf.mxu0
      %v4968 = vadd.f32 0.0, %v4967
      %v4969 = vpop.f32.mrf.mxu0
      %4970 = vmatprep.mubr.f32.mxu0 0.0
      %4971 = vmatmul.mubr.f32.gmra.mxu0 %v4681
      %v4972 = vpop.f32.mrf.mxu0
      %v4973 = vadd.f32 0.0, %v4972
      %v4974 = vpop.f32.mrf.mxu0
      %4975 = vmatprep.mubr.f32.mxu0 0.0
      %4976 = vmatmul.mubr.f32.gmra.mxu0 %v4684
      %v4977 = vpop.f32.mrf.mxu0
      %v4978 = vadd.f32 0.0, %v4977
      %v4979 = vpop.f32.mrf.mxu0
      %4980 = vmatprep.mubr.f32.mxu0 0.0
      %4981 = vmatmul.mubr.f32.gmra.mxu0 %v4687
      %v4982 = vpop.f32.mrf.mxu0
      %v4983 = vadd.f32 0.0, %v4982
      %v4984 = vpop.f32.mrf.mxu0
      %4985 = vmatprep.mubr.f32.mxu0 0.0
      %4986 = vmatmul.mubr.f32.gmra.mxu0 %v4690
      %v4987 = vpop.f32.mrf.mxu0
      %v4988 = vadd.f32 0.0, %v4987
      %v4989 = vpop.f32.mrf.mxu0
      %4990 = vmatprep.mubr.f32.mxu0 0.0
      %4991 = vmatmul.mubr.f32.gmra.mxu0 %v4693
      %v4992 = vpop.f32.mrf.mxu0
      %v4993 = vadd.f32 0.0, %v4992
      %v4994 = vpop.f32.mrf.mxu0
      %4995 = vmatprep.mubr.f32.mxu0 0.0
      %4996 = vmatmul.mubr.f32.gmra.mxu0 %v4696
      %v4997 = vpop.f32.mrf.mxu0
      %v4998 = vadd.f32 0.0, %v4997
      %v4999 = vpop.f32.mrf.mxu0
      %5000 = vmatprep.mubr.f32.mxu0 0.0
      %5001 = vmatmul.mubr.f32.gmra.mxu0 %v4699
      %v5002 = vpop.f32.mrf.mxu0
      %v5003 = vadd.f32 0.0, %v5002
      %v5004 = vpop.f32.mrf.mxu0
      %5005 = vdwg.mxu0
      %v5006 = vadd.f32 %v4459, %v4768
      %v5007 = vadd.f32 %v4460, %v4773
      %v5008 = vadd.f32 %v4461, %v4778
      %v5009 = vadd.f32 %v4462, %v4783
      %v5010 = vadd.f32 %v4463, %v4788
      %v5011 = vadd.f32 %v4464, %v4793
      %v5012 = vadd.f32 %v4465, %v4798
      %v5013 = vadd.f32 %v4466, %v4803
      %v5014 = vadd.f32 %v4467, %v4808
      %v5015 = vadd.f32 %v4468, %v4813
      %v5016 = vadd.f32 %v4469, %v4818
      %v5017 = vadd.f32 %v4470, %v4823
      %v5018 = vadd.f32 %v4471, %v4828
      %v5019 = vadd.f32 %v4472, %v4833
      %v5020 = vadd.f32 %v4473, %v4838
      %v5021 = vadd.f32 %v4474, %v4843
      %v5022 = vadd.f32 %v4475, %v4848
      %v5023 = vadd.f32 %v4476, %v4853
      %v5024 = vadd.f32 %v4477, %v4858
      %v5025 = vadd.f32 %v4478, %v4863
      %v5026 = vadd.f32 %v4479, %v4868
      %v5027 = vadd.f32 %v4480, %v4873
      %v5028 = vadd.f32 %v4481, %v4878
      %v5029 = vadd.f32 %v4482, %v4883
      %v5030 = vadd.f32 %v4483, %v4888
      %v5031 = vadd.f32 %v4484, %v4893
      %v5032 = vadd.f32 %v4485, %v4898
      %v5033 = vadd.f32 %v4486, %v4903
      %v5034 = vadd.f32 %v4487, %v4908
      %v5035 = vadd.f32 %v4488, %v4913
      %v5036 = vadd.f32 %v4489, %v4918
      %v5037 = vadd.f32 %v4490, %v4923
      %v5038 = vadd.f32 %v4491, %v4928
      %v5039 = vadd.f32 %v4492, %v4933
      %v5040 = vadd.f32 %v4493, %v4938
      %v5041 = vadd.f32 %v4494, %v4943
      %v5042 = vadd.f32 %v4495, %v4948
      %v5043 = vadd.f32 %v4496, %v4953
      %v5044 = vadd.f32 %v4497, %v4958
      %v5045 = vadd.f32 %v4498, %v4963
      %v5046 = vadd.f32 %v4499, %v4968
      %v5047 = vadd.f32 %v4500, %v4973
      %v5048 = vadd.f32 %v4501, %v4978
      %v5049 = vadd.f32 %v4502, %v4983
      %v5050 = vadd.f32 %v4503, %v4988
      %v5051 = vadd.f32 %v4504, %v4993
      %v5052 = vadd.f32 %v4505, %v4998
      %v5053 = vadd.f32 %v4506, %v5003
      %v5054 = vld [vmem:[%s2] sm:$0x1]
      %v5056 = vlaneseq
      %v5057 = vshrl.u32 %v5056, 7
      %v5058 = vsub.s32 0, %v5057
      %v5059 = vrot.slane %v5054, %v5058
      %v5061 = vadd.f32 %v5006, %v5059
      %v5062 = vadd.f32 %v5007, %v5059
      %v5063 = vadd.f32 %v5008, %v5059
      %v5064 = vadd.f32 %v5009, %v5059
      %v5065 = vadd.f32 %v5010, %v5059
      %v5066 = vadd.f32 %v5011, %v5059
      %v5067 = vadd.f32 %v5012, %v5059
      %v5068 = vadd.f32 %v5013, %v5059
      %v5069 = vadd.f32 %v5014, %v5059
      %v5070 = vadd.f32 %v5015, %v5059
      %v5071 = vadd.f32 %v5016, %v5059
      %v5072 = vadd.f32 %v5017, %v5059
      %v5073 = vadd.f32 %v5018, %v5059
      %v5074 = vadd.f32 %v5019, %v5059
      %v5075 = vadd.f32 %v5020, %v5059
      %v5076 = vadd.f32 %v5021, %v5059
      %v5077 = vadd.f32 %v5022, %v5059
      %v5078 = vadd.f32 %v5023, %v5059
      %v5079 = vadd.f32 %v5024, %v5059
      %v5080 = vadd.f32 %v5025, %v5059
      %v5081 = vadd.f32 %v5026, %v5059
      %v5082 = vadd.f32 %v5027, %v5059
      %v5083 = vadd.f32 %v5028, %v5059
      %v5084 = vadd.f32 %v5029, %v5059
      %v5085 = vadd.f32 %v5030, %v5059
      %v5086 = vadd.f32 %v5031, %v5059
      %v5087 = vadd.f32 %v5032, %v5059
      %v5088 = vadd.f32 %v5033, %v5059
      %v5089 = vadd.f32 %v5034, %v5059
      %v5090 = vadd.f32 %v5035, %v5059
      %v5091 = vadd.f32 %v5036, %v5059
      %v5092 = vadd.f32 %v5037, %v5059
      %v5093 = vadd.f32 %v5038, %v5059
      %v5094 = vadd.f32 %v5039, %v5059
      %v5095 = vadd.f32 %v5040, %v5059
      %v5096 = vadd.f32 %v5041, %v5059
      %v5097 = vadd.f32 %v5042, %v5059
      %v5098 = vadd.f32 %v5043, %v5059
      %v5099 = vadd.f32 %v5044, %v5059
      %v5100 = vadd.f32 %v5045, %v5059
      %v5101 = vadd.f32 %v5046, %v5059
      %v5102 = vadd.f32 %v5047, %v5059
      %v5103 = vadd.f32 %v5048, %v5059
      %v5104 = vadd.f32 %v5049, %v5059
      %v5105 = vadd.f32 %v5050, %v5059
      %v5106 = vadd.f32 %v5051, %v5059
      %v5107 = vadd.f32 %v5052, %v5059
      %v5108 = vadd.f32 %v5053, %v5059
      %v5109 = vmax.f32 %v5061, 0.0
      %v5110 = vmax.f32 %v5062, 0.0
      %v5111 = vmax.f32 %v5063, 0.0
      %v5112 = vmax.f32 %v5064, 0.0
      %v5113 = vmax.f32 %v5065, 0.0
      %v5114 = vmax.f32 %v5066, 0.0
      %v5115 = vmax.f32 %v5067, 0.0
      %v5116 = vmax.f32 %v5068, 0.0
      %v5117 = vmax.f32 %v5069, 0.0
      %v5118 = vmax.f32 %v5070, 0.0
      %v5119 = vmax.f32 %v5071, 0.0
      %v5120 = vmax.f32 %v5072, 0.0
      %v5121 = vmax.f32 %v5073, 0.0
      %v5122 = vmax.f32 %v5074, 0.0
      %v5123 = vmax.f32 %v5075, 0.0
      %v5124 = vmax.f32 %v5076, 0.0
      %v5125 = vmax.f32 %v5077, 0.0
      %v5126 = vmax.f32 %v5078, 0.0
      %v5127 = vmax.f32 %v5079, 0.0
      %v5128 = vmax.f32 %v5080, 0.0
      %v5129 = vmax.f32 %v5081, 0.0
      %v5130 = vmax.f32 %v5082, 0.0
      %v5131 = vmax.f32 %v5083, 0.0
      %v5132 = vmax.f32 %v5084, 0.0
      %v5133 = vmax.f32 %v5085, 0.0
      %v5134 = vmax.f32 %v5086, 0.0
      %v5135 = vmax.f32 %v5087, 0.0
      %v5136 = vmax.f32 %v5088, 0.0
      %v5137 = vmax.f32 %v5089, 0.0
      %v5138 = vmax.f32 %v5090, 0.0
      %v5139 = vmax.f32 %v5091, 0.0
      %v5140 = vmax.f32 %v5092, 0.0
      %v5141 = vmax.f32 %v5093, 0.0
      %v5142 = vmax.f32 %v5094, 0.0
      %v5143 = vmax.f32 %v5095, 0.0
      %v5144 = vmax.f32 %v5096, 0.0
      %v5145 = vmax.f32 %v5097, 0.0
      %v5146 = vmax.f32 %v5098, 0.0
      %v5147 = vmax.f32 %v5099, 0.0
      %v5148 = vmax.f32 %v5100, 0.0
      %v5149 = vmax.f32 %v5101, 0.0
      %v5150 = vmax.f32 %v5102, 0.0
      %v5151 = vmax.f32 %v5103, 0.0
      %v5152 = vmax.f32 %v5104, 0.0
      %v5153 = vmax.f32 %v5105, 0.0
      %v5154 = vmax.f32 %v5106, 0.0
      %v5155 = vmax.f32 %v5107, 0.0
      %v5156 = vmax.f32 %v5108, 0.0
      %v5157 = vmax.f32 %v5109, %v5112
      %v5158 = vmax.f32 %v5110, %v5113
      %v5159 = vmax.f32 %v5111, %v5114
      %v5160 = vmax.f32 %v5115, %v5118
      %v5161 = vmax.f32 %v5116, %v5119
      %v5162 = vmax.f32 %v5117, %v5120
      %v5163 = vmax.f32 %v5121, %v5124
      %v5164 = vmax.f32 %v5122, %v5125
      %v5165 = vmax.f32 %v5123, %v5126
      %v5166 = vmax.f32 %v5127, %v5130
      %v5167 = vmax.f32 %v5128, %v5131
      %v5168 = vmax.f32 %v5129, %v5132
      %v5169 = vmax.f32 %v5133, %v5136
      %v5170 = vmax.f32 %v5134, %v5137
      %v5171 = vmax.f32 %v5135, %v5138
      %v5172 = vmax.f32 %v5139, %v5142
      %v5173 = vmax.f32 %v5140, %v5143
      %v5174 = vmax.f32 %v5141, %v5144
      %v5175 = vmax.f32 %v5145, %v5148
      %v5176 = vmax.f32 %v5146, %v5149
      %v5177 = vmax.f32 %v5147, %v5150
      %v5178 = vmax.f32 %v5151, %v5154
      %v5179 = vmax.f32 %v5152, %v5155
      %v5180 = vmax.f32 %v5153, %v5156
      %vm5181 = vcmask 130048
      %5182 = vst.msk [vmem:[#allocation2] sm:$0xff] %vm5181, %v5157
      %5183 = vst.msk [vmem:[#allocation2 + $0x8] sm:$0xff] %vm5181, %v5158
      %5184 = vst.msk [vmem:[#allocation2 + $0x10] sm:$0xff] %vm5181, %v5159
      %5185 = vst.msk [vmem:[#allocation2 + $0x18] sm:$0xff] %vm5181, %v5160
      %5186 = vst.msk [vmem:[#allocation2 + $0x20] sm:$0xff] %vm5181, %v5161
      %5187 = vst.msk [vmem:[#allocation2 + $0x28] sm:$0xff] %vm5181, %v5162
      %5188 = vst.msk [vmem:[#allocation2 + $0x30] sm:$0xff] %vm5181, %v5163
      %5189 = vst.msk [vmem:[#allocation2 + $0x38] sm:$0xff] %vm5181, %v5164
      %5190 = vst.msk [vmem:[#allocation2 + $0x40] sm:$0xff] %vm5181, %v5165
      %5191 = vst.msk [vmem:[#allocation2 + $0x48] sm:$0xff] %vm5181, %v5166
      %5192 = vst.msk [vmem:[#allocation2 + $0x50] sm:$0xff] %vm5181, %v5167
      %5193 = vst.msk [vmem:[#allocation2 + $0x58] sm:$0xff] %vm5181, %v5168
      %5194 = vst.msk [vmem:[#allocation2 + $0x60] sm:$0xff] %vm5181, %v5169
      %5195 = vst.msk [vmem:[#allocation2 + $0x68] sm:$0xff] %vm5181, %v5170
      %5196 = vst.msk [vmem:[#allocation2 + $0x70] sm:$0xff] %vm5181, %v5171
      %5197 = vst.msk [vmem:[#allocation2 + $0x78] sm:$0xff] %vm5181, %v5172
      %5198 = vst.msk [vmem:[#allocation2 + $0x80] sm:$0xff] %vm5181, %v5173
      %5199 = vst.msk [vmem:[#allocation2 + $0x88] sm:$0xff] %vm5181, %v5174
      %5200 = vst.msk [vmem:[#allocation2 + $0x90] sm:$0xff] %vm5181, %v5175
      %5201 = vst.msk [vmem:[#allocation2 + $0x98] sm:$0xff] %vm5181, %v5176
      %5202 = vst.msk [vmem:[#allocation2 + $0xa0] sm:$0xff] %vm5181, %v5177
      %5203 = vst.msk [vmem:[#allocation2 + $0xa8] sm:$0xff] %vm5181, %v5178
      %5204 = vst.msk [vmem:[#allocation2 + $0xb0] sm:$0xff] %vm5181, %v5179
      %5205 = vst.msk [vmem:[#allocation2 + $0xb8] sm:$0xff] %vm5181, %v5180
      %v5206 = vld [vmem:[#allocation2] ss:$2 sm:$0xff]
      %s5207 = scalar_lea.vmem [#allocation2], 24
      %v5208 = vld [vmem:[%s5207] ss:$2 sm:$0xff]
      %s5209 = scalar_lea.vmem [#allocation2], 48
      %v5210 = vld [vmem:[%s5209] ss:$2 sm:$0xff]
      %s5211 = scalar_lea.vmem [#allocation2], 72
      %v5212 = vld [vmem:[%s5211] ss:$2 sm:$0xff]
      %s5213 = scalar_lea.vmem [#allocation2], 96
      %v5214 = vld [vmem:[%s5213] ss:$2 sm:$0xff]
      %s5215 = scalar_lea.vmem [#allocation2], 120
      %v5216 = vld [vmem:[%s5215] ss:$2 sm:$0xff]
      %s5217 = scalar_lea.vmem [#allocation2], 144
      %v5218 = vld [vmem:[%s5217] ss:$2 sm:$0xff]
      %s5219 = scalar_lea.vmem [#allocation2], 168
      %v5220 = vld [vmem:[%s5219] ss:$2 sm:$0xff]
      %s5221 = scalar_lea.vmem [#allocation2], 1
      %v5222 = vld [vmem:[%s5221] ss:$2 sm:$0xff]
      %s5223 = scalar_lea.vmem [#allocation2], 25
      %v5224 = vld [vmem:[%s5223] ss:$2 sm:$0xff]
      %s5225 = scalar_lea.vmem [#allocation2], 49
      %v5226 = vld [vmem:[%s5225] ss:$2 sm:$0xff]
      %s5227 = scalar_lea.vmem [#allocation2], 73
      %v5228 = vld [vmem:[%s5227] ss:$2 sm:$0xff]
      %s5229 = scalar_lea.vmem [#allocation2], 97
      %v5230 = vld [vmem:[%s5229] ss:$2 sm:$0xff]
      %s5231 = scalar_lea.vmem [#allocation2], 121
      %v5232 = vld [vmem:[%s5231] ss:$2 sm:$0xff]
      %s5233 = scalar_lea.vmem [#allocation2], 145
      %v5234 = vld [vmem:[%s5233] ss:$2 sm:$0xff]
      %s5235 = scalar_lea.vmem [#allocation2], 169
      %v5236 = vld [vmem:[%s5235] ss:$2 sm:$0xff]
      %v5237 = vmax.f32 %v5206, %v5222
      %v5238 = vmax.f32 %v5208, %v5224
      %v5239 = vmax.f32 %v5210, %v5226
      %v5240 = vmax.f32 %v5212, %v5228
      %v5241 = vmax.f32 %v5214, %v5230
      %v5242 = vmax.f32 %v5216, %v5232
      %v5243 = vmax.f32 %v5218, %v5234
      %v5244 = vmax.f32 %v5220, %v5236
      %5245 = vst.msk [vmem:[#allocation3] sm:$0xff] %vm5181, 0.0
      %5246 = vst.msk [vmem:[#allocation3 + $0x8] sm:$0xff] %vm5181, 0.0
      %vm5247 = vcmask 123904
      %5248 = vst.msk [vmem:[#allocation3 + $0x10] sm:$0x3] %vm5247, 0.0
      %5249 = vst.msk [vmem:[#allocation3 + $0x18] sm:$0xff] %vm5181, 0.0
      %5250 = vst.msk [vmem:[#allocation3 + $0x20] sm:$0xff] %vm5181, 0.0
      %5251 = vst.msk [vmem:[#allocation3 + $0x28] sm:$0x3] %vm5247, 0.0
      %5252 = vst.msk [vmem:[#allocation3 + $0x30] sm:$0xff] %vm5181, 0.0
      %5253 = vst.msk [vmem:[#allocation3 + $0x38] sm:$0xff] %vm5181, 0.0
      %5254 = vst.msk [vmem:[#allocation3 + $0x40] sm:$0x3] %vm5247, 0.0
      %5255 = vst.msk [vmem:[#allocation3 + $0x48] sm:$0xff] %vm5181, 0.0
      %5256 = vst.msk [vmem:[#allocation3 + $0x50] sm:$0xff] %vm5181, 0.0
      %5257 = vst.msk [vmem:[#allocation3 + $0x58] sm:$0x3] %vm5247, 0.0
      %5258 = vst.msk [vmem:[#allocation3 + $0x60] sm:$0xff] %vm5181, 0.0
      %5259 = vst.msk [vmem:[#allocation3 + $0x68] sm:$0xff] %vm5181, 0.0
      %5260 = vst.msk [vmem:[#allocation3 + $0x70] sm:$0x3] %vm5247, 0.0
      %5261 = vst.msk [vmem:[#allocation3 + $0x78] sm:$0xff] %vm5181, 0.0
      %5262 = vst.msk [vmem:[#allocation3 + $0x80] sm:$0xff] %vm5181, 0.0
      %5263 = vst.msk [vmem:[#allocation3 + $0x88] sm:$0x3] %vm5247, 0.0
      %5264 = vst.msk [vmem:[#allocation3 + $0x90] sm:$0xff] %vm5181, 0.0
      %5265 = vst.msk [vmem:[#allocation3 + $0x98] sm:$0xff] %vm5181, 0.0
      %5266 = vst.msk [vmem:[#allocation3 + $0xa0] sm:$0x3] %vm5247, 0.0
      %5267 = vst.msk [vmem:[#allocation3 + $0xa8] sm:$0xff] %vm5181, 0.0
      %5268 = vst.msk [vmem:[#allocation3 + $0xb0] sm:$0xff] %vm5181, 0.0
      %5269 = vst.msk [vmem:[#allocation3 + $0xb8] sm:$0x3] %vm5247, 0.0
      %5270 = vst.msk [vmem:[#allocation3 + $0xc0] sm:$0xff] %vm5181, 0.0
      %5271 = vst.msk [vmem:[#allocation3 + $0xc8] sm:$0xff] %vm5181, 0.0
      %5272 = vst.msk [vmem:[#allocation3 + $0xd0] sm:$0x3] %vm5247, 0.0
      %5273 = vst.msk [vmem:[#allocation3 + $0xd8] sm:$0xff] %vm5181, 0.0
      %5274 = vst.msk [vmem:[#allocation3 + $0xe0] sm:$0xff] %vm5181, 0.0
      %5275 = vst.msk [vmem:[#allocation3 + $0xe8] sm:$0x3] %vm5247, 0.0
      %s5276 = scalar_lea.vmem [#allocation3], 24
      %5277 = vst.msk [vmem:[%s5276 + $0x1] sm:$0xff] %vm5181, %v5237
      %5278 = vst.msk [vmem:[%s5276 + $0x19] sm:$0xff] %vm5181, %v5238
      %5279 = vst.msk [vmem:[%s5276 + $0x31] sm:$0xff] %vm5181, %v5239
      %5280 = vst.msk [vmem:[%s5276 + $0x49] sm:$0xff] %vm5181, %v5240
      %5281 = vst.msk [vmem:[%s5276 + $0x61] sm:$0xff] %vm5181, %v5241
      %5282 = vst.msk [vmem:[%s5276 + $0x79] sm:$0xff] %vm5181, %v5242
      %5283 = vst.msk [vmem:[%s5276 + $0x91] sm:$0xff] %vm5181, %v5243
      %5284 = vst.msk [vmem:[%s5276 + $0xa9] sm:$0xff] %vm5181, %v5244
      %v5285 = vld [vmem:[#allocation3] sm:$0xff]
      %v5286 = vld [vmem:[#allocation3 + $0x8] sm:$0xff]
      %v5287 = vld [vmem:[#allocation3 + $0x18] sm:$0xff]
      %v5288 = vld [vmem:[#allocation3 + $0x20] sm:$0xff]
      %v5289 = vld [vmem:[#allocation3 + $0x30] sm:$0xff]
      %v5290 = vld [vmem:[#allocation3 + $0x38] sm:$0xff]
      %v5291 = vld [vmem:[#allocation3 + $0x48] sm:$0xff]
      %v5292 = vld [vmem:[#allocation3 + $0x50] sm:$0xff]
      %v5293 = vld [vmem:[#allocation3 + $0x60] sm:$0xff]
      %v5294 = vld [vmem:[#allocation3 + $0x68] sm:$0xff]
      %v5295 = vld [vmem:[#allocation3 + $0x78] sm:$0xff]
      %v5296 = vld [vmem:[#allocation3 + $0x80] sm:$0xff]
      %v5297 = vld [vmem:[#allocation3 + $0x90] sm:$0xff]
      %v5298 = vld [vmem:[#allocation3 + $0x98] sm:$0xff]
      %v5299 = vld [vmem:[#allocation3 + $0xa8] sm:$0xff]
      %v5300 = vld [vmem:[#allocation3 + $0xb0] sm:$0xff]
      %v5301 = vld [vmem:[%s3] sm:$0xff]
      %v5302 = vld [vmem:[%s3 + $0x8] sm:$0xff]
      %v5303 = vld [vmem:[#allocation3 + $0x1] sm:$0xff]
      %v5304 = vld [vmem:[#allocation3 + $0x9] sm:$0xff]
      %v5305 = vld [vmem:[#allocation3 + $0x19] sm:$0xff]
      %v5306 = vld [vmem:[#allocation3 + $0x21] sm:$0xff]
      %v5307 = vld [vmem:[#allocation3 + $0x31] sm:$0xff]
      %v5308 = vld [vmem:[#allocation3 + $0x39] sm:$0xff]
      %v5309 = vld [vmem:[#allocation3 + $0x49] sm:$0xff]
      %v5310 = vld [vmem:[#allocation3 + $0x51] sm:$0xff]
      %v5311 = vld [vmem:[#allocation3 + $0x61] sm:$0xff]
      %v5312 = vld [vmem:[#allocation3 + $0x69] sm:$0xff]
      %v5313 = vld [vmem:[#allocation3 + $0x79] sm:$0xff]
      %v5314 = vld [vmem:[#allocation3 + $0x81] sm:$0xff]
      %v5315 = vld [vmem:[#allocation3 + $0x91] sm:$0xff]
      %v5316 = vld [vmem:[#allocation3 + $0x99] sm:$0xff]
      %v5317 = vld [vmem:[#allocation3 + $0xa9] sm:$0xff]
      %v5318 = vld [vmem:[#allocation3 + $0xb1] sm:$0xff]
      %s5319 = scalar_lea.vmem %s3, 16
      %v5320 = vld [vmem:[%s5319] sm:$0xff]
      %v5321 = vld [vmem:[%s5319 + $0x8] sm:$0xff]
      %v5323 = vsel %vm5181, %v5303, 0
      %v5326 = vsel %vm5181, %v5304, 0
      %v5329 = vsel %vm5181, %v5305, 0
      %v5332 = vsel %vm5181, %v5306, 0
      %v5335 = vsel %vm5181, %v5307, 0
      %v5338 = vsel %vm5181, %v5308, 0
      %v5341 = vsel %vm5181, %v5309, 0
      %v5344 = vsel %vm5181, %v5310, 0
      %v5347 = vsel %vm5181, %v5311, 0
      %v5350 = vsel %vm5181, %v5312, 0
      %v5353 = vsel %vm5181, %v5313, 0
      %v5356 = vsel %vm5181, %v5314, 0
      %v5359 = vsel %vm5181, %v5315, 0
      %v5362 = vsel %vm5181, %v5316, 0
      %v5365 = vsel %vm5181, %v5317, 0
      %v5368 = vsel %vm5181, %v5318, 0
      %5370 = vmatprep.subr.mxu0 0.0
      %5371 = vmatpush1.msra.mxu0 0.0
      %5372 = vmatprep.subr.mxu0 0.0
      %5373 = vmatpush1.msra.mxu0 0.0
      %5374 = vmatprep.subr.mxu0 0.0
      %5375 = vmatpush1.msra.mxu0 0.0
      %5376 = vmatprep.subr.mxu0 0.0
      %5377 = vmatpush1.msra.mxu0 0.0
      %5378 = vmatprep.subr.mxu0 0.0
      %5379 = vmatpush1.msra.mxu0 0.0
      %5380 = vmatprep.subr.mxu0 0.0
      %5381 = vmatpush1.msra.mxu0 0.0
      %5382 = vmatprep.subr.mxu0 0.0
      %5383 = vmatpush1.msra.mxu0 0.0
      %5384 = vmatprep.subr.mxu0 0.0
      %5385 = vmatpush1.msra.mxu0 0.0
      %5386 = vmatprep.subr.mxu0 0.0
      %5387 = vmatpush1.msra.mxu0 0.0
      %5388 = vmatprep.subr.mxu0 0.0
      %5389 = vmatpush1.msra.mxu0 0.0
      %5390 = vmatprep.subr.mxu0 0.0
      %5391 = vmatpush1.msra.mxu0 0.0
      %5392 = vmatprep.subr.mxu0 0.0
      %5393 = vmatpush1.msra.mxu0 0.0
      %5394 = vmatprep.subr.mxu0 0.0
      %5395 = vmatpush1.msra.mxu0 0.0
      %5396 = vmatprep.subr.mxu0 0.0
      %5397 = vmatpush1.msra.mxu0 0.0
      %5398 = vmatprep.subr.mxu0 0.0
      %5399 = vmatpush1.msra.mxu0 %v5321
      %5400 = vmatprep.subr.mxu0 0.0
      %5401 = vmatpush1.msra.mxu0 %v5320
      %5402 = vmatprep.subr.mxu0 0.0
      %5403 = vmatpush2.msra.mxu0 0.0
      %5404 = vmatprep.subr.mxu0 0.0
      %5405 = vmatpush2.msra.mxu0 0.0
      %5406 = vmatprep.subr.mxu0 0.0
      %5407 = vmatpush2.msra.mxu0 0.0
      %5408 = vmatprep.subr.mxu0 0.0
      %5409 = vmatpush2.msra.mxu0 0.0
      %5410 = vmatprep.subr.mxu0 0.0
      %5411 = vmatpush2.msra.mxu0 0.0
      %5412 = vmatprep.subr.mxu0 0.0
      %5413 = vmatpush2.msra.mxu0 0.0
      %5414 = vmatprep.subr.mxu0 0.0
      %5415 = vmatpush2.msra.mxu0 0.0
      %5416 = vmatprep.subr.mxu0 0.0
      %5417 = vmatpush2.msra.mxu0 0.0
      %5418 = vmatprep.subr.mxu0 0.0
      %5419 = vmatpush2.msra.mxu0 0.0
      %5420 = vmatprep.subr.mxu0 0.0
      %5421 = vmatpush2.msra.mxu0 0.0
      %5422 = vmatprep.subr.mxu0 0.0
      %5423 = vmatpush2.msra.mxu0 0.0
      %5424 = vmatprep.subr.mxu0 0.0
      %5425 = vmatpush2.msra.mxu0 0.0
      %5426 = vmatprep.subr.mxu0 0.0
      %5427 = vmatpush2.msra.mxu0 0.0
      %5428 = vmatprep.subr.mxu0 0.0
      %5429 = vmatpush2.msra.mxu0 0.0
      %5430 = vmatprep.subr.mxu0 0.0
      %5431 = vmatpush2.msra.mxu0 0.0
      %5432 = vmatprep.subr.mxu0 0.0
      %5433 = vmatpush2.msra.mxu0 0.0
      %5434 = vmatprep.mubr.f32.mxu0 0.0
      %5435 = vmatmul.mubr.f32.gmra.mxu0 %v5323
      %v5436 = vpop.f32.mrf.mxu0
      %v5437 = vadd.f32 0.0, %v5436
      %v5438 = vpop.f32.mrf.mxu0
      %5439 = vmatprep.mubr.f32.mxu0 0.0
      %5440 = vmatmul.mubr.f32.gmra.mxu0 %v5326
      %v5441 = vpop.f32.mrf.mxu0
      %v5442 = vadd.f32 0.0, %v5441
      %v5443 = vpop.f32.mrf.mxu0
      %5444 = vmatprep.mubr.f32.mxu0 0.0
      %5445 = vmatmul.mubr.f32.gmra.mxu0 %v5329
      %v5446 = vpop.f32.mrf.mxu0
      %v5447 = vadd.f32 0.0, %v5446
      %v5448 = vpop.f32.mrf.mxu0
      %5449 = vmatprep.mubr.f32.mxu0 0.0
      %5450 = vmatmul.mubr.f32.gmra.mxu0 %v5332
      %v5451 = vpop.f32.mrf.mxu0
      %v5452 = vadd.f32 0.0, %v5451
      %v5453 = vpop.f32.mrf.mxu0
      %5454 = vmatprep.mubr.f32.mxu0 0.0
      %5455 = vmatmul.mubr.f32.gmra.mxu0 %v5335
      %v5456 = vpop.f32.mrf.mxu0
      %v5457 = vadd.f32 0.0, %v5456
      %v5458 = vpop.f32.mrf.mxu0
      %5459 = vmatprep.mubr.f32.mxu0 0.0
      %5460 = vmatmul.mubr.f32.gmra.mxu0 %v5338
      %v5461 = vpop.f32.mrf.mxu0
      %v5462 = vadd.f32 0.0, %v5461
      %v5463 = vpop.f32.mrf.mxu0
      %5464 = vmatprep.mubr.f32.mxu0 0.0
      %5465 = vmatmul.mubr.f32.gmra.mxu0 %v5341
      %v5466 = vpop.f32.mrf.mxu0
      %v5467 = vadd.f32 0.0, %v5466
      %v5468 = vpop.f32.mrf.mxu0
      %5469 = vmatprep.mubr.f32.mxu0 0.0
      %5470 = vmatmul.mubr.f32.gmra.mxu0 %v5344
      %v5471 = vpop.f32.mrf.mxu0
      %v5472 = vadd.f32 0.0, %v5471
      %v5473 = vpop.f32.mrf.mxu0
      %5474 = vmatprep.mubr.f32.mxu0 0.0
      %5475 = vmatmul.mubr.f32.gmra.mxu0 %v5347
      %v5476 = vpop.f32.mrf.mxu0
      %v5477 = vadd.f32 0.0, %v5476
      %v5478 = vpop.f32.mrf.mxu0
      %5479 = vmatprep.mubr.f32.mxu0 0.0
      %5480 = vmatmul.mubr.f32.gmra.mxu0 %v5350
      %v5481 = vpop.f32.mrf.mxu0
      %v5482 = vadd.f32 0.0, %v5481
      %v5483 = vpop.f32.mrf.mxu0
      %5484 = vmatprep.mubr.f32.mxu0 0.0
      %5485 = vmatmul.mubr.f32.gmra.mxu0 %v5353
      %v5486 = vpop.f32.mrf.mxu0
      %v5487 = vadd.f32 0.0, %v5486
      %v5488 = vpop.f32.mrf.mxu0
      %5489 = vmatprep.mubr.f32.mxu0 0.0
      %5490 = vmatmul.mubr.f32.gmra.mxu0 %v5356
      %v5491 = vpop.f32.mrf.mxu0
      %v5492 = vadd.f32 0.0, %v5491
      %v5493 = vpop.f32.mrf.mxu0
      %5494 = vmatprep.mubr.f32.mxu0 0.0
      %5495 = vmatmul.mubr.f32.gmra.mxu0 %v5359
      %v5496 = vpop.f32.mrf.mxu0
      %v5497 = vadd.f32 0.0, %v5496
      %v5498 = vpop.f32.mrf.mxu0
      %5499 = vmatprep.mubr.f32.mxu0 0.0
      %5500 = vmatmul.mubr.f32.gmra.mxu0 %v5362
      %v5501 = vpop.f32.mrf.mxu0
      %v5502 = vadd.f32 0.0, %v5501
      %v5503 = vpop.f32.mrf.mxu0
      %5504 = vmatprep.mubr.f32.mxu0 0.0
      %5505 = vmatmul.mubr.f32.gmra.mxu0 %v5365
      %v5506 = vpop.f32.mrf.mxu0
      %v5507 = vadd.f32 0.0, %v5506
      %v5508 = vpop.f32.mrf.mxu0
      %5509 = vmatprep.mubr.f32.mxu0 0.0
      %5510 = vmatmul.mubr.f32.gmra.mxu0 %v5368
      %v5511 = vpop.f32.mrf.mxu0
      %v5512 = vadd.f32 0.0, %v5511
      %v5513 = vpop.f32.mrf.mxu0
      %5514 = vdwg.mxu0
      %v5516 = vsel %vm5181, %v5285, 0
      %v5519 = vsel %vm5181, %v5286, 0
      %v5522 = vsel %vm5181, %v5287, 0
      %v5525 = vsel %vm5181, %v5288, 0
      %v5528 = vsel %vm5181, %v5289, 0
      %v5531 = vsel %vm5181, %v5290, 0
      %v5534 = vsel %vm5181, %v5291, 0
      %v5537 = vsel %vm5181, %v5292, 0
      %v5540 = vsel %vm5181, %v5293, 0
      %v5543 = vsel %vm5181, %v5294, 0
      %v5546 = vsel %vm5181, %v5295, 0
      %v5549 = vsel %vm5181, %v5296, 0
      %v5552 = vsel %vm5181, %v5297, 0
      %v5555 = vsel %vm5181, %v5298, 0
      %v5558 = vsel %vm5181, %v5299, 0
      %v5561 = vsel %vm5181, %v5300, 0
      %5563 = vmatprep.subr.mxu0 0.0
      %5564 = vmatpush1.msra.mxu0 0.0
      %5565 = vmatprep.subr.mxu0 0.0
      %5566 = vmatpush1.msra.mxu0 0.0
      %5567 = vmatprep.subr.mxu0 0.0
      %5568 = vmatpush1.msra.mxu0 0.0
      %5569 = vmatprep.subr.mxu0 0.0
      %5570 = vmatpush1.msra.mxu0 0.0
      %5571 = vmatprep.subr.mxu0 0.0
      %5572 = vmatpush1.msra.mxu0 0.0
      %5573 = vmatprep.subr.mxu0 0.0
      %5574 = vmatpush1.msra.mxu0 0.0
      %5575 = vmatprep.subr.mxu0 0.0
      %5576 = vmatpush1.msra.mxu0 0.0
      %5577 = vmatprep.subr.mxu0 0.0
      %5578 = vmatpush1.msra.mxu0 0.0
      %5579 = vmatprep.subr.mxu0 0.0
      %5580 = vmatpush1.msra.mxu0 0.0
      %5581 = vmatprep.subr.mxu0 0.0
      %5582 = vmatpush1.msra.mxu0 0.0
      %5583 = vmatprep.subr.mxu0 0.0
      %5584 = vmatpush1.msra.mxu0 0.0
      %5585 = vmatprep.subr.mxu0 0.0
      %5586 = vmatpush1.msra.mxu0 0.0
      %5587 = vmatprep.subr.mxu0 0.0
      %5588 = vmatpush1.msra.mxu0 0.0
      %5589 = vmatprep.subr.mxu0 0.0
      %5590 = vmatpush1.msra.mxu0 0.0
      %5591 = vmatprep.subr.mxu0 0.0
      %5592 = vmatpush1.msra.mxu0 %v5302
      %5593 = vmatprep.subr.mxu0 0.0
      %5594 = vmatpush1.msra.mxu0 %v5301
      %5595 = vmatprep.subr.mxu0 0.0
      %5596 = vmatpush2.msra.mxu0 0.0
      %5597 = vmatprep.subr.mxu0 0.0
      %5598 = vmatpush2.msra.mxu0 0.0
      %5599 = vmatprep.subr.mxu0 0.0
      %5600 = vmatpush2.msra.mxu0 0.0
      %5601 = vmatprep.subr.mxu0 0.0
      %5602 = vmatpush2.msra.mxu0 0.0
      %5603 = vmatprep.subr.mxu0 0.0
      %5604 = vmatpush2.msra.mxu0 0.0
      %5605 = vmatprep.subr.mxu0 0.0
      %5606 = vmatpush2.msra.mxu0 0.0
      %5607 = vmatprep.subr.mxu0 0.0
      %5608 = vmatpush2.msra.mxu0 0.0
      %5609 = vmatprep.subr.mxu0 0.0
      %5610 = vmatpush2.msra.mxu0 0.0
      %5611 = vmatprep.subr.mxu0 0.0
      %5612 = vmatpush2.msra.mxu0 0.0
      %5613 = vmatprep.subr.mxu0 0.0
      %5614 = vmatpush2.msra.mxu0 0.0
      %5615 = vmatprep.subr.mxu0 0.0
      %5616 = vmatpush2.msra.mxu0 0.0
      %5617 = vmatprep.subr.mxu0 0.0
      %5618 = vmatpush2.msra.mxu0 0.0
      %5619 = vmatprep.subr.mxu0 0.0
      %5620 = vmatpush2.msra.mxu0 0.0
      %5621 = vmatprep.subr.mxu0 0.0
      %5622 = vmatpush2.msra.mxu0 0.0
      %5623 = vmatprep.subr.mxu0 0.0
      %5624 = vmatpush2.msra.mxu0 0.0
      %5625 = vmatprep.subr.mxu0 0.0
      %5626 = vmatpush2.msra.mxu0 0.0
      %5627 = vmatprep.mubr.f32.mxu0 0.0
      %5628 = vmatmul.mubr.f32.gmra.mxu0 %v5516
      %v5629 = vpop.f32.mrf.mxu0
      %v5630 = vadd.f32 %v5437, %v5629
      %v5631 = vpop.f32.mrf.mxu0
      %5632 = vmatprep.mubr.f32.mxu0 0.0
      %5633 = vmatmul.mubr.f32.gmra.mxu0 %v5519
      %v5634 = vpop.f32.mrf.mxu0
      %v5635 = vadd.f32 %v5442, %v5634
      %v5636 = vpop.f32.mrf.mxu0
      %5637 = vmatprep.mubr.f32.mxu0 0.0
      %5638 = vmatmul.mubr.f32.gmra.mxu0 %v5522
      %v5639 = vpop.f32.mrf.mxu0
      %v5640 = vadd.f32 %v5447, %v5639
      %v5641 = vpop.f32.mrf.mxu0
      %5642 = vmatprep.mubr.f32.mxu0 0.0
      %5643 = vmatmul.mubr.f32.gmra.mxu0 %v5525
      %v5644 = vpop.f32.mrf.mxu0
      %v5645 = vadd.f32 %v5452, %v5644
      %v5646 = vpop.f32.mrf.mxu0
      %5647 = vmatprep.mubr.f32.mxu0 0.0
      %5648 = vmatmul.mubr.f32.gmra.mxu0 %v5528
      %v5649 = vpop.f32.mrf.mxu0
      %v5650 = vadd.f32 %v5457, %v5649
      %v5651 = vpop.f32.mrf.mxu0
      %5652 = vmatprep.mubr.f32.mxu0 0.0
      %5653 = vmatmul.mubr.f32.gmra.mxu0 %v5531
      %v5654 = vpop.f32.mrf.mxu0
      %v5655 = vadd.f32 %v5462, %v5654
      %v5656 = vpop.f32.mrf.mxu0
      %5657 = vmatprep.mubr.f32.mxu0 0.0
      %5658 = vmatmul.mubr.f32.gmra.mxu0 %v5534
      %v5659 = vpop.f32.mrf.mxu0
      %v5660 = vadd.f32 %v5467, %v5659
      %v5661 = vpop.f32.mrf.mxu0
      %5662 = vmatprep.mubr.f32.mxu0 0.0
      %5663 = vmatmul.mubr.f32.gmra.mxu0 %v5537
      %v5664 = vpop.f32.mrf.mxu0
      %v5665 = vadd.f32 %v5472, %v5664
      %v5666 = vpop.f32.mrf.mxu0
      %5667 = vmatprep.mubr.f32.mxu0 0.0
      %5668 = vmatmul.mubr.f32.gmra.mxu0 %v5540
      %v5669 = vpop.f32.mrf.mxu0
      %v5670 = vadd.f32 %v5477, %v5669
      %v5671 = vpop.f32.mrf.mxu0
      %5672 = vmatprep.mubr.f32.mxu0 0.0
      %5673 = vmatmul.mubr.f32.gmra.mxu0 %v5543
      %v5674 = vpop.f32.mrf.mxu0
      %v5675 = vadd.f32 %v5482, %v5674
      %v5676 = vpop.f32.mrf.mxu0
      %5677 = vmatprep.mubr.f32.mxu0 0.0
      %5678 = vmatmul.mubr.f32.gmra.mxu0 %v5546
      %v5679 = vpop.f32.mrf.mxu0
      %v5680 = vadd.f32 %v5487, %v5679
      %v5681 = vpop.f32.mrf.mxu0
      %5682 = vmatprep.mubr.f32.mxu0 0.0
      %5683 = vmatmul.mubr.f32.gmra.mxu0 %v5549
      %v5684 = vpop.f32.mrf.mxu0
      %v5685 = vadd.f32 %v5492, %v5684
      %v5686 = vpop.f32.mrf.mxu0
      %5687 = vmatprep.mubr.f32.mxu0 0.0
      %5688 = vmatmul.mubr.f32.gmra.mxu0 %v5552
      %v5689 = vpop.f32.mrf.mxu0
      %v5690 = vadd.f32 %v5497, %v5689
      %v5691 = vpop.f32.mrf.mxu0
      %5692 = vmatprep.mubr.f32.mxu0 0.0
      %5693 = vmatmul.mubr.f32.gmra.mxu0 %v5555
      %v5694 = vpop.f32.mrf.mxu0
      %v5695 = vadd.f32 %v5502, %v5694
      %v5696 = vpop.f32.mrf.mxu0
      %5697 = vmatprep.mubr.f32.mxu0 0.0
      %5698 = vmatmul.mubr.f32.gmra.mxu0 %v5558
      %v5699 = vpop.f32.mrf.mxu0
      %v5700 = vadd.f32 %v5507, %v5699
      %v5701 = vpop.f32.mrf.mxu0
      %5702 = vmatprep.mubr.f32.mxu0 0.0
      %5703 = vmatmul.mubr.f32.gmra.mxu0 %v5561
      %v5704 = vpop.f32.mrf.mxu0
      %v5705 = vadd.f32 %v5512, %v5704
      %v5706 = vpop.f32.mrf.mxu0
      %5707 = vdwg.mxu0
      %v5708 = vld [vmem:[#allocation3 + $0x2] sm:$0xff]
      %v5709 = vld [vmem:[#allocation3 + $0xa] sm:$0xff]
      %v5710 = vld [vmem:[#allocation3 + $0x1a] sm:$0xff]
      %v5711 = vld [vmem:[#allocation3 + $0x22] sm:$0xff]
      %v5712 = vld [vmem:[#allocation3 + $0x32] sm:$0xff]
      %v5713 = vld [vmem:[#allocation3 + $0x3a] sm:$0xff]
      %v5714 = vld [vmem:[#allocation3 + $0x4a] sm:$0xff]
      %v5715 = vld [vmem:[#allocation3 + $0x52] sm:$0xff]
      %v5716 = vld [vmem:[#allocation3 + $0x62] sm:$0xff]
      %v5717 = vld [vmem:[#allocation3 + $0x6a] sm:$0xff]
      %v5718 = vld [vmem:[#allocation3 + $0x7a] sm:$0xff]
      %v5719 = vld [vmem:[#allocation3 + $0x82] sm:$0xff]
      %v5720 = vld [vmem:[#allocation3 + $0x92] sm:$0xff]
      %v5721 = vld [vmem:[#allocation3 + $0x9a] sm:$0xff]
      %v5722 = vld [vmem:[#allocation3 + $0xaa] sm:$0xff]
      %v5723 = vld [vmem:[#allocation3 + $0xb2] sm:$0xff]
      %s5724 = scalar_lea.vmem %s3, 32
      %v5725 = vld [vmem:[%s5724] sm:$0xff]
      %v5726 = vld [vmem:[%s5724 + $0x8] sm:$0xff]
      %v5728 = vsel %vm5181, %v5708, 0
      %v5731 = vsel %vm5181, %v5709, 0
      %v5734 = vsel %vm5181, %v5710, 0
      %v5737 = vsel %vm5181, %v5711, 0
      %v5740 = vsel %vm5181, %v5712, 0
      %v5743 = vsel %vm5181, %v5713, 0
      %v5746 = vsel %vm5181, %v5714, 0
      %v5749 = vsel %vm5181, %v5715, 0
      %v5752 = vsel %vm5181, %v5716, 0
      %v5755 = vsel %vm5181, %v5717, 0
      %v5758 = vsel %vm5181, %v5718, 0
      %v5761 = vsel %vm5181, %v5719, 0
      %v5764 = vsel %vm5181, %v5720, 0
      %v5767 = vsel %vm5181, %v5721, 0
      %v5770 = vsel %vm5181, %v5722, 0
      %v5773 = vsel %vm5181, %v5723, 0
      %5775 = vmatprep.subr.mxu0 0.0
      %5776 = vmatpush1.msra.mxu0 0.0
      %5777 = vmatprep.subr.mxu0 0.0
      %5778 = vmatpush1.msra.mxu0 0.0
      %5779 = vmatprep.subr.mxu0 0.0
      %5780 = vmatpush1.msra.mxu0 0.0
      %5781 = vmatprep.subr.mxu0 0.0
      %5782 = vmatpush1.msra.mxu0 0.0
      %5783 = vmatprep.subr.mxu0 0.0
      %5784 = vmatpush1.msra.mxu0 0.0
      %5785 = vmatprep.subr.mxu0 0.0
      %5786 = vmatpush1.msra.mxu0 0.0
      %5787 = vmatprep.subr.mxu0 0.0
      %5788 = vmatpush1.msra.mxu0 0.0
      %5789 = vmatprep.subr.mxu0 0.0
      %5790 = vmatpush1.msra.mxu0 0.0
      %5791 = vmatprep.subr.mxu0 0.0
      %5792 = vmatpush1.msra.mxu0 0.0
      %5793 = vmatprep.subr.mxu0 0.0
      %5794 = vmatpush1.msra.mxu0 0.0
      %5795 = vmatprep.subr.mxu0 0.0
      %5796 = vmatpush1.msra.mxu0 0.0
      %5797 = vmatprep.subr.mxu0 0.0
      %5798 = vmatpush1.msra.mxu0 0.0
      %5799 = vmatprep.subr.mxu0 0.0
      %5800 = vmatpush1.msra.mxu0 0.0
      %5801 = vmatprep.subr.mxu0 0.0
      %5802 = vmatpush1.msra.mxu0 0.0
      %5803 = vmatprep.subr.mxu0 0.0
      %5804 = vmatpush1.msra.mxu0 %v5726
      %5805 = vmatprep.subr.mxu0 0.0
      %5806 = vmatpush1.msra.mxu0 %v5725
      %5807 = vmatprep.subr.mxu0 0.0
      %5808 = vmatpush2.msra.mxu0 0.0
      %5809 = vmatprep.subr.mxu0 0.0
      %5810 = vmatpush2.msra.mxu0 0.0
      %5811 = vmatprep.subr.mxu0 0.0
      %5812 = vmatpush2.msra.mxu0 0.0
      %5813 = vmatprep.subr.mxu0 0.0
      %5814 = vmatpush2.msra.mxu0 0.0
      %5815 = vmatprep.subr.mxu0 0.0
      %5816 = vmatpush2.msra.mxu0 0.0
      %5817 = vmatprep.subr.mxu0 0.0
      %5818 = vmatpush2.msra.mxu0 0.0
      %5819 = vmatprep.subr.mxu0 0.0
      %5820 = vmatpush2.msra.mxu0 0.0
      %5821 = vmatprep.subr.mxu0 0.0
      %5822 = vmatpush2.msra.mxu0 0.0
      %5823 = vmatprep.subr.mxu0 0.0
      %5824 = vmatpush2.msra.mxu0 0.0
      %5825 = vmatprep.subr.mxu0 0.0
      %5826 = vmatpush2.msra.mxu0 0.0
      %5827 = vmatprep.subr.mxu0 0.0
      %5828 = vmatpush2.msra.mxu0 0.0
      %5829 = vmatprep.subr.mxu0 0.0
      %5830 = vmatpush2.msra.mxu0 0.0
      %5831 = vmatprep.subr.mxu0 0.0
      %5832 = vmatpush2.msra.mxu0 0.0
      %5833 = vmatprep.subr.mxu0 0.0
      %5834 = vmatpush2.msra.mxu0 0.0
      %5835 = vmatprep.subr.mxu0 0.0
      %5836 = vmatpush2.msra.mxu0 0.0
      %5837 = vmatprep.subr.mxu0 0.0
      %5838 = vmatpush2.msra.mxu0 0.0
      %5839 = vmatprep.mubr.f32.mxu0 0.0
      %5840 = vmatmul.mubr.f32.gmra.mxu0 %v5728
      %v5841 = vpop.f32.mrf.mxu0
      %v5842 = vadd.f32 0.0, %v5841
      %v5843 = vpop.f32.mrf.mxu0
      %5844 = vmatprep.mubr.f32.mxu0 0.0
      %5845 = vmatmul.mubr.f32.gmra.mxu0 %v5731
      %v5846 = vpop.f32.mrf.mxu0
      %v5847 = vadd.f32 0.0, %v5846
      %v5848 = vpop.f32.mrf.mxu0
      %5849 = vmatprep.mubr.f32.mxu0 0.0
      %5850 = vmatmul.mubr.f32.gmra.mxu0 %v5734
      %v5851 = vpop.f32.mrf.mxu0
      %v5852 = vadd.f32 0.0, %v5851
      %v5853 = vpop.f32.mrf.mxu0
      %5854 = vmatprep.mubr.f32.mxu0 0.0
      %5855 = vmatmul.mubr.f32.gmra.mxu0 %v5737
      %v5856 = vpop.f32.mrf.mxu0
      %v5857 = vadd.f32 0.0, %v5856
      %v5858 = vpop.f32.mrf.mxu0
      %5859 = vmatprep.mubr.f32.mxu0 0.0
      %5860 = vmatmul.mubr.f32.gmra.mxu0 %v5740
      %v5861 = vpop.f32.mrf.mxu0
      %v5862 = vadd.f32 0.0, %v5861
      %v5863 = vpop.f32.mrf.mxu0
      %5864 = vmatprep.mubr.f32.mxu0 0.0
      %5865 = vmatmul.mubr.f32.gmra.mxu0 %v5743
      %v5866 = vpop.f32.mrf.mxu0
      %v5867 = vadd.f32 0.0, %v5866
      %v5868 = vpop.f32.mrf.mxu0
      %5869 = vmatprep.mubr.f32.mxu0 0.0
      %5870 = vmatmul.mubr.f32.gmra.mxu0 %v5746
      %v5871 = vpop.f32.mrf.mxu0
      %v5872 = vadd.f32 0.0, %v5871
      %v5873 = vpop.f32.mrf.mxu0
      %5874 = vmatprep.mubr.f32.mxu0 0.0
      %5875 = vmatmul.mubr.f32.gmra.mxu0 %v5749
      %v5876 = vpop.f32.mrf.mxu0
      %v5877 = vadd.f32 0.0, %v5876
      %v5878 = vpop.f32.mrf.mxu0
      %5879 = vmatprep.mubr.f32.mxu0 0.0
      %5880 = vmatmul.mubr.f32.gmra.mxu0 %v5752
      %v5881 = vpop.f32.mrf.mxu0
      %v5882 = vadd.f32 0.0, %v5881
      %v5883 = vpop.f32.mrf.mxu0
      %5884 = vmatprep.mubr.f32.mxu0 0.0
      %5885 = vmatmul.mubr.f32.gmra.mxu0 %v5755
      %v5886 = vpop.f32.mrf.mxu0
      %v5887 = vadd.f32 0.0, %v5886
      %v5888 = vpop.f32.mrf.mxu0
      %5889 = vmatprep.mubr.f32.mxu0 0.0
      %5890 = vmatmul.mubr.f32.gmra.mxu0 %v5758
      %v5891 = vpop.f32.mrf.mxu0
      %v5892 = vadd.f32 0.0, %v5891
      %v5893 = vpop.f32.mrf.mxu0
      %5894 = vmatprep.mubr.f32.mxu0 0.0
      %5895 = vmatmul.mubr.f32.gmra.mxu0 %v5761
      %v5896 = vpop.f32.mrf.mxu0
      %v5897 = vadd.f32 0.0, %v5896
      %v5898 = vpop.f32.mrf.mxu0
      %5899 = vmatprep.mubr.f32.mxu0 0.0
      %5900 = vmatmul.mubr.f32.gmra.mxu0 %v5764
      %v5901 = vpop.f32.mrf.mxu0
      %v5902 = vadd.f32 0.0, %v5901
      %v5903 = vpop.f32.mrf.mxu0
      %5904 = vmatprep.mubr.f32.mxu0 0.0
      %5905 = vmatmul.mubr.f32.gmra.mxu0 %v5767
      %v5906 = vpop.f32.mrf.mxu0
      %v5907 = vadd.f32 0.0, %v5906
      %v5908 = vpop.f32.mrf.mxu0
      %5909 = vmatprep.mubr.f32.mxu0 0.0
      %5910 = vmatmul.mubr.f32.gmra.mxu0 %v5770
      %v5911 = vpop.f32.mrf.mxu0
      %v5912 = vadd.f32 0.0, %v5911
      %v5913 = vpop.f32.mrf.mxu0
      %5914 = vmatprep.mubr.f32.mxu0 0.0
      %5915 = vmatmul.mubr.f32.gmra.mxu0 %v5773
      %v5916 = vpop.f32.mrf.mxu0
      %v5917 = vadd.f32 0.0, %v5916
      %v5918 = vpop.f32.mrf.mxu0
      %5919 = vdwg.mxu0
      %v5920 = vadd.f32 %v5630, %v5842
      %v5921 = vadd.f32 %v5635, %v5847
      %v5922 = vadd.f32 %v5640, %v5852
      %v5923 = vadd.f32 %v5645, %v5857
      %v5924 = vadd.f32 %v5650, %v5862
      %v5925 = vadd.f32 %v5655, %v5867
      %v5926 = vadd.f32 %v5660, %v5872
      %v5927 = vadd.f32 %v5665, %v5877
      %v5928 = vadd.f32 %v5670, %v5882
      %v5929 = vadd.f32 %v5675, %v5887
      %v5930 = vadd.f32 %v5680, %v5892
      %v5931 = vadd.f32 %v5685, %v5897
      %v5932 = vadd.f32 %v5690, %v5902
      %v5933 = vadd.f32 %v5695, %v5907
      %v5934 = vadd.f32 %v5700, %v5912
      %v5935 = vadd.f32 %v5705, %v5917
      %v5936 = vld [vmem:[%s5276] sm:$0xff]
      %v5937 = vld [vmem:[%s5276 + $0x8] sm:$0xff]
      %v5938 = vld [vmem:[%s5276 + $0x18] sm:$0xff]
      %v5939 = vld [vmem:[%s5276 + $0x20] sm:$0xff]
      %v5940 = vld [vmem:[%s5276 + $0x30] sm:$0xff]
      %v5941 = vld [vmem:[%s5276 + $0x38] sm:$0xff]
      %v5942 = vld [vmem:[%s5276 + $0x48] sm:$0xff]
      %v5943 = vld [vmem:[%s5276 + $0x50] sm:$0xff]
      %v5944 = vld [vmem:[%s5276 + $0x60] sm:$0xff]
      %v5945 = vld [vmem:[%s5276 + $0x68] sm:$0xff]
      %v5946 = vld [vmem:[%s5276 + $0x78] sm:$0xff]
      %v5947 = vld [vmem:[%s5276 + $0x80] sm:$0xff]
      %v5948 = vld [vmem:[%s5276 + $0x90] sm:$0xff]
      %v5949 = vld [vmem:[%s5276 + $0x98] sm:$0xff]
      %v5950 = vld [vmem:[%s5276 + $0xa8] sm:$0xff]
      %v5951 = vld [vmem:[%s5276 + $0xb0] sm:$0xff]
      %s5952 = scalar_lea.vmem %s3, 48
      %v5953 = vld [vmem:[%s5952] sm:$0xff]
      %v5954 = vld [vmem:[%s5952 + $0x8] sm:$0xff]
      %v5956 = vsel %vm5181, %v5936, 0
      %v5959 = vsel %vm5181, %v5937, 0
      %v5962 = vsel %vm5181, %v5938, 0
      %v5965 = vsel %vm5181, %v5939, 0
      %v5968 = vsel %vm5181, %v5940, 0
      %v5971 = vsel %vm5181, %v5941, 0
      %v5974 = vsel %vm5181, %v5942, 0
      %v5977 = vsel %vm5181, %v5943, 0
      %v5980 = vsel %vm5181, %v5944, 0
      %v5983 = vsel %vm5181, %v5945, 0
      %v5986 = vsel %vm5181, %v5946, 0
      %v5989 = vsel %vm5181, %v5947, 0
      %v5992 = vsel %vm5181, %v5948, 0
      %v5995 = vsel %vm5181, %v5949, 0
      %v5998 = vsel %vm5181, %v5950, 0
      %v6001 = vsel %vm5181, %v5951, 0
      %6003 = vmatprep.subr.mxu0 0.0
      %6004 = vmatpush1.msra.mxu0 0.0
      %6005 = vmatprep.subr.mxu0 0.0
      %6006 = vmatpush1.msra.mxu0 0.0
      %6007 = vmatprep.subr.mxu0 0.0
      %6008 = vmatpush1.msra.mxu0 0.0
      %6009 = vmatprep.subr.mxu0 0.0
      %6010 = vmatpush1.msra.mxu0 0.0
      %6011 = vmatprep.subr.mxu0 0.0
      %6012 = vmatpush1.msra.mxu0 0.0
      %6013 = vmatprep.subr.mxu0 0.0
      %6014 = vmatpush1.msra.mxu0 0.0
      %6015 = vmatprep.subr.mxu0 0.0
      %6016 = vmatpush1.msra.mxu0 0.0
      %6017 = vmatprep.subr.mxu0 0.0
      %6018 = vmatpush1.msra.mxu0 0.0
      %6019 = vmatprep.subr.mxu0 0.0
      %6020 = vmatpush1.msra.mxu0 0.0
      %6021 = vmatprep.subr.mxu0 0.0
      %6022 = vmatpush1.msra.mxu0 0.0
      %6023 = vmatprep.subr.mxu0 0.0
      %6024 = vmatpush1.msra.mxu0 0.0
      %6025 = vmatprep.subr.mxu0 0.0
      %6026 = vmatpush1.msra.mxu0 0.0
      %6027 = vmatprep.subr.mxu0 0.0
      %6028 = vmatpush1.msra.mxu0 0.0
      %6029 = vmatprep.subr.mxu0 0.0
      %6030 = vmatpush1.msra.mxu0 0.0
      %6031 = vmatprep.subr.mxu0 0.0
      %6032 = vmatpush1.msra.mxu0 %v5954
      %6033 = vmatprep.subr.mxu0 0.0
      %6034 = vmatpush1.msra.mxu0 %v5953
      %6035 = vmatprep.subr.mxu0 0.0
      %6036 = vmatpush2.msra.mxu0 0.0
      %6037 = vmatprep.subr.mxu0 0.0
      %6038 = vmatpush2.msra.mxu0 0.0
      %6039 = vmatprep.subr.mxu0 0.0
      %6040 = vmatpush2.msra.mxu0 0.0
      %6041 = vmatprep.subr.mxu0 0.0
      %6042 = vmatpush2.msra.mxu0 0.0
      %6043 = vmatprep.subr.mxu0 0.0
      %6044 = vmatpush2.msra.mxu0 0.0
      %6045 = vmatprep.subr.mxu0 0.0
      %6046 = vmatpush2.msra.mxu0 0.0
      %6047 = vmatprep.subr.mxu0 0.0
      %6048 = vmatpush2.msra.mxu0 0.0
      %6049 = vmatprep.subr.mxu0 0.0
      %6050 = vmatpush2.msra.mxu0 0.0
      %6051 = vmatprep.subr.mxu0 0.0
      %6052 = vmatpush2.msra.mxu0 0.0
      %6053 = vmatprep.subr.mxu0 0.0
      %6054 = vmatpush2.msra.mxu0 0.0
      %6055 = vmatprep.subr.mxu0 0.0
      %6056 = vmatpush2.msra.mxu0 0.0
      %6057 = vmatprep.subr.mxu0 0.0
      %6058 = vmatpush2.msra.mxu0 0.0
      %6059 = vmatprep.subr.mxu0 0.0
      %6060 = vmatpush2.msra.mxu0 0.0
      %6061 = vmatprep.subr.mxu0 0.0
      %6062 = vmatpush2.msra.mxu0 0.0
      %6063 = vmatprep.subr.mxu0 0.0
      %6064 = vmatpush2.msra.mxu0 0.0
      %6065 = vmatprep.subr.mxu0 0.0
      %6066 = vmatpush2.msra.mxu0 0.0
      %6067 = vmatprep.mubr.f32.mxu0 0.0
      %6068 = vmatmul.mubr.f32.gmra.mxu0 %v5956
      %v6069 = vpop.f32.mrf.mxu0
      %v6070 = vadd.f32 0.0, %v6069
      %v6071 = vpop.f32.mrf.mxu0
      %6072 = vmatprep.mubr.f32.mxu0 0.0
      %6073 = vmatmul.mubr.f32.gmra.mxu0 %v5959
      %v6074 = vpop.f32.mrf.mxu0
      %v6075 = vadd.f32 0.0, %v6074
      %v6076 = vpop.f32.mrf.mxu0
      %6077 = vmatprep.mubr.f32.mxu0 0.0
      %6078 = vmatmul.mubr.f32.gmra.mxu0 %v5962
      %v6079 = vpop.f32.mrf.mxu0
      %v6080 = vadd.f32 0.0, %v6079
      %v6081 = vpop.f32.mrf.mxu0
      %6082 = vmatprep.mubr.f32.mxu0 0.0
      %6083 = vmatmul.mubr.f32.gmra.mxu0 %v5965
      %v6084 = vpop.f32.mrf.mxu0
      %v6085 = vadd.f32 0.0, %v6084
      %v6086 = vpop.f32.mrf.mxu0
      %6087 = vmatprep.mubr.f32.mxu0 0.0
      %6088 = vmatmul.mubr.f32.gmra.mxu0 %v5968
      %v6089 = vpop.f32.mrf.mxu0
      %v6090 = vadd.f32 0.0, %v6089
      %v6091 = vpop.f32.mrf.mxu0
      %6092 = vmatprep.mubr.f32.mxu0 0.0
      %6093 = vmatmul.mubr.f32.gmra.mxu0 %v5971
      %v6094 = vpop.f32.mrf.mxu0
      %v6095 = vadd.f32 0.0, %v6094
      %v6096 = vpop.f32.mrf.mxu0
      %6097 = vmatprep.mubr.f32.mxu0 0.0
      %6098 = vmatmul.mubr.f32.gmra.mxu0 %v5974
      %v6099 = vpop.f32.mrf.mxu0
      %v6100 = vadd.f32 0.0, %v6099
      %v6101 = vpop.f32.mrf.mxu0
      %6102 = vmatprep.mubr.f32.mxu0 0.0
      %6103 = vmatmul.mubr.f32.gmra.mxu0 %v5977
      %v6104 = vpop.f32.mrf.mxu0
      %v6105 = vadd.f32 0.0, %v6104
      %v6106 = vpop.f32.mrf.mxu0
      %6107 = vmatprep.mubr.f32.mxu0 0.0
      %6108 = vmatmul.mubr.f32.gmra.mxu0 %v5980
      %v6109 = vpop.f32.mrf.mxu0
      %v6110 = vadd.f32 0.0, %v6109
      %v6111 = vpop.f32.mrf.mxu0
      %6112 = vmatprep.mubr.f32.mxu0 0.0
      %6113 = vmatmul.mubr.f32.gmra.mxu0 %v5983
      %v6114 = vpop.f32.mrf.mxu0
      %v6115 = vadd.f32 0.0, %v6114
      %v6116 = vpop.f32.mrf.mxu0
      %6117 = vmatprep.mubr.f32.mxu0 0.0
      %6118 = vmatmul.mubr.f32.gmra.mxu0 %v5986
      %v6119 = vpop.f32.mrf.mxu0
      %v6120 = vadd.f32 0.0, %v6119
      %v6121 = vpop.f32.mrf.mxu0
      %6122 = vmatprep.mubr.f32.mxu0 0.0
      %6123 = vmatmul.mubr.f32.gmra.mxu0 %v5989
      %v6124 = vpop.f32.mrf.mxu0
      %v6125 = vadd.f32 0.0, %v6124
      %v6126 = vpop.f32.mrf.mxu0
      %6127 = vmatprep.mubr.f32.mxu0 0.0
      %6128 = vmatmul.mubr.f32.gmra.mxu0 %v5992
      %v6129 = vpop.f32.mrf.mxu0
      %v6130 = vadd.f32 0.0, %v6129
      %v6131 = vpop.f32.mrf.mxu0
      %6132 = vmatprep.mubr.f32.mxu0 0.0
      %6133 = vmatmul.mubr.f32.gmra.mxu0 %v5995
      %v6134 = vpop.f32.mrf.mxu0
      %v6135 = vadd.f32 0.0, %v6134
      %v6136 = vpop.f32.mrf.mxu0
      %6137 = vmatprep.mubr.f32.mxu0 0.0
      %6138 = vmatmul.mubr.f32.gmra.mxu0 %v5998
      %v6139 = vpop.f32.mrf.mxu0
      %v6140 = vadd.f32 0.0, %v6139
      %v6141 = vpop.f32.mrf.mxu0
      %6142 = vmatprep.mubr.f32.mxu0 0.0
      %6143 = vmatmul.mubr.f32.gmra.mxu0 %v6001
      %v6144 = vpop.f32.mrf.mxu0
      %v6145 = vadd.f32 0.0, %v6144
      %v6146 = vpop.f32.mrf.mxu0
      %6147 = vdwg.mxu0
      %v6148 = vadd.f32 %v5920, %v6070
      %v6149 = vadd.f32 %v5921, %v6075
      %v6150 = vadd.f32 %v5922, %v6080
      %v6151 = vadd.f32 %v5923, %v6085
      %v6152 = vadd.f32 %v5924, %v6090
      %v6153 = vadd.f32 %v5925, %v6095
      %v6154 = vadd.f32 %v5926, %v6100
      %v6155 = vadd.f32 %v5927, %v6105
      %v6156 = vadd.f32 %v5928, %v6110
      %v6157 = vadd.f32 %v5929, %v6115
      %v6158 = vadd.f32 %v5930, %v6120
      %v6159 = vadd.f32 %v5931, %v6125
      %v6160 = vadd.f32 %v5932, %v6130
      %v6161 = vadd.f32 %v5933, %v6135
      %v6162 = vadd.f32 %v5934, %v6140
      %v6163 = vadd.f32 %v5935, %v6145
      %v6164 = vld [vmem:[%s5276 + $0x1] sm:$0xff]
      %v6165 = vld [vmem:[%s5276 + $0x9] sm:$0xff]
      %v6166 = vld [vmem:[%s5276 + $0x19] sm:$0xff]
      %v6167 = vld [vmem:[%s5276 + $0x21] sm:$0xff]
      %v6168 = vld [vmem:[%s5276 + $0x31] sm:$0xff]
      %v6169 = vld [vmem:[%s5276 + $0x39] sm:$0xff]
      %v6170 = vld [vmem:[%s5276 + $0x49] sm:$0xff]
      %v6171 = vld [vmem:[%s5276 + $0x51] sm:$0xff]
      %v6172 = vld [vmem:[%s5276 + $0x61] sm:$0xff]
      %v6173 = vld [vmem:[%s5276 + $0x69] sm:$0xff]
      %v6174 = vld [vmem:[%s5276 + $0x79] sm:$0xff]
      %v6175 = vld [vmem:[%s5276 + $0x81] sm:$0xff]
      %v6176 = vld [vmem:[%s5276 + $0x91] sm:$0xff]
      %v6177 = vld [vmem:[%s5276 + $0x99] sm:$0xff]
      %v6178 = vld [vmem:[%s5276 + $0xa9] sm:$0xff]
      %v6179 = vld [vmem:[%s5276 + $0xb1] sm:$0xff]
      %s6180 = scalar_lea.vmem %s3, 64
      %v6181 = vld [vmem:[%s6180] sm:$0xff]
      %v6182 = vld [vmem:[%s6180 + $0x8] sm:$0xff]
      %v6184 = vsel %vm5181, %v6164, 0
      %v6187 = vsel %vm5181, %v6165, 0
      %v6190 = vsel %vm5181, %v6166, 0
      %v6193 = vsel %vm5181, %v6167, 0
      %v6196 = vsel %vm5181, %v6168, 0
      %v6199 = vsel %vm5181, %v6169, 0
      %v6202 = vsel %vm5181, %v6170, 0
      %v6205 = vsel %vm5181, %v6171, 0
      %v6208 = vsel %vm5181, %v6172, 0
      %v6211 = vsel %vm5181, %v6173, 0
      %v6214 = vsel %vm5181, %v6174, 0
      %v6217 = vsel %vm5181, %v6175, 0
      %v6220 = vsel %vm5181, %v6176, 0
      %v6223 = vsel %vm5181, %v6177, 0
      %v6226 = vsel %vm5181, %v6178, 0
      %v6229 = vsel %vm5181, %v6179, 0
      %6231 = vmatprep.subr.mxu0 0.0
      %6232 = vmatpush1.msra.mxu0 0.0
      %6233 = vmatprep.subr.mxu0 0.0
      %6234 = vmatpush1.msra.mxu0 0.0
      %6235 = vmatprep.subr.mxu0 0.0
      %6236 = vmatpush1.msra.mxu0 0.0
      %6237 = vmatprep.subr.mxu0 0.0
      %6238 = vmatpush1.msra.mxu0 0.0
      %6239 = vmatprep.subr.mxu0 0.0
      %6240 = vmatpush1.msra.mxu0 0.0
      %6241 = vmatprep.subr.mxu0 0.0
      %6242 = vmatpush1.msra.mxu0 0.0
      %6243 = vmatprep.subr.mxu0 0.0
      %6244 = vmatpush1.msra.mxu0 0.0
      %6245 = vmatprep.subr.mxu0 0.0
      %6246 = vmatpush1.msra.mxu0 0.0
      %6247 = vmatprep.subr.mxu0 0.0
      %6248 = vmatpush1.msra.mxu0 0.0
      %6249 = vmatprep.subr.mxu0 0.0
      %6250 = vmatpush1.msra.mxu0 0.0
      %6251 = vmatprep.subr.mxu0 0.0
      %6252 = vmatpush1.msra.mxu0 0.0
      %6253 = vmatprep.subr.mxu0 0.0
      %6254 = vmatpush1.msra.mxu0 0.0
      %6255 = vmatprep.subr.mxu0 0.0
      %6256 = vmatpush1.msra.mxu0 0.0
      %6257 = vmatprep.subr.mxu0 0.0
      %6258 = vmatpush1.msra.mxu0 0.0
      %6259 = vmatprep.subr.mxu0 0.0
      %6260 = vmatpush1.msra.mxu0 %v6182
      %6261 = vmatprep.subr.mxu0 0.0
      %6262 = vmatpush1.msra.mxu0 %v6181
      %6263 = vmatprep.subr.mxu0 0.0
      %6264 = vmatpush2.msra.mxu0 0.0
      %6265 = vmatprep.subr.mxu0 0.0
      %6266 = vmatpush2.msra.mxu0 0.0
      %6267 = vmatprep.subr.mxu0 0.0
      %6268 = vmatpush2.msra.mxu0 0.0
      %6269 = vmatprep.subr.mxu0 0.0
      %6270 = vmatpush2.msra.mxu0 0.0
      %6271 = vmatprep.subr.mxu0 0.0
      %6272 = vmatpush2.msra.mxu0 0.0
      %6273 = vmatprep.subr.mxu0 0.0
      %6274 = vmatpush2.msra.mxu0 0.0
      %6275 = vmatprep.subr.mxu0 0.0
      %6276 = vmatpush2.msra.mxu0 0.0
      %6277 = vmatprep.subr.mxu0 0.0
      %6278 = vmatpush2.msra.mxu0 0.0
      %6279 = vmatprep.subr.mxu0 0.0
      %6280 = vmatpush2.msra.mxu0 0.0
      %6281 = vmatprep.subr.mxu0 0.0
      %6282 = vmatpush2.msra.mxu0 0.0
      %6283 = vmatprep.subr.mxu0 0.0
      %6284 = vmatpush2.msra.mxu0 0.0
      %6285 = vmatprep.subr.mxu0 0.0
      %6286 = vmatpush2.msra.mxu0 0.0
      %6287 = vmatprep.subr.mxu0 0.0
      %6288 = vmatpush2.msra.mxu0 0.0
      %6289 = vmatprep.subr.mxu0 0.0
      %6290 = vmatpush2.msra.mxu0 0.0
      %6291 = vmatprep.subr.mxu0 0.0
      %6292 = vmatpush2.msra.mxu0 0.0
      %6293 = vmatprep.subr.mxu0 0.0
      %6294 = vmatpush2.msra.mxu0 0.0
      %6295 = vmatprep.mubr.f32.mxu0 0.0
      %6296 = vmatmul.mubr.f32.gmra.mxu0 %v6184
      %v6297 = vpop.f32.mrf.mxu0
      %v6298 = vadd.f32 0.0, %v6297
      %v6299 = vpop.f32.mrf.mxu0
      %6300 = vmatprep.mubr.f32.mxu0 0.0
      %6301 = vmatmul.mubr.f32.gmra.mxu0 %v6187
      %v6302 = vpop.f32.mrf.mxu0
      %v6303 = vadd.f32 0.0, %v6302
      %v6304 = vpop.f32.mrf.mxu0
      %6305 = vmatprep.mubr.f32.mxu0 0.0
      %6306 = vmatmul.mubr.f32.gmra.mxu0 %v6190
      %v6307 = vpop.f32.mrf.mxu0
      %v6308 = vadd.f32 0.0, %v6307
      %v6309 = vpop.f32.mrf.mxu0
      %6310 = vmatprep.mubr.f32.mxu0 0.0
      %6311 = vmatmul.mubr.f32.gmra.mxu0 %v6193
      %v6312 = vpop.f32.mrf.mxu0
      %v6313 = vadd.f32 0.0, %v6312
      %v6314 = vpop.f32.mrf.mxu0
      %6315 = vmatprep.mubr.f32.mxu0 0.0
      %6316 = vmatmul.mubr.f32.gmra.mxu0 %v6196
      %v6317 = vpop.f32.mrf.mxu0
      %v6318 = vadd.f32 0.0, %v6317
      %v6319 = vpop.f32.mrf.mxu0
      %6320 = vmatprep.mubr.f32.mxu0 0.0
      %6321 = vmatmul.mubr.f32.gmra.mxu0 %v6199
      %v6322 = vpop.f32.mrf.mxu0
      %v6323 = vadd.f32 0.0, %v6322
      %v6324 = vpop.f32.mrf.mxu0
      %6325 = vmatprep.mubr.f32.mxu0 0.0
      %6326 = vmatmul.mubr.f32.gmra.mxu0 %v6202
      %v6327 = vpop.f32.mrf.mxu0
      %v6328 = vadd.f32 0.0, %v6327
      %v6329 = vpop.f32.mrf.mxu0
      %6330 = vmatprep.mubr.f32.mxu0 0.0
      %6331 = vmatmul.mubr.f32.gmra.mxu0 %v6205
      %v6332 = vpop.f32.mrf.mxu0
      %v6333 = vadd.f32 0.0, %v6332
      %v6334 = vpop.f32.mrf.mxu0
      %6335 = vmatprep.mubr.f32.mxu0 0.0
      %6336 = vmatmul.mubr.f32.gmra.mxu0 %v6208
      %v6337 = vpop.f32.mrf.mxu0
      %v6338 = vadd.f32 0.0, %v6337
      %v6339 = vpop.f32.mrf.mxu0
      %6340 = vmatprep.mubr.f32.mxu0 0.0
      %6341 = vmatmul.mubr.f32.gmra.mxu0 %v6211
      %v6342 = vpop.f32.mrf.mxu0
      %v6343 = vadd.f32 0.0, %v6342
      %v6344 = vpop.f32.mrf.mxu0
      %6345 = vmatprep.mubr.f32.mxu0 0.0
      %6346 = vmatmul.mubr.f32.gmra.mxu0 %v6214
      %v6347 = vpop.f32.mrf.mxu0
      %v6348 = vadd.f32 0.0, %v6347
      %v6349 = vpop.f32.mrf.mxu0
      %6350 = vmatprep.mubr.f32.mxu0 0.0
      %6351 = vmatmul.mubr.f32.gmra.mxu0 %v6217
      %v6352 = vpop.f32.mrf.mxu0
      %v6353 = vadd.f32 0.0, %v6352
      %v6354 = vpop.f32.mrf.mxu0
      %6355 = vmatprep.mubr.f32.mxu0 0.0
      %6356 = vmatmul.mubr.f32.gmra.mxu0 %v6220
      %v6357 = vpop.f32.mrf.mxu0
      %v6358 = vadd.f32 0.0, %v6357
      %v6359 = vpop.f32.mrf.mxu0
      %6360 = vmatprep.mubr.f32.mxu0 0.0
      %6361 = vmatmul.mubr.f32.gmra.mxu0 %v6223
      %v6362 = vpop.f32.mrf.mxu0
      %v6363 = vadd.f32 0.0, %v6362
      %v6364 = vpop.f32.mrf.mxu0
      %6365 = vmatprep.mubr.f32.mxu0 0.0
      %6366 = vmatmul.mubr.f32.gmra.mxu0 %v6226
      %v6367 = vpop.f32.mrf.mxu0
      %v6368 = vadd.f32 0.0, %v6367
      %v6369 = vpop.f32.mrf.mxu0
      %6370 = vmatprep.mubr.f32.mxu0 0.0
      %6371 = vmatmul.mubr.f32.gmra.mxu0 %v6229
      %v6372 = vpop.f32.mrf.mxu0
      %v6373 = vadd.f32 0.0, %v6372
      %v6374 = vpop.f32.mrf.mxu0
      %6375 = vdwg.mxu0
      %v6376 = vadd.f32 %v6148, %v6298
      %v6377 = vadd.f32 %v6149, %v6303
      %v6378 = vadd.f32 %v6150, %v6308
      %v6379 = vadd.f32 %v6151, %v6313
      %v6380 = vadd.f32 %v6152, %v6318
      %v6381 = vadd.f32 %v6153, %v6323
      %v6382 = vadd.f32 %v6154, %v6328
      %v6383 = vadd.f32 %v6155, %v6333
      %v6384 = vadd.f32 %v6156, %v6338
      %v6385 = vadd.f32 %v6157, %v6343
      %v6386 = vadd.f32 %v6158, %v6348
      %v6387 = vadd.f32 %v6159, %v6353
      %v6388 = vadd.f32 %v6160, %v6358
      %v6389 = vadd.f32 %v6161, %v6363
      %v6390 = vadd.f32 %v6162, %v6368
      %v6391 = vadd.f32 %v6163, %v6373
      %v6392 = vld [vmem:[%s5276 + $0x2] sm:$0xff]
      %v6393 = vld [vmem:[%s5276 + $0xa] sm:$0xff]
      %v6394 = vld [vmem:[%s5276 + $0x1a] sm:$0xff]
      %v6395 = vld [vmem:[%s5276 + $0x22] sm:$0xff]
      %v6396 = vld [vmem:[%s5276 + $0x32] sm:$0xff]
      %v6397 = vld [vmem:[%s5276 + $0x3a] sm:$0xff]
      %v6398 = vld [vmem:[%s5276 + $0x4a] sm:$0xff]
      %v6399 = vld [vmem:[%s5276 + $0x52] sm:$0xff]
      %v6400 = vld [vmem:[%s5276 + $0x62] sm:$0xff]
      %v6401 = vld [vmem:[%s5276 + $0x6a] sm:$0xff]
      %v6402 = vld [vmem:[%s5276 + $0x7a] sm:$0xff]
      %v6403 = vld [vmem:[%s5276 + $0x82] sm:$0xff]
      %v6404 = vld [vmem:[%s5276 + $0x92] sm:$0xff]
      %v6405 = vld [vmem:[%s5276 + $0x9a] sm:$0xff]
      %v6406 = vld [vmem:[%s5276 + $0xaa] sm:$0xff]
      %v6407 = vld [vmem:[%s5276 + $0xb2] sm:$0xff]
      %s6408 = scalar_lea.vmem %s3, 80
      %v6409 = vld [vmem:[%s6408] sm:$0xff]
      %v6410 = vld [vmem:[%s6408 + $0x8] sm:$0xff]
      %v6412 = vsel %vm5181, %v6392, 0
      %v6415 = vsel %vm5181, %v6393, 0
      %v6418 = vsel %vm5181, %v6394, 0
      %v6421 = vsel %vm5181, %v6395, 0
      %v6424 = vsel %vm5181, %v6396, 0
      %v6427 = vsel %vm5181, %v6397, 0
      %v6430 = vsel %vm5181, %v6398, 0
      %v6433 = vsel %vm5181, %v6399, 0
      %v6436 = vsel %vm5181, %v6400, 0
      %v6439 = vsel %vm5181, %v6401, 0
      %v6442 = vsel %vm5181, %v6402, 0
      %v6445 = vsel %vm5181, %v6403, 0
      %v6448 = vsel %vm5181, %v6404, 0
      %v6451 = vsel %vm5181, %v6405, 0
      %v6454 = vsel %vm5181, %v6406, 0
      %v6457 = vsel %vm5181, %v6407, 0
      %6459 = vmatprep.subr.mxu0 0.0
      %6460 = vmatpush1.msra.mxu0 0.0
      %6461 = vmatprep.subr.mxu0 0.0
      %6462 = vmatpush1.msra.mxu0 0.0
      %6463 = vmatprep.subr.mxu0 0.0
      %6464 = vmatpush1.msra.mxu0 0.0
      %6465 = vmatprep.subr.mxu0 0.0
      %6466 = vmatpush1.msra.mxu0 0.0
      %6467 = vmatprep.subr.mxu0 0.0
      %6468 = vmatpush1.msra.mxu0 0.0
      %6469 = vmatprep.subr.mxu0 0.0
      %6470 = vmatpush1.msra.mxu0 0.0
      %6471 = vmatprep.subr.mxu0 0.0
      %6472 = vmatpush1.msra.mxu0 0.0
      %6473 = vmatprep.subr.mxu0 0.0
      %6474 = vmatpush1.msra.mxu0 0.0
      %6475 = vmatprep.subr.mxu0 0.0
      %6476 = vmatpush1.msra.mxu0 0.0
      %6477 = vmatprep.subr.mxu0 0.0
      %6478 = vmatpush1.msra.mxu0 0.0
      %6479 = vmatprep.subr.mxu0 0.0
      %6480 = vmatpush1.msra.mxu0 0.0
      %6481 = vmatprep.subr.mxu0 0.0
      %6482 = vmatpush1.msra.mxu0 0.0
      %6483 = vmatprep.subr.mxu0 0.0
      %6484 = vmatpush1.msra.mxu0 0.0
      %6485 = vmatprep.subr.mxu0 0.0
      %6486 = vmatpush1.msra.mxu0 0.0
      %6487 = vmatprep.subr.mxu0 0.0
      %6488 = vmatpush1.msra.mxu0 %v6410
      %6489 = vmatprep.subr.mxu0 0.0
      %6490 = vmatpush1.msra.mxu0 %v6409
      %6491 = vmatprep.subr.mxu0 0.0
      %6492 = vmatpush2.msra.mxu0 0.0
      %6493 = vmatprep.subr.mxu0 0.0
      %6494 = vmatpush2.msra.mxu0 0.0
      %6495 = vmatprep.subr.mxu0 0.0
      %6496 = vmatpush2.msra.mxu0 0.0
      %6497 = vmatprep.subr.mxu0 0.0
      %6498 = vmatpush2.msra.mxu0 0.0
      %6499 = vmatprep.subr.mxu0 0.0
      %6500 = vmatpush2.msra.mxu0 0.0
      %6501 = vmatprep.subr.mxu0 0.0
      %6502 = vmatpush2.msra.mxu0 0.0
      %6503 = vmatprep.subr.mxu0 0.0
      %6504 = vmatpush2.msra.mxu0 0.0
      %6505 = vmatprep.subr.mxu0 0.0
      %6506 = vmatpush2.msra.mxu0 0.0
      %6507 = vmatprep.subr.mxu0 0.0
      %6508 = vmatpush2.msra.mxu0 0.0
      %6509 = vmatprep.subr.mxu0 0.0
      %6510 = vmatpush2.msra.mxu0 0.0
      %6511 = vmatprep.subr.mxu0 0.0
      %6512 = vmatpush2.msra.mxu0 0.0
      %6513 = vmatprep.subr.mxu0 0.0
      %6514 = vmatpush2.msra.mxu0 0.0
      %6515 = vmatprep.subr.mxu0 0.0
      %6516 = vmatpush2.msra.mxu0 0.0
      %6517 = vmatprep.subr.mxu0 0.0
      %6518 = vmatpush2.msra.mxu0 0.0
      %6519 = vmatprep.subr.mxu0 0.0
      %6520 = vmatpush2.msra.mxu0 0.0
      %6521 = vmatprep.subr.mxu0 0.0
      %6522 = vmatpush2.msra.mxu0 0.0
      %6523 = vmatprep.mubr.f32.mxu0 0.0
      %6524 = vmatmul.mubr.f32.gmra.mxu0 %v6412
      %v6525 = vpop.f32.mrf.mxu0
      %v6526 = vadd.f32 0.0, %v6525
      %v6527 = vpop.f32.mrf.mxu0
      %6528 = vmatprep.mubr.f32.mxu0 0.0
      %6529 = vmatmul.mubr.f32.gmra.mxu0 %v6415
      %v6530 = vpop.f32.mrf.mxu0
      %v6531 = vadd.f32 0.0, %v6530
      %v6532 = vpop.f32.mrf.mxu0
      %6533 = vmatprep.mubr.f32.mxu0 0.0
      %6534 = vmatmul.mubr.f32.gmra.mxu0 %v6418
      %v6535 = vpop.f32.mrf.mxu0
      %v6536 = vadd.f32 0.0, %v6535
      %v6537 = vpop.f32.mrf.mxu0
      %6538 = vmatprep.mubr.f32.mxu0 0.0
      %6539 = vmatmul.mubr.f32.gmra.mxu0 %v6421
      %v6540 = vpop.f32.mrf.mxu0
      %v6541 = vadd.f32 0.0, %v6540
      %v6542 = vpop.f32.mrf.mxu0
      %6543 = vmatprep.mubr.f32.mxu0 0.0
      %6544 = vmatmul.mubr.f32.gmra.mxu0 %v6424
      %v6545 = vpop.f32.mrf.mxu0
      %v6546 = vadd.f32 0.0, %v6545
      %v6547 = vpop.f32.mrf.mxu0
      %6548 = vmatprep.mubr.f32.mxu0 0.0
      %6549 = vmatmul.mubr.f32.gmra.mxu0 %v6427
      %v6550 = vpop.f32.mrf.mxu0
      %v6551 = vadd.f32 0.0, %v6550
      %v6552 = vpop.f32.mrf.mxu0
      %6553 = vmatprep.mubr.f32.mxu0 0.0
      %6554 = vmatmul.mubr.f32.gmra.mxu0 %v6430
      %v6555 = vpop.f32.mrf.mxu0
      %v6556 = vadd.f32 0.0, %v6555
      %v6557 = vpop.f32.mrf.mxu0
      %6558 = vmatprep.mubr.f32.mxu0 0.0
      %6559 = vmatmul.mubr.f32.gmra.mxu0 %v6433
      %v6560 = vpop.f32.mrf.mxu0
      %v6561 = vadd.f32 0.0, %v6560
      %v6562 = vpop.f32.mrf.mxu0
      %6563 = vmatprep.mubr.f32.mxu0 0.0
      %6564 = vmatmul.mubr.f32.gmra.mxu0 %v6436
      %v6565 = vpop.f32.mrf.mxu0
      %v6566 = vadd.f32 0.0, %v6565
      %v6567 = vpop.f32.mrf.mxu0
      %6568 = vmatprep.mubr.f32.mxu0 0.0
      %6569 = vmatmul.mubr.f32.gmra.mxu0 %v6439
      %v6570 = vpop.f32.mrf.mxu0
      %v6571 = vadd.f32 0.0, %v6570
      %v6572 = vpop.f32.mrf.mxu0
      %6573 = vmatprep.mubr.f32.mxu0 0.0
      %6574 = vmatmul.mubr.f32.gmra.mxu0 %v6442
      %v6575 = vpop.f32.mrf.mxu0
      %v6576 = vadd.f32 0.0, %v6575
      %v6577 = vpop.f32.mrf.mxu0
      %6578 = vmatprep.mubr.f32.mxu0 0.0
      %6579 = vmatmul.mubr.f32.gmra.mxu0 %v6445
      %v6580 = vpop.f32.mrf.mxu0
      %v6581 = vadd.f32 0.0, %v6580
      %v6582 = vpop.f32.mrf.mxu0
      %6583 = vmatprep.mubr.f32.mxu0 0.0
      %6584 = vmatmul.mubr.f32.gmra.mxu0 %v6448
      %v6585 = vpop.f32.mrf.mxu0
      %v6586 = vadd.f32 0.0, %v6585
      %v6587 = vpop.f32.mrf.mxu0
      %6588 = vmatprep.mubr.f32.mxu0 0.0
      %6589 = vmatmul.mubr.f32.gmra.mxu0 %v6451
      %v6590 = vpop.f32.mrf.mxu0
      %v6591 = vadd.f32 0.0, %v6590
      %v6592 = vpop.f32.mrf.mxu0
      %6593 = vmatprep.mubr.f32.mxu0 0.0
      %6594 = vmatmul.mubr.f32.gmra.mxu0 %v6454
      %v6595 = vpop.f32.mrf.mxu0
      %v6596 = vadd.f32 0.0, %v6595
      %v6597 = vpop.f32.mrf.mxu0
      %6598 = vmatprep.mubr.f32.mxu0 0.0
      %6599 = vmatmul.mubr.f32.gmra.mxu0 %v6457
      %v6600 = vpop.f32.mrf.mxu0
      %v6601 = vadd.f32 0.0, %v6600
      %v6602 = vpop.f32.mrf.mxu0
      %6603 = vdwg.mxu0
      %v6604 = vadd.f32 %v6376, %v6526
      %v6605 = vadd.f32 %v6377, %v6531
      %v6606 = vadd.f32 %v6378, %v6536
      %v6607 = vadd.f32 %v6379, %v6541
      %v6608 = vadd.f32 %v6380, %v6546
      %v6609 = vadd.f32 %v6381, %v6551
      %v6610 = vadd.f32 %v6382, %v6556
      %v6611 = vadd.f32 %v6383, %v6561
      %v6612 = vadd.f32 %v6384, %v6566
      %v6613 = vadd.f32 %v6385, %v6571
      %v6614 = vadd.f32 %v6386, %v6576
      %v6615 = vadd.f32 %v6387, %v6581
      %v6616 = vadd.f32 %v6388, %v6586
      %v6617 = vadd.f32 %v6389, %v6591
      %v6618 = vadd.f32 %v6390, %v6596
      %v6619 = vadd.f32 %v6391, %v6601
      %s6620 = scalar_lea.vmem [#allocation3], 48
      %v6621 = vld [vmem:[%s6620] sm:$0xff]
      %v6622 = vld [vmem:[%s6620 + $0x8] sm:$0xff]
      %v6623 = vld [vmem:[%s6620 + $0x18] sm:$0xff]
      %v6624 = vld [vmem:[%s6620 + $0x20] sm:$0xff]
      %v6625 = vld [vmem:[%s6620 + $0x30] sm:$0xff]
      %v6626 = vld [vmem:[%s6620 + $0x38] sm:$0xff]
      %v6627 = vld [vmem:[%s6620 + $0x48] sm:$0xff]
      %v6628 = vld [vmem:[%s6620 + $0x50] sm:$0xff]
      %v6629 = vld [vmem:[%s6620 + $0x60] sm:$0xff]
      %v6630 = vld [vmem:[%s6620 + $0x68] sm:$0xff]
      %v6631 = vld [vmem:[%s6620 + $0x78] sm:$0xff]
      %v6632 = vld [vmem:[%s6620 + $0x80] sm:$0xff]
      %v6633 = vld [vmem:[%s6620 + $0x90] sm:$0xff]
      %v6634 = vld [vmem:[%s6620 + $0x98] sm:$0xff]
      %v6635 = vld [vmem:[%s6620 + $0xa8] sm:$0xff]
      %v6636 = vld [vmem:[%s6620 + $0xb0] sm:$0xff]
      %s6637 = scalar_lea.vmem %s3, 96
      %v6638 = vld [vmem:[%s6637] sm:$0xff]
      %v6639 = vld [vmem:[%s6637 + $0x8] sm:$0xff]
      %v6641 = vsel %vm5181, %v6621, 0
      %v6644 = vsel %vm5181, %v6622, 0
      %v6647 = vsel %vm5181, %v6623, 0
      %v6650 = vsel %vm5181, %v6624, 0
      %v6653 = vsel %vm5181, %v6625, 0
      %v6656 = vsel %vm5181, %v6626, 0
      %v6659 = vsel %vm5181, %v6627, 0
      %v6662 = vsel %vm5181, %v6628, 0
      %v6665 = vsel %vm5181, %v6629, 0
      %v6668 = vsel %vm5181, %v6630, 0
      %v6671 = vsel %vm5181, %v6631, 0
      %v6674 = vsel %vm5181, %v6632, 0
      %v6677 = vsel %vm5181, %v6633, 0
      %v6680 = vsel %vm5181, %v6634, 0
      %v6683 = vsel %vm5181, %v6635, 0
      %v6686 = vsel %vm5181, %v6636, 0
      %6688 = vmatprep.subr.mxu0 0.0
      %6689 = vmatpush1.msra.mxu0 0.0
      %6690 = vmatprep.subr.mxu0 0.0
      %6691 = vmatpush1.msra.mxu0 0.0
      %6692 = vmatprep.subr.mxu0 0.0
      %6693 = vmatpush1.msra.mxu0 0.0
      %6694 = vmatprep.subr.mxu0 0.0
      %6695 = vmatpush1.msra.mxu0 0.0
      %6696 = vmatprep.subr.mxu0 0.0
      %6697 = vmatpush1.msra.mxu0 0.0
      %6698 = vmatprep.subr.mxu0 0.0
      %6699 = vmatpush1.msra.mxu0 0.0
      %6700 = vmatprep.subr.mxu0 0.0
      %6701 = vmatpush1.msra.mxu0 0.0
      %6702 = vmatprep.subr.mxu0 0.0
      %6703 = vmatpush1.msra.mxu0 0.0
      %6704 = vmatprep.subr.mxu0 0.0
      %6705 = vmatpush1.msra.mxu0 0.0
      %6706 = vmatprep.subr.mxu0 0.0
      %6707 = vmatpush1.msra.mxu0 0.0
      %6708 = vmatprep.subr.mxu0 0.0
      %6709 = vmatpush1.msra.mxu0 0.0
      %6710 = vmatprep.subr.mxu0 0.0
      %6711 = vmatpush1.msra.mxu0 0.0
      %6712 = vmatprep.subr.mxu0 0.0
      %6713 = vmatpush1.msra.mxu0 0.0
      %6714 = vmatprep.subr.mxu0 0.0
      %6715 = vmatpush1.msra.mxu0 0.0
      %6716 = vmatprep.subr.mxu0 0.0
      %6717 = vmatpush1.msra.mxu0 %v6639
      %6718 = vmatprep.subr.mxu0 0.0
      %6719 = vmatpush1.msra.mxu0 %v6638
      %6720 = vmatprep.subr.mxu0 0.0
      %6721 = vmatpush2.msra.mxu0 0.0
      %6722 = vmatprep.subr.mxu0 0.0
      %6723 = vmatpush2.msra.mxu0 0.0
      %6724 = vmatprep.subr.mxu0 0.0
      %6725 = vmatpush2.msra.mxu0 0.0
      %6726 = vmatprep.subr.mxu0 0.0
      %6727 = vmatpush2.msra.mxu0 0.0
      %6728 = vmatprep.subr.mxu0 0.0
      %6729 = vmatpush2.msra.mxu0 0.0
      %6730 = vmatprep.subr.mxu0 0.0
      %6731 = vmatpush2.msra.mxu0 0.0
      %6732 = vmatprep.subr.mxu0 0.0
      %6733 = vmatpush2.msra.mxu0 0.0
      %6734 = vmatprep.subr.mxu0 0.0
      %6735 = vmatpush2.msra.mxu0 0.0
      %6736 = vmatprep.subr.mxu0 0.0
      %6737 = vmatpush2.msra.mxu0 0.0
      %6738 = vmatprep.subr.mxu0 0.0
      %6739 = vmatpush2.msra.mxu0 0.0
      %6740 = vmatprep.subr.mxu0 0.0
      %6741 = vmatpush2.msra.mxu0 0.0
      %6742 = vmatprep.subr.mxu0 0.0
      %6743 = vmatpush2.msra.mxu0 0.0
      %6744 = vmatprep.subr.mxu0 0.0
      %6745 = vmatpush2.msra.mxu0 0.0
      %6746 = vmatprep.subr.mxu0 0.0
      %6747 = vmatpush2.msra.mxu0 0.0
      %6748 = vmatprep.subr.mxu0 0.0
      %6749 = vmatpush2.msra.mxu0 0.0
      %6750 = vmatprep.subr.mxu0 0.0
      %6751 = vmatpush2.msra.mxu0 0.0
      %6752 = vmatprep.mubr.f32.mxu0 0.0
      %6753 = vmatmul.mubr.f32.gmra.mxu0 %v6641
      %v6754 = vpop.f32.mrf.mxu0
      %v6755 = vadd.f32 0.0, %v6754
      %v6756 = vpop.f32.mrf.mxu0
      %6757 = vmatprep.mubr.f32.mxu0 0.0
      %6758 = vmatmul.mubr.f32.gmra.mxu0 %v6644
      %v6759 = vpop.f32.mrf.mxu0
      %v6760 = vadd.f32 0.0, %v6759
      %v6761 = vpop.f32.mrf.mxu0
      %6762 = vmatprep.mubr.f32.mxu0 0.0
      %6763 = vmatmul.mubr.f32.gmra.mxu0 %v6647
      %v6764 = vpop.f32.mrf.mxu0
      %v6765 = vadd.f32 0.0, %v6764
      %v6766 = vpop.f32.mrf.mxu0
      %6767 = vmatprep.mubr.f32.mxu0 0.0
      %6768 = vmatmul.mubr.f32.gmra.mxu0 %v6650
      %v6769 = vpop.f32.mrf.mxu0
      %v6770 = vadd.f32 0.0, %v6769
      %v6771 = vpop.f32.mrf.mxu0
      %6772 = vmatprep.mubr.f32.mxu0 0.0
      %6773 = vmatmul.mubr.f32.gmra.mxu0 %v6653
      %v6774 = vpop.f32.mrf.mxu0
      %v6775 = vadd.f32 0.0, %v6774
      %v6776 = vpop.f32.mrf.mxu0
      %6777 = vmatprep.mubr.f32.mxu0 0.0
      %6778 = vmatmul.mubr.f32.gmra.mxu0 %v6656
      %v6779 = vpop.f32.mrf.mxu0
      %v6780 = vadd.f32 0.0, %v6779
      %v6781 = vpop.f32.mrf.mxu0
      %6782 = vmatprep.mubr.f32.mxu0 0.0
      %6783 = vmatmul.mubr.f32.gmra.mxu0 %v6659
      %v6784 = vpop.f32.mrf.mxu0
      %v6785 = vadd.f32 0.0, %v6784
      %v6786 = vpop.f32.mrf.mxu0
      %6787 = vmatprep.mubr.f32.mxu0 0.0
      %6788 = vmatmul.mubr.f32.gmra.mxu0 %v6662
      %v6789 = vpop.f32.mrf.mxu0
      %v6790 = vadd.f32 0.0, %v6789
      %v6791 = vpop.f32.mrf.mxu0
      %6792 = vmatprep.mubr.f32.mxu0 0.0
      %6793 = vmatmul.mubr.f32.gmra.mxu0 %v6665
      %v6794 = vpop.f32.mrf.mxu0
      %v6795 = vadd.f32 0.0, %v6794
      %v6796 = vpop.f32.mrf.mxu0
      %6797 = vmatprep.mubr.f32.mxu0 0.0
      %6798 = vmatmul.mubr.f32.gmra.mxu0 %v6668
      %v6799 = vpop.f32.mrf.mxu0
      %v6800 = vadd.f32 0.0, %v6799
      %v6801 = vpop.f32.mrf.mxu0
      %6802 = vmatprep.mubr.f32.mxu0 0.0
      %6803 = vmatmul.mubr.f32.gmra.mxu0 %v6671
      %v6804 = vpop.f32.mrf.mxu0
      %v6805 = vadd.f32 0.0, %v6804
      %v6806 = vpop.f32.mrf.mxu0
      %6807 = vmatprep.mubr.f32.mxu0 0.0
      %6808 = vmatmul.mubr.f32.gmra.mxu0 %v6674
      %v6809 = vpop.f32.mrf.mxu0
      %v6810 = vadd.f32 0.0, %v6809
      %v6811 = vpop.f32.mrf.mxu0
      %6812 = vmatprep.mubr.f32.mxu0 0.0
      %6813 = vmatmul.mubr.f32.gmra.mxu0 %v6677
      %v6814 = vpop.f32.mrf.mxu0
      %v6815 = vadd.f32 0.0, %v6814
      %v6816 = vpop.f32.mrf.mxu0
      %6817 = vmatprep.mubr.f32.mxu0 0.0
      %6818 = vmatmul.mubr.f32.gmra.mxu0 %v6680
      %v6819 = vpop.f32.mrf.mxu0
      %v6820 = vadd.f32 0.0, %v6819
      %v6821 = vpop.f32.mrf.mxu0
      %6822 = vmatprep.mubr.f32.mxu0 0.0
      %6823 = vmatmul.mubr.f32.gmra.mxu0 %v6683
      %v6824 = vpop.f32.mrf.mxu0
      %v6825 = vadd.f32 0.0, %v6824
      %v6826 = vpop.f32.mrf.mxu0
      %6827 = vmatprep.mubr.f32.mxu0 0.0
      %6828 = vmatmul.mubr.f32.gmra.mxu0 %v6686
      %v6829 = vpop.f32.mrf.mxu0
      %v6830 = vadd.f32 0.0, %v6829
      %v6831 = vpop.f32.mrf.mxu0
      %6832 = vdwg.mxu0
      %v6833 = vadd.f32 %v6604, %v6755
      %v6834 = vadd.f32 %v6605, %v6760
      %v6835 = vadd.f32 %v6606, %v6765
      %v6836 = vadd.f32 %v6607, %v6770
      %v6837 = vadd.f32 %v6608, %v6775
      %v6838 = vadd.f32 %v6609, %v6780
      %v6839 = vadd.f32 %v6610, %v6785
      %v6840 = vadd.f32 %v6611, %v6790
      %v6841 = vadd.f32 %v6612, %v6795
      %v6842 = vadd.f32 %v6613, %v6800
      %v6843 = vadd.f32 %v6614, %v6805
      %v6844 = vadd.f32 %v6615, %v6810
      %v6845 = vadd.f32 %v6616, %v6815
      %v6846 = vadd.f32 %v6617, %v6820
      %v6847 = vadd.f32 %v6618, %v6825
      %v6848 = vadd.f32 %v6619, %v6830
      %v6849 = vld [vmem:[%s6620 + $0x1] sm:$0xff]
      %v6850 = vld [vmem:[%s6620 + $0x9] sm:$0xff]
      %v6851 = vld [vmem:[%s6620 + $0x19] sm:$0xff]
      %v6852 = vld [vmem:[%s6620 + $0x21] sm:$0xff]
      %v6853 = vld [vmem:[%s6620 + $0x31] sm:$0xff]
      %v6854 = vld [vmem:[%s6620 + $0x39] sm:$0xff]
      %v6855 = vld [vmem:[%s6620 + $0x49] sm:$0xff]
      %v6856 = vld [vmem:[%s6620 + $0x51] sm:$0xff]
      %v6857 = vld [vmem:[%s6620 + $0x61] sm:$0xff]
      %v6858 = vld [vmem:[%s6620 + $0x69] sm:$0xff]
      %v6859 = vld [vmem:[%s6620 + $0x79] sm:$0xff]
      %v6860 = vld [vmem:[%s6620 + $0x81] sm:$0xff]
      %v6861 = vld [vmem:[%s6620 + $0x91] sm:$0xff]
      %v6862 = vld [vmem:[%s6620 + $0x99] sm:$0xff]
      %v6863 = vld [vmem:[%s6620 + $0xa9] sm:$0xff]
      %v6864 = vld [vmem:[%s6620 + $0xb1] sm:$0xff]
      %s6865 = scalar_lea.vmem %s3, 112
      %v6866 = vld [vmem:[%s6865] sm:$0xff]
      %v6867 = vld [vmem:[%s6865 + $0x8] sm:$0xff]
      %v6869 = vsel %vm5181, %v6849, 0
      %v6872 = vsel %vm5181, %v6850, 0
      %v6875 = vsel %vm5181, %v6851, 0
      %v6878 = vsel %vm5181, %v6852, 0
      %v6881 = vsel %vm5181, %v6853, 0
      %v6884 = vsel %vm5181, %v6854, 0
      %v6887 = vsel %vm5181, %v6855, 0
      %v6890 = vsel %vm5181, %v6856, 0
      %v6893 = vsel %vm5181, %v6857, 0
      %v6896 = vsel %vm5181, %v6858, 0
      %v6899 = vsel %vm5181, %v6859, 0
      %v6902 = vsel %vm5181, %v6860, 0
      %v6905 = vsel %vm5181, %v6861, 0
      %v6908 = vsel %vm5181, %v6862, 0
      %v6911 = vsel %vm5181, %v6863, 0
      %v6914 = vsel %vm5181, %v6864, 0
      %6916 = vmatprep.subr.mxu0 0.0
      %6917 = vmatpush1.msra.mxu0 0.0
      %6918 = vmatprep.subr.mxu0 0.0
      %6919 = vmatpush1.msra.mxu0 0.0
      %6920 = vmatprep.subr.mxu0 0.0
      %6921 = vmatpush1.msra.mxu0 0.0
      %6922 = vmatprep.subr.mxu0 0.0
      %6923 = vmatpush1.msra.mxu0 0.0
      %6924 = vmatprep.subr.mxu0 0.0
      %6925 = vmatpush1.msra.mxu0 0.0
      %6926 = vmatprep.subr.mxu0 0.0
      %6927 = vmatpush1.msra.mxu0 0.0
      %6928 = vmatprep.subr.mxu0 0.0
      %6929 = vmatpush1.msra.mxu0 0.0
      %6930 = vmatprep.subr.mxu0 0.0
      %6931 = vmatpush1.msra.mxu0 0.0
      %6932 = vmatprep.subr.mxu0 0.0
      %6933 = vmatpush1.msra.mxu0 0.0
      %6934 = vmatprep.subr.mxu0 0.0
      %6935 = vmatpush1.msra.mxu0 0.0
      %6936 = vmatprep.subr.mxu0 0.0
      %6937 = vmatpush1.msra.mxu0 0.0
      %6938 = vmatprep.subr.mxu0 0.0
      %6939 = vmatpush1.msra.mxu0 0.0
      %6940 = vmatprep.subr.mxu0 0.0
      %6941 = vmatpush1.msra.mxu0 0.0
      %6942 = vmatprep.subr.mxu0 0.0
      %6943 = vmatpush1.msra.mxu0 0.0
      %6944 = vmatprep.subr.mxu0 0.0
      %6945 = vmatpush1.msra.mxu0 %v6867
      %6946 = vmatprep.subr.mxu0 0.0
      %6947 = vmatpush1.msra.mxu0 %v6866
      %6948 = vmatprep.subr.mxu0 0.0
      %6949 = vmatpush2.msra.mxu0 0.0
      %6950 = vmatprep.subr.mxu0 0.0
      %6951 = vmatpush2.msra.mxu0 0.0
      %6952 = vmatprep.subr.mxu0 0.0
      %6953 = vmatpush2.msra.mxu0 0.0
      %6954 = vmatprep.subr.mxu0 0.0
      %6955 = vmatpush2.msra.mxu0 0.0
      %6956 = vmatprep.subr.mxu0 0.0
      %6957 = vmatpush2.msra.mxu0 0.0
      %6958 = vmatprep.subr.mxu0 0.0
      %6959 = vmatpush2.msra.mxu0 0.0
      %6960 = vmatprep.subr.mxu0 0.0
      %6961 = vmatpush2.msra.mxu0 0.0
      %6962 = vmatprep.subr.mxu0 0.0
      %6963 = vmatpush2.msra.mxu0 0.0
      %6964 = vmatprep.subr.mxu0 0.0
      %6965 = vmatpush2.msra.mxu0 0.0
      %6966 = vmatprep.subr.mxu0 0.0
      %6967 = vmatpush2.msra.mxu0 0.0
      %6968 = vmatprep.subr.mxu0 0.0
      %6969 = vmatpush2.msra.mxu0 0.0
      %6970 = vmatprep.subr.mxu0 0.0
      %6971 = vmatpush2.msra.mxu0 0.0
      %6972 = vmatprep.subr.mxu0 0.0
      %6973 = vmatpush2.msra.mxu0 0.0
      %6974 = vmatprep.subr.mxu0 0.0
      %6975 = vmatpush2.msra.mxu0 0.0
      %6976 = vmatprep.subr.mxu0 0.0
      %6977 = vmatpush2.msra.mxu0 0.0
      %6978 = vmatprep.subr.mxu0 0.0
      %6979 = vmatpush2.msra.mxu0 0.0
      %6980 = vmatprep.mubr.f32.mxu0 0.0
      %6981 = vmatmul.mubr.f32.gmra.mxu0 %v6869
      %v6982 = vpop.f32.mrf.mxu0
      %v6983 = vadd.f32 0.0, %v6982
      %v6984 = vpop.f32.mrf.mxu0
      %6985 = vmatprep.mubr.f32.mxu0 0.0
      %6986 = vmatmul.mubr.f32.gmra.mxu0 %v6872
      %v6987 = vpop.f32.mrf.mxu0
      %v6988 = vadd.f32 0.0, %v6987
      %v6989 = vpop.f32.mrf.mxu0
      %6990 = vmatprep.mubr.f32.mxu0 0.0
      %6991 = vmatmul.mubr.f32.gmra.mxu0 %v6875
      %v6992 = vpop.f32.mrf.mxu0
      %v6993 = vadd.f32 0.0, %v6992
      %v6994 = vpop.f32.mrf.mxu0
      %6995 = vmatprep.mubr.f32.mxu0 0.0
      %6996 = vmatmul.mubr.f32.gmra.mxu0 %v6878
      %v6997 = vpop.f32.mrf.mxu0
      %v6998 = vadd.f32 0.0, %v6997
      %v6999 = vpop.f32.mrf.mxu0
      %7000 = vmatprep.mubr.f32.mxu0 0.0
      %7001 = vmatmul.mubr.f32.gmra.mxu0 %v6881
      %v7002 = vpop.f32.mrf.mxu0
      %v7003 = vadd.f32 0.0, %v7002
      %v7004 = vpop.f32.mrf.mxu0
      %7005 = vmatprep.mubr.f32.mxu0 0.0
      %7006 = vmatmul.mubr.f32.gmra.mxu0 %v6884
      %v7007 = vpop.f32.mrf.mxu0
      %v7008 = vadd.f32 0.0, %v7007
      %v7009 = vpop.f32.mrf.mxu0
      %7010 = vmatprep.mubr.f32.mxu0 0.0
      %7011 = vmatmul.mubr.f32.gmra.mxu0 %v6887
      %v7012 = vpop.f32.mrf.mxu0
      %v7013 = vadd.f32 0.0, %v7012
      %v7014 = vpop.f32.mrf.mxu0
      %7015 = vmatprep.mubr.f32.mxu0 0.0
      %7016 = vmatmul.mubr.f32.gmra.mxu0 %v6890
      %v7017 = vpop.f32.mrf.mxu0
      %v7018 = vadd.f32 0.0, %v7017
      %v7019 = vpop.f32.mrf.mxu0
      %7020 = vmatprep.mubr.f32.mxu0 0.0
      %7021 = vmatmul.mubr.f32.gmra.mxu0 %v6893
      %v7022 = vpop.f32.mrf.mxu0
      %v7023 = vadd.f32 0.0, %v7022
      %v7024 = vpop.f32.mrf.mxu0
      %7025 = vmatprep.mubr.f32.mxu0 0.0
      %7026 = vmatmul.mubr.f32.gmra.mxu0 %v6896
      %v7027 = vpop.f32.mrf.mxu0
      %v7028 = vadd.f32 0.0, %v7027
      %v7029 = vpop.f32.mrf.mxu0
      %7030 = vmatprep.mubr.f32.mxu0 0.0
      %7031 = vmatmul.mubr.f32.gmra.mxu0 %v6899
      %v7032 = vpop.f32.mrf.mxu0
      %v7033 = vadd.f32 0.0, %v7032
      %v7034 = vpop.f32.mrf.mxu0
      %7035 = vmatprep.mubr.f32.mxu0 0.0
      %7036 = vmatmul.mubr.f32.gmra.mxu0 %v6902
      %v7037 = vpop.f32.mrf.mxu0
      %v7038 = vadd.f32 0.0, %v7037
      %v7039 = vpop.f32.mrf.mxu0
      %7040 = vmatprep.mubr.f32.mxu0 0.0
      %7041 = vmatmul.mubr.f32.gmra.mxu0 %v6905
      %v7042 = vpop.f32.mrf.mxu0
      %v7043 = vadd.f32 0.0, %v7042
      %v7044 = vpop.f32.mrf.mxu0
      %7045 = vmatprep.mubr.f32.mxu0 0.0
      %7046 = vmatmul.mubr.f32.gmra.mxu0 %v6908
      %v7047 = vpop.f32.mrf.mxu0
      %v7048 = vadd.f32 0.0, %v7047
      %v7049 = vpop.f32.mrf.mxu0
      %7050 = vmatprep.mubr.f32.mxu0 0.0
      %7051 = vmatmul.mubr.f32.gmra.mxu0 %v6911
      %v7052 = vpop.f32.mrf.mxu0
      %v7053 = vadd.f32 0.0, %v7052
      %v7054 = vpop.f32.mrf.mxu0
      %7055 = vmatprep.mubr.f32.mxu0 0.0
      %7056 = vmatmul.mubr.f32.gmra.mxu0 %v6914
      %v7057 = vpop.f32.mrf.mxu0
      %v7058 = vadd.f32 0.0, %v7057
      %v7059 = vpop.f32.mrf.mxu0
      %7060 = vdwg.mxu0
      %v7061 = vadd.f32 %v6833, %v6983
      %v7062 = vadd.f32 %v6834, %v6988
      %v7063 = vadd.f32 %v6835, %v6993
      %v7064 = vadd.f32 %v6836, %v6998
      %v7065 = vadd.f32 %v6837, %v7003
      %v7066 = vadd.f32 %v6838, %v7008
      %v7067 = vadd.f32 %v6839, %v7013
      %v7068 = vadd.f32 %v6840, %v7018
      %v7069 = vadd.f32 %v6841, %v7023
      %v7070 = vadd.f32 %v6842, %v7028
      %v7071 = vadd.f32 %v6843, %v7033
      %v7072 = vadd.f32 %v6844, %v7038
      %v7073 = vadd.f32 %v6845, %v7043
      %v7074 = vadd.f32 %v6846, %v7048
      %v7075 = vadd.f32 %v6847, %v7053
      %v7076 = vadd.f32 %v6848, %v7058
      %v7077 = vld [vmem:[%s6620 + $0x2] sm:$0xff]
      %v7078 = vld [vmem:[%s6620 + $0xa] sm:$0xff]
      %v7079 = vld [vmem:[%s6620 + $0x1a] sm:$0xff]
      %v7080 = vld [vmem:[%s6620 + $0x22] sm:$0xff]
      %v7081 = vld [vmem:[%s6620 + $0x32] sm:$0xff]
      %v7082 = vld [vmem:[%s6620 + $0x3a] sm:$0xff]
      %v7083 = vld [vmem:[%s6620 + $0x4a] sm:$0xff]
      %v7084 = vld [vmem:[%s6620 + $0x52] sm:$0xff]
      %v7085 = vld [vmem:[%s6620 + $0x62] sm:$0xff]
      %v7086 = vld [vmem:[%s6620 + $0x6a] sm:$0xff]
      %v7087 = vld [vmem:[%s6620 + $0x7a] sm:$0xff]
      %v7088 = vld [vmem:[%s6620 + $0x82] sm:$0xff]
      %v7089 = vld [vmem:[%s6620 + $0x92] sm:$0xff]
      %v7090 = vld [vmem:[%s6620 + $0x9a] sm:$0xff]
      %v7091 = vld [vmem:[%s6620 + $0xaa] sm:$0xff]
      %v7092 = vld [vmem:[%s6620 + $0xb2] sm:$0xff]
      %s7093 = scalar_lea.vmem %s3, 128
      %v7094 = vld [vmem:[%s7093] sm:$0xff]
      %v7095 = vld [vmem:[%s7093 + $0x8] sm:$0xff]
      %v7097 = vsel %vm5181, %v7077, 0
      %v7100 = vsel %vm5181, %v7078, 0
      %v7103 = vsel %vm5181, %v7079, 0
      %v7106 = vsel %vm5181, %v7080, 0
      %v7109 = vsel %vm5181, %v7081, 0
      %v7112 = vsel %vm5181, %v7082, 0
      %v7115 = vsel %vm5181, %v7083, 0
      %v7118 = vsel %vm5181, %v7084, 0
      %v7121 = vsel %vm5181, %v7085, 0
      %v7124 = vsel %vm5181, %v7086, 0
      %v7127 = vsel %vm5181, %v7087, 0
      %v7130 = vsel %vm5181, %v7088, 0
      %v7133 = vsel %vm5181, %v7089, 0
      %v7136 = vsel %vm5181, %v7090, 0
      %v7139 = vsel %vm5181, %v7091, 0
      %v7142 = vsel %vm5181, %v7092, 0
      %7144 = vmatprep.subr.mxu0 0.0
      %7145 = vmatpush1.msra.mxu0 0.0
      %7146 = vmatprep.subr.mxu0 0.0
      %7147 = vmatpush1.msra.mxu0 0.0
      %7148 = vmatprep.subr.mxu0 0.0
      %7149 = vmatpush1.msra.mxu0 0.0
      %7150 = vmatprep.subr.mxu0 0.0
      %7151 = vmatpush1.msra.mxu0 0.0
      %7152 = vmatprep.subr.mxu0 0.0
      %7153 = vmatpush1.msra.mxu0 0.0
      %7154 = vmatprep.subr.mxu0 0.0
      %7155 = vmatpush1.msra.mxu0 0.0
      %7156 = vmatprep.subr.mxu0 0.0
      %7157 = vmatpush1.msra.mxu0 0.0
      %7158 = vmatprep.subr.mxu0 0.0
      %7159 = vmatpush1.msra.mxu0 0.0
      %7160 = vmatprep.subr.mxu0 0.0
      %7161 = vmatpush1.msra.mxu0 0.0
      %7162 = vmatprep.subr.mxu0 0.0
      %7163 = vmatpush1.msra.mxu0 0.0
      %7164 = vmatprep.subr.mxu0 0.0
      %7165 = vmatpush1.msra.mxu0 0.0
      %7166 = vmatprep.subr.mxu0 0.0
      %7167 = vmatpush1.msra.mxu0 0.0
      %7168 = vmatprep.subr.mxu0 0.0
      %7169 = vmatpush1.msra.mxu0 0.0
      %7170 = vmatprep.subr.mxu0 0.0
      %7171 = vmatpush1.msra.mxu0 0.0
      %7172 = vmatprep.subr.mxu0 0.0
      %7173 = vmatpush1.msra.mxu0 %v7095
      %7174 = vmatprep.subr.mxu0 0.0
      %7175 = vmatpush1.msra.mxu0 %v7094
      %7176 = vmatprep.subr.mxu0 0.0
      %7177 = vmatpush2.msra.mxu0 0.0
      %7178 = vmatprep.subr.mxu0 0.0
      %7179 = vmatpush2.msra.mxu0 0.0
      %7180 = vmatprep.subr.mxu0 0.0
      %7181 = vmatpush2.msra.mxu0 0.0
      %7182 = vmatprep.subr.mxu0 0.0
      %7183 = vmatpush2.msra.mxu0 0.0
      %7184 = vmatprep.subr.mxu0 0.0
      %7185 = vmatpush2.msra.mxu0 0.0
      %7186 = vmatprep.subr.mxu0 0.0
      %7187 = vmatpush2.msra.mxu0 0.0
      %7188 = vmatprep.subr.mxu0 0.0
      %7189 = vmatpush2.msra.mxu0 0.0
      %7190 = vmatprep.subr.mxu0 0.0
      %7191 = vmatpush2.msra.mxu0 0.0
      %7192 = vmatprep.subr.mxu0 0.0
      %7193 = vmatpush2.msra.mxu0 0.0
      %7194 = vmatprep.subr.mxu0 0.0
      %7195 = vmatpush2.msra.mxu0 0.0
      %7196 = vmatprep.subr.mxu0 0.0
      %7197 = vmatpush2.msra.mxu0 0.0
      %7198 = vmatprep.subr.mxu0 0.0
      %7199 = vmatpush2.msra.mxu0 0.0
      %7200 = vmatprep.subr.mxu0 0.0
      %7201 = vmatpush2.msra.mxu0 0.0
      %7202 = vmatprep.subr.mxu0 0.0
      %7203 = vmatpush2.msra.mxu0 0.0
      %7204 = vmatprep.subr.mxu0 0.0
      %7205 = vmatpush2.msra.mxu0 0.0
      %7206 = vmatprep.subr.mxu0 0.0
      %7207 = vmatpush2.msra.mxu0 0.0
      %7208 = vmatprep.mubr.f32.mxu0 0.0
      %7209 = vmatmul.mubr.f32.gmra.mxu0 %v7097
      %v7210 = vpop.f32.mrf.mxu0
      %v7211 = vadd.f32 0.0, %v7210
      %v7212 = vpop.f32.mrf.mxu0
      %7213 = vmatprep.mubr.f32.mxu0 0.0
      %7214 = vmatmul.mubr.f32.gmra.mxu0 %v7100
      %v7215 = vpop.f32.mrf.mxu0
      %v7216 = vadd.f32 0.0, %v7215
      %v7217 = vpop.f32.mrf.mxu0
      %7218 = vmatprep.mubr.f32.mxu0 0.0
      %7219 = vmatmul.mubr.f32.gmra.mxu0 %v7103
      %v7220 = vpop.f32.mrf.mxu0
      %v7221 = vadd.f32 0.0, %v7220
      %v7222 = vpop.f32.mrf.mxu0
      %7223 = vmatprep.mubr.f32.mxu0 0.0
      %7224 = vmatmul.mubr.f32.gmra.mxu0 %v7106
      %v7225 = vpop.f32.mrf.mxu0
      %v7226 = vadd.f32 0.0, %v7225
      %v7227 = vpop.f32.mrf.mxu0
      %7228 = vmatprep.mubr.f32.mxu0 0.0
      %7229 = vmatmul.mubr.f32.gmra.mxu0 %v7109
      %v7230 = vpop.f32.mrf.mxu0
      %v7231 = vadd.f32 0.0, %v7230
      %v7232 = vpop.f32.mrf.mxu0
      %7233 = vmatprep.mubr.f32.mxu0 0.0
      %7234 = vmatmul.mubr.f32.gmra.mxu0 %v7112
      %v7235 = vpop.f32.mrf.mxu0
      %v7236 = vadd.f32 0.0, %v7235
      %v7237 = vpop.f32.mrf.mxu0
      %7238 = vmatprep.mubr.f32.mxu0 0.0
      %7239 = vmatmul.mubr.f32.gmra.mxu0 %v7115
      %v7240 = vpop.f32.mrf.mxu0
      %v7241 = vadd.f32 0.0, %v7240
      %v7242 = vpop.f32.mrf.mxu0
      %7243 = vmatprep.mubr.f32.mxu0 0.0
      %7244 = vmatmul.mubr.f32.gmra.mxu0 %v7118
      %v7245 = vpop.f32.mrf.mxu0
      %v7246 = vadd.f32 0.0, %v7245
      %v7247 = vpop.f32.mrf.mxu0
      %7248 = vmatprep.mubr.f32.mxu0 0.0
      %7249 = vmatmul.mubr.f32.gmra.mxu0 %v7121
      %v7250 = vpop.f32.mrf.mxu0
      %v7251 = vadd.f32 0.0, %v7250
      %v7252 = vpop.f32.mrf.mxu0
      %7253 = vmatprep.mubr.f32.mxu0 0.0
      %7254 = vmatmul.mubr.f32.gmra.mxu0 %v7124
      %v7255 = vpop.f32.mrf.mxu0
      %v7256 = vadd.f32 0.0, %v7255
      %v7257 = vpop.f32.mrf.mxu0
      %7258 = vmatprep.mubr.f32.mxu0 0.0
      %7259 = vmatmul.mubr.f32.gmra.mxu0 %v7127
      %v7260 = vpop.f32.mrf.mxu0
      %v7261 = vadd.f32 0.0, %v7260
      %v7262 = vpop.f32.mrf.mxu0
      %7263 = vmatprep.mubr.f32.mxu0 0.0
      %7264 = vmatmul.mubr.f32.gmra.mxu0 %v7130
      %v7265 = vpop.f32.mrf.mxu0
      %v7266 = vadd.f32 0.0, %v7265
      %v7267 = vpop.f32.mrf.mxu0
      %7268 = vmatprep.mubr.f32.mxu0 0.0
      %7269 = vmatmul.mubr.f32.gmra.mxu0 %v7133
      %v7270 = vpop.f32.mrf.mxu0
      %v7271 = vadd.f32 0.0, %v7270
      %v7272 = vpop.f32.mrf.mxu0
      %7273 = vmatprep.mubr.f32.mxu0 0.0
      %7274 = vmatmul.mubr.f32.gmra.mxu0 %v7136
      %v7275 = vpop.f32.mrf.mxu0
      %v7276 = vadd.f32 0.0, %v7275
      %v7277 = vpop.f32.mrf.mxu0
      %7278 = vmatprep.mubr.f32.mxu0 0.0
      %7279 = vmatmul.mubr.f32.gmra.mxu0 %v7139
      %v7280 = vpop.f32.mrf.mxu0
      %v7281 = vadd.f32 0.0, %v7280
      %v7282 = vpop.f32.mrf.mxu0
      %7283 = vmatprep.mubr.f32.mxu0 0.0
      %7284 = vmatmul.mubr.f32.gmra.mxu0 %v7142
      %v7285 = vpop.f32.mrf.mxu0
      %v7286 = vadd.f32 0.0, %v7285
      %v7287 = vpop.f32.mrf.mxu0
      %7288 = vdwg.mxu0
      %v7289 = vadd.f32 %v7061, %v7211
      %v7290 = vadd.f32 %v7062, %v7216
      %v7291 = vadd.f32 %v7063, %v7221
      %v7292 = vadd.f32 %v7064, %v7226
      %v7293 = vadd.f32 %v7065, %v7231
      %v7294 = vadd.f32 %v7066, %v7236
      %v7295 = vadd.f32 %v7067, %v7241
      %v7296 = vadd.f32 %v7068, %v7246
      %v7297 = vadd.f32 %v7069, %v7251
      %v7298 = vadd.f32 %v7070, %v7256
      %v7299 = vadd.f32 %v7071, %v7261
      %v7300 = vadd.f32 %v7072, %v7266
      %v7301 = vadd.f32 %v7073, %v7271
      %v7302 = vadd.f32 %v7074, %v7276
      %v7303 = vadd.f32 %v7075, %v7281
      %v7304 = vadd.f32 %v7076, %v7286
      %v7305 = vld [vmem:[%s4] sm:$0x1]
      %v7307 = vlaneseq
      %v7308 = vshrl.u32 %v7307, 7
      %v7309 = vsub.s32 0, %v7308
      %v7310 = vrot.slane %v7305, %v7309
      %v7312 = vadd.f32 %v7289, %v7310
      %v7313 = vadd.f32 %v7290, %v7310
      %v7314 = vadd.f32 %v7291, %v7310
      %v7315 = vadd.f32 %v7292, %v7310
      %v7316 = vadd.f32 %v7293, %v7310
      %v7317 = vadd.f32 %v7294, %v7310
      %v7318 = vadd.f32 %v7295, %v7310
      %v7319 = vadd.f32 %v7296, %v7310
      %v7320 = vadd.f32 %v7297, %v7310
      %v7321 = vadd.f32 %v7298, %v7310
      %v7322 = vadd.f32 %v7299, %v7310
      %v7323 = vadd.f32 %v7300, %v7310
      %v7324 = vadd.f32 %v7301, %v7310
      %v7325 = vadd.f32 %v7302, %v7310
      %v7326 = vadd.f32 %v7303, %v7310
      %v7327 = vadd.f32 %v7304, %v7310
      %v7328 = vmax.f32 %v7312, 0.0
      %v7329 = vmax.f32 %v7313, 0.0
      %v7330 = vmax.f32 %v7314, 0.0
      %v7331 = vmax.f32 %v7315, 0.0
      %v7332 = vmax.f32 %v7316, 0.0
      %v7333 = vmax.f32 %v7317, 0.0
      %v7334 = vmax.f32 %v7318, 0.0
      %v7335 = vmax.f32 %v7319, 0.0
      %v7336 = vmax.f32 %v7320, 0.0
      %v7337 = vmax.f32 %v7321, 0.0
      %v7338 = vmax.f32 %v7322, 0.0
      %v7339 = vmax.f32 %v7323, 0.0
      %v7340 = vmax.f32 %v7324, 0.0
      %v7341 = vmax.f32 %v7325, 0.0
      %v7342 = vmax.f32 %v7326, 0.0
      %v7343 = vmax.f32 %v7327, 0.0
      %v7344 = vmax.f32 %v7328, %v7330
      %v7345 = vmax.f32 %v7329, %v7331
      %v7346 = vmax.f32 %v7332, %v7334
      %v7347 = vmax.f32 %v7333, %v7335
      %v7348 = vmax.f32 %v7336, %v7338
      %v7349 = vmax.f32 %v7337, %v7339
      %v7350 = vmax.f32 %v7340, %v7342
      %v7351 = vmax.f32 %v7341, %v7343
      %vm7352 = vcmask 261120
      %7353 = vst.msk [vmem:[#allocation4] sm:$0xff] %vm7352, %v7344
      %7354 = vst.msk [vmem:[#allocation4 + $0x8] sm:$0xff] %vm7352, %v7345
      %7355 = vst.msk [vmem:[#allocation4 + $0x10] sm:$0xff] %vm7352, %v7346
      %7356 = vst.msk [vmem:[#allocation4 + $0x18] sm:$0xff] %vm7352, %v7347
      %7357 = vst.msk [vmem:[#allocation4 + $0x20] sm:$0xff] %vm7352, %v7348
      %7358 = vst.msk [vmem:[#allocation4 + $0x28] sm:$0xff] %vm7352, %v7349
      %7359 = vst.msk [vmem:[#allocation4 + $0x30] sm:$0xff] %vm7352, %v7350
      %7360 = vst.msk [vmem:[#allocation4 + $0x38] sm:$0xff] %vm7352, %v7351
      %v7361 = vld [vmem:[#allocation4] ss:$2 sm:$0xf]
      %s7362 = scalar_lea.vmem [#allocation4], 16
      %v7363 = vld [vmem:[%s7362] ss:$2 sm:$0xf]
      %s7364 = scalar_lea.vmem [#allocation4], 32
      %v7365 = vld [vmem:[%s7364] ss:$2 sm:$0xf]
      %s7366 = scalar_lea.vmem [#allocation4], 48
      %v7367 = vld [vmem:[%s7366] ss:$2 sm:$0xf]
      %s7368 = scalar_lea.vmem [#allocation4], 1
      %v7369 = vld [vmem:[%s7368] ss:$2 sm:$0xf]
      %s7370 = scalar_lea.vmem [#allocation4], 17
      %v7371 = vld [vmem:[%s7370] ss:$2 sm:$0xf]
      %s7372 = scalar_lea.vmem [#allocation4], 33
      %v7373 = vld [vmem:[%s7372] ss:$2 sm:$0xf]
      %s7374 = scalar_lea.vmem [#allocation4], 49
      %v7375 = vld [vmem:[%s7374] ss:$2 sm:$0xf]
      %v7376 = vmax.f32 %v7361, %v7369
      %v7377 = vmax.f32 %v7363, %v7371
      %v7378 = vmax.f32 %v7365, %v7373
      %v7379 = vmax.f32 %v7367, %v7375
      %vm7380 = vcmask 257024
      %7381 = vst.msk [vmem:[%s224] sm:$0xf] %vm7380, %v7376
      %7382 = vst.msk [vmem:[%s224 + $0x4] sm:$0xf] %vm7380, %v7377
      %7383 = vst.msk [vmem:[%s224 + $0x8] sm:$0xf] %vm7380, %v7378
      %7384 = vst.msk [vmem:[%s224 + $0xc] sm:$0xf] %vm7380, %v7379
      %p7385 = scmp.lt.s32.totalorder %s16, 1
      %s7386 = scalar_select %p7385, %s16, 1
      %s7387 = smul.addr %s7386, 4
      %s7388 = smul.addr %s7387, 4
      %s7389 = scalar_lea.vmem %s5, %s7388
      // Predicated region
      $region41: #{simple_cnn_forward.2} parent=39 // pred_check
        %p7390 = pneg %p144
      $region42: #{simple_cnn_forward.2} parent=39 // pred_check_branch
        %7392 = sbr.rel (%p7390) target = $region44
      $region43: #{simple_cnn_forward.2} parent=39 // pred_region
        _
      $region44: #{simple_cnn_forward.2} parent=39 // pred_fallthru
        _
    $region40: #{simple_cnn_forward.2} parent=5 // pred_fallthru
      _
    %p7393 = scmp.le.s32.totalorder 2, %s11
    // Predicated region
    $region45: #{simple_cnn_forward.2} parent=5 // pred_check
      %p7394 = pneg %p7393
    $region46: #{simple_cnn_forward.2} parent=5 // pred_check_branch
      %7396 = sbr.rel (%p7394) target = $region48
    $region47: #{simple_cnn_forward.2} parent=5 // pred_region
      %s7397 = ssub.s32 %s11, 2
      // Predicated region
      $region49: #{simple_cnn_forward.2} parent=47 // pred_check
        %p7398 = pneg %p150
      $region50: #{simple_cnn_forward.2} parent=47 // pred_check_branch
        %7400 = sbr.rel (%p7398) target = $region52
      $region51: #{simple_cnn_forward.2} parent=47 // pred_region
        %p7401 = scmp.lt.s32.totalorder %s17, 1
        %s7402 = scalar_select %p7401, %s17, 1
        %s7403 = smul.addr %s7402, 4
        %s7404 = smul.addr %s7403, 4
        %s7405 = scalar_lea.vmem %s5, %s7404
      $region52: #{simple_cnn_forward.2} parent=47 // pred_fallthru
        _
    $region48: #{simple_cnn_forward.2} parent=5 // pred_fallthru
      _
  $region6: #{simple_cnn_forward.2} parent=0 // loop_footer
    %s15 = sadd.s32 1, %s11
  $region7: #{simple_cnn_forward.2} parent=0 // loop_footer_branch
    %10 = sbr.rel target = $region3
  $region8: #{simple_cnn_forward.2} parent=0 // loop_exit
    _

</llo_original>
